<compile_context>
chip_gen: v7x
topology: tpu7x:2x2x1
jax: 0.10.0
libtpu: 0.0.40
codegen_flags: <defaults>
</compile_context>

<pallas_src>
import jax
import jax.numpy as jnp
from jax import lax
from jax.experimental import pallas as pl
from jax.experimental.pallas import tpu as pltpu


# ----------------------------------------------------------------------------
# Shared body: bidirectional GRU over time + Yang-style attention pooling.
# ----------------------------------------------------------------------------
def _bigru_attention(x_ref, wih_f_ref, whh_f_ref, bih_f_ref, bhh_f_ref,
                     wih_b_ref, whh_b_ref, bih_b_ref, bhh_b_ref,
                     wa_ref, ba_ref, ctx_ref):
    """x_ref: (B, T, E) batch-major block.  Returns enc (B, 2H), alpha (B, T).

    Weights are fused over the 3 GRU gates in PyTorch order (r, z, n):
      wih: (E, 3H), whh: (H, 3H), bih/bhh: (1, 3H).
    """
    B, T, E = x_ref.shape
    H = whh_f_ref.shape[0]
    H3 = 3 * H

    wih_f = wih_f_ref[...]; whh_f = whh_f_ref[...]
    bih_f = bih_f_ref[...]; bhh_f = bhh_f_ref[...]
    wih_b = wih_b_ref[...]; whh_b = whh_b_ref[...]
    bih_b = bih_b_ref[...]; bhh_b = bhh_b_ref[...]

    # Hoist the input projection out of the recurrence as one fat matmul per
    # direction when the (B, T, E) -> (B*T, E) collapse is tile-aligned
    # (T % 8 == 0); otherwise project per timestep (still gate-fused).
    if T % 8 == 0:
        x_flat = x_ref[...].reshape(B * T, E)
        gi_f_all = (jnp.dot(x_flat, wih_f, preferred_element_type=jnp.float32)
                    + bih_f).reshape(B, T, H3)
        gi_b_all = (jnp.dot(x_flat, wih_b, preferred_element_type=jnp.float32)
                    + bih_b).reshape(B, T, H3)
        gi_f = lambda t: gi_f_all[:, t, :]
        gi_b = lambda t: gi_b_all[:, t, :]
    else:
        gi_f = lambda t: (jnp.dot(x_ref[:, t, :], wih_f,
                                  preferred_element_type=jnp.float32) + bih_f)
        gi_b = lambda t: (jnp.dot(x_ref[:, t, :], wih_b,
                                  preferred_element_type=jnp.float32) + bih_b)

    def cell(gi, h, whh, bhh):
        # PyTorch GRU: r = s(gi_r+gh_r); z = s(gi_z+gh_z);
        #              n = tanh(gi_n + r*(W_hn h + b_hn)); h' = (1-z)*n + z*h
        gh = jnp.dot(h, whh, preferred_element_type=jnp.float32) + bhh
        r = jax.nn.sigmoid(gi[:, 0:H] + gh[:, 0:H])
        z = jax.nn.sigmoid(gi[:, H:2 * H] + gh[:, H:2 * H])
        n = jnp.tanh(gi[:, 2 * H:H3] + r * gh[:, 2 * H:H3])
        return (1.0 - z) * n + z * h

    # T is small and static: fully unrolled static loop (equivalent to
    # fori_loop(unroll=True) but with constant indices).  Forward and backward
    # recurrences are interleaved so their h @ Whh matmuls overlap; only the
    # per-direction h-dependency chain is serial.
    h_f = jnp.zeros((B, H), jnp.float32)
    h_b = jnp.zeros((B, H), jnp.float32)
    hs_f = [None] * T
    hs_b = [None] * T
    for t in range(T):
        tb = T - 1 - t
        h_f = cell(gi_f(t), h_f, whh_f, bhh_f)
        h_b = cell(gi_b(tb), h_b, whh_b, bhh_b)
        hs_f[t] = h_f
        hs_b[tb] = h_b

    h_all = [jnp.concatenate([hs_f[t], hs_b[t]], axis=-1) for t in range(T)]  # T x (B, 2H)

    # Additive attention: u_t = tanh(h_t W + b); a = softmax_t(u_t . ctx);
    # enc = sum_t a_t * h_t.  Scores collected lane-dense as (B, T).
    wa = wa_ref[...]; ba = ba_ref[...]; ctx = ctx_ref[...]
    scores = []
    for t in range(T):
        u_t = jnp.tanh(jnp.dot(h_all[t], wa, preferred_element_type=jnp.float32) + ba)
        scores.append(jnp.sum(u_t * ctx, axis=-1, keepdims=True))            # (B, 1)
    s = jnp.concatenate(scores, axis=-1)                                     # (B, T)
    m = jnp.max(s, axis=-1, keepdims=True)
    e = jnp.exp(s - m)
    alpha = e / jnp.sum(e, axis=-1, keepdims=True)                           # (B, T)

    enc = jnp.zeros((B, 2 * H), jnp.float32)
    for t in range(T):
        enc = enc + alpha[:, t:t + 1] * h_all[t]
    return enc, alpha


# ----------------------------------------------------------------------------
# Kernel 1: word-level encoder (bi-GRU + word attention), batch-block parallel.
# ----------------------------------------------------------------------------
def _word_encoder_kernel(x_ref, wih_f, whh_f, bih_f, bhh_f,
                         wih_b, whh_b, bih_b, bhh_b,
                         wa, ba, ctx,
                         enc_ref, alpha_ref):
    enc, alpha = _bigru_attention(x_ref, wih_f, whh_f, bih_f, bhh_f,
                                  wih_b, whh_b, bih_b, bhh_b, wa, ba, ctx)
    enc_ref[0] = enc          # block (1, Bblk, 2H)
    alpha_ref[0] = alpha      # block (1, Bblk, T)


def word_encode(emb, gru_f, gru_b, attn):
    """emb: (B, T, E) batch-major.  Returns sen_enc (B, 2H), word_attn (B, T)."""
    B, T, E = emb.shape
    H = gru_f[1].shape[0]
    D = 2 * H
    # Parallel batch-block axis: shards independent sequences across TensorCores
    # on v7x; harmless single-core loop on v5e/v6e.
    nblk = 2 if (B % 2 == 0 and B >= 4) else 1
    bblk = B // nblk

    wih_f, whh_f, bih_f, bhh_f = gru_f
    wih_b, whh_b, bih_b, bhh_b = gru_b
    wa, ba, ctx = attn

    def full(shape):
        return pl.BlockSpec(shape, lambda *_: (0,) * len(shape))

    enc3, alpha3 = pl.pallas_call(
        _word_encoder_kernel,
        out_shape=(jax.ShapeDtypeStruct((nblk, bblk, D), jnp.float32),
                   jax.ShapeDtypeStruct((nblk, bblk, T), jnp.float32)),
        grid=(nblk,),
        in_specs=[
            pl.BlockSpec((bblk, T, E), lambda i: (i, 0, 0)),
            full(wih_f.shape), full(whh_f.shape), full(bih_f.shape), full(bhh_f.shape),
            full(wih_b.shape), full(whh_b.shape), full(bih_b.shape), full(bhh_b.shape),
            full(wa.shape), full(ba.shape), full(ctx.shape),
        ],
        out_specs=(pl.BlockSpec((1, bblk, D), lambda i: (i, 0, 0)),
                   pl.BlockSpec((1, bblk, T), lambda i: (i, 0, 0))),
        compiler_params=pltpu.CompilerParams(dimension_semantics=("parallel",)),
    )(emb, wih_f, whh_f, bih_f, bhh_f, wih_b, whh_b, bih_b, bhh_b, wa, ba, ctx)
    return enc3.reshape(B, D), alpha3.reshape(B, T)


# ----------------------------------------------------------------------------
# Kernel 2: sentence-level encoder (bi-GRU + sentence attention) + BN + Linear.
# ----------------------------------------------------------------------------
def _sent_encoder_head_kernel(x_ref, wih_f, whh_f, bih_f, bhh_f,
                              wih_b, whh_b, bih_b, bhh_b,
                              wa, ba, ctx,
                              gamma, beta, mean, var, wo, bo,
                              y_ref, alpha_ref):
    doc, alpha = _bigru_attention(x_ref, wih_f, whh_f, bih_f, bhh_f,
                                  wih_b, whh_b, bih_b, bhh_b, wa, ba, ctx)
    # Eval-mode BatchNorm1d (running stats) + Dropout(identity in eval) + Linear.
    inv = lax.rsqrt(var[...] + 1e-5)
    xn = (doc - mean[...]) * inv * gamma[...] + beta[...]
    y_ref[...] = jnp.dot(xn, wo[...], preferred_element_type=jnp.float32) + bo[...]
    alpha_ref[...] = alpha


def sent_encode_head(sen_enc, gru_f, gru_b, attn, bn, out):
    """sen_enc: (n_doc, n_sents, 2Hw).  Returns y_pred (n_doc, C), sent_attn (n_doc, n_sents)."""
    B, T, E = sen_enc.shape
    C = out[0].shape[1]
    operands = (sen_enc, *gru_f, *gru_b, *attn, *bn, *out)

    def full(x):
        return pl.BlockSpec(x.shape, lambda *_: (0,) * x.ndim)

    return pl.pallas_call(
        _sent_encoder_head_kernel,
        out_shape=(jax.ShapeDtypeStruct((B, C), jnp.float32),
                   jax.ShapeDtypeStruct((B, T), jnp.float32)),
        grid=(1,),
        in_specs=[full(o) for o in operands],
        out_specs=(pl.BlockSpec((B, C), lambda i: (0, 0)),
                   pl.BlockSpec((B, T), lambda i: (0, 0))),
        compiler_params=pltpu.CompilerParams(dimension_semantics=("arbitrary",)),
    )(*operands)


# ----------------------------------------------------------------------------
# Parameter construction (deterministic, synthetic) + full HAN forward
# ----------------------------------------------------------------------------
def init_gru_params(key, in_dim, hidden):
    # Fused-gate layout, PyTorch gate order (r, z, n) along the last axis.
    k = 1.0 / jnp.sqrt(jnp.float32(hidden))
    ks = jax.random.split(key, 4)
    wih = jax.random.uniform(ks[0], (in_dim, 3 * hidden), jnp.float32, -k, k)
    whh = jax.random.uniform(ks[1], (hidden, 3 * hidden), jnp.float32, -k, k)
    bih = jax.random.uniform(ks[2], (1, 3 * hidden), jnp.float32, -k, k)
    bhh = jax.random.uniform(ks[3], (1, 3 * hidden), jnp.float32, -k, k)
    return (wih, whh, bih, bhh)


def init_attn_params(key, dim):
    ks = jax.random.split(key, 3)
    w = 0.1 * jax.random.normal(ks[0], (dim, dim), jnp.float32)
    b = 0.1 * jax.random.normal(ks[1], (1, dim), jnp.float32)
    ctx = 0.1 * jax.random.normal(ks[2], (1, dim), jnp.float32)
    return (w, b, ctx)


def init_han_params(key, num_tokens, embed_size, word_hidden, sent_hidden, num_classes):
    word_out = 2 * word_hidden   # bidirectional GRU word encoder
    sent_out = 2 * sent_hidden   # bidirectional GRU sentence encoder
    ks = jax.random.split(key, 8)
    return {
        "embedding": 0.1 * jax.random.normal(ks[0], (num_tokens, embed_size), jnp.float32),
        "word_gru_f": init_gru_params(ks[1], embed_size, word_hidden),
        "word_gru_b": init_gru_params(ks[2], embed_size, word_hidden),
        "word_attn": init_attn_params(ks[3], word_out),
        "sent_gru_f": init_gru_params(ks[4], word_out, sent_hidden),
        "sent_gru_b": init_gru_params(ks[5], word_out, sent_hidden),
        "sent_attn": init_attn_params(ks[6], sent_out),
        "bn": (jnp.ones((1, sent_out), jnp.float32),    # gamma
               jnp.zeros((1, sent_out), jnp.float32),   # beta
               jnp.zeros((1, sent_out), jnp.float32),   # running mean
               jnp.ones((1, sent_out), jnp.float32)),   # running var
        "out": (0.1 * jax.random.normal(ks[7], (sent_out, num_classes), jnp.float32),
                jnp.zeros((1, num_classes), jnp.float32)),
    }


def han_forward(params, sents):
    # sents: (n_doc, n_sents, sen_len) int32 token ids
    n_doc, n_sents, sen_len = sents.shape
    tokens = sents.reshape(-1, sen_len)                                    # (B_w, L)

    # --- word level ---
    # TODO(synk): data-dependent embedding gather is left to XLA (no clean
    # BlockSpec equivalent at this scale).
    emb = jnp.take(params["embedding"], tokens, axis=0)                    # (B_w, L, E)
    sen_enc, word_attn = word_encode(emb, params["word_gru_f"],
                                     params["word_gru_b"], params["word_attn"])

    # stack_and_pad_tensors: all docs have n_sents sentences -> pure reshape
    sen_enc = sen_enc.reshape(n_doc, n_sents, -1)                          # (n_doc, n_sents, 2Hw)

    # --- sentence level + head (BN eval + Dropout eval + Linear) fused ---
    # TODO(synk): BatchNorm1d uses eval-mode running stats; training-mode batch
    # statistics and stochastic Dropout are not replicated.
    y_pred, sent_attn = sent_encode_head(sen_enc, params["sent_gru_f"],
                                         params["sent_gru_b"], params["sent_attn"],
                                         params["bn"], params["out"])
    return y_pred, word_attn, sent_attn, 0


if __name__ == "__main__":
    # small shapes consistent with the module's forward
    num_tokens, embed_size = 50, 32
    word_hidden, sent_hidden, num_classes = 16, 16, 5
    n_doc, n_sents, sen_len = 2, 4, 8

    key = jax.random.PRNGKey(0)
    k_params, k_data = jax.random.split(key)
    params = init_han_params(k_params, num_tokens, embed_size,
                             word_hidden, sent_hidden, num_classes)
    sents = jax.random.randint(k_data, (n_doc, n_sents, sen_len), 0, num_tokens,
                               dtype=jnp.int32)

    han = jax.jit(han_forward)
    y_pred, word_attn, sent_attn, _zero = han(params, sents)
    jax.block_until_ready((y_pred, word_attn, sent_attn))

    assert y_pred.shape == (n_doc, num_classes)
    assert word_attn.shape == (n_doc * n_sents, sen_len)
    assert sent_attn.shape == (n_doc, n_sents)
    print("KERNEL_OK")
</pallas_src>

<mosaic_0001>
module attributes {stable_mosaic.version = 11 : i64} {
  func.func @_sent_encoder_head_kernel(%arg0: i32, %arg1: memref<2x4x32xf32, #tpu.memory_space<vmem>>, %arg2: memref<32x48xf32, #tpu.memory_space<vmem>>, %arg3: memref<16x48xf32, #tpu.memory_space<vmem>>, %arg4: memref<1x48xf32, #tpu.memory_space<vmem>>, %arg5: memref<1x48xf32, #tpu.memory_space<vmem>>, %arg6: memref<32x48xf32, #tpu.memory_space<vmem>>, %arg7: memref<16x48xf32, #tpu.memory_space<vmem>>, %arg8: memref<1x48xf32, #tpu.memory_space<vmem>>, %arg9: memref<1x48xf32, #tpu.memory_space<vmem>>, %arg10: memref<32x32xf32, #tpu.memory_space<vmem>>, %arg11: memref<1x32xf32, #tpu.memory_space<vmem>>, %arg12: memref<1x32xf32, #tpu.memory_space<vmem>>, %arg13: memref<1x32xf32, #tpu.memory_space<vmem>>, %arg14: memref<1x32xf32, #tpu.memory_space<vmem>>, %arg15: memref<1x32xf32, #tpu.memory_space<vmem>>, %arg16: memref<1x32xf32, #tpu.memory_space<vmem>>, %arg17: memref<32x5xf32, #tpu.memory_space<vmem>>, %arg18: memref<1x5xf32, #tpu.memory_space<vmem>>, %arg19: memref<2x5xf32, #tpu.memory_space<vmem>>, %arg20: memref<2x4xf32, #tpu.memory_space<vmem>>) attributes {dimension_semantics = [#tpu.dimension_semantics<arbitrary>], iteration_bounds = array<i64: 1>, scalar_prefetch = 0 : i64, scratch_operands = 0 : i64, tpu.core_type = #tpu.core_type<tc>, window_params = [{pipeline_mode = #tpu.pipeline_mode<synchronous>, transform_indices = @transform_0, window_bounds = array<i64: 2, 4, 32>}, {pipeline_mode = #tpu.pipeline_mode<synchronous>, transform_indices = @transform_1, window_bounds = array<i64: 32, 48>}, {pipeline_mode = #tpu.pipeline_mode<synchronous>, transform_indices = @transform_2, window_bounds = array<i64: 16, 48>}, {pipeline_mode = #tpu.pipeline_mode<synchronous>, transform_indices = @transform_3, window_bounds = array<i64: 1, 48>}, {pipeline_mode = #tpu.pipeline_mode<synchronous>, transform_indices = @transform_4, window_bounds = array<i64: 1, 48>}, {pipeline_mode = #tpu.pipeline_mode<synchronous>, transform_indices = @transform_5, window_bounds = array<i64: 32, 48>}, {pipeline_mode = #tpu.pipeline_mode<synchronous>, transform_indices = @transform_6, window_bounds = array<i64: 16, 48>}, {pipeline_mode = #tpu.pipeline_mode<synchronous>, transform_indices = @transform_7, window_bounds = array<i64: 1, 48>}, {pipeline_mode = #tpu.pipeline_mode<synchronous>, transform_indices = @transform_8, window_bounds = array<i64: 1, 48>}, {pipeline_mode = #tpu.pipeline_mode<synchronous>, transform_indices = @transform_9, window_bounds = array<i64: 32, 32>}, {pipeline_mode = #tpu.pipeline_mode<synchronous>, transform_indices = @transform_10, window_bounds = array<i64: 1, 32>}, {pipeline_mode = #tpu.pipeline_mode<synchronous>, transform_indices = @transform_11, window_bounds = array<i64: 1, 32>}, {pipeline_mode = #tpu.pipeline_mode<synchronous>, transform_indices = @transform_12, window_bounds = array<i64: 1, 32>}, {pipeline_mode = #tpu.pipeline_mode<synchronous>, transform_indices = @transform_13, window_bounds = array<i64: 1, 32>}, {pipeline_mode = #tpu.pipeline_mode<synchronous>, transform_indices = @transform_14, window_bounds = array<i64: 1, 32>}, {pipeline_mode = #tpu.pipeline_mode<synchronous>, transform_indices = @transform_15, window_bounds = array<i64: 1, 32>}, {pipeline_mode = #tpu.pipeline_mode<synchronous>, transform_indices = @transform_16, window_bounds = array<i64: 32, 5>}, {pipeline_mode = #tpu.pipeline_mode<synchronous>, transform_indices = @transform_17, window_bounds = array<i64: 1, 5>}, {pipeline_mode = #tpu.pipeline_mode<synchronous>, transform_indices = @transform_18, window_bounds = array<i64: 2, 5>}, {pipeline_mode = #tpu.pipeline_mode<synchronous>, transform_indices = @transform_19, window_bounds = array<i64: 2, 4>}]} {
    %c0 = arith.constant 0 : index
    %c0_0 = arith.constant 0 : index
    %0 = vector.load %arg2[%c0, %c0_0] : memref<32x48xf32, #tpu.memory_space<vmem>>, vector<32x48xf32>
    %c0_1 = arith.constant 0 : index
    %c0_2 = arith.constant 0 : index
    %1 = vector.load %arg3[%c0_1, %c0_2] : memref<16x48xf32, #tpu.memory_space<vmem>>, vector<16x48xf32>
    %c0_3 = arith.constant 0 : index
    %c0_4 = arith.constant 0 : index
    %2 = vector.load %arg4[%c0_3, %c0_4] : memref<1x48xf32, #tpu.memory_space<vmem>>, vector<1x48xf32>
    %c0_5 = arith.constant 0 : index
    %c0_6 = arith.constant 0 : index
    %3 = vector.load %arg5[%c0_5, %c0_6] : memref<1x48xf32, #tpu.memory_space<vmem>>, vector<1x48xf32>
    %c0_7 = arith.constant 0 : index
    %c0_8 = arith.constant 0 : index
    %4 = vector.load %arg6[%c0_7, %c0_8] : memref<32x48xf32, #tpu.memory_space<vmem>>, vector<32x48xf32>
    %c0_9 = arith.constant 0 : index
    %c0_10 = arith.constant 0 : index
    %5 = vector.load %arg7[%c0_9, %c0_10] : memref<16x48xf32, #tpu.memory_space<vmem>>, vector<16x48xf32>
    %c0_11 = arith.constant 0 : index
    %c0_12 = arith.constant 0 : index
    %6 = vector.load %arg8[%c0_11, %c0_12] : memref<1x48xf32, #tpu.memory_space<vmem>>, vector<1x48xf32>
    %c0_13 = arith.constant 0 : index
    %c0_14 = arith.constant 0 : index
    %7 = vector.load %arg9[%c0_13, %c0_14] : memref<1x48xf32, #tpu.memory_space<vmem>>, vector<1x48xf32>
    %cst = arith.constant 0.000000e+00 : f32
    %8 = vector.broadcast %cst : f32 to vector<2x16xf32>
    %cst_15 = arith.constant 0.000000e+00 : f32
    %9 = vector.broadcast %cst_15 : f32 to vector<2x16xf32>
    %c0_16 = arith.constant 0 : index
    %c0_17 = arith.constant 0 : index
    %c0_18 = arith.constant 0 : index
    %10 = vector.load %arg1[%c0_16, %c0_17, %c0_18] : memref<2x4x32xf32, #tpu.memory_space<vmem>>, vector<2x1x32xf32>
    %11 = vector.shape_cast %10 : vector<2x1x32xf32> to vector<2x32xf32>
    %cst_19 = arith.constant dense<0.000000e+00> : vector<2x48xf32>
    %12 = tpu.matmul %11, %0, %cst_19 {dimension_numbers = #tpu.dot_dimension_numbers<[1], [0], [0], [1], [0, 0, 1, 1], [], []>} : vector<2x32xf32>, vector<32x48xf32>, vector<2x48xf32> -> vector<2x48xf32>
    %13 = vector.broadcast %2 : vector<1x48xf32> to vector<2x48xf32>
    %14 = arith.addf %12, %13 : vector<2x48xf32>
    %cst_20 = arith.constant dense<0.000000e+00> : vector<2x48xf32>
    %15 = tpu.matmul %8, %1, %cst_20 {dimension_numbers = #tpu.dot_dimension_numbers<[1], [0], [0], [1], [0, 0, 1, 1], [], []>} : vector<2x16xf32>, vector<16x48xf32>, vector<2x48xf32> -> vector<2x48xf32>
    %16 = vector.broadcast %3 : vector<1x48xf32> to vector<2x48xf32>
    %17 = arith.addf %15, %16 : vector<2x48xf32>
    %18 = vector.extract_strided_slice %14 {offsets = [0, 0], sizes = [2, 16], strides = [1, 1]} : vector<2x48xf32> to vector<2x16xf32>
    %19 = vector.extract_strided_slice %17 {offsets = [0, 0], sizes = [2, 16], strides = [1, 1]} : vector<2x48xf32> to vector<2x16xf32>
    %20 = arith.addf %18, %19 : vector<2x16xf32>
    %21 = arith.negf %20 : vector<2x16xf32>
    %22 = math.exp %21 : vector<2x16xf32>
    %cst_21 = arith.constant 1.000000e+00 : f32
    %23 = vector.broadcast %cst_21 : f32 to vector<2x16xf32>
    %24 = arith.addf %23, %22 : vector<2x16xf32>
    %25 = arith.divf %23, %24 : vector<2x16xf32>
    %26 = vector.extract_strided_slice %14 {offsets = [0, 16], sizes = [2, 16], strides = [1, 1]} : vector<2x48xf32> to vector<2x16xf32>
    %27 = vector.extract_strided_slice %17 {offsets = [0, 16], sizes = [2, 16], strides = [1, 1]} : vector<2x48xf32> to vector<2x16xf32>
    %28 = arith.addf %26, %27 : vector<2x16xf32>
    %29 = arith.negf %28 : vector<2x16xf32>
    %30 = math.exp %29 : vector<2x16xf32>
    %cst_22 = arith.constant 1.000000e+00 : f32
    %31 = vector.broadcast %cst_22 : f32 to vector<2x16xf32>
    %32 = arith.addf %31, %30 : vector<2x16xf32>
    %33 = arith.divf %31, %32 : vector<2x16xf32>
    %34 = vector.extract_strided_slice %14 {offsets = [0, 32], sizes = [2, 16], strides = [1, 1]} : vector<2x48xf32> to vector<2x16xf32>
    %35 = vector.extract_strided_slice %17 {offsets = [0, 32], sizes = [2, 16], strides = [1, 1]} : vector<2x48xf32> to vector<2x16xf32>
    %36 = arith.mulf %25, %35 : vector<2x16xf32>
    %37 = arith.addf %34, %36 : vector<2x16xf32>
    %38 = math.tanh %37 : vector<2x16xf32>
    %cst_23 = arith.constant 1.000000e+00 : f32
    %39 = vector.broadcast %cst_23 : f32 to vector<2x16xf32>
    %40 = arith.subf %39, %33 : vector<2x16xf32>
    %41 = arith.mulf %40, %38 : vector<2x16xf32>
    %42 = arith.mulf %33, %8 : vector<2x16xf32>
    %43 = arith.addf %41, %42 : vector<2x16xf32>
    %c0_24 = arith.constant 0 : index
    %c3 = arith.constant 3 : index
    %c0_25 = arith.constant 0 : index
    %44 = vector.load %arg1[%c0_24, %c3, %c0_25] : memref<2x4x32xf32, #tpu.memory_space<vmem>>, vector<2x1x32xf32>
    %45 = vector.shape_cast %44 : vector<2x1x32xf32> to vector<2x32xf32>
    %cst_26 = arith.constant dense<0.000000e+00> : vector<2x48xf32>
    %46 = tpu.matmul %45, %4, %cst_26 {dimension_numbers = #tpu.dot_dimension_numbers<[1], [0], [0], [1], [0, 0, 1, 1], [], []>} : vector<2x32xf32>, vector<32x48xf32>, vector<2x48xf32> -> vector<2x48xf32>
    %47 = vector.broadcast %6 : vector<1x48xf32> to vector<2x48xf32>
    %48 = arith.addf %46, %47 : vector<2x48xf32>
    %cst_27 = arith.constant dense<0.000000e+00> : vector<2x48xf32>
    %49 = tpu.matmul %9, %5, %cst_27 {dimension_numbers = #tpu.dot_dimension_numbers<[1], [0], [0], [1], [0, 0, 1, 1], [], []>} : vector<2x16xf32>, vector<16x48xf32>, vector<2x48xf32> -> vector<2x48xf32>
    %50 = vector.broadcast %7 : vector<1x48xf32> to vector<2x48xf32>
    %51 = arith.addf %49, %50 : vector<2x48xf32>
    %52 = vector.extract_strided_slice %48 {offsets = [0, 0], sizes = [2, 16], strides = [1, 1]} : vector<2x48xf32> to vector<2x16xf32>
    %53 = vector.extract_strided_slice %51 {offsets = [0, 0], sizes = [2, 16], strides = [1, 1]} : vector<2x48xf32> to vector<2x16xf32>
    %54 = arith.addf %52, %53 : vector<2x16xf32>
    %55 = arith.negf %54 : vector<2x16xf32>
    %56 = math.exp %55 : vector<2x16xf32>
    %cst_28 = arith.constant 1.000000e+00 : f32
    %57 = vector.broadcast %cst_28 : f32 to vector<2x16xf32>
    %58 = arith.addf %57, %56 : vector<2x16xf32>
    %59 = arith.divf %57, %58 : vector<2x16xf32>
    %60 = vector.extract_strided_slice %48 {offsets = [0, 16], sizes = [2, 16], strides = [1, 1]} : vector<2x48xf32> to vector<2x16xf32>
    %61 = vector.extract_strided_slice %51 {offsets = [0, 16], sizes = [2, 16], strides = [1, 1]} : vector<2x48xf32> to vector<2x16xf32>
    %62 = arith.addf %60, %61 : vector<2x16xf32>
    %63 = arith.negf %62 : vector<2x16xf32>
    %64 = math.exp %63 : vector<2x16xf32>
    %cst_29 = arith.constant 1.000000e+00 : f32
    %65 = vector.broadcast %cst_29 : f32 to vector<2x16xf32>
    %66 = arith.addf %65, %64 : vector<2x16xf32>
    %67 = arith.divf %65, %66 : vector<2x16xf32>
    %68 = vector.extract_strided_slice %48 {offsets = [0, 32], sizes = [2, 16], strides = [1, 1]} : vector<2x48xf32> to vector<2x16xf32>
    %69 = vector.extract_strided_slice %51 {offsets = [0, 32], sizes = [2, 16], strides = [1, 1]} : vector<2x48xf32> to vector<2x16xf32>
    %70 = arith.mulf %59, %69 : vector<2x16xf32>
    %71 = arith.addf %68, %70 : vector<2x16xf32>
    %72 = math.tanh %71 : vector<2x16xf32>
    %cst_30 = arith.constant 1.000000e+00 : f32
    %73 = vector.broadcast %cst_30 : f32 to vector<2x16xf32>
    %74 = arith.subf %73, %67 : vector<2x16xf32>
    %75 = arith.mulf %74, %72 : vector<2x16xf32>
    %76 = arith.mulf %67, %9 : vector<2x16xf32>
    %77 = arith.addf %75, %76 : vector<2x16xf32>
    %c0_31 = arith.constant 0 : index
    %c1 = arith.constant 1 : index
    %c0_32 = arith.constant 0 : index
    %78 = vector.load %arg1[%c0_31, %c1, %c0_32] : memref<2x4x32xf32, #tpu.memory_space<vmem>>, vector<2x1x32xf32>
    %79 = vector.shape_cast %78 : vector<2x1x32xf32> to vector<2x32xf32>
    %cst_33 = arith.constant dense<0.000000e+00> : vector<2x48xf32>
    %80 = tpu.matmul %79, %0, %cst_33 {dimension_numbers = #tpu.dot_dimension_numbers<[1], [0], [0], [1], [0, 0, 1, 1], [], []>} : vector<2x32xf32>, vector<32x48xf32>, vector<2x48xf32> -> vector<2x48xf32>
    %81 = vector.broadcast %2 : vector<1x48xf32> to vector<2x48xf32>
    %82 = arith.addf %80, %81 : vector<2x48xf32>
    %cst_34 = arith.constant dense<0.000000e+00> : vector<2x48xf32>
    %83 = tpu.matmul %43, %1, %cst_34 {dimension_numbers = #tpu.dot_dimension_numbers<[1], [0], [0], [1], [0, 0, 1, 1], [], []>} : vector<2x16xf32>, vector<16x48xf32>, vector<2x48xf32> -> vector<2x48xf32>
    %84 = vector.broadcast %3 : vector<1x48xf32> to vector<2x48xf32>
    %85 = arith.addf %83, %84 : vector<2x48xf32>
    %86 = vector.extract_strided_slice %82 {offsets = [0, 0], sizes = [2, 16], strides = [1, 1]} : vector<2x48xf32> to vector<2x16xf32>
    %87 = vector.extract_strided_slice %85 {offsets = [0, 0], sizes = [2, 16], strides = [1, 1]} : vector<2x48xf32> to vector<2x16xf32>
    %88 = arith.addf %86, %87 : vector<2x16xf32>
    %89 = arith.negf %88 : vector<2x16xf32>
    %90 = math.exp %89 : vector<2x16xf32>
    %cst_35 = arith.constant 1.000000e+00 : f32
    %91 = vector.broadcast %cst_35 : f32 to vector<2x16xf32>
    %92 = arith.addf %91, %90 : vector<2x16xf32>
    %93 = arith.divf %91, %92 : vector<2x16xf32>
    %94 = vector.extract_strided_slice %82 {offsets = [0, 16], sizes = [2, 16], strides = [1, 1]} : vector<2x48xf32> to vector<2x16xf32>
    %95 = vector.extract_strided_slice %85 {offsets = [0, 16], sizes = [2, 16], strides = [1, 1]} : vector<2x48xf32> to vector<2x16xf32>
    %96 = arith.addf %94, %95 : vector<2x16xf32>
    %97 = arith.negf %96 : vector<2x16xf32>
    %98 = math.exp %97 : vector<2x16xf32>
    %cst_36 = arith.constant 1.000000e+00 : f32
    %99 = vector.broadcast %cst_36 : f32 to vector<2x16xf32>
    %100 = arith.addf %99, %98 : vector<2x16xf32>
    %101 = arith.divf %99, %100 : vector<2x16xf32>
    %102 = vector.extract_strided_slice %82 {offsets = [0, 32], sizes = [2, 16], strides = [1, 1]} : vector<2x48xf32> to vector<2x16xf32>
    %103 = vector.extract_strided_slice %85 {offsets = [0, 32], sizes = [2, 16], strides = [1, 1]} : vector<2x48xf32> to vector<2x16xf32>
    %104 = arith.mulf %93, %103 : vector<2x16xf32>
    %105 = arith.addf %102, %104 : vector<2x16xf32>
    %106 = math.tanh %105 : vector<2x16xf32>
    %cst_37 = arith.constant 1.000000e+00 : f32
    %107 = vector.broadcast %cst_37 : f32 to vector<2x16xf32>
    %108 = arith.subf %107, %101 : vector<2x16xf32>
    %109 = arith.mulf %108, %106 : vector<2x16xf32>
    %110 = arith.mulf %101, %43 : vector<2x16xf32>
    %111 = arith.addf %109, %110 : vector<2x16xf32>
    %c0_38 = arith.constant 0 : index
    %c2 = arith.constant 2 : index
    %c0_39 = arith.constant 0 : index
    %112 = vector.load %arg1[%c0_38, %c2, %c0_39] : memref<2x4x32xf32, #tpu.memory_space<vmem>>, vector<2x1x32xf32>
    %113 = vector.shape_cast %112 : vector<2x1x32xf32> to vector<2x32xf32>
    %cst_40 = arith.constant dense<0.000000e+00> : vector<2x48xf32>
    %114 = tpu.matmul %113, %4, %cst_40 {dimension_numbers = #tpu.dot_dimension_numbers<[1], [0], [0], [1], [0, 0, 1, 1], [], []>} : vector<2x32xf32>, vector<32x48xf32>, vector<2x48xf32> -> vector<2x48xf32>
    %115 = vector.broadcast %6 : vector<1x48xf32> to vector<2x48xf32>
    %116 = arith.addf %114, %115 : vector<2x48xf32>
    %cst_41 = arith.constant dense<0.000000e+00> : vector<2x48xf32>
    %117 = tpu.matmul %77, %5, %cst_41 {dimension_numbers = #tpu.dot_dimension_numbers<[1], [0], [0], [1], [0, 0, 1, 1], [], []>} : vector<2x16xf32>, vector<16x48xf32>, vector<2x48xf32> -> vector<2x48xf32>
    %118 = vector.broadcast %7 : vector<1x48xf32> to vector<2x48xf32>
    %119 = arith.addf %117, %118 : vector<2x48xf32>
    %120 = vector.extract_strided_slice %116 {offsets = [0, 0], sizes = [2, 16], strides = [1, 1]} : vector<2x48xf32> to vector<2x16xf32>
    %121 = vector.extract_strided_slice %119 {offsets = [0, 0], sizes = [2, 16], strides = [1, 1]} : vector<2x48xf32> to vector<2x16xf32>
    %122 = arith.addf %120, %121 : vector<2x16xf32>
    %123 = arith.negf %122 : vector<2x16xf32>
    %124 = math.exp %123 : vector<2x16xf32>
    %cst_42 = arith.constant 1.000000e+00 : f32
    %125 = vector.broadcast %cst_42 : f32 to vector<2x16xf32>
    %126 = arith.addf %125, %124 : vector<2x16xf32>
    %127 = arith.divf %125, %126 : vector<2x16xf32>
    %128 = vector.extract_strided_slice %116 {offsets = [0, 16], sizes = [2, 16], strides = [1, 1]} : vector<2x48xf32> to vector<2x16xf32>
    %129 = vector.extract_strided_slice %119 {offsets = [0, 16], sizes = [2, 16], strides = [1, 1]} : vector<2x48xf32> to vector<2x16xf32>
    %130 = arith.addf %128, %129 : vector<2x16xf32>
    %131 = arith.negf %130 : vector<2x16xf32>
    %132 = math.exp %131 : vector<2x16xf32>
    %cst_43 = arith.constant 1.000000e+00 : f32
    %133 = vector.broadcast %cst_43 : f32 to vector<2x16xf32>
    %134 = arith.addf %133, %132 : vector<2x16xf32>
    %135 = arith.divf %133, %134 : vector<2x16xf32>
    %136 = vector.extract_strided_slice %116 {offsets = [0, 32], sizes = [2, 16], strides = [1, 1]} : vector<2x48xf32> to vector<2x16xf32>
    %137 = vector.extract_strided_slice %119 {offsets = [0, 32], sizes = [2, 16], strides = [1, 1]} : vector<2x48xf32> to vector<2x16xf32>
    %138 = arith.mulf %127, %137 : vector<2x16xf32>
    %139 = arith.addf %136, %138 : vector<2x16xf32>
    %140 = math.tanh %139 : vector<2x16xf32>
    %cst_44 = arith.constant 1.000000e+00 : f32
    %141 = vector.broadcast %cst_44 : f32 to vector<2x16xf32>
    %142 = arith.subf %141, %135 : vector<2x16xf32>
    %143 = arith.mulf %142, %140 : vector<2x16xf32>
    %144 = arith.mulf %135, %77 : vector<2x16xf32>
    %145 = arith.addf %143, %144 : vector<2x16xf32>
    %c0_45 = arith.constant 0 : index
    %c2_46 = arith.constant 2 : index
    %c0_47 = arith.constant 0 : index
    %146 = vector.load %arg1[%c0_45, %c2_46, %c0_47] : memref<2x4x32xf32, #tpu.memory_space<vmem>>, vector<2x1x32xf32>
    %147 = vector.shape_cast %146 : vector<2x1x32xf32> to vector<2x32xf32>
    %cst_48 = arith.constant dense<0.000000e+00> : vector<2x48xf32>
    %148 = tpu.matmul %147, %0, %cst_48 {dimension_numbers = #tpu.dot_dimension_numbers<[1], [0], [0], [1], [0, 0, 1, 1], [], []>} : vector<2x32xf32>, vector<32x48xf32>, vector<2x48xf32> -> vector<2x48xf32>
    %149 = vector.broadcast %2 : vector<1x48xf32> to vector<2x48xf32>
    %150 = arith.addf %148, %149 : vector<2x48xf32>
    %cst_49 = arith.constant dense<0.000000e+00> : vector<2x48xf32>
    %151 = tpu.matmul %111, %1, %cst_49 {dimension_numbers = #tpu.dot_dimension_numbers<[1], [0], [0], [1], [0, 0, 1, 1], [], []>} : vector<2x16xf32>, vector<16x48xf32>, vector<2x48xf32> -> vector<2x48xf32>
    %152 = vector.broadcast %3 : vector<1x48xf32> to vector<2x48xf32>
    %153 = arith.addf %151, %152 : vector<2x48xf32>
    %154 = vector.extract_strided_slice %150 {offsets = [0, 0], sizes = [2, 16], strides = [1, 1]} : vector<2x48xf32> to vector<2x16xf32>
    %155 = vector.extract_strided_slice %153 {offsets = [0, 0], sizes = [2, 16], strides = [1, 1]} : vector<2x48xf32> to vector<2x16xf32>
    %156 = arith.addf %154, %155 : vector<2x16xf32>
    %157 = arith.negf %156 : vector<2x16xf32>
    %158 = math.exp %157 : vector<2x16xf32>
    %cst_50 = arith.constant 1.000000e+00 : f32
    %159 = vector.broadcast %cst_50 : f32 to vector<2x16xf32>
    %160 = arith.addf %159, %158 : vector<2x16xf32>
    %161 = arith.divf %159, %160 : vector<2x16xf32>
    %162 = vector.extract_strided_slice %150 {offsets = [0, 16], sizes = [2, 16], strides = [1, 1]} : vector<2x48xf32> to vector<2x16xf32>
    %163 = vector.extract_strided_slice %153 {offsets = [0, 16], sizes = [2, 16], strides = [1, 1]} : vector<2x48xf32> to vector<2x16xf32>
    %164 = arith.addf %162, %163 : vector<2x16xf32>
    %165 = arith.negf %164 : vector<2x16xf32>
    %166 = math.exp %165 : vector<2x16xf32>
    %cst_51 = arith.constant 1.000000e+00 : f32
    %167 = vector.broadcast %cst_51 : f32 to vector<2x16xf32>
    %168 = arith.addf %167, %166 : vector<2x16xf32>
    %169 = arith.divf %167, %168 : vector<2x16xf32>
    %170 = vector.extract_strided_slice %150 {offsets = [0, 32], sizes = [2, 16], strides = [1, 1]} : vector<2x48xf32> to vector<2x16xf32>
    %171 = vector.extract_strided_slice %153 {offsets = [0, 32], sizes = [2, 16], strides = [1, 1]} : vector<2x48xf32> to vector<2x16xf32>
    %172 = arith.mulf %161, %171 : vector<2x16xf32>
    %173 = arith.addf %170, %172 : vector<2x16xf32>
    %174 = math.tanh %173 : vector<2x16xf32>
    %cst_52 = arith.constant 1.000000e+00 : f32
    %175 = vector.broadcast %cst_52 : f32 to vector<2x16xf32>
    %176 = arith.subf %175, %169 : vector<2x16xf32>
    %177 = arith.mulf %176, %174 : vector<2x16xf32>
    %178 = arith.mulf %169, %111 : vector<2x16xf32>
    %179 = arith.addf %177, %178 : vector<2x16xf32>
    %c0_53 = arith.constant 0 : index
    %c1_54 = arith.constant 1 : index
    %c0_55 = arith.constant 0 : index
    %180 = vector.load %arg1[%c0_53, %c1_54, %c0_55] : memref<2x4x32xf32, #tpu.memory_space<vmem>>, vector<2x1x32xf32>
    %181 = vector.shape_cast %180 : vector<2x1x32xf32> to vector<2x32xf32>
    %cst_56 = arith.constant dense<0.000000e+00> : vector<2x48xf32>
    %182 = tpu.matmul %181, %4, %cst_56 {dimension_numbers = #tpu.dot_dimension_numbers<[1], [0], [0], [1], [0, 0, 1, 1], [], []>} : vector<2x32xf32>, vector<32x48xf32>, vector<2x48xf32> -> vector<2x48xf32>
    %183 = vector.broadcast %6 : vector<1x48xf32> to vector<2x48xf32>
    %184 = arith.addf %182, %183 : vector<2x48xf32>
    %cst_57 = arith.constant dense<0.000000e+00> : vector<2x48xf32>
    %185 = tpu.matmul %145, %5, %cst_57 {dimension_numbers = #tpu.dot_dimension_numbers<[1], [0], [0], [1], [0, 0, 1, 1], [], []>} : vector<2x16xf32>, vector<16x48xf32>, vector<2x48xf32> -> vector<2x48xf32>
    %186 = vector.broadcast %7 : vector<1x48xf32> to vector<2x48xf32>
    %187 = arith.addf %185, %186 : vector<2x48xf32>
    %188 = vector.extract_strided_slice %184 {offsets = [0, 0], sizes = [2, 16], strides = [1, 1]} : vector<2x48xf32> to vector<2x16xf32>
    %189 = vector.extract_strided_slice %187 {offsets = [0, 0], sizes = [2, 16], strides = [1, 1]} : vector<2x48xf32> to vector<2x16xf32>
    %190 = arith.addf %188, %189 : vector<2x16xf32>
    %191 = arith.negf %190 : vector<2x16xf32>
    %192 = math.exp %191 : vector<2x16xf32>
    %cst_58 = arith.constant 1.000000e+00 : f32
    %193 = vector.broadcast %cst_58 : f32 to vector<2x16xf32>
    %194 = arith.addf %193, %192 : vector<2x16xf32>
    %195 = arith.divf %193, %194 : vector<2x16xf32>
    %196 = vector.extract_strided_slice %184 {offsets = [0, 16], sizes = [2, 16], strides = [1, 1]} : vector<2x48xf32> to vector<2x16xf32>
    %197 = vector.extract_strided_slice %187 {offsets = [0, 16], sizes = [2, 16], strides = [1, 1]} : vector<2x48xf32> to vector<2x16xf32>
    %198 = arith.addf %196, %197 : vector<2x16xf32>
    %199 = arith.negf %198 : vector<2x16xf32>
    %200 = math.exp %199 : vector<2x16xf32>
    %cst_59 = arith.constant 1.000000e+00 : f32
    %201 = vector.broadcast %cst_59 : f32 to vector<2x16xf32>
    %202 = arith.addf %201, %200 : vector<2x16xf32>
    %203 = arith.divf %201, %202 : vector<2x16xf32>
    %204 = vector.extract_strided_slice %184 {offsets = [0, 32], sizes = [2, 16], strides = [1, 1]} : vector<2x48xf32> to vector<2x16xf32>
    %205 = vector.extract_strided_slice %187 {offsets = [0, 32], sizes = [2, 16], strides = [1, 1]} : vector<2x48xf32> to vector<2x16xf32>
    %206 = arith.mulf %195, %205 : vector<2x16xf32>
    %207 = arith.addf %204, %206 : vector<2x16xf32>
    %208 = math.tanh %207 : vector<2x16xf32>
    %cst_60 = arith.constant 1.000000e+00 : f32
    %209 = vector.broadcast %cst_60 : f32 to vector<2x16xf32>
    %210 = arith.subf %209, %203 : vector<2x16xf32>
    %211 = arith.mulf %210, %208 : vector<2x16xf32>
    %212 = arith.mulf %203, %145 : vector<2x16xf32>
    %213 = arith.addf %211, %212 : vector<2x16xf32>
    %c0_61 = arith.constant 0 : index
    %c3_62 = arith.constant 3 : index
    %c0_63 = arith.constant 0 : index
    %214 = vector.load %arg1[%c0_61, %c3_62, %c0_63] : memref<2x4x32xf32, #tpu.memory_space<vmem>>, vector<2x1x32xf32>
    %215 = vector.shape_cast %214 : vector<2x1x32xf32> to vector<2x32xf32>
    %cst_64 = arith.constant dense<0.000000e+00> : vector<2x48xf32>
    %216 = tpu.matmul %215, %0, %cst_64 {dimension_numbers = #tpu.dot_dimension_numbers<[1], [0], [0], [1], [0, 0, 1, 1], [], []>} : vector<2x32xf32>, vector<32x48xf32>, vector<2x48xf32> -> vector<2x48xf32>
    %217 = vector.broadcast %2 : vector<1x48xf32> to vector<2x48xf32>
    %218 = arith.addf %216, %217 : vector<2x48xf32>
    %cst_65 = arith.constant dense<0.000000e+00> : vector<2x48xf32>
    %219 = tpu.matmul %179, %1, %cst_65 {dimension_numbers = #tpu.dot_dimension_numbers<[1], [0], [0], [1], [0, 0, 1, 1], [], []>} : vector<2x16xf32>, vector<16x48xf32>, vector<2x48xf32> -> vector<2x48xf32>
    %220 = vector.broadcast %3 : vector<1x48xf32> to vector<2x48xf32>
    %221 = arith.addf %219, %220 : vector<2x48xf32>
    %222 = vector.extract_strided_slice %218 {offsets = [0, 0], sizes = [2, 16], strides = [1, 1]} : vector<2x48xf32> to vector<2x16xf32>
    %223 = vector.extract_strided_slice %221 {offsets = [0, 0], sizes = [2, 16], strides = [1, 1]} : vector<2x48xf32> to vector<2x16xf32>
    %224 = arith.addf %222, %223 : vector<2x16xf32>
    %225 = arith.negf %224 : vector<2x16xf32>
    %226 = math.exp %225 : vector<2x16xf32>
    %cst_66 = arith.constant 1.000000e+00 : f32
    %227 = vector.broadcast %cst_66 : f32 to vector<2x16xf32>
    %228 = arith.addf %227, %226 : vector<2x16xf32>
    %229 = arith.divf %227, %228 : vector<2x16xf32>
    %230 = vector.extract_strided_slice %218 {offsets = [0, 16], sizes = [2, 16], strides = [1, 1]} : vector<2x48xf32> to vector<2x16xf32>
    %231 = vector.extract_strided_slice %221 {offsets = [0, 16], sizes = [2, 16], strides = [1, 1]} : vector<2x48xf32> to vector<2x16xf32>
    %232 = arith.addf %230, %231 : vector<2x16xf32>
    %233 = arith.negf %232 : vector<2x16xf32>
    %234 = math.exp %233 : vector<2x16xf32>
    %cst_67 = arith.constant 1.000000e+00 : f32
    %235 = vector.broadcast %cst_67 : f32 to vector<2x16xf32>
    %236 = arith.addf %235, %234 : vector<2x16xf32>
    %237 = arith.divf %235, %236 : vector<2x16xf32>
    %238 = vector.extract_strided_slice %218 {offsets = [0, 32], sizes = [2, 16], strides = [1, 1]} : vector<2x48xf32> to vector<2x16xf32>
    %239 = vector.extract_strided_slice %221 {offsets = [0, 32], sizes = [2, 16], strides = [1, 1]} : vector<2x48xf32> to vector<2x16xf32>
    %240 = arith.mulf %229, %239 : vector<2x16xf32>
    %241 = arith.addf %238, %240 : vector<2x16xf32>
    %242 = math.tanh %241 : vector<2x16xf32>
    %cst_68 = arith.constant 1.000000e+00 : f32
    %243 = vector.broadcast %cst_68 : f32 to vector<2x16xf32>
    %244 = arith.subf %243, %237 : vector<2x16xf32>
    %245 = arith.mulf %244, %242 : vector<2x16xf32>
    %246 = arith.mulf %237, %179 : vector<2x16xf32>
    %247 = arith.addf %245, %246 : vector<2x16xf32>
    %c0_69 = arith.constant 0 : index
    %c0_70 = arith.constant 0 : index
    %c0_71 = arith.constant 0 : index
    %248 = vector.load %arg1[%c0_69, %c0_70, %c0_71] : memref<2x4x32xf32, #tpu.memory_space<vmem>>, vector<2x1x32xf32>
    %249 = vector.shape_cast %248 : vector<2x1x32xf32> to vector<2x32xf32>
    %cst_72 = arith.constant dense<0.000000e+00> : vector<2x48xf32>
    %250 = tpu.matmul %249, %4, %cst_72 {dimension_numbers = #tpu.dot_dimension_numbers<[1], [0], [0], [1], [0, 0, 1, 1], [], []>} : vector<2x32xf32>, vector<32x48xf32>, vector<2x48xf32> -> vector<2x48xf32>
    %251 = vector.broadcast %6 : vector<1x48xf32> to vector<2x48xf32>
    %252 = arith.addf %250, %251 : vector<2x48xf32>
    %cst_73 = arith.constant dense<0.000000e+00> : vector<2x48xf32>
    %253 = tpu.matmul %213, %5, %cst_73 {dimension_numbers = #tpu.dot_dimension_numbers<[1], [0], [0], [1], [0, 0, 1, 1], [], []>} : vector<2x16xf32>, vector<16x48xf32>, vector<2x48xf32> -> vector<2x48xf32>
    %254 = vector.broadcast %7 : vector<1x48xf32> to vector<2x48xf32>
    %255 = arith.addf %253, %254 : vector<2x48xf32>
    %256 = vector.extract_strided_slice %252 {offsets = [0, 0], sizes = [2, 16], strides = [1, 1]} : vector<2x48xf32> to vector<2x16xf32>
    %257 = vector.extract_strided_slice %255 {offsets = [0, 0], sizes = [2, 16], strides = [1, 1]} : vector<2x48xf32> to vector<2x16xf32>
    %258 = arith.addf %256, %257 : vector<2x16xf32>
    %259 = arith.negf %258 : vector<2x16xf32>
    %260 = math.exp %259 : vector<2x16xf32>
    %cst_74 = arith.constant 1.000000e+00 : f32
    %261 = vector.broadcast %cst_74 : f32 to vector<2x16xf32>
    %262 = arith.addf %261, %260 : vector<2x16xf32>
    %263 = arith.divf %261, %262 : vector<2x16xf32>
    %264 = vector.extract_strided_slice %252 {offsets = [0, 16], sizes = [2, 16], strides = [1, 1]} : vector<2x48xf32> to vector<2x16xf32>
    %265 = vector.extract_strided_slice %255 {offsets = [0, 16], sizes = [2, 16], strides = [1, 1]} : vector<2x48xf32> to vector<2x16xf32>
    %266 = arith.addf %264, %265 : vector<2x16xf32>
    %267 = arith.negf %266 : vector<2x16xf32>
    %268 = math.exp %267 : vector<2x16xf32>
    %cst_75 = arith.constant 1.000000e+00 : f32
    %269 = vector.broadcast %cst_75 : f32 to vector<2x16xf32>
    %270 = arith.addf %269, %268 : vector<2x16xf32>
    %271 = arith.divf %269, %270 : vector<2x16xf32>
    %272 = vector.extract_strided_slice %252 {offsets = [0, 32], sizes = [2, 16], strides = [1, 1]} : vector<2x48xf32> to vector<2x16xf32>
    %273 = vector.extract_strided_slice %255 {offsets = [0, 32], sizes = [2, 16], strides = [1, 1]} : vector<2x48xf32> to vector<2x16xf32>
    %274 = arith.mulf %263, %273 : vector<2x16xf32>
    %275 = arith.addf %272, %274 : vector<2x16xf32>
    %276 = math.tanh %275 : vector<2x16xf32>
    %cst_76 = arith.constant 1.000000e+00 : f32
    %277 = vector.broadcast %cst_76 : f32 to vector<2x16xf32>
    %278 = arith.subf %277, %271 : vector<2x16xf32>
    %279 = arith.mulf %278, %276 : vector<2x16xf32>
    %280 = arith.mulf %271, %213 : vector<2x16xf32>
    %281 = arith.addf %279, %280 : vector<2x16xf32>
    %282 = tpu.concatenate %43, %281 in 1 : vector<2x16xf32>, vector<2x16xf32> -> vector<2x32xf32>
    %283 = tpu.concatenate %111, %213 in 1 : vector<2x16xf32>, vector<2x16xf32> -> vector<2x32xf32>
    %284 = tpu.concatenate %179, %145 in 1 : vector<2x16xf32>, vector<2x16xf32> -> vector<2x32xf32>
    %285 = tpu.concatenate %247, %77 in 1 : vector<2x16xf32>, vector<2x16xf32> -> vector<2x32xf32>
    %c0_77 = arith.constant 0 : index
    %c0_78 = arith.constant 0 : index
    %286 = vector.load %arg10[%c0_77, %c0_78] : memref<32x32xf32, #tpu.memory_space<vmem>>, vector<32x32xf32>
    %c0_79 = arith.constant 0 : index
    %c0_80 = arith.constant 0 : index
    %287 = vector.load %arg11[%c0_79, %c0_80] : memref<1x32xf32, #tpu.memory_space<vmem>>, vector<1x32xf32>
    %c0_81 = arith.constant 0 : index
    %c0_82 = arith.constant 0 : index
    %288 = vector.load %arg12[%c0_81, %c0_82] : memref<1x32xf32, #tpu.memory_space<vmem>>, vector<1x32xf32>
    %cst_83 = arith.constant dense<0.000000e+00> : vector<2x32xf32>
    %289 = tpu.matmul %282, %286, %cst_83 {dimension_numbers = #tpu.dot_dimension_numbers<[1], [0], [0], [1], [0, 0, 1, 1], [], []>} : vector<2x32xf32>, vector<32x32xf32>, vector<2x32xf32> -> vector<2x32xf32>
    %290 = vector.broadcast %287 : vector<1x32xf32> to vector<2x32xf32>
    %291 = arith.addf %289, %290 : vector<2x32xf32>
    %292 = math.tanh %291 : vector<2x32xf32>
    %293 = vector.broadcast %288 : vector<1x32xf32> to vector<2x32xf32>
    %294 = arith.mulf %292, %293 : vector<2x32xf32>
    %cst_84 = arith.constant dense<0.000000e+00> : vector<2xf32>
    %295 = vector.multi_reduction <add>, %294, %cst_84 [1] : vector<2x32xf32> to vector<2xf32>
    %296 = vector.shape_cast %295 : vector<2xf32> to vector<2x1xf32>
    %cst_85 = arith.constant dense<0.000000e+00> : vector<2x32xf32>
    %297 = tpu.matmul %283, %286, %cst_85 {dimension_numbers = #tpu.dot_dimension_numbers<[1], [0], [0], [1], [0, 0, 1, 1], [], []>} : vector<2x32xf32>, vector<32x32xf32>, vector<2x32xf32> -> vector<2x32xf32>
    %298 = vector.broadcast %287 : vector<1x32xf32> to vector<2x32xf32>
    %299 = arith.addf %297, %298 : vector<2x32xf32>
    %300 = math.tanh %299 : vector<2x32xf32>
    %301 = vector.broadcast %288 : vector<1x32xf32> to vector<2x32xf32>
    %302 = arith.mulf %300, %301 : vector<2x32xf32>
    %cst_86 = arith.constant dense<0.000000e+00> : vector<2xf32>
    %303 = vector.multi_reduction <add>, %302, %cst_86 [1] : vector<2x32xf32> to vector<2xf32>
    %304 = vector.shape_cast %303 : vector<2xf32> to vector<2x1xf32>
    %cst_87 = arith.constant dense<0.000000e+00> : vector<2x32xf32>
    %305 = tpu.matmul %284, %286, %cst_87 {dimension_numbers = #tpu.dot_dimension_numbers<[1], [0], [0], [1], [0, 0, 1, 1], [], []>} : vector<2x32xf32>, vector<32x32xf32>, vector<2x32xf32> -> vector<2x32xf32>
    %306 = vector.broadcast %287 : vector<1x32xf32> to vector<2x32xf32>
    %307 = arith.addf %305, %306 : vector<2x32xf32>
    %308 = math.tanh %307 : vector<2x32xf32>
    %309 = vector.broadcast %288 : vector<1x32xf32> to vector<2x32xf32>
    %310 = arith.mulf %308, %309 : vector<2x32xf32>
    %cst_88 = arith.constant dense<0.000000e+00> : vector<2xf32>
    %311 = vector.multi_reduction <add>, %310, %cst_88 [1] : vector<2x32xf32> to vector<2xf32>
    %312 = vector.shape_cast %311 : vector<2xf32> to vector<2x1xf32>
    %cst_89 = arith.constant dense<0.000000e+00> : vector<2x32xf32>
    %313 = tpu.matmul %285, %286, %cst_89 {dimension_numbers = #tpu.dot_dimension_numbers<[1], [0], [0], [1], [0, 0, 1, 1], [], []>} : vector<2x32xf32>, vector<32x32xf32>, vector<2x32xf32> -> vector<2x32xf32>
    %314 = vector.broadcast %287 : vector<1x32xf32> to vector<2x32xf32>
    %315 = arith.addf %313, %314 : vector<2x32xf32>
    %316 = math.tanh %315 : vector<2x32xf32>
    %317 = vector.broadcast %288 : vector<1x32xf32> to vector<2x32xf32>
    %318 = arith.mulf %316, %317 : vector<2x32xf32>
    %cst_90 = arith.constant dense<0.000000e+00> : vector<2xf32>
    %319 = vector.multi_reduction <add>, %318, %cst_90 [1] : vector<2x32xf32> to vector<2xf32>
    %320 = vector.shape_cast %319 : vector<2xf32> to vector<2x1xf32>
    %321 = tpu.concatenate %296, %304, %312, %320 in 1 : vector<2x1xf32>, vector<2x1xf32>, vector<2x1xf32>, vector<2x1xf32> -> vector<2x4xf32>
    %cst_91 = arith.constant dense<0xFF800000> : vector<2xf32>
    %322 = vector.multi_reduction <maximumf>, %321, %cst_91 [1] : vector<2x4xf32> to vector<2xf32>
    %323 = vector.shape_cast %322 : vector<2xf32> to vector<2x1xf32>
    %324 = vector.broadcast %323 : vector<2x1xf32> to vector<2x4xf32>
    %325 = arith.subf %321, %324 : vector<2x4xf32>
    %326 = math.exp %325 : vector<2x4xf32>
    %cst_92 = arith.constant dense<0.000000e+00> : vector<2xf32>
    %327 = vector.multi_reduction <add>, %326, %cst_92 [1] : vector<2x4xf32> to vector<2xf32>
    %328 = vector.shape_cast %327 : vector<2xf32> to vector<2x1xf32>
    %329 = vector.broadcast %328 : vector<2x1xf32> to vector<2x4xf32>
    %330 = arith.divf %326, %329 : vector<2x4xf32>
    %cst_93 = arith.constant 0.000000e+00 : f32
    %331 = vector.broadcast %cst_93 : f32 to vector<2x32xf32>
    %332 = vector.extract_strided_slice %330 {offsets = [0, 0], sizes = [2, 1], strides = [1, 1]} : vector<2x4xf32> to vector<2x1xf32>
    %333 = vector.broadcast %332 : vector<2x1xf32> to vector<2x32xf32>
    %334 = arith.mulf %333, %282 : vector<2x32xf32>
    %335 = arith.addf %331, %334 : vector<2x32xf32>
    %336 = vector.extract_strided_slice %330 {offsets = [0, 1], sizes = [2, 1], strides = [1, 1]} : vector<2x4xf32> to vector<2x1xf32>
    %337 = vector.broadcast %336 : vector<2x1xf32> to vector<2x32xf32>
    %338 = arith.mulf %337, %283 : vector<2x32xf32>
    %339 = arith.addf %335, %338 : vector<2x32xf32>
    %340 = vector.extract_strided_slice %330 {offsets = [0, 2], sizes = [2, 1], strides = [1, 1]} : vector<2x4xf32> to vector<2x1xf32>
    %341 = vector.broadcast %340 : vector<2x1xf32> to vector<2x32xf32>
    %342 = arith.mulf %341, %284 : vector<2x32xf32>
    %343 = arith.addf %339, %342 : vector<2x32xf32>
    %344 = vector.extract_strided_slice %330 {offsets = [0, 3], sizes = [2, 1], strides = [1, 1]} : vector<2x4xf32> to vector<2x1xf32>
    %345 = vector.broadcast %344 : vector<2x1xf32> to vector<2x32xf32>
    %346 = arith.mulf %345, %285 : vector<2x32xf32>
    %347 = arith.addf %343, %346 : vector<2x32xf32>
    %c0_94 = arith.constant 0 : index
    %c0_95 = arith.constant 0 : index
    %348 = vector.load %arg16[%c0_94, %c0_95] : memref<1x32xf32, #tpu.memory_space<vmem>>, vector<1x32xf32>
    %cst_96 = arith.constant 9.99999974E-6 : f32
    %349 = vector.broadcast %cst_96 : f32 to vector<1x32xf32>
    %350 = arith.addf %348, %349 : vector<1x32xf32>
    %351 = math.rsqrt %350 : vector<1x32xf32>
    %c0_97 = arith.constant 0 : index
    %c0_98 = arith.constant 0 : index
    %352 = vector.load %arg15[%c0_97, %c0_98] : memref<1x32xf32, #tpu.memory_space<vmem>>, vector<1x32xf32>
    %353 = vector.broadcast %352 : vector<1x32xf32> to vector<2x32xf32>
    %354 = arith.subf %347, %353 : vector<2x32xf32>
    %355 = vector.broadcast %351 : vector<1x32xf32> to vector<2x32xf32>
    %356 = arith.mulf %354, %355 : vector<2x32xf32>
    %c0_99 = arith.constant 0 : index
    %c0_100 = arith.constant 0 : index
    %357 = vector.load %arg13[%c0_99, %c0_100] : memref<1x32xf32, #tpu.memory_space<vmem>>, vector<1x32xf32>
    %358 = vector.broadcast %357 : vector<1x32xf32> to vector<2x32xf32>
    %359 = arith.mulf %356, %358 : vector<2x32xf32>
    %c0_101 = arith.constant 0 : index
    %c0_102 = arith.constant 0 : index
    %360 = vector.load %arg14[%c0_101, %c0_102] : memref<1x32xf32, #tpu.memory_space<vmem>>, vector<1x32xf32>
    %361 = vector.broadcast %360 : vector<1x32xf32> to vector<2x32xf32>
    %362 = arith.addf %359, %361 : vector<2x32xf32>
    %c0_103 = arith.constant 0 : index
    %c0_104 = arith.constant 0 : index
    %363 = vector.load %arg17[%c0_103, %c0_104] : memref<32x5xf32, #tpu.memory_space<vmem>>, vector<32x5xf32>
    %cst_105 = arith.constant dense<0.000000e+00> : vector<2x5xf32>
    %364 = tpu.matmul %362, %363, %cst_105 {dimension_numbers = #tpu.dot_dimension_numbers<[1], [0], [0], [1], [0, 0, 1, 1], [], []>} : vector<2x32xf32>, vector<32x5xf32>, vector<2x5xf32> -> vector<2x5xf32>
    %c0_106 = arith.constant 0 : index
    %c0_107 = arith.constant 0 : index
    %365 = vector.load %arg18[%c0_106, %c0_107] : memref<1x5xf32, #tpu.memory_space<vmem>>, vector<1x5xf32>
    %366 = vector.broadcast %365 : vector<1x5xf32> to vector<2x5xf32>
    %367 = arith.addf %364, %366 : vector<2x5xf32>
    %c0_108 = arith.constant 0 : index
    %c0_109 = arith.constant 0 : index
    %368 = vector.load %arg19[%c0_108, %c0_109] : memref<2x5xf32, #tpu.memory_space<vmem>>, vector<2x5xf32>
    tpu.vector_store %arg19[%c0_108, %c0_109], %367 {strides = array<i32>} : memref<2x5xf32, #tpu.memory_space<vmem>>, vector<2x5xf32>,
    %c0_110 = arith.constant 0 : index
    %c0_111 = arith.constant 0 : index
    %369 = vector.load %arg20[%c0_110, %c0_111] : memref<2x4xf32, #tpu.memory_space<vmem>>, vector<2x4xf32>
    tpu.vector_store %arg20[%c0_110, %c0_111], %330 {strides = array<i32>} : memref<2x4xf32, #tpu.memory_space<vmem>>, vector<2x4xf32>,
    return
  }
  func.func @transform_0(%arg0: i32) -> (i32, i32, i32) {
    %c0_i32 = arith.constant 0 : i32
    %c0_i32_0 = arith.constant 0 : i32
    %c0_i32_1 = arith.constant 0 : i32
    %c0_i32_2 = arith.constant 0 : i32
    return %c0_i32, %c0_i32_0, %c0_i32_1 : i32, i32, i32
  }
  func.func @transform_1(%arg0: i32) -> (i32, i32) {
    %c0_i32 = arith.constant 0 : i32
    %c0_i32_0 = arith.constant 0 : i32
    %c0_i32_1 = arith.constant 0 : i32
    return %c0_i32, %c0_i32_0 : i32, i32
  }
  func.func @transform_2(%arg0: i32) -> (i32, i32) {
    %c0_i32 = arith.constant 0 : i32
    %c0_i32_0 = arith.constant 0 : i32
    %c0_i32_1 = arith.constant 0 : i32
    return %c0_i32, %c0_i32_0 : i32, i32
  }
  func.func @transform_3(%arg0: i32) -> (i32, i32) {
    %c0_i32 = arith.constant 0 : i32
    %c0_i32_0 = arith.constant 0 : i32
    %c0_i32_1 = arith.constant 0 : i32
    return %c0_i32, %c0_i32_0 : i32, i32
  }
  func.func @transform_4(%arg0: i32) -> (i32, i32) {
    %c0_i32 = arith.constant 0 : i32
    %c0_i32_0 = arith.constant 0 : i32
    %c0_i32_1 = arith.constant 0 : i32
    return %c0_i32, %c0_i32_0 : i32, i32
  }
  func.func @transform_5(%arg0: i32) -> (i32, i32) {
    %c0_i32 = arith.constant 0 : i32
    %c0_i32_0 = arith.constant 0 : i32
    %c0_i32_1 = arith.constant 0 : i32
    return %c0_i32, %c0_i32_0 : i32, i32
  }
  func.func @transform_6(%arg0: i32) -> (i32, i32) {
    %c0_i32 = arith.constant 0 : i32
    %c0_i32_0 = arith.constant 0 : i32
    %c0_i32_1 = arith.constant 0 : i32
    return %c0_i32, %c0_i32_0 : i32, i32
  }
  func.func @transform_7(%arg0: i32) -> (i32, i32) {
    %c0_i32 = arith.constant 0 : i32
    %c0_i32_0 = arith.constant 0 : i32
    %c0_i32_1 = arith.constant 0 : i32
    return %c0_i32, %c0_i32_0 : i32, i32
  }
  func.func @transform_8(%arg0: i32) -> (i32, i32) {
    %c0_i32 = arith.constant 0 : i32
    %c0_i32_0 = arith.constant 0 : i32
    %c0_i32_1 = arith.constant 0 : i32
    return %c0_i32, %c0_i32_0 : i32, i32
  }
  func.func @transform_9(%arg0: i32) -> (i32, i32) {
    %c0_i32 = arith.constant 0 : i32
    %c0_i32_0 = arith.constant 0 : i32
    %c0_i32_1 = arith.constant 0 : i32
    return %c0_i32, %c0_i32_0 : i32, i32
  }
  func.func @transform_10(%arg0: i32) -> (i32, i32) {
    %c0_i32 = arith.constant 0 : i32
    %c0_i32_0 = arith.constant 0 : i32
    %c0_i32_1 = arith.constant 0 : i32
    return %c0_i32, %c0_i32_0 : i32, i32
  }
  func.func @transform_11(%arg0: i32) -> (i32, i32) {
    %c0_i32 = arith.constant 0 : i32
    %c0_i32_0 = arith.constant 0 : i32
    %c0_i32_1 = arith.constant 0 : i32
    return %c0_i32, %c0_i32_0 : i32, i32
  }
  func.func @transform_12(%arg0: i32) -> (i32, i32) {
    %c0_i32 = arith.constant 0 : i32
    %c0_i32_0 = arith.constant 0 : i32
    %c0_i32_1 = arith.constant 0 : i32
    return %c0_i32, %c0_i32_0 : i32, i32
  }
  func.func @transform_13(%arg0: i32) -> (i32, i32) {
    %c0_i32 = arith.constant 0 : i32
    %c0_i32_0 = arith.constant 0 : i32
    %c0_i32_1 = arith.constant 0 : i32
    return %c0_i32, %c0_i32_0 : i32, i32
  }
  func.func @transform_14(%arg0: i32) -> (i32, i32) {
    %c0_i32 = arith.constant 0 : i32
    %c0_i32_0 = arith.constant 0 : i32
    %c0_i32_1 = arith.constant 0 : i32
    return %c0_i32, %c0_i32_0 : i32, i32
  }
  func.func @transform_15(%arg0: i32) -> (i32, i32) {
    %c0_i32 = arith.constant 0 : i32
    %c0_i32_0 = arith.constant 0 : i32
    %c0_i32_1 = arith.constant 0 : i32
    return %c0_i32, %c0_i32_0 : i32, i32
  }
  func.func @transform_16(%arg0: i32) -> (i32, i32) {
    %c0_i32 = arith.constant 0 : i32
    %c0_i32_0 = arith.constant 0 : i32
    %c0_i32_1 = arith.constant 0 : i32
    return %c0_i32, %c0_i32_0 : i32, i32
  }
  func.func @transform_17(%arg0: i32) -> (i32, i32) {
    %c0_i32 = arith.constant 0 : i32
    %c0_i32_0 = arith.constant 0 : i32
    %c0_i32_1 = arith.constant 0 : i32
    return %c0_i32, %c0_i32_0 : i32, i32
  }
  func.func @transform_18(%arg0: i32) -> (i32, i32) {
    %c0_i32 = arith.constant 0 : i32
    %c0_i32_0 = arith.constant 0 : i32
    %c0_i32_1 = arith.constant 0 : i32
    return %c0_i32, %c0_i32_0 : i32, i32
  }
  func.func @transform_19(%arg0: i32) -> (i32, i32) {
    %c0_i32 = arith.constant 0 : i32
    %c0_i32_0 = arith.constant 0 : i32
    %c0_i32_1 = arith.constant 0 : i32
    return %c0_i32, %c0_i32_0 : i32, i32
  }
}

module attributes {stable_mosaic.version = 11 : i64} {
  func.func @_word_encoder_kernel(%arg0: i32, %arg1: memref<4x8x32xf32, #tpu.memory_space<vmem>>, %arg2: memref<32x48xf32, #tpu.memory_space<vmem>>, %arg3: memref<16x48xf32, #tpu.memory_space<vmem>>, %arg4: memref<1x48xf32, #tpu.memory_space<vmem>>, %arg5: memref<1x48xf32, #tpu.memory_space<vmem>>, %arg6: memref<32x48xf32, #tpu.memory_space<vmem>>, %arg7: memref<16x48xf32, #tpu.memory_space<vmem>>, %arg8: memref<1x48xf32, #tpu.memory_space<vmem>>, %arg9: memref<1x48xf32, #tpu.memory_space<vmem>>, %arg10: memref<32x32xf32, #tpu.memory_space<vmem>>, %arg11: memref<1x32xf32, #tpu.memory_space<vmem>>, %arg12: memref<1x32xf32, #tpu.memory_space<vmem>>, %arg13: memref<1x4x32xf32, #tpu.memory_space<vmem>>, %arg14: memref<1x4x8xf32, #tpu.memory_space<vmem>>) attributes {dimension_semantics = [#tpu.dimension_semantics<parallel>], iteration_bounds = array<i64: 2>, scalar_prefetch = 0 : i64, scratch_operands = 0 : i64, tpu.core_type = #tpu.core_type<tc>, window_params = [{transform_indices = @transform_0, window_bounds = array<i64: 4, 8, 32>}, {pipeline_mode = #tpu.pipeline_mode<synchronous>, transform_indices = @transform_1, window_bounds = array<i64: 32, 48>}, {pipeline_mode = #tpu.pipeline_mode<synchronous>, transform_indices = @transform_2, window_bounds = array<i64: 16, 48>}, {pipeline_mode = #tpu.pipeline_mode<synchronous>, transform_indices = @transform_3, window_bounds = array<i64: 1, 48>}, {pipeline_mode = #tpu.pipeline_mode<synchronous>, transform_indices = @transform_4, window_bounds = array<i64: 1, 48>}, {pipeline_mode = #tpu.pipeline_mode<synchronous>, transform_indices = @transform_5, window_bounds = array<i64: 32, 48>}, {pipeline_mode = #tpu.pipeline_mode<synchronous>, transform_indices = @transform_6, window_bounds = array<i64: 16, 48>}, {pipeline_mode = #tpu.pipeline_mode<synchronous>, transform_indices = @transform_7, window_bounds = array<i64: 1, 48>}, {pipeline_mode = #tpu.pipeline_mode<synchronous>, transform_indices = @transform_8, window_bounds = array<i64: 1, 48>}, {pipeline_mode = #tpu.pipeline_mode<synchronous>, transform_indices = @transform_9, window_bounds = array<i64: 32, 32>}, {pipeline_mode = #tpu.pipeline_mode<synchronous>, transform_indices = @transform_10, window_bounds = array<i64: 1, 32>}, {pipeline_mode = #tpu.pipeline_mode<synchronous>, transform_indices = @transform_11, window_bounds = array<i64: 1, 32>}, {transform_indices = @transform_12, window_bounds = array<i64: 1, 4, 32>}, {transform_indices = @transform_13, window_bounds = array<i64: 1, 4, 8>}]} {
    %c0 = arith.constant 0 : index
    %c0_0 = arith.constant 0 : index
    %0 = vector.load %arg2[%c0, %c0_0] : memref<32x48xf32, #tpu.memory_space<vmem>>, vector<32x48xf32>
    %c0_1 = arith.constant 0 : index
    %c0_2 = arith.constant 0 : index
    %1 = vector.load %arg3[%c0_1, %c0_2] : memref<16x48xf32, #tpu.memory_space<vmem>>, vector<16x48xf32>
    %c0_3 = arith.constant 0 : index
    %c0_4 = arith.constant 0 : index
    %2 = vector.load %arg4[%c0_3, %c0_4] : memref<1x48xf32, #tpu.memory_space<vmem>>, vector<1x48xf32>
    %c0_5 = arith.constant 0 : index
    %c0_6 = arith.constant 0 : index
    %3 = vector.load %arg5[%c0_5, %c0_6] : memref<1x48xf32, #tpu.memory_space<vmem>>, vector<1x48xf32>
    %c0_7 = arith.constant 0 : index
    %c0_8 = arith.constant 0 : index
    %4 = vector.load %arg6[%c0_7, %c0_8] : memref<32x48xf32, #tpu.memory_space<vmem>>, vector<32x48xf32>
    %c0_9 = arith.constant 0 : index
    %c0_10 = arith.constant 0 : index
    %5 = vector.load %arg7[%c0_9, %c0_10] : memref<16x48xf32, #tpu.memory_space<vmem>>, vector<16x48xf32>
    %c0_11 = arith.constant 0 : index
    %c0_12 = arith.constant 0 : index
    %6 = vector.load %arg8[%c0_11, %c0_12] : memref<1x48xf32, #tpu.memory_space<vmem>>, vector<1x48xf32>
    %c0_13 = arith.constant 0 : index
    %c0_14 = arith.constant 0 : index
    %7 = vector.load %arg9[%c0_13, %c0_14] : memref<1x48xf32, #tpu.memory_space<vmem>>, vector<1x48xf32>
    %c0_15 = arith.constant 0 : index
    %c0_16 = arith.constant 0 : index
    %c0_17 = arith.constant 0 : index
    %8 = vector.load %arg1[%c0_15, %c0_16, %c0_17] : memref<4x8x32xf32, #tpu.memory_space<vmem>>, vector<4x8x32xf32>
    %9 = vector.shape_cast %8 : vector<4x8x32xf32> to vector<32x32xf32>
    %cst = arith.constant dense<0.000000e+00> : vector<32x48xf32>
    %10 = tpu.matmul %9, %0, %cst {dimension_numbers = #tpu.dot_dimension_numbers<[1], [0], [0], [1], [0, 0, 1, 1], [], []>} : vector<32x32xf32>, vector<32x48xf32>, vector<32x48xf32> -> vector<32x48xf32>
    %11 = vector.broadcast %2 : vector<1x48xf32> to vector<32x48xf32>
    %12 = arith.addf %10, %11 : vector<32x48xf32>
    %13 = vector.shape_cast %12 : vector<32x48xf32> to vector<4x8x48xf32>
    %cst_18 = arith.constant dense<0.000000e+00> : vector<32x48xf32>
    %14 = tpu.matmul %9, %4, %cst_18 {dimension_numbers = #tpu.dot_dimension_numbers<[1], [0], [0], [1], [0, 0, 1, 1], [], []>} : vector<32x32xf32>, vector<32x48xf32>, vector<32x48xf32> -> vector<32x48xf32>
    %15 = vector.broadcast %6 : vector<1x48xf32> to vector<32x48xf32>
    %16 = arith.addf %14, %15 : vector<32x48xf32>
    %17 = vector.shape_cast %16 : vector<32x48xf32> to vector<4x8x48xf32>
    %cst_19 = arith.constant 0.000000e+00 : f32
    %18 = vector.broadcast %cst_19 : f32 to vector<4x16xf32>
    %cst_20 = arith.constant 0.000000e+00 : f32
    %19 = vector.broadcast %cst_20 : f32 to vector<4x16xf32>
    %20 = vector.extract_strided_slice %13 {offsets = [0, 0, 0], sizes = [4, 1, 48], strides = [1, 1, 1]} : vector<4x8x48xf32> to vector<4x1x48xf32>
    %21 = vector.shape_cast %20 : vector<4x1x48xf32> to vector<4x48xf32>
    %cst_21 = arith.constant dense<0.000000e+00> : vector<4x48xf32>
    %22 = tpu.matmul %18, %1, %cst_21 {dimension_numbers = #tpu.dot_dimension_numbers<[1], [0], [0], [1], [0, 0, 1, 1], [], []>} : vector<4x16xf32>, vector<16x48xf32>, vector<4x48xf32> -> vector<4x48xf32>
    %23 = vector.broadcast %3 : vector<1x48xf32> to vector<4x48xf32>
    %24 = arith.addf %22, %23 : vector<4x48xf32>
    %25 = vector.extract_strided_slice %21 {offsets = [0, 0], sizes = [4, 16], strides = [1, 1]} : vector<4x48xf32> to vector<4x16xf32>
    %26 = vector.extract_strided_slice %24 {offsets = [0, 0], sizes = [4, 16], strides = [1, 1]} : vector<4x48xf32> to vector<4x16xf32>
    %27 = arith.addf %25, %26 : vector<4x16xf32>
    %28 = arith.negf %27 : vector<4x16xf32>
    %29 = math.exp %28 : vector<4x16xf32>
    %cst_22 = arith.constant 1.000000e+00 : f32
    %30 = vector.broadcast %cst_22 : f32 to vector<4x16xf32>
    %31 = arith.addf %30, %29 : vector<4x16xf32>
    %32 = arith.divf %30, %31 : vector<4x16xf32>
    %33 = vector.extract_strided_slice %21 {offsets = [0, 16], sizes = [4, 16], strides = [1, 1]} : vector<4x48xf32> to vector<4x16xf32>
    %34 = vector.extract_strided_slice %24 {offsets = [0, 16], sizes = [4, 16], strides = [1, 1]} : vector<4x48xf32> to vector<4x16xf32>
    %35 = arith.addf %33, %34 : vector<4x16xf32>
    %36 = arith.negf %35 : vector<4x16xf32>
    %37 = math.exp %36 : vector<4x16xf32>
    %cst_23 = arith.constant 1.000000e+00 : f32
    %38 = vector.broadcast %cst_23 : f32 to vector<4x16xf32>
    %39 = arith.addf %38, %37 : vector<4x16xf32>
    %40 = arith.divf %38, %39 : vector<4x16xf32>
    %41 = vector.extract_strided_slice %21 {offsets = [0, 32], sizes = [4, 16], strides = [1, 1]} : vector<4x48xf32> to vector<4x16xf32>
    %42 = vector.extract_strided_slice %24 {offsets = [0, 32], sizes = [4, 16], strides = [1, 1]} : vector<4x48xf32> to vector<4x16xf32>
    %43 = arith.mulf %32, %42 : vector<4x16xf32>
    %44 = arith.addf %41, %43 : vector<4x16xf32>
    %45 = math.tanh %44 : vector<4x16xf32>
    %cst_24 = arith.constant 1.000000e+00 : f32
    %46 = vector.broadcast %cst_24 : f32 to vector<4x16xf32>
    %47 = arith.subf %46, %40 : vector<4x16xf32>
    %48 = arith.mulf %47, %45 : vector<4x16xf32>
    %49 = arith.mulf %40, %18 : vector<4x16xf32>
    %50 = arith.addf %48, %49 : vector<4x16xf32>
    %51 = vector.extract_strided_slice %17 {offsets = [0, 7, 0], sizes = [4, 1, 48], strides = [1, 1, 1]} : vector<4x8x48xf32> to vector<4x1x48xf32>
    %52 = vector.shape_cast %51 : vector<4x1x48xf32> to vector<4x48xf32>
    %cst_25 = arith.constant dense<0.000000e+00> : vector<4x48xf32>
    %53 = tpu.matmul %19, %5, %cst_25 {dimension_numbers = #tpu.dot_dimension_numbers<[1], [0], [0], [1], [0, 0, 1, 1], [], []>} : vector<4x16xf32>, vector<16x48xf32>, vector<4x48xf32> -> vector<4x48xf32>
    %54 = vector.broadcast %7 : vector<1x48xf32> to vector<4x48xf32>
    %55 = arith.addf %53, %54 : vector<4x48xf32>
    %56 = vector.extract_strided_slice %52 {offsets = [0, 0], sizes = [4, 16], strides = [1, 1]} : vector<4x48xf32> to vector<4x16xf32>
    %57 = vector.extract_strided_slice %55 {offsets = [0, 0], sizes = [4, 16], strides = [1, 1]} : vector<4x48xf32> to vector<4x16xf32>
    %58 = arith.addf %56, %57 : vector<4x16xf32>
    %59 = arith.negf %58 : vector<4x16xf32>
    %60 = math.exp %59 : vector<4x16xf32>
    %cst_26 = arith.constant 1.000000e+00 : f32
    %61 = vector.broadcast %cst_26 : f32 to vector<4x16xf32>
    %62 = arith.addf %61, %60 : vector<4x16xf32>
    %63 = arith.divf %61, %62 : vector<4x16xf32>
    %64 = vector.extract_strided_slice %52 {offsets = [0, 16], sizes = [4, 16], strides = [1, 1]} : vector<4x48xf32> to vector<4x16xf32>
    %65 = vector.extract_strided_slice %55 {offsets = [0, 16], sizes = [4, 16], strides = [1, 1]} : vector<4x48xf32> to vector<4x16xf32>
    %66 = arith.addf %64, %65 : vector<4x16xf32>
    %67 = arith.negf %66 : vector<4x16xf32>
    %68 = math.exp %67 : vector<4x16xf32>
    %cst_27 = arith.constant 1.000000e+00 : f32
    %69 = vector.broadcast %cst_27 : f32 to vector<4x16xf32>
    %70 = arith.addf %69, %68 : vector<4x16xf32>
    %71 = arith.divf %69, %70 : vector<4x16xf32>
    %72 = vector.extract_strided_slice %52 {offsets = [0, 32], sizes = [4, 16], strides = [1, 1]} : vector<4x48xf32> to vector<4x16xf32>
    %73 = vector.extract_strided_slice %55 {offsets = [0, 32], sizes = [4, 16], strides = [1, 1]} : vector<4x48xf32> to vector<4x16xf32>
    %74 = arith.mulf %63, %73 : vector<4x16xf32>
    %75 = arith.addf %72, %74 : vector<4x16xf32>
    %76 = math.tanh %75 : vector<4x16xf32>
    %cst_28 = arith.constant 1.000000e+00 : f32
    %77 = vector.broadcast %cst_28 : f32 to vector<4x16xf32>
    %78 = arith.subf %77, %71 : vector<4x16xf32>
    %79 = arith.mulf %78, %76 : vector<4x16xf32>
    %80 = arith.mulf %71, %19 : vector<4x16xf32>
    %81 = arith.addf %79, %80 : vector<4x16xf32>
    %82 = vector.extract_strided_slice %13 {offsets = [0, 1, 0], sizes = [4, 1, 48], strides = [1, 1, 1]} : vector<4x8x48xf32> to vector<4x1x48xf32>
    %83 = vector.shape_cast %82 : vector<4x1x48xf32> to vector<4x48xf32>
    %cst_29 = arith.constant dense<0.000000e+00> : vector<4x48xf32>
    %84 = tpu.matmul %50, %1, %cst_29 {dimension_numbers = #tpu.dot_dimension_numbers<[1], [0], [0], [1], [0, 0, 1, 1], [], []>} : vector<4x16xf32>, vector<16x48xf32>, vector<4x48xf32> -> vector<4x48xf32>
    %85 = vector.broadcast %3 : vector<1x48xf32> to vector<4x48xf32>
    %86 = arith.addf %84, %85 : vector<4x48xf32>
    %87 = vector.extract_strided_slice %83 {offsets = [0, 0], sizes = [4, 16], strides = [1, 1]} : vector<4x48xf32> to vector<4x16xf32>
    %88 = vector.extract_strided_slice %86 {offsets = [0, 0], sizes = [4, 16], strides = [1, 1]} : vector<4x48xf32> to vector<4x16xf32>
    %89 = arith.addf %87, %88 : vector<4x16xf32>
    %90 = arith.negf %89 : vector<4x16xf32>
    %91 = math.exp %90 : vector<4x16xf32>
    %cst_30 = arith.constant 1.000000e+00 : f32
    %92 = vector.broadcast %cst_30 : f32 to vector<4x16xf32>
    %93 = arith.addf %92, %91 : vector<4x16xf32>
    %94 = arith.divf %92, %93 : vector<4x16xf32>
    %95 = vector.extract_strided_slice %83 {offsets = [0, 16], sizes = [4, 16], strides = [1, 1]} : vector<4x48xf32> to vector<4x16xf32>
    %96 = vector.extract_strided_slice %86 {offsets = [0, 16], sizes = [4, 16], strides = [1, 1]} : vector<4x48xf32> to vector<4x16xf32>
    %97 = arith.addf %95, %96 : vector<4x16xf32>
    %98 = arith.negf %97 : vector<4x16xf32>
    %99 = math.exp %98 : vector<4x16xf32>
    %cst_31 = arith.constant 1.000000e+00 : f32
    %100 = vector.broadcast %cst_31 : f32 to vector<4x16xf32>
    %101 = arith.addf %100, %99 : vector<4x16xf32>
    %102 = arith.divf %100, %101 : vector<4x16xf32>
    %103 = vector.extract_strided_slice %83 {offsets = [0, 32], sizes = [4, 16], strides = [1, 1]} : vector<4x48xf32> to vector<4x16xf32>
    %104 = vector.extract_strided_slice %86 {offsets = [0, 32], sizes = [4, 16], strides = [1, 1]} : vector<4x48xf32> to vector<4x16xf32>
    %105 = arith.mulf %94, %104 : vector<4x16xf32>
    %106 = arith.addf %103, %105 : vector<4x16xf32>
    %107 = math.tanh %106 : vector<4x16xf32>
    %cst_32 = arith.constant 1.000000e+00 : f32
    %108 = vector.broadcast %cst_32 : f32 to vector<4x16xf32>
    %109 = arith.subf %108, %102 : vector<4x16xf32>
    %110 = arith.mulf %109, %107 : vector<4x16xf32>
    %111 = arith.mulf %102, %50 : vector<4x16xf32>
    %112 = arith.addf %110, %111 : vector<4x16xf32>
    %113 = vector.extract_strided_slice %17 {offsets = [0, 6, 0], sizes = [4, 1, 48], strides = [1, 1, 1]} : vector<4x8x48xf32> to vector<4x1x48xf32>
    %114 = vector.shape_cast %113 : vector<4x1x48xf32> to vector<4x48xf32>
    %cst_33 = arith.constant dense<0.000000e+00> : vector<4x48xf32>
    %115 = tpu.matmul %81, %5, %cst_33 {dimension_numbers = #tpu.dot_dimension_numbers<[1], [0], [0], [1], [0, 0, 1, 1], [], []>} : vector<4x16xf32>, vector<16x48xf32>, vector<4x48xf32> -> vector<4x48xf32>
    %116 = vector.broadcast %7 : vector<1x48xf32> to vector<4x48xf32>
    %117 = arith.addf %115, %116 : vector<4x48xf32>
    %118 = vector.extract_strided_slice %114 {offsets = [0, 0], sizes = [4, 16], strides = [1, 1]} : vector<4x48xf32> to vector<4x16xf32>
    %119 = vector.extract_strided_slice %117 {offsets = [0, 0], sizes = [4, 16], strides = [1, 1]} : vector<4x48xf32> to vector<4x16xf32>
    %120 = arith.addf %118, %119 : vector<4x16xf32>
    %121 = arith.negf %120 : vector<4x16xf32>
    %122 = math.exp %121 : vector<4x16xf32>
    %cst_34 = arith.constant 1.000000e+00 : f32
    %123 = vector.broadcast %cst_34 : f32 to vector<4x16xf32>
    %124 = arith.addf %123, %122 : vector<4x16xf32>
    %125 = arith.divf %123, %124 : vector<4x16xf32>
    %126 = vector.extract_strided_slice %114 {offsets = [0, 16], sizes = [4, 16], strides = [1, 1]} : vector<4x48xf32> to vector<4x16xf32>
    %127 = vector.extract_strided_slice %117 {offsets = [0, 16], sizes = [4, 16], strides = [1, 1]} : vector<4x48xf32> to vector<4x16xf32>
    %128 = arith.addf %126, %127 : vector<4x16xf32>
    %129 = arith.negf %128 : vector<4x16xf32>
    %130 = math.exp %129 : vector<4x16xf32>
    %cst_35 = arith.constant 1.000000e+00 : f32
    %131 = vector.broadcast %cst_35 : f32 to vector<4x16xf32>
    %132 = arith.addf %131, %130 : vector<4x16xf32>
    %133 = arith.divf %131, %132 : vector<4x16xf32>
    %134 = vector.extract_strided_slice %114 {offsets = [0, 32], sizes = [4, 16], strides = [1, 1]} : vector<4x48xf32> to vector<4x16xf32>
    %135 = vector.extract_strided_slice %117 {offsets = [0, 32], sizes = [4, 16], strides = [1, 1]} : vector<4x48xf32> to vector<4x16xf32>
    %136 = arith.mulf %125, %135 : vector<4x16xf32>
    %137 = arith.addf %134, %136 : vector<4x16xf32>
    %138 = math.tanh %137 : vector<4x16xf32>
    %cst_36 = arith.constant 1.000000e+00 : f32
    %139 = vector.broadcast %cst_36 : f32 to vector<4x16xf32>
    %140 = arith.subf %139, %133 : vector<4x16xf32>
    %141 = arith.mulf %140, %138 : vector<4x16xf32>
    %142 = arith.mulf %133, %81 : vector<4x16xf32>
    %143 = arith.addf %141, %142 : vector<4x16xf32>
    %144 = vector.extract_strided_slice %13 {offsets = [0, 2, 0], sizes = [4, 1, 48], strides = [1, 1, 1]} : vector<4x8x48xf32> to vector<4x1x48xf32>
    %145 = vector.shape_cast %144 : vector<4x1x48xf32> to vector<4x48xf32>
    %cst_37 = arith.constant dense<0.000000e+00> : vector<4x48xf32>
    %146 = tpu.matmul %112, %1, %cst_37 {dimension_numbers = #tpu.dot_dimension_numbers<[1], [0], [0], [1], [0, 0, 1, 1], [], []>} : vector<4x16xf32>, vector<16x48xf32>, vector<4x48xf32> -> vector<4x48xf32>
    %147 = vector.broadcast %3 : vector<1x48xf32> to vector<4x48xf32>
    %148 = arith.addf %146, %147 : vector<4x48xf32>
    %149 = vector.extract_strided_slice %145 {offsets = [0, 0], sizes = [4, 16], strides = [1, 1]} : vector<4x48xf32> to vector<4x16xf32>
    %150 = vector.extract_strided_slice %148 {offsets = [0, 0], sizes = [4, 16], strides = [1, 1]} : vector<4x48xf32> to vector<4x16xf32>
    %151 = arith.addf %149, %150 : vector<4x16xf32>
    %152 = arith.negf %151 : vector<4x16xf32>
    %153 = math.exp %152 : vector<4x16xf32>
    %cst_38 = arith.constant 1.000000e+00 : f32
    %154 = vector.broadcast %cst_38 : f32 to vector<4x16xf32>
    %155 = arith.addf %154, %153 : vector<4x16xf32>
    %156 = arith.divf %154, %155 : vector<4x16xf32>
    %157 = vector.extract_strided_slice %145 {offsets = [0, 16], sizes = [4, 16], strides = [1, 1]} : vector<4x48xf32> to vector<4x16xf32>
    %158 = vector.extract_strided_slice %148 {offsets = [0, 16], sizes = [4, 16], strides = [1, 1]} : vector<4x48xf32> to vector<4x16xf32>
    %159 = arith.addf %157, %158 : vector<4x16xf32>
    %160 = arith.negf %159 : vector<4x16xf32>
    %161 = math.exp %160 : vector<4x16xf32>
    %cst_39 = arith.constant 1.000000e+00 : f32
    %162 = vector.broadcast %cst_39 : f32 to vector<4x16xf32>
    %163 = arith.addf %162, %161 : vector<4x16xf32>
    %164 = arith.divf %162, %163 : vector<4x16xf32>
    %165 = vector.extract_strided_slice %145 {offsets = [0, 32], sizes = [4, 16], strides = [1, 1]} : vector<4x48xf32> to vector<4x16xf32>
    %166 = vector.extract_strided_slice %148 {offsets = [0, 32], sizes = [4, 16], strides = [1, 1]} : vector<4x48xf32> to vector<4x16xf32>
    %167 = arith.mulf %156, %166 : vector<4x16xf32>
    %168 = arith.addf %165, %167 : vector<4x16xf32>
    %169 = math.tanh %168 : vector<4x16xf32>
    %cst_40 = arith.constant 1.000000e+00 : f32
    %170 = vector.broadcast %cst_40 : f32 to vector<4x16xf32>
    %171 = arith.subf %170, %164 : vector<4x16xf32>
    %172 = arith.mulf %171, %169 : vector<4x16xf32>
    %173 = arith.mulf %164, %112 : vector<4x16xf32>
    %174 = arith.addf %172, %173 : vector<4x16xf32>
    %175 = vector.extract_strided_slice %17 {offsets = [0, 5, 0], sizes = [4, 1, 48], strides = [1, 1, 1]} : vector<4x8x48xf32> to vector<4x1x48xf32>
    %176 = vector.shape_cast %175 : vector<4x1x48xf32> to vector<4x48xf32>
    %cst_41 = arith.constant dense<0.000000e+00> : vector<4x48xf32>
    %177 = tpu.matmul %143, %5, %cst_41 {dimension_numbers = #tpu.dot_dimension_numbers<[1], [0], [0], [1], [0, 0, 1, 1], [], []>} : vector<4x16xf32>, vector<16x48xf32>, vector<4x48xf32> -> vector<4x48xf32>
    %178 = vector.broadcast %7 : vector<1x48xf32> to vector<4x48xf32>
    %179 = arith.addf %177, %178 : vector<4x48xf32>
    %180 = vector.extract_strided_slice %176 {offsets = [0, 0], sizes = [4, 16], strides = [1, 1]} : vector<4x48xf32> to vector<4x16xf32>
    %181 = vector.extract_strided_slice %179 {offsets = [0, 0], sizes = [4, 16], strides = [1, 1]} : vector<4x48xf32> to vector<4x16xf32>
    %182 = arith.addf %180, %181 : vector<4x16xf32>
    %183 = arith.negf %182 : vector<4x16xf32>
    %184 = math.exp %183 : vector<4x16xf32>
    %cst_42 = arith.constant 1.000000e+00 : f32
    %185 = vector.broadcast %cst_42 : f32 to vector<4x16xf32>
    %186 = arith.addf %185, %184 : vector<4x16xf32>
    %187 = arith.divf %185, %186 : vector<4x16xf32>
    %188 = vector.extract_strided_slice %176 {offsets = [0, 16], sizes = [4, 16], strides = [1, 1]} : vector<4x48xf32> to vector<4x16xf32>
    %189 = vector.extract_strided_slice %179 {offsets = [0, 16], sizes = [4, 16], strides = [1, 1]} : vector<4x48xf32> to vector<4x16xf32>
    %190 = arith.addf %188, %189 : vector<4x16xf32>
    %191 = arith.negf %190 : vector<4x16xf32>
    %192 = math.exp %191 : vector<4x16xf32>
    %cst_43 = arith.constant 1.000000e+00 : f32
    %193 = vector.broadcast %cst_43 : f32 to vector<4x16xf32>
    %194 = arith.addf %193, %192 : vector<4x16xf32>
    %195 = arith.divf %193, %194 : vector<4x16xf32>
    %196 = vector.extract_strided_slice %176 {offsets = [0, 32], sizes = [4, 16], strides = [1, 1]} : vector<4x48xf32> to vector<4x16xf32>
    %197 = vector.extract_strided_slice %179 {offsets = [0, 32], sizes = [4, 16], strides = [1, 1]} : vector<4x48xf32> to vector<4x16xf32>
    %198 = arith.mulf %187, %197 : vector<4x16xf32>
    %199 = arith.addf %196, %198 : vector<4x16xf32>
    %200 = math.tanh %199 : vector<4x16xf32>
    %cst_44 = arith.constant 1.000000e+00 : f32
    %201 = vector.broadcast %cst_44 : f32 to vector<4x16xf32>
    %202 = arith.subf %201, %195 : vector<4x16xf32>
    %203 = arith.mulf %202, %200 : vector<4x16xf32>
    %204 = arith.mulf %195, %143 : vector<4x16xf32>
    %205 = arith.addf %203, %204 : vector<4x16xf32>
    %206 = vector.extract_strided_slice %13 {offsets = [0, 3, 0], sizes = [4, 1, 48], strides = [1, 1, 1]} : vector<4x8x48xf32> to vector<4x1x48xf32>
    %207 = vector.shape_cast %206 : vector<4x1x48xf32> to vector<4x48xf32>
    %cst_45 = arith.constant dense<0.000000e+00> : vector<4x48xf32>
    %208 = tpu.matmul %174, %1, %cst_45 {dimension_numbers = #tpu.dot_dimension_numbers<[1], [0], [0], [1], [0, 0, 1, 1], [], []>} : vector<4x16xf32>, vector<16x48xf32>, vector<4x48xf32> -> vector<4x48xf32>
    %209 = vector.broadcast %3 : vector<1x48xf32> to vector<4x48xf32>
    %210 = arith.addf %208, %209 : vector<4x48xf32>
    %211 = vector.extract_strided_slice %207 {offsets = [0, 0], sizes = [4, 16], strides = [1, 1]} : vector<4x48xf32> to vector<4x16xf32>
    %212 = vector.extract_strided_slice %210 {offsets = [0, 0], sizes = [4, 16], strides = [1, 1]} : vector<4x48xf32> to vector<4x16xf32>
    %213 = arith.addf %211, %212 : vector<4x16xf32>
    %214 = arith.negf %213 : vector<4x16xf32>
    %215 = math.exp %214 : vector<4x16xf32>
    %cst_46 = arith.constant 1.000000e+00 : f32
    %216 = vector.broadcast %cst_46 : f32 to vector<4x16xf32>
    %217 = arith.addf %216, %215 : vector<4x16xf32>
    %218 = arith.divf %216, %217 : vector<4x16xf32>
    %219 = vector.extract_strided_slice %207 {offsets = [0, 16], sizes = [4, 16], strides = [1, 1]} : vector<4x48xf32> to vector<4x16xf32>
    %220 = vector.extract_strided_slice %210 {offsets = [0, 16], sizes = [4, 16], strides = [1, 1]} : vector<4x48xf32> to vector<4x16xf32>
    %221 = arith.addf %219, %220 : vector<4x16xf32>
    %222 = arith.negf %221 : vector<4x16xf32>
    %223 = math.exp %222 : vector<4x16xf32>
    %cst_47 = arith.constant 1.000000e+00 : f32
    %224 = vector.broadcast %cst_47 : f32 to vector<4x16xf32>
    %225 = arith.addf %224, %223 : vector<4x16xf32>
    %226 = arith.divf %224, %225 : vector<4x16xf32>
    %227 = vector.extract_strided_slice %207 {offsets = [0, 32], sizes = [4, 16], strides = [1, 1]} : vector<4x48xf32> to vector<4x16xf32>
    %228 = vector.extract_strided_slice %210 {offsets = [0, 32], sizes = [4, 16], strides = [1, 1]} : vector<4x48xf32> to vector<4x16xf32>
    %229 = arith.mulf %218, %228 : vector<4x16xf32>
    %230 = arith.addf %227, %229 : vector<4x16xf32>
    %231 = math.tanh %230 : vector<4x16xf32>
    %cst_48 = arith.constant 1.000000e+00 : f32
    %232 = vector.broadcast %cst_48 : f32 to vector<4x16xf32>
    %233 = arith.subf %232, %226 : vector<4x16xf32>
    %234 = arith.mulf %233, %231 : vector<4x16xf32>
    %235 = arith.mulf %226, %174 : vector<4x16xf32>
    %236 = arith.addf %234, %235 : vector<4x16xf32>
    %237 = vector.extract_strided_slice %17 {offsets = [0, 4, 0], sizes = [4, 1, 48], strides = [1, 1, 1]} : vector<4x8x48xf32> to vector<4x1x48xf32>
    %238 = vector.shape_cast %237 : vector<4x1x48xf32> to vector<4x48xf32>
    %cst_49 = arith.constant dense<0.000000e+00> : vector<4x48xf32>
    %239 = tpu.matmul %205, %5, %cst_49 {dimension_numbers = #tpu.dot_dimension_numbers<[1], [0], [0], [1], [0, 0, 1, 1], [], []>} : vector<4x16xf32>, vector<16x48xf32>, vector<4x48xf32> -> vector<4x48xf32>
    %240 = vector.broadcast %7 : vector<1x48xf32> to vector<4x48xf32>
    %241 = arith.addf %239, %240 : vector<4x48xf32>
    %242 = vector.extract_strided_slice %238 {offsets = [0, 0], sizes = [4, 16], strides = [1, 1]} : vector<4x48xf32> to vector<4x16xf32>
    %243 = vector.extract_strided_slice %241 {offsets = [0, 0], sizes = [4, 16], strides = [1, 1]} : vector<4x48xf32> to vector<4x16xf32>
    %244 = arith.addf %242, %243 : vector<4x16xf32>
    %245 = arith.negf %244 : vector<4x16xf32>
    %246 = math.exp %245 : vector<4x16xf32>
    %cst_50 = arith.constant 1.000000e+00 : f32
    %247 = vector.broadcast %cst_50 : f32 to vector<4x16xf32>
    %248 = arith.addf %247, %246 : vector<4x16xf32>
    %249 = arith.divf %247, %248 : vector<4x16xf32>
    %250 = vector.extract_strided_slice %238 {offsets = [0, 16], sizes = [4, 16], strides = [1, 1]} : vector<4x48xf32> to vector<4x16xf32>
    %251 = vector.extract_strided_slice %241 {offsets = [0, 16], sizes = [4, 16], strides = [1, 1]} : vector<4x48xf32> to vector<4x16xf32>
    %252 = arith.addf %250, %251 : vector<4x16xf32>
    %253 = arith.negf %252 : vector<4x16xf32>
    %254 = math.exp %253 : vector<4x16xf32>
    %cst_51 = arith.constant 1.000000e+00 : f32
    %255 = vector.broadcast %cst_51 : f32 to vector<4x16xf32>
    %256 = arith.addf %255, %254 : vector<4x16xf32>
    %257 = arith.divf %255, %256 : vector<4x16xf32>
    %258 = vector.extract_strided_slice %238 {offsets = [0, 32], sizes = [4, 16], strides = [1, 1]} : vector<4x48xf32> to vector<4x16xf32>
    %259 = vector.extract_strided_slice %241 {offsets = [0, 32], sizes = [4, 16], strides = [1, 1]} : vector<4x48xf32> to vector<4x16xf32>
    %260 = arith.mulf %249, %259 : vector<4x16xf32>
    %261 = arith.addf %258, %260 : vector<4x16xf32>
    %262 = math.tanh %261 : vector<4x16xf32>
    %cst_52 = arith.constant 1.000000e+00 : f32
    %263 = vector.broadcast %cst_52 : f32 to vector<4x16xf32>
    %264 = arith.subf %263, %257 : vector<4x16xf32>
    %265 = arith.mulf %264, %262 : vector<4x16xf32>
    %266 = arith.mulf %257, %205 : vector<4x16xf32>
    %267 = arith.addf %265, %266 : vector<4x16xf32>
    %268 = vector.extract_strided_slice %13 {offsets = [0, 4, 0], sizes = [4, 1, 48], strides = [1, 1, 1]} : vector<4x8x48xf32> to vector<4x1x48xf32>
    %269 = vector.shape_cast %268 : vector<4x1x48xf32> to vector<4x48xf32>
    %cst_53 = arith.constant dense<0.000000e+00> : vector<4x48xf32>
    %270 = tpu.matmul %236, %1, %cst_53 {dimension_numbers = #tpu.dot_dimension_numbers<[1], [0], [0], [1], [0, 0, 1, 1], [], []>} : vector<4x16xf32>, vector<16x48xf32>, vector<4x48xf32> -> vector<4x48xf32>
    %271 = vector.broadcast %3 : vector<1x48xf32> to vector<4x48xf32>
    %272 = arith.addf %270, %271 : vector<4x48xf32>
    %273 = vector.extract_strided_slice %269 {offsets = [0, 0], sizes = [4, 16], strides = [1, 1]} : vector<4x48xf32> to vector<4x16xf32>
    %274 = vector.extract_strided_slice %272 {offsets = [0, 0], sizes = [4, 16], strides = [1, 1]} : vector<4x48xf32> to vector<4x16xf32>
    %275 = arith.addf %273, %274 : vector<4x16xf32>
    %276 = arith.negf %275 : vector<4x16xf32>
    %277 = math.exp %276 : vector<4x16xf32>
    %cst_54 = arith.constant 1.000000e+00 : f32
    %278 = vector.broadcast %cst_54 : f32 to vector<4x16xf32>
    %279 = arith.addf %278, %277 : vector<4x16xf32>
    %280 = arith.divf %278, %279 : vector<4x16xf32>
    %281 = vector.extract_strided_slice %269 {offsets = [0, 16], sizes = [4, 16], strides = [1, 1]} : vector<4x48xf32> to vector<4x16xf32>
    %282 = vector.extract_strided_slice %272 {offsets = [0, 16], sizes = [4, 16], strides = [1, 1]} : vector<4x48xf32> to vector<4x16xf32>
    %283 = arith.addf %281, %282 : vector<4x16xf32>
    %284 = arith.negf %283 : vector<4x16xf32>
    %285 = math.exp %284 : vector<4x16xf32>
    %cst_55 = arith.constant 1.000000e+00 : f32
    %286 = vector.broadcast %cst_55 : f32 to vector<4x16xf32>
    %287 = arith.addf %286, %285 : vector<4x16xf32>
    %288 = arith.divf %286, %287 : vector<4x16xf32>
    %289 = vector.extract_strided_slice %269 {offsets = [0, 32], sizes = [4, 16], strides = [1, 1]} : vector<4x48xf32> to vector<4x16xf32>
    %290 = vector.extract_strided_slice %272 {offsets = [0, 32], sizes = [4, 16], strides = [1, 1]} : vector<4x48xf32> to vector<4x16xf32>
    %291 = arith.mulf %280, %290 : vector<4x16xf32>
    %292 = arith.addf %289, %291 : vector<4x16xf32>
    %293 = math.tanh %292 : vector<4x16xf32>
    %cst_56 = arith.constant 1.000000e+00 : f32
    %294 = vector.broadcast %cst_56 : f32 to vector<4x16xf32>
    %295 = arith.subf %294, %288 : vector<4x16xf32>
    %296 = arith.mulf %295, %293 : vector<4x16xf32>
    %297 = arith.mulf %288, %236 : vector<4x16xf32>
    %298 = arith.addf %296, %297 : vector<4x16xf32>
    %299 = vector.extract_strided_slice %17 {offsets = [0, 3, 0], sizes = [4, 1, 48], strides = [1, 1, 1]} : vector<4x8x48xf32> to vector<4x1x48xf32>
    %300 = vector.shape_cast %299 : vector<4x1x48xf32> to vector<4x48xf32>
    %cst_57 = arith.constant dense<0.000000e+00> : vector<4x48xf32>
    %301 = tpu.matmul %267, %5, %cst_57 {dimension_numbers = #tpu.dot_dimension_numbers<[1], [0], [0], [1], [0, 0, 1, 1], [], []>} : vector<4x16xf32>, vector<16x48xf32>, vector<4x48xf32> -> vector<4x48xf32>
    %302 = vector.broadcast %7 : vector<1x48xf32> to vector<4x48xf32>
    %303 = arith.addf %301, %302 : vector<4x48xf32>
    %304 = vector.extract_strided_slice %300 {offsets = [0, 0], sizes = [4, 16], strides = [1, 1]} : vector<4x48xf32> to vector<4x16xf32>
    %305 = vector.extract_strided_slice %303 {offsets = [0, 0], sizes = [4, 16], strides = [1, 1]} : vector<4x48xf32> to vector<4x16xf32>
    %306 = arith.addf %304, %305 : vector<4x16xf32>
    %307 = arith.negf %306 : vector<4x16xf32>
    %308 = math.exp %307 : vector<4x16xf32>
    %cst_58 = arith.constant 1.000000e+00 : f32
    %309 = vector.broadcast %cst_58 : f32 to vector<4x16xf32>
    %310 = arith.addf %309, %308 : vector<4x16xf32>
    %311 = arith.divf %309, %310 : vector<4x16xf32>
    %312 = vector.extract_strided_slice %300 {offsets = [0, 16], sizes = [4, 16], strides = [1, 1]} : vector<4x48xf32> to vector<4x16xf32>
    %313 = vector.extract_strided_slice %303 {offsets = [0, 16], sizes = [4, 16], strides = [1, 1]} : vector<4x48xf32> to vector<4x16xf32>
    %314 = arith.addf %312, %313 : vector<4x16xf32>
    %315 = arith.negf %314 : vector<4x16xf32>
    %316 = math.exp %315 : vector<4x16xf32>
    %cst_59 = arith.constant 1.000000e+00 : f32
    %317 = vector.broadcast %cst_59 : f32 to vector<4x16xf32>
    %318 = arith.addf %317, %316 : vector<4x16xf32>
    %319 = arith.divf %317, %318 : vector<4x16xf32>
    %320 = vector.extract_strided_slice %300 {offsets = [0, 32], sizes = [4, 16], strides = [1, 1]} : vector<4x48xf32> to vector<4x16xf32>
    %321 = vector.extract_strided_slice %303 {offsets = [0, 32], sizes = [4, 16], strides = [1, 1]} : vector<4x48xf32> to vector<4x16xf32>
    %322 = arith.mulf %311, %321 : vector<4x16xf32>
    %323 = arith.addf %320, %322 : vector<4x16xf32>
    %324 = math.tanh %323 : vector<4x16xf32>
    %cst_60 = arith.constant 1.000000e+00 : f32
    %325 = vector.broadcast %cst_60 : f32 to vector<4x16xf32>
    %326 = arith.subf %325, %319 : vector<4x16xf32>
    %327 = arith.mulf %326, %324 : vector<4x16xf32>
    %328 = arith.mulf %319, %267 : vector<4x16xf32>
    %329 = arith.addf %327, %328 : vector<4x16xf32>
    %330 = vector.extract_strided_slice %13 {offsets = [0, 5, 0], sizes = [4, 1, 48], strides = [1, 1, 1]} : vector<4x8x48xf32> to vector<4x1x48xf32>
    %331 = vector.shape_cast %330 : vector<4x1x48xf32> to vector<4x48xf32>
    %cst_61 = arith.constant dense<0.000000e+00> : vector<4x48xf32>
    %332 = tpu.matmul %298, %1, %cst_61 {dimension_numbers = #tpu.dot_dimension_numbers<[1], [0], [0], [1], [0, 0, 1, 1], [], []>} : vector<4x16xf32>, vector<16x48xf32>, vector<4x48xf32> -> vector<4x48xf32>
    %333 = vector.broadcast %3 : vector<1x48xf32> to vector<4x48xf32>
    %334 = arith.addf %332, %333 : vector<4x48xf32>
    %335 = vector.extract_strided_slice %331 {offsets = [0, 0], sizes = [4, 16], strides = [1, 1]} : vector<4x48xf32> to vector<4x16xf32>
    %336 = vector.extract_strided_slice %334 {offsets = [0, 0], sizes = [4, 16], strides = [1, 1]} : vector<4x48xf32> to vector<4x16xf32>
    %337 = arith.addf %335, %336 : vector<4x16xf32>
    %338 = arith.negf %337 : vector<4x16xf32>
    %339 = math.exp %338 : vector<4x16xf32>
    %cst_62 = arith.constant 1.000000e+00 : f32
    %340 = vector.broadcast %cst_62 : f32 to vector<4x16xf32>
    %341 = arith.addf %340, %339 : vector<4x16xf32>
    %342 = arith.divf %340, %341 : vector<4x16xf32>
    %343 = vector.extract_strided_slice %331 {offsets = [0, 16], sizes = [4, 16], strides = [1, 1]} : vector<4x48xf32> to vector<4x16xf32>
    %344 = vector.extract_strided_slice %334 {offsets = [0, 16], sizes = [4, 16], strides = [1, 1]} : vector<4x48xf32> to vector<4x16xf32>
    %345 = arith.addf %343, %344 : vector<4x16xf32>
    %346 = arith.negf %345 : vector<4x16xf32>
    %347 = math.exp %346 : vector<4x16xf32>
    %cst_63 = arith.constant 1.000000e+00 : f32
    %348 = vector.broadcast %cst_63 : f32 to vector<4x16xf32>
    %349 = arith.addf %348, %347 : vector<4x16xf32>
    %350 = arith.divf %348, %349 : vector<4x16xf32>
    %351 = vector.extract_strided_slice %331 {offsets = [0, 32], sizes = [4, 16], strides = [1, 1]} : vector<4x48xf32> to vector<4x16xf32>
    %352 = vector.extract_strided_slice %334 {offsets = [0, 32], sizes = [4, 16], strides = [1, 1]} : vector<4x48xf32> to vector<4x16xf32>
    %353 = arith.mulf %342, %352 : vector<4x16xf32>
    %354 = arith.addf %351, %353 : vector<4x16xf32>
    %355 = math.tanh %354 : vector<4x16xf32>
    %cst_64 = arith.constant 1.000000e+00 : f32
    %356 = vector.broadcast %cst_64 : f32 to vector<4x16xf32>
    %357 = arith.subf %356, %350 : vector<4x16xf32>
    %358 = arith.mulf %357, %355 : vector<4x16xf32>
    %359 = arith.mulf %350, %298 : vector<4x16xf32>
    %360 = arith.addf %358, %359 : vector<4x16xf32>
    %361 = vector.extract_strided_slice %17 {offsets = [0, 2, 0], sizes = [4, 1, 48], strides = [1, 1, 1]} : vector<4x8x48xf32> to vector<4x1x48xf32>
    %362 = vector.shape_cast %361 : vector<4x1x48xf32> to vector<4x48xf32>
    %cst_65 = arith.constant dense<0.000000e+00> : vector<4x48xf32>
    %363 = tpu.matmul %329, %5, %cst_65 {dimension_numbers = #tpu.dot_dimension_numbers<[1], [0], [0], [1], [0, 0, 1, 1], [], []>} : vector<4x16xf32>, vector<16x48xf32>, vector<4x48xf32> -> vector<4x48xf32>
    %364 = vector.broadcast %7 : vector<1x48xf32> to vector<4x48xf32>
    %365 = arith.addf %363, %364 : vector<4x48xf32>
    %366 = vector.extract_strided_slice %362 {offsets = [0, 0], sizes = [4, 16], strides = [1, 1]} : vector<4x48xf32> to vector<4x16xf32>
    %367 = vector.extract_strided_slice %365 {offsets = [0, 0], sizes = [4, 16], strides = [1, 1]} : vector<4x48xf32> to vector<4x16xf32>
    %368 = arith.addf %366, %367 : vector<4x16xf32>
    %369 = arith.negf %368 : vector<4x16xf32>
    %370 = math.exp %369 : vector<4x16xf32>
    %cst_66 = arith.constant 1.000000e+00 : f32
    %371 = vector.broadcast %cst_66 : f32 to vector<4x16xf32>
    %372 = arith.addf %371, %370 : vector<4x16xf32>
    %373 = arith.divf %371, %372 : vector<4x16xf32>
    %374 = vector.extract_strided_slice %362 {offsets = [0, 16], sizes = [4, 16], strides = [1, 1]} : vector<4x48xf32> to vector<4x16xf32>
    %375 = vector.extract_strided_slice %365 {offsets = [0, 16], sizes = [4, 16], strides = [1, 1]} : vector<4x48xf32> to vector<4x16xf32>
    %376 = arith.addf %374, %375 : vector<4x16xf32>
    %377 = arith.negf %376 : vector<4x16xf32>
    %378 = math.exp %377 : vector<4x16xf32>
    %cst_67 = arith.constant 1.000000e+00 : f32
    %379 = vector.broadcast %cst_67 : f32 to vector<4x16xf32>
    %380 = arith.addf %379, %378 : vector<4x16xf32>
    %381 = arith.divf %379, %380 : vector<4x16xf32>
    %382 = vector.extract_strided_slice %362 {offsets = [0, 32], sizes = [4, 16], strides = [1, 1]} : vector<4x48xf32> to vector<4x16xf32>
    %383 = vector.extract_strided_slice %365 {offsets = [0, 32], sizes = [4, 16], strides = [1, 1]} : vector<4x48xf32> to vector<4x16xf32>
    %384 = arith.mulf %373, %383 : vector<4x16xf32>
    %385 = arith.addf %382, %384 : vector<4x16xf32>
    %386 = math.tanh %385 : vector<4x16xf32>
    %cst_68 = arith.constant 1.000000e+00 : f32
    %387 = vector.broadcast %cst_68 : f32 to vector<4x16xf32>
    %388 = arith.subf %387, %381 : vector<4x16xf32>
    %389 = arith.mulf %388, %386 : vector<4x16xf32>
    %390 = arith.mulf %381, %329 : vector<4x16xf32>
    %391 = arith.addf %389, %390 : vector<4x16xf32>
    %392 = vector.extract_strided_slice %13 {offsets = [0, 6, 0], sizes = [4, 1, 48], strides = [1, 1, 1]} : vector<4x8x48xf32> to vector<4x1x48xf32>
    %393 = vector.shape_cast %392 : vector<4x1x48xf32> to vector<4x48xf32>
    %cst_69 = arith.constant dense<0.000000e+00> : vector<4x48xf32>
    %394 = tpu.matmul %360, %1, %cst_69 {dimension_numbers = #tpu.dot_dimension_numbers<[1], [0], [0], [1], [0, 0, 1, 1], [], []>} : vector<4x16xf32>, vector<16x48xf32>, vector<4x48xf32> -> vector<4x48xf32>
    %395 = vector.broadcast %3 : vector<1x48xf32> to vector<4x48xf32>
    %396 = arith.addf %394, %395 : vector<4x48xf32>
    %397 = vector.extract_strided_slice %393 {offsets = [0, 0], sizes = [4, 16], strides = [1, 1]} : vector<4x48xf32> to vector<4x16xf32>
    %398 = vector.extract_strided_slice %396 {offsets = [0, 0], sizes = [4, 16], strides = [1, 1]} : vector<4x48xf32> to vector<4x16xf32>
    %399 = arith.addf %397, %398 : vector<4x16xf32>
    %400 = arith.negf %399 : vector<4x16xf32>
    %401 = math.exp %400 : vector<4x16xf32>
    %cst_70 = arith.constant 1.000000e+00 : f32
    %402 = vector.broadcast %cst_70 : f32 to vector<4x16xf32>
    %403 = arith.addf %402, %401 : vector<4x16xf32>
    %404 = arith.divf %402, %403 : vector<4x16xf32>
    %405 = vector.extract_strided_slice %393 {offsets = [0, 16], sizes = [4, 16], strides = [1, 1]} : vector<4x48xf32> to vector<4x16xf32>
    %406 = vector.extract_strided_slice %396 {offsets = [0, 16], sizes = [4, 16], strides = [1, 1]} : vector<4x48xf32> to vector<4x16xf32>
    %407 = arith.addf %405, %406 : vector<4x16xf32>
    %408 = arith.negf %407 : vector<4x16xf32>
    %409 = math.exp %408 : vector<4x16xf32>
    %cst_71 = arith.constant 1.000000e+00 : f32
    %410 = vector.broadcast %cst_71 : f32 to vector<4x16xf32>
    %411 = arith.addf %410, %409 : vector<4x16xf32>
    %412 = arith.divf %410, %411 : vector<4x16xf32>
    %413 = vector.extract_strided_slice %393 {offsets = [0, 32], sizes = [4, 16], strides = [1, 1]} : vector<4x48xf32> to vector<4x16xf32>
    %414 = vector.extract_strided_slice %396 {offsets = [0, 32], sizes = [4, 16], strides = [1, 1]} : vector<4x48xf32> to vector<4x16xf32>
    %415 = arith.mulf %404, %414 : vector<4x16xf32>
    %416 = arith.addf %413, %415 : vector<4x16xf32>
    %417 = math.tanh %416 : vector<4x16xf32>
    %cst_72 = arith.constant 1.000000e+00 : f32
    %418 = vector.broadcast %cst_72 : f32 to vector<4x16xf32>
    %419 = arith.subf %418, %412 : vector<4x16xf32>
    %420 = arith.mulf %419, %417 : vector<4x16xf32>
    %421 = arith.mulf %412, %360 : vector<4x16xf32>
    %422 = arith.addf %420, %421 : vector<4x16xf32>
    %423 = vector.extract_strided_slice %17 {offsets = [0, 1, 0], sizes = [4, 1, 48], strides = [1, 1, 1]} : vector<4x8x48xf32> to vector<4x1x48xf32>
    %424 = vector.shape_cast %423 : vector<4x1x48xf32> to vector<4x48xf32>
    %cst_73 = arith.constant dense<0.000000e+00> : vector<4x48xf32>
    %425 = tpu.matmul %391, %5, %cst_73 {dimension_numbers = #tpu.dot_dimension_numbers<[1], [0], [0], [1], [0, 0, 1, 1], [], []>} : vector<4x16xf32>, vector<16x48xf32>, vector<4x48xf32> -> vector<4x48xf32>
    %426 = vector.broadcast %7 : vector<1x48xf32> to vector<4x48xf32>
    %427 = arith.addf %425, %426 : vector<4x48xf32>
    %428 = vector.extract_strided_slice %424 {offsets = [0, 0], sizes = [4, 16], strides = [1, 1]} : vector<4x48xf32> to vector<4x16xf32>
    %429 = vector.extract_strided_slice %427 {offsets = [0, 0], sizes = [4, 16], strides = [1, 1]} : vector<4x48xf32> to vector<4x16xf32>
    %430 = arith.addf %428, %429 : vector<4x16xf32>
    %431 = arith.negf %430 : vector<4x16xf32>
    %432 = math.exp %431 : vector<4x16xf32>
    %cst_74 = arith.constant 1.000000e+00 : f32
    %433 = vector.broadcast %cst_74 : f32 to vector<4x16xf32>
    %434 = arith.addf %433, %432 : vector<4x16xf32>
    %435 = arith.divf %433, %434 : vector<4x16xf32>
    %436 = vector.extract_strided_slice %424 {offsets = [0, 16], sizes = [4, 16], strides = [1, 1]} : vector<4x48xf32> to vector<4x16xf32>
    %437 = vector.extract_strided_slice %427 {offsets = [0, 16], sizes = [4, 16], strides = [1, 1]} : vector<4x48xf32> to vector<4x16xf32>
    %438 = arith.addf %436, %437 : vector<4x16xf32>
    %439 = arith.negf %438 : vector<4x16xf32>
    %440 = math.exp %439 : vector<4x16xf32>
    %cst_75 = arith.constant 1.000000e+00 : f32
    %441 = vector.broadcast %cst_75 : f32 to vector<4x16xf32>
    %442 = arith.addf %441, %440 : vector<4x16xf32>
    %443 = arith.divf %441, %442 : vector<4x16xf32>
    %444 = vector.extract_strided_slice %424 {offsets = [0, 32], sizes = [4, 16], strides = [1, 1]} : vector<4x48xf32> to vector<4x16xf32>
    %445 = vector.extract_strided_slice %427 {offsets = [0, 32], sizes = [4, 16], strides = [1, 1]} : vector<4x48xf32> to vector<4x16xf32>
    %446 = arith.mulf %435, %445 : vector<4x16xf32>
    %447 = arith.addf %444, %446 : vector<4x16xf32>
    %448 = math.tanh %447 : vector<4x16xf32>
    %cst_76 = arith.constant 1.000000e+00 : f32
    %449 = vector.broadcast %cst_76 : f32 to vector<4x16xf32>
    %450 = arith.subf %449, %443 : vector<4x16xf32>
    %451 = arith.mulf %450, %448 : vector<4x16xf32>
    %452 = arith.mulf %443, %391 : vector<4x16xf32>
    %453 = arith.addf %451, %452 : vector<4x16xf32>
    %454 = vector.extract_strided_slice %13 {offsets = [0, 7, 0], sizes = [4, 1, 48], strides = [1, 1, 1]} : vector<4x8x48xf32> to vector<4x1x48xf32>
    %455 = vector.shape_cast %454 : vector<4x1x48xf32> to vector<4x48xf32>
    %cst_77 = arith.constant dense<0.000000e+00> : vector<4x48xf32>
    %456 = tpu.matmul %422, %1, %cst_77 {dimension_numbers = #tpu.dot_dimension_numbers<[1], [0], [0], [1], [0, 0, 1, 1], [], []>} : vector<4x16xf32>, vector<16x48xf32>, vector<4x48xf32> -> vector<4x48xf32>
    %457 = vector.broadcast %3 : vector<1x48xf32> to vector<4x48xf32>
    %458 = arith.addf %456, %457 : vector<4x48xf32>
    %459 = vector.extract_strided_slice %455 {offsets = [0, 0], sizes = [4, 16], strides = [1, 1]} : vector<4x48xf32> to vector<4x16xf32>
    %460 = vector.extract_strided_slice %458 {offsets = [0, 0], sizes = [4, 16], strides = [1, 1]} : vector<4x48xf32> to vector<4x16xf32>
    %461 = arith.addf %459, %460 : vector<4x16xf32>
    %462 = arith.negf %461 : vector<4x16xf32>
    %463 = math.exp %462 : vector<4x16xf32>
    %cst_78 = arith.constant 1.000000e+00 : f32
    %464 = vector.broadcast %cst_78 : f32 to vector<4x16xf32>
    %465 = arith.addf %464, %463 : vector<4x16xf32>
    %466 = arith.divf %464, %465 : vector<4x16xf32>
    %467 = vector.extract_strided_slice %455 {offsets = [0, 16], sizes = [4, 16], strides = [1, 1]} : vector<4x48xf32> to vector<4x16xf32>
    %468 = vector.extract_strided_slice %458 {offsets = [0, 16], sizes = [4, 16], strides = [1, 1]} : vector<4x48xf32> to vector<4x16xf32>
    %469 = arith.addf %467, %468 : vector<4x16xf32>
    %470 = arith.negf %469 : vector<4x16xf32>
    %471 = math.exp %470 : vector<4x16xf32>
    %cst_79 = arith.constant 1.000000e+00 : f32
    %472 = vector.broadcast %cst_79 : f32 to vector<4x16xf32>
    %473 = arith.addf %472, %471 : vector<4x16xf32>
    %474 = arith.divf %472, %473 : vector<4x16xf32>
    %475 = vector.extract_strided_slice %455 {offsets = [0, 32], sizes = [4, 16], strides = [1, 1]} : vector<4x48xf32> to vector<4x16xf32>
    %476 = vector.extract_strided_slice %458 {offsets = [0, 32], sizes = [4, 16], strides = [1, 1]} : vector<4x48xf32> to vector<4x16xf32>
    %477 = arith.mulf %466, %476 : vector<4x16xf32>
    %478 = arith.addf %475, %477 : vector<4x16xf32>
    %479 = math.tanh %478 : vector<4x16xf32>
    %cst_80 = arith.constant 1.000000e+00 : f32
    %480 = vector.broadcast %cst_80 : f32 to vector<4x16xf32>
    %481 = arith.subf %480, %474 : vector<4x16xf32>
    %482 = arith.mulf %481, %479 : vector<4x16xf32>
    %483 = arith.mulf %474, %422 : vector<4x16xf32>
    %484 = arith.addf %482, %483 : vector<4x16xf32>
    %485 = vector.extract_strided_slice %17 {offsets = [0, 0, 0], sizes = [4, 1, 48], strides = [1, 1, 1]} : vector<4x8x48xf32> to vector<4x1x48xf32>
    %486 = vector.shape_cast %485 : vector<4x1x48xf32> to vector<4x48xf32>
    %cst_81 = arith.constant dense<0.000000e+00> : vector<4x48xf32>
    %487 = tpu.matmul %453, %5, %cst_81 {dimension_numbers = #tpu.dot_dimension_numbers<[1], [0], [0], [1], [0, 0, 1, 1], [], []>} : vector<4x16xf32>, vector<16x48xf32>, vector<4x48xf32> -> vector<4x48xf32>
    %488 = vector.broadcast %7 : vector<1x48xf32> to vector<4x48xf32>
    %489 = arith.addf %487, %488 : vector<4x48xf32>
    %490 = vector.extract_strided_slice %486 {offsets = [0, 0], sizes = [4, 16], strides = [1, 1]} : vector<4x48xf32> to vector<4x16xf32>
    %491 = vector.extract_strided_slice %489 {offsets = [0, 0], sizes = [4, 16], strides = [1, 1]} : vector<4x48xf32> to vector<4x16xf32>
    %492 = arith.addf %490, %491 : vector<4x16xf32>
    %493 = arith.negf %492 : vector<4x16xf32>
    %494 = math.exp %493 : vector<4x16xf32>
    %cst_82 = arith.constant 1.000000e+00 : f32
    %495 = vector.broadcast %cst_82 : f32 to vector<4x16xf32>
    %496 = arith.addf %495, %494 : vector<4x16xf32>
    %497 = arith.divf %495, %496 : vector<4x16xf32>
    %498 = vector.extract_strided_slice %486 {offsets = [0, 16], sizes = [4, 16], strides = [1, 1]} : vector<4x48xf32> to vector<4x16xf32>
    %499 = vector.extract_strided_slice %489 {offsets = [0, 16], sizes = [4, 16], strides = [1, 1]} : vector<4x48xf32> to vector<4x16xf32>
    %500 = arith.addf %498, %499 : vector<4x16xf32>
    %501 = arith.negf %500 : vector<4x16xf32>
    %502 = math.exp %501 : vector<4x16xf32>
    %cst_83 = arith.constant 1.000000e+00 : f32
    %503 = vector.broadcast %cst_83 : f32 to vector<4x16xf32>
    %504 = arith.addf %503, %502 : vector<4x16xf32>
    %505 = arith.divf %503, %504 : vector<4x16xf32>
    %506 = vector.extract_strided_slice %486 {offsets = [0, 32], sizes = [4, 16], strides = [1, 1]} : vector<4x48xf32> to vector<4x16xf32>
    %507 = vector.extract_strided_slice %489 {offsets = [0, 32], sizes = [4, 16], strides = [1, 1]} : vector<4x48xf32> to vector<4x16xf32>
    %508 = arith.mulf %497, %507 : vector<4x16xf32>
    %509 = arith.addf %506, %508 : vector<4x16xf32>
    %510 = math.tanh %509 : vector<4x16xf32>
    %cst_84 = arith.constant 1.000000e+00 : f32
    %511 = vector.broadcast %cst_84 : f32 to vector<4x16xf32>
    %512 = arith.subf %511, %505 : vector<4x16xf32>
    %513 = arith.mulf %512, %510 : vector<4x16xf32>
    %514 = arith.mulf %505, %453 : vector<4x16xf32>
    %515 = arith.addf %513, %514 : vector<4x16xf32>
    %516 = tpu.concatenate %50, %515 in 1 : vector<4x16xf32>, vector<4x16xf32> -> vector<4x32xf32>
    %517 = tpu.concatenate %112, %453 in 1 : vector<4x16xf32>, vector<4x16xf32> -> vector<4x32xf32>
    %518 = tpu.concatenate %174, %391 in 1 : vector<4x16xf32>, vector<4x16xf32> -> vector<4x32xf32>
    %519 = tpu.concatenate %236, %329 in 1 : vector<4x16xf32>, vector<4x16xf32> -> vector<4x32xf32>
    %520 = tpu.concatenate %298, %267 in 1 : vector<4x16xf32>, vector<4x16xf32> -> vector<4x32xf32>
    %521 = tpu.concatenate %360, %205 in 1 : vector<4x16xf32>, vector<4x16xf32> -> vector<4x32xf32>
    %522 = tpu.concatenate %422, %143 in 1 : vector<4x16xf32>, vector<4x16xf32> -> vector<4x32xf32>
    %523 = tpu.concatenate %484, %81 in 1 : vector<4x16xf32>, vector<4x16xf32> -> vector<4x32xf32>
    %c0_85 = arith.constant 0 : index
    %c0_86 = arith.constant 0 : index
    %524 = vector.load %arg10[%c0_85, %c0_86] : memref<32x32xf32, #tpu.memory_space<vmem>>, vector<32x32xf32>
    %c0_87 = arith.constant 0 : index
    %c0_88 = arith.constant 0 : index
    %525 = vector.load %arg11[%c0_87, %c0_88] : memref<1x32xf32, #tpu.memory_space<vmem>>, vector<1x32xf32>
    %c0_89 = arith.constant 0 : index
    %c0_90 = arith.constant 0 : index
    %526 = vector.load %arg12[%c0_89, %c0_90] : memref<1x32xf32, #tpu.memory_space<vmem>>, vector<1x32xf32>
    %cst_91 = arith.constant dense<0.000000e+00> : vector<4x32xf32>
    %527 = tpu.matmul %516, %524, %cst_91 {dimension_numbers = #tpu.dot_dimension_numbers<[1], [0], [0], [1], [0, 0, 1, 1], [], []>} : vector<4x32xf32>, vector<32x32xf32>, vector<4x32xf32> -> vector<4x32xf32>
    %528 = vector.broadcast %525 : vector<1x32xf32> to vector<4x32xf32>
    %529 = arith.addf %527, %528 : vector<4x32xf32>
    %530 = math.tanh %529 : vector<4x32xf32>
    %531 = vector.broadcast %526 : vector<1x32xf32> to vector<4x32xf32>
    %532 = arith.mulf %530, %531 : vector<4x32xf32>
    %cst_92 = arith.constant dense<0.000000e+00> : vector<4xf32>
    %533 = vector.multi_reduction <add>, %532, %cst_92 [1] : vector<4x32xf32> to vector<4xf32>
    %534 = vector.shape_cast %533 : vector<4xf32> to vector<4x1xf32>
    %cst_93 = arith.constant dense<0.000000e+00> : vector<4x32xf32>
    %535 = tpu.matmul %517, %524, %cst_93 {dimension_numbers = #tpu.dot_dimension_numbers<[1], [0], [0], [1], [0, 0, 1, 1], [], []>} : vector<4x32xf32>, vector<32x32xf32>, vector<4x32xf32> -> vector<4x32xf32>
    %536 = vector.broadcast %525 : vector<1x32xf32> to vector<4x32xf32>
    %537 = arith.addf %535, %536 : vector<4x32xf32>
    %538 = math.tanh %537 : vector<4x32xf32>
    %539 = vector.broadcast %526 : vector<1x32xf32> to vector<4x32xf32>
    %540 = arith.mulf %538, %539 : vector<4x32xf32>
    %cst_94 = arith.constant dense<0.000000e+00> : vector<4xf32>
    %541 = vector.multi_reduction <add>, %540, %cst_94 [1] : vector<4x32xf32> to vector<4xf32>
    %542 = vector.shape_cast %541 : vector<4xf32> to vector<4x1xf32>
    %cst_95 = arith.constant dense<0.000000e+00> : vector<4x32xf32>
    %543 = tpu.matmul %518, %524, %cst_95 {dimension_numbers = #tpu.dot_dimension_numbers<[1], [0], [0], [1], [0, 0, 1, 1], [], []>} : vector<4x32xf32>, vector<32x32xf32>, vector<4x32xf32> -> vector<4x32xf32>
    %544 = vector.broadcast %525 : vector<1x32xf32> to vector<4x32xf32>
    %545 = arith.addf %543, %544 : vector<4x32xf32>
    %546 = math.tanh %545 : vector<4x32xf32>
    %547 = vector.broadcast %526 : vector<1x32xf32> to vector<4x32xf32>
    %548 = arith.mulf %546, %547 : vector<4x32xf32>
    %cst_96 = arith.constant dense<0.000000e+00> : vector<4xf32>
    %549 = vector.multi_reduction <add>, %548, %cst_96 [1] : vector<4x32xf32> to vector<4xf32>
    %550 = vector.shape_cast %549 : vector<4xf32> to vector<4x1xf32>
    %cst_97 = arith.constant dense<0.000000e+00> : vector<4x32xf32>
    %551 = tpu.matmul %519, %524, %cst_97 {dimension_numbers = #tpu.dot_dimension_numbers<[1], [0], [0], [1], [0, 0, 1, 1], [], []>} : vector<4x32xf32>, vector<32x32xf32>, vector<4x32xf32> -> vector<4x32xf32>
    %552 = vector.broadcast %525 : vector<1x32xf32> to vector<4x32xf32>
    %553 = arith.addf %551, %552 : vector<4x32xf32>
    %554 = math.tanh %553 : vector<4x32xf32>
    %555 = vector.broadcast %526 : vector<1x32xf32> to vector<4x32xf32>
    %556 = arith.mulf %554, %555 : vector<4x32xf32>
    %cst_98 = arith.constant dense<0.000000e+00> : vector<4xf32>
    %557 = vector.multi_reduction <add>, %556, %cst_98 [1] : vector<4x32xf32> to vector<4xf32>
    %558 = vector.shape_cast %557 : vector<4xf32> to vector<4x1xf32>
    %cst_99 = arith.constant dense<0.000000e+00> : vector<4x32xf32>
    %559 = tpu.matmul %520, %524, %cst_99 {dimension_numbers = #tpu.dot_dimension_numbers<[1], [0], [0], [1], [0, 0, 1, 1], [], []>} : vector<4x32xf32>, vector<32x32xf32>, vector<4x32xf32> -> vector<4x32xf32>
    %560 = vector.broadcast %525 : vector<1x32xf32> to vector<4x32xf32>
    %561 = arith.addf %559, %560 : vector<4x32xf32>
    %562 = math.tanh %561 : vector<4x32xf32>
    %563 = vector.broadcast %526 : vector<1x32xf32> to vector<4x32xf32>
    %564 = arith.mulf %562, %563 : vector<4x32xf32>
    %cst_100 = arith.constant dense<0.000000e+00> : vector<4xf32>
    %565 = vector.multi_reduction <add>, %564, %cst_100 [1] : vector<4x32xf32> to vector<4xf32>
    %566 = vector.shape_cast %565 : vector<4xf32> to vector<4x1xf32>
    %cst_101 = arith.constant dense<0.000000e+00> : vector<4x32xf32>
    %567 = tpu.matmul %521, %524, %cst_101 {dimension_numbers = #tpu.dot_dimension_numbers<[1], [0], [0], [1], [0, 0, 1, 1], [], []>} : vector<4x32xf32>, vector<32x32xf32>, vector<4x32xf32> -> vector<4x32xf32>
    %568 = vector.broadcast %525 : vector<1x32xf32> to vector<4x32xf32>
    %569 = arith.addf %567, %568 : vector<4x32xf32>
    %570 = math.tanh %569 : vector<4x32xf32>
    %571 = vector.broadcast %526 : vector<1x32xf32> to vector<4x32xf32>
    %572 = arith.mulf %570, %571 : vector<4x32xf32>
    %cst_102 = arith.constant dense<0.000000e+00> : vector<4xf32>
    %573 = vector.multi_reduction <add>, %572, %cst_102 [1] : vector<4x32xf32> to vector<4xf32>
    %574 = vector.shape_cast %573 : vector<4xf32> to vector<4x1xf32>
    %cst_103 = arith.constant dense<0.000000e+00> : vector<4x32xf32>
    %575 = tpu.matmul %522, %524, %cst_103 {dimension_numbers = #tpu.dot_dimension_numbers<[1], [0], [0], [1], [0, 0, 1, 1], [], []>} : vector<4x32xf32>, vector<32x32xf32>, vector<4x32xf32> -> vector<4x32xf32>
    %576 = vector.broadcast %525 : vector<1x32xf32> to vector<4x32xf32>
    %577 = arith.addf %575, %576 : vector<4x32xf32>
    %578 = math.tanh %577 : vector<4x32xf32>
    %579 = vector.broadcast %526 : vector<1x32xf32> to vector<4x32xf32>
    %580 = arith.mulf %578, %579 : vector<4x32xf32>
    %cst_104 = arith.constant dense<0.000000e+00> : vector<4xf32>
    %581 = vector.multi_reduction <add>, %580, %cst_104 [1] : vector<4x32xf32> to vector<4xf32>
    %582 = vector.shape_cast %581 : vector<4xf32> to vector<4x1xf32>
    %cst_105 = arith.constant dense<0.000000e+00> : vector<4x32xf32>
    %583 = tpu.matmul %523, %524, %cst_105 {dimension_numbers = #tpu.dot_dimension_numbers<[1], [0], [0], [1], [0, 0, 1, 1], [], []>} : vector<4x32xf32>, vector<32x32xf32>, vector<4x32xf32> -> vector<4x32xf32>
    %584 = vector.broadcast %525 : vector<1x32xf32> to vector<4x32xf32>
    %585 = arith.addf %583, %584 : vector<4x32xf32>
    %586 = math.tanh %585 : vector<4x32xf32>
    %587 = vector.broadcast %526 : vector<1x32xf32> to vector<4x32xf32>
    %588 = arith.mulf %586, %587 : vector<4x32xf32>
    %cst_106 = arith.constant dense<0.000000e+00> : vector<4xf32>
    %589 = vector.multi_reduction <add>, %588, %cst_106 [1] : vector<4x32xf32> to vector<4xf32>
    %590 = vector.shape_cast %589 : vector<4xf32> to vector<4x1xf32>
    %591 = tpu.concatenate %534, %542, %550, %558, %566, %574, %582, %590 in 1 : vector<4x1xf32>, vector<4x1xf32>, vector<4x1xf32>, vector<4x1xf32>, vector<4x1xf32>, vector<4x1xf32>, vector<4x1xf32>, vector<4x1xf32> -> vector<4x8xf32>
    %cst_107 = arith.constant dense<0xFF800000> : vector<4xf32>
    %592 = vector.multi_reduction <maximumf>, %591, %cst_107 [1] : vector<4x8xf32> to vector<4xf32>
    %593 = vector.shape_cast %592 : vector<4xf32> to vector<4x1xf32>
    %594 = vector.broadcast %593 : vector<4x1xf32> to vector<4x8xf32>
    %595 = arith.subf %591, %594 : vector<4x8xf32>
    %596 = math.exp %595 : vector<4x8xf32>
    %cst_108 = arith.constant dense<0.000000e+00> : vector<4xf32>
    %597 = vector.multi_reduction <add>, %596, %cst_108 [1] : vector<4x8xf32> to vector<4xf32>
    %598 = vector.shape_cast %597 : vector<4xf32> to vector<4x1xf32>
    %599 = vector.broadcast %598 : vector<4x1xf32> to vector<4x8xf32>
    %600 = arith.divf %596, %599 : vector<4x8xf32>
    %cst_109 = arith.constant 0.000000e+00 : f32
    %601 = vector.broadcast %cst_109 : f32 to vector<4x32xf32>
    %602 = vector.extract_strided_slice %600 {offsets = [0, 0], sizes = [4, 1], strides = [1, 1]} : vector<4x8xf32> to vector<4x1xf32>
    %603 = vector.broadcast %602 : vector<4x1xf32> to vector<4x32xf32>
    %604 = arith.mulf %603, %516 : vector<4x32xf32>
    %605 = arith.addf %601, %604 : vector<4x32xf32>
    %606 = vector.extract_strided_slice %600 {offsets = [0, 1], sizes = [4, 1], strides = [1, 1]} : vector<4x8xf32> to vector<4x1xf32>
    %607 = vector.broadcast %606 : vector<4x1xf32> to vector<4x32xf32>
    %608 = arith.mulf %607, %517 : vector<4x32xf32>
    %609 = arith.addf %605, %608 : vector<4x32xf32>
    %610 = vector.extract_strided_slice %600 {offsets = [0, 2], sizes = [4, 1], strides = [1, 1]} : vector<4x8xf32> to vector<4x1xf32>
    %611 = vector.broadcast %610 : vector<4x1xf32> to vector<4x32xf32>
    %612 = arith.mulf %611, %518 : vector<4x32xf32>
    %613 = arith.addf %609, %612 : vector<4x32xf32>
    %614 = vector.extract_strided_slice %600 {offsets = [0, 3], sizes = [4, 1], strides = [1, 1]} : vector<4x8xf32> to vector<4x1xf32>
    %615 = vector.broadcast %614 : vector<4x1xf32> to vector<4x32xf32>
    %616 = arith.mulf %615, %519 : vector<4x32xf32>
    %617 = arith.addf %613, %616 : vector<4x32xf32>
    %618 = vector.extract_strided_slice %600 {offsets = [0, 4], sizes = [4, 1], strides = [1, 1]} : vector<4x8xf32> to vector<4x1xf32>
    %619 = vector.broadcast %618 : vector<4x1xf32> to vector<4x32xf32>
    %620 = arith.mulf %619, %520 : vector<4x32xf32>
    %621 = arith.addf %617, %620 : vector<4x32xf32>
    %622 = vector.extract_strided_slice %600 {offsets = [0, 5], sizes = [4, 1], strides = [1, 1]} : vector<4x8xf32> to vector<4x1xf32>
    %623 = vector.broadcast %622 : vector<4x1xf32> to vector<4x32xf32>
    %624 = arith.mulf %623, %521 : vector<4x32xf32>
    %625 = arith.addf %621, %624 : vector<4x32xf32>
    %626 = vector.extract_strided_slice %600 {offsets = [0, 6], sizes = [4, 1], strides = [1, 1]} : vector<4x8xf32> to vector<4x1xf32>
    %627 = vector.broadcast %626 : vector<4x1xf32> to vector<4x32xf32>
    %628 = arith.mulf %627, %522 : vector<4x32xf32>
    %629 = arith.addf %625, %628 : vector<4x32xf32>
    %630 = vector.extract_strided_slice %600 {offsets = [0, 7], sizes = [4, 1], strides = [1, 1]} : vector<4x8xf32> to vector<4x1xf32>
    %631 = vector.broadcast %630 : vector<4x1xf32> to vector<4x32xf32>
    %632 = arith.mulf %631, %523 : vector<4x32xf32>
    %633 = arith.addf %629, %632 : vector<4x32xf32>
    %c0_110 = arith.constant 0 : index
    %c0_111 = arith.constant 0 : index
    %c0_112 = arith.constant 0 : index
    %634 = vector.load %arg13[%c0_110, %c0_111, %c0_112] : memref<1x4x32xf32, #tpu.memory_space<vmem>>, vector<1x4x32xf32>
    %635 = vector.shape_cast %634 : vector<1x4x32xf32> to vector<4x32xf32>
    %636 = vector.shape_cast %633 : vector<4x32xf32> to vector<1x4x32xf32>
    tpu.vector_store %arg13[%c0_110, %c0_111, %c0_112], %636 {strides = array<i32>} : memref<1x4x32xf32, #tpu.memory_space<vmem>>, vector<1x4x32xf32>,
    %c0_113 = arith.constant 0 : index
    %c0_114 = arith.constant 0 : index
    %c0_115 = arith.constant 0 : index
    %637 = vector.load %arg14[%c0_113, %c0_114, %c0_115] : memref<1x4x8xf32, #tpu.memory_space<vmem>>, vector<1x4x8xf32>
    %638 = vector.shape_cast %637 : vector<1x4x8xf32> to vector<4x8xf32>
    %639 = vector.shape_cast %600 : vector<4x8xf32> to vector<1x4x8xf32>
    tpu.vector_store %arg14[%c0_113, %c0_114, %c0_115], %639 {strides = array<i32>} : memref<1x4x8xf32, #tpu.memory_space<vmem>>, vector<1x4x8xf32>,
    return
  }
  func.func @transform_0(%arg0: i32) -> (i32, i32, i32) {
    %c0_i32 = arith.constant 0 : i32
    %c0_i32_0 = arith.constant 0 : i32
    %c0_i32_1 = arith.constant 0 : i32
    return %arg0, %c0_i32, %c0_i32_0 : i32, i32, i32
  }
  func.func @transform_1(%arg0: i32) -> (i32, i32) {
    %c0_i32 = arith.constant 0 : i32
    %c0_i32_0 = arith.constant 0 : i32
    %c0_i32_1 = arith.constant 0 : i32
    return %c0_i32, %c0_i32_0 : i32, i32
  }
  func.func @transform_2(%arg0: i32) -> (i32, i32) {
    %c0_i32 = arith.constant 0 : i32
    %c0_i32_0 = arith.constant 0 : i32
    %c0_i32_1 = arith.constant 0 : i32
    return %c0_i32, %c0_i32_0 : i32, i32
  }
  func.func @transform_3(%arg0: i32) -> (i32, i32) {
    %c0_i32 = arith.constant 0 : i32
    %c0_i32_0 = arith.constant 0 : i32
    %c0_i32_1 = arith.constant 0 : i32
    return %c0_i32, %c0_i32_0 : i32, i32
  }
  func.func @transform_4(%arg0: i32) -> (i32, i32) {
    %c0_i32 = arith.constant 0 : i32
    %c0_i32_0 = arith.constant 0 : i32
    %c0_i32_1 = arith.constant 0 : i32
    return %c0_i32, %c0_i32_0 : i32, i32
  }
  func.func @transform_5(%arg0: i32) -> (i32, i32) {
    %c0_i32 = arith.constant 0 : i32
    %c0_i32_0 = arith.constant 0 : i32
    %c0_i32_1 = arith.constant 0 : i32
    return %c0_i32, %c0_i32_0 : i32, i32
  }
  func.func @transform_6(%arg0: i32) -> (i32, i32) {
    %c0_i32 = arith.constant 0 : i32
    %c0_i32_0 = arith.constant 0 : i32
    %c0_i32_1 = arith.constant 0 : i32
    return %c0_i32, %c0_i32_0 : i32, i32
  }
  func.func @transform_7(%arg0: i32) -> (i32, i32) {
    %c0_i32 = arith.constant 0 : i32
    %c0_i32_0 = arith.constant 0 : i32
    %c0_i32_1 = arith.constant 0 : i32
    return %c0_i32, %c0_i32_0 : i32, i32
  }
  func.func @transform_8(%arg0: i32) -> (i32, i32) {
    %c0_i32 = arith.constant 0 : i32
    %c0_i32_0 = arith.constant 0 : i32
    %c0_i32_1 = arith.constant 0 : i32
    return %c0_i32, %c0_i32_0 : i32, i32
  }
  func.func @transform_9(%arg0: i32) -> (i32, i32) {
    %c0_i32 = arith.constant 0 : i32
    %c0_i32_0 = arith.constant 0 : i32
    %c0_i32_1 = arith.constant 0 : i32
    return %c0_i32, %c0_i32_0 : i32, i32
  }
  func.func @transform_10(%arg0: i32) -> (i32, i32) {
    %c0_i32 = arith.constant 0 : i32
    %c0_i32_0 = arith.constant 0 : i32
    %c0_i32_1 = arith.constant 0 : i32
    return %c0_i32, %c0_i32_0 : i32, i32
  }
  func.func @transform_11(%arg0: i32) -> (i32, i32) {
    %c0_i32 = arith.constant 0 : i32
    %c0_i32_0 = arith.constant 0 : i32
    %c0_i32_1 = arith.constant 0 : i32
    return %c0_i32, %c0_i32_0 : i32, i32
  }
  func.func @transform_12(%arg0: i32) -> (i32, i32, i32) {
    %c0_i32 = arith.constant 0 : i32
    %c0_i32_0 = arith.constant 0 : i32
    %c0_i32_1 = arith.constant 0 : i32
    return %arg0, %c0_i32, %c0_i32_0 : i32, i32, i32
  }
  func.func @transform_13(%arg0: i32) -> (i32, i32, i32) {
    %c0_i32 = arith.constant 0 : i32
    %c0_i32_0 = arith.constant 0 : i32
    %c0_i32_1 = arith.constant 0 : i32
    return %arg0, %c0_i32, %c0_i32_0 : i32, i32, i32
  }
}

</mosaic_0001>

<llo_original>
// kernel: han_forward.3
$region0: #{han_forward.3}
  #allocation0 [shape = 'u32[]', space=smem, size = 0x4, offset = 0x4, fixed_abs, tag = 'smem constant byte address 0x4 - core index']
  #allocation1 [shape = 'u32[144,128]{1,0:T(1,128)}', space=vmem, size = 0x12000, scoped, tag = 'internal scratch']
  %s0 = inlined_call_operand.vmem [shape: f32[2,4,32], index: 0, kind: input, shape index: {}]
  %s1 = inlined_call_operand.vmem [shape: f32[32,48], index: 1, kind: input, shape index: {}]
  %s2 = inlined_call_operand.vmem [shape: f32[16,48], index: 2, kind: input, shape index: {}]
  %s3 = inlined_call_operand.vmem [shape: f32[1,48], index: 3, kind: input, shape index: {}]
  %s4 = inlined_call_operand.vmem [shape: f32[1,48], index: 4, kind: input, shape index: {}]
  %s5 = inlined_call_operand.vmem [shape: f32[32,48], index: 5, kind: input, shape index: {}]
  %s6 = inlined_call_operand.vmem [shape: f32[16,48], index: 6, kind: input, shape index: {}]
  %s7 = inlined_call_operand.vmem [shape: f32[1,48], index: 7, kind: input, shape index: {}]
  %s8 = inlined_call_operand.vmem [shape: f32[1,48], index: 8, kind: input, shape index: {}]
  %s9 = inlined_call_operand.vmem [shape: f32[32,32], index: 9, kind: input, shape index: {}]
  %s10 = inlined_call_operand.vmem [shape: f32[1,32], index: 10, kind: input, shape index: {}]
  %s11 = inlined_call_operand.vmem [shape: f32[1,32], index: 11, kind: input, shape index: {}]
  %s12 = inlined_call_operand.vmem [shape: f32[1,32], index: 12, kind: input, shape index: {}]
  %s13 = inlined_call_operand.vmem [shape: f32[1,32], index: 13, kind: input, shape index: {}]
  %s14 = inlined_call_operand.vmem [shape: f32[1,32], index: 14, kind: input, shape index: {}]
  %s15 = inlined_call_operand.vmem [shape: f32[1,32], index: 15, kind: input, shape index: {}]
  %s16 = inlined_call_operand.vmem [shape: f32[32,5], index: 16, kind: input, shape index: {}]
  %s17 = inlined_call_operand.vmem [shape: f32[1,5], index: 17, kind: input, shape index: {}]
  %s18 = inlined_call_operand.hbm [shape: f32[2,5], index: 18, kind: output, shape index: {0}]
  %s19 = inlined_call_operand.hbm [shape: f32[2,4], index: 19, kind: output, shape index: {1}]
  %20 = xla_tuple %s18, %s19
  %s21 = sld [smem:[#allocation0]]
  $region90: #{han_forward.3} parent=0
    _
  %s23 = ssub.s32 1, %s21
  %s24 = scalar_select 0, %s23, %s21
  $region1: #{han_forward.3} parent=0
    #allocation2 [shape = 'u8[1024]{0}', space=vmem, size = 0x400, scoped, tag = 'output window, operand 0, single buffered']
    #allocation3 [shape = 's32[1]{0}', space=sflag, size = 0x4, scoped, tag = 'scoped memory for han_forward.3']
    #allocation4 [shape = 'u8[1024]{0}', space=vmem, size = 0x400, scoped, tag = 'output window, operand 1, single buffered']
    #allocation5 [shape = 's32[1]{0}', space=sflag, size = 0x4, scoped, tag = 'scoped memory for han_forward.3']
    %25 = vsyncpa [#allocation3], 0
    %26 = vsyncpa [#allocation5], 0
    // Predicated region
    $region2: #{han_forward.3} parent=1 // pred_check
      _
    $region3: #{han_forward.3} parent=1 // pred_check_branch
      %28 = sbr.rel (0) target = $region5
    $region4: #{han_forward.3} parent=1 // pred_region
      _
    $region5: #{han_forward.3} parent=1 // pred_fallthru
      _
    // Predicated region
    $region6: #{han_forward.3} parent=1 // pred_check
      _
    $region7: #{han_forward.3} parent=1 // pred_check_branch
      %30 = sbr.rel (0) target = $region9
    $region8: #{han_forward.3} parent=1 // pred_region
      _
    $region9: #{han_forward.3} parent=1 // pred_fallthru
      _
    // Predicated region
    $region10: #{han_forward.3} parent=1 // pred_check
      _
    $region11: #{han_forward.3} parent=1 // pred_check_branch
      %32 = sbr.rel (0) target = $region13
    $region12: #{han_forward.3} parent=1 // pred_region
      _
    $region13: #{han_forward.3} parent=1 // pred_fallthru
      _
    // Predicated region
    $region14: #{han_forward.3} parent=1 // pred_check
      _
    $region15: #{han_forward.3} parent=1 // pred_check_branch
      %34 = sbr.rel (0) target = $region17
    $region16: #{han_forward.3} parent=1 // pred_region
      _
    $region17: #{han_forward.3} parent=1 // pred_fallthru
      _
    // Predicated region
    $region18: #{han_forward.3} parent=1 // pred_check
      _
    $region19: #{han_forward.3} parent=1 // pred_check_branch
      %36 = sbr.rel (0) target = $region21
    $region20: #{han_forward.3} parent=1 // pred_region
      _
    $region21: #{han_forward.3} parent=1 // pred_fallthru
      _
    // Predicated region
    $region22: #{han_forward.3} parent=1 // pred_check
      _
    $region23: #{han_forward.3} parent=1 // pred_check_branch
      %38 = sbr.rel (0) target = $region25
    $region24: #{han_forward.3} parent=1 // pred_region
      _
    $region25: #{han_forward.3} parent=1 // pred_fallthru
      _
    // Predicated region
    $region26: #{han_forward.3} parent=1 // pred_check
      _
    $region27: #{han_forward.3} parent=1 // pred_check_branch
      %40 = sbr.rel (0) target = $region29
    $region28: #{han_forward.3} parent=1 // pred_region
      _
    $region29: #{han_forward.3} parent=1 // pred_fallthru
      _
    // Predicated region
    $region30: #{han_forward.3} parent=1 // pred_check
      _
    $region31: #{han_forward.3} parent=1 // pred_check_branch
      %42 = sbr.rel (0) target = $region33
    $region32: #{han_forward.3} parent=1 // pred_region
      _
    $region33: #{han_forward.3} parent=1 // pred_fallthru
      _
    // Predicated region
    $region34: #{han_forward.3} parent=1 // pred_check
      _
    $region35: #{han_forward.3} parent=1 // pred_check_branch
      %44 = sbr.rel (0) target = $region37
    $region36: #{han_forward.3} parent=1 // pred_region
      _
    $region37: #{han_forward.3} parent=1 // pred_fallthru
      _
    // Predicated region
    $region38: #{han_forward.3} parent=1 // pred_check
      _
    $region39: #{han_forward.3} parent=1 // pred_check_branch
      %46 = sbr.rel (0) target = $region41
    $region40: #{han_forward.3} parent=1 // pred_region
      _
    $region41: #{han_forward.3} parent=1 // pred_fallthru
      _
    // Predicated region
    $region42: #{han_forward.3} parent=1 // pred_check
      _
    $region43: #{han_forward.3} parent=1 // pred_check_branch
      %48 = sbr.rel (0) target = $region45
    $region44: #{han_forward.3} parent=1 // pred_region
      _
    $region45: #{han_forward.3} parent=1 // pred_fallthru
      _
    // Predicated region
    $region46: #{han_forward.3} parent=1 // pred_check
      _
    $region47: #{han_forward.3} parent=1 // pred_check_branch
      %50 = sbr.rel (0) target = $region49
    $region48: #{han_forward.3} parent=1 // pred_region
      _
    $region49: #{han_forward.3} parent=1 // pred_fallthru
      _
    // Predicated region
    $region50: #{han_forward.3} parent=1 // pred_check
      _
    $region51: #{han_forward.3} parent=1 // pred_check_branch
      %52 = sbr.rel (0) target = $region53
    $region52: #{han_forward.3} parent=1 // pred_region
      _
    $region53: #{han_forward.3} parent=1 // pred_fallthru
      _
    // Predicated region
    $region54: #{han_forward.3} parent=1 // pred_check
      _
    $region55: #{han_forward.3} parent=1 // pred_check_branch
      %54 = sbr.rel (0) target = $region57
    $region56: #{han_forward.3} parent=1 // pred_region
      _
    $region57: #{han_forward.3} parent=1 // pred_fallthru
      _
    // Predicated region
    $region58: #{han_forward.3} parent=1 // pred_check
      _
    $region59: #{han_forward.3} parent=1 // pred_check_branch
      %56 = sbr.rel (0) target = $region61
    $region60: #{han_forward.3} parent=1 // pred_region
      _
    $region61: #{han_forward.3} parent=1 // pred_fallthru
      _
    // Predicated region
    $region62: #{han_forward.3} parent=1 // pred_check
      _
    $region63: #{han_forward.3} parent=1 // pred_check_branch
      %58 = sbr.rel (0) target = $region65
    $region64: #{han_forward.3} parent=1 // pred_region
      _
    $region65: #{han_forward.3} parent=1 // pred_fallthru
      _
    // Predicated region
    $region66: #{han_forward.3} parent=1 // pred_check
      _
    $region67: #{han_forward.3} parent=1 // pred_check_branch
      %60 = sbr.rel (0) target = $region69
    $region68: #{han_forward.3} parent=1 // pred_region
      _
    $region69: #{han_forward.3} parent=1 // pred_fallthru
      _
    // Predicated region
    $region70: #{han_forward.3} parent=1 // pred_check
      _
    $region71: #{han_forward.3} parent=1 // pred_check_branch
      %62 = sbr.rel (0) target = $region73
    $region72: #{han_forward.3} parent=1 // pred_region
      _
    $region73: #{han_forward.3} parent=1 // pred_fallthru
      _
    %v63 = vld [vmem:[%s1] sm:$0xff]
    %v64 = vld [vmem:[%s1 + $0x8] sm:$0xff]
    %v65 = vld [vmem:[%s1 + $0x10] sm:$0xff]
    %v66 = vld [vmem:[%s1 + $0x18] sm:$0xff]
    %v67 = vld [vmem:[%s2] sm:$0xff]
    %v68 = vld [vmem:[%s2 + $0x8] sm:$0xff]
    %v69 = vld [vmem:[%s3] sm:$0x1]
    %v70 = vld [vmem:[%s4] sm:$0x1]
    %v71 = vld [vmem:[%s5] sm:$0xff]
    %v72 = vld [vmem:[%s5 + $0x8] sm:$0xff]
    %v73 = vld [vmem:[%s5 + $0x10] sm:$0xff]
    %v74 = vld [vmem:[%s5 + $0x18] sm:$0xff]
    %v75 = vld [vmem:[%s6] sm:$0xff]
    %v76 = vld [vmem:[%s6 + $0x8] sm:$0xff]
    %v77 = vld [vmem:[%s7] sm:$0x1]
    %v78 = vld [vmem:[%s8] sm:$0x1]
    %v79 = vld [vmem:[%s0] sm:$0x1]
    %v80 = vld [vmem:[%s0 + $0x4] sm:$0x1]
    %v82 = vlaneseq
    %v83 = vshrl.u32 %v82, 7
    %v84 = vsub.s32 0, %v83
    %v85 = vrot.slane %v69, %v84
    %v89 = vrot.slane %v80, 7
    %vm90 = vcmask 1041409
    %v91 = vsel %vm90, %v89, %v79
    %vm92 = vcmask 261120
    %v93 = vsel %vm92, %v91, 0
    %95 = vmatprep.subr.mxu0 0.0
    %96 = vmatpush1.msra.mxu0 %v63
    %97 = vmatprep.subr.mxu0 0.0
    %98 = vmatpush1.msra.mxu0 %v64
    %99 = vmatprep.subr.mxu0 0.0
    %100 = vmatpush1.msra.mxu0 %v65
    %101 = vmatprep.subr.mxu0 0.0
    %102 = vmatpush1.msra.mxu0 %v66
    %103 = vmatprep.subr.mxu0 0.0
    %104 = vmatpush1.msra.mxu0 0.0
    %105 = vmatprep.subr.mxu0 0.0
    %106 = vmatpush1.msra.mxu0 0.0
    %107 = vmatprep.subr.mxu0 0.0
    %108 = vmatpush1.msra.mxu0 0.0
    %109 = vmatprep.subr.mxu0 0.0
    %110 = vmatpush1.msra.mxu0 0.0
    %111 = vmatprep.subr.mxu0 0.0
    %112 = vmatpush1.msra.mxu0 0.0
    %113 = vmatprep.subr.mxu0 0.0
    %114 = vmatpush1.msra.mxu0 0.0
    %115 = vmatprep.subr.mxu0 0.0
    %116 = vmatpush1.msra.mxu0 0.0
    %117 = vmatprep.subr.mxu0 0.0
    %118 = vmatpush1.msra.mxu0 0.0
    %119 = vmatprep.subr.mxu0 0.0
    %120 = vmatpush1.msra.mxu0 0.0
    %121 = vmatprep.subr.mxu0 0.0
    %122 = vmatpush1.msra.mxu0 0.0
    %123 = vmatprep.subr.mxu0 0.0
    %124 = vmatpush1.msra.mxu0 0.0
    %125 = vmatprep.subr.mxu0 0.0
    %126 = vmatpush1.msra.mxu0 0.0
    %127 = vmatprep.subr.mxu0 0.0
    %128 = vmatpush1.msra.mxu0 0.0
    %129 = vmatprep.subr.mxu0 0.0
    %130 = vmatpush1.msra.mxu0 0.0
    %131 = vmatprep.subr.mxu0 0.0
    %132 = vmatpush1.msra.mxu0 0.0
    %133 = vmatprep.subr.mxu0 0.0
    %134 = vmatpush1.msra.mxu0 0.0
    %135 = vmatprep.subr.mxu0 0.0
    %136 = vmatpush1.msra.mxu0 0.0
    %137 = vmatprep.subr.mxu0 0.0
    %138 = vmatpush1.msra.mxu0 0.0
    %139 = vmatprep.subr.mxu0 0.0
    %140 = vmatpush1.msra.mxu0 0.0
    %141 = vmatprep.subr.mxu0 0.0
    %142 = vmatpush1.msra.mxu0 0.0
    %143 = vmatprep.subr.mxu0 0.0
    %144 = vmatpush1.msra.mxu0 0.0
    %145 = vmatprep.subr.mxu0 0.0
    %146 = vmatpush1.msra.mxu0 0.0
    %147 = vmatprep.subr.mxu0 0.0
    %148 = vmatpush1.msra.mxu0 0.0
    %149 = vmatprep.subr.mxu0 0.0
    %150 = vmatpush1.msra.mxu0 0.0
    %151 = vmatprep.subr.mxu0 0.0
    %152 = vmatpush1.msra.mxu0 0.0
    %153 = vmatprep.subr.mxu0 0.0
    %154 = vmatpush1.msra.mxu0 0.0
    %155 = vmatprep.subr.mxu0 0.0
    %156 = vmatpush1.msra.mxu0 0.0
    %157 = vmatprep.subr.mxu0 0.0
    %158 = vmatpush1.msra.mxu0 0.0
    %159 = vmatprep.mubr.f32.mxu0 0.0
    %160 = vmatmul.mubr.f32.gmra.mrb[0].mxu0 %v93
    %v161 = vpop.f32.mrb[0].mxu0
    %v162 = vadd.f32 %v85, %v161
    %v163 = vpop.f32.mrb[0].mxu0
    %164 = vdwg.mxu0
    %v166 = vlaneseq
    %v167 = vshrl.u32 %v166, 7
    %v168 = vsub.s32 0, %v167
    %v169 = vrot.slane %v70, %v168
    %vm171 = vcmask 130048
    %v173 = vsel %vm171, 0.0, 0
    %175 = vmatprep.subr.mxu0 0.0
    %176 = vmatpush1.msra.mxu0 %v67
    %177 = vmatprep.subr.mxu0 0.0
    %178 = vmatpush1.msra.mxu0 %v68
    %179 = vmatprep.subr.mxu0 0.0
    %180 = vmatpush1.msra.mxu0 0.0
    %181 = vmatprep.subr.mxu0 0.0
    %182 = vmatpush1.msra.mxu0 0.0
    %183 = vmatprep.subr.mxu0 0.0
    %184 = vmatpush1.msra.mxu0 0.0
    %185 = vmatprep.subr.mxu0 0.0
    %186 = vmatpush1.msra.mxu0 0.0
    %187 = vmatprep.subr.mxu0 0.0
    %188 = vmatpush1.msra.mxu0 0.0
    %189 = vmatprep.subr.mxu0 0.0
    %190 = vmatpush1.msra.mxu0 0.0
    %191 = vmatprep.subr.mxu0 0.0
    %192 = vmatpush1.msra.mxu0 0.0
    %193 = vmatprep.subr.mxu0 0.0
    %194 = vmatpush1.msra.mxu0 0.0
    %195 = vmatprep.subr.mxu0 0.0
    %196 = vmatpush1.msra.mxu0 0.0
    %197 = vmatprep.subr.mxu0 0.0
    %198 = vmatpush1.msra.mxu0 0.0
    %199 = vmatprep.subr.mxu0 0.0
    %200 = vmatpush1.msra.mxu0 0.0
    %201 = vmatprep.subr.mxu0 0.0
    %202 = vmatpush1.msra.mxu0 0.0
    %203 = vmatprep.subr.mxu0 0.0
    %204 = vmatpush1.msra.mxu0 0.0
    %205 = vmatprep.subr.mxu0 0.0
    %206 = vmatpush1.msra.mxu0 0.0
    %207 = vmatprep.subr.mxu0 0.0
    %208 = vmatpush1.msra.mxu0 0.0
    %209 = vmatprep.subr.mxu0 0.0
    %210 = vmatpush1.msra.mxu0 0.0
    %211 = vmatprep.subr.mxu0 0.0
    %212 = vmatpush1.msra.mxu0 0.0
    %213 = vmatprep.subr.mxu0 0.0
    %214 = vmatpush1.msra.mxu0 0.0
    %215 = vmatprep.subr.mxu0 0.0
    %216 = vmatpush1.msra.mxu0 0.0
    %217 = vmatprep.subr.mxu0 0.0
    %218 = vmatpush1.msra.mxu0 0.0
    %219 = vmatprep.subr.mxu0 0.0
    %220 = vmatpush1.msra.mxu0 0.0
    %221 = vmatprep.subr.mxu0 0.0
    %222 = vmatpush1.msra.mxu0 0.0
    %223 = vmatprep.subr.mxu0 0.0
    %224 = vmatpush1.msra.mxu0 0.0
    %225 = vmatprep.subr.mxu0 0.0
    %226 = vmatpush1.msra.mxu0 0.0
    %227 = vmatprep.subr.mxu0 0.0
    %228 = vmatpush1.msra.mxu0 0.0
    %229 = vmatprep.subr.mxu0 0.0
    %230 = vmatpush1.msra.mxu0 0.0
    %231 = vmatprep.subr.mxu0 0.0
    %232 = vmatpush1.msra.mxu0 0.0
    %233 = vmatprep.subr.mxu0 0.0
    %234 = vmatpush1.msra.mxu0 0.0
    %235 = vmatprep.subr.mxu0 0.0
    %236 = vmatpush1.msra.mxu0 0.0
    %237 = vmatprep.subr.mxu0 0.0
    %238 = vmatpush1.msra.mxu0 0.0
    %239 = vmatprep.mubr.f32.mxu0 0.0
    %240 = vmatmul.mubr.f32.gmra.mrb[0].mxu0 %v173
    %v241 = vpop.f32.mrb[0].mxu0
    %v242 = vadd.f32 %v169, %v241
    %v243 = vpop.f32.mrb[0].mxu0
    %244 = vdwg.mxu0
    %v245 = vadd.f32 %v162, %v242
    %v246 = vxor.u32 %v245, 2147483648
    %v247 = vmul.f32 %v246, 1.442695
    %v248 = vpow.pop %v247
    %v249 = vadd.f32 %v248, 1.0
    %v250 = vrcp.pop %v249
    %v251 = vmul.f32 1.0, %v250
    %253 = vrot.lane.b32.xlu0 %v242, 96
    %v254 = vpop.permute.xlu0 %253
    %v256 = vmul.f32 %v251, %v254
    %258 = vrot.lane.b32.xlu0 %v256, 32
    %v259 = vpop.permute.xlu0 %258
    %v261 = vadd.f32 %v162, %v259
    %v262 = vtanh.pop %v261
    %v263 = vsub.f32 1.0, %v251
    %265 = vrot.lane.b32.xlu0 %v262, 112
    %v266 = vpop.permute.xlu0 %265
    %v268 = vmul.f32 %v263, %v266
    %v269 = vmul.f32 %v251, 0.0
    %v270 = vadd.f32 %v268, %v269
    %v271 = vld [vmem:[%s0 + $0x3] sm:$0x1]
    %v272 = vld [vmem:[%s0 + $0x7] sm:$0x1]
    %v274 = vlaneseq
    %v275 = vshrl.u32 %v274, 7
    %v276 = vsub.s32 0, %v275
    %v277 = vrot.slane %v77, %v276
    %v281 = vrot.slane %v272, 7
    %v282 = vsel %vm90, %v281, %v271
    %v283 = vsel %vm92, %v282, 0
    %285 = vmatprep.subr.mxu0 0.0
    %286 = vmatpush1.msra.mxu0 %v71
    %287 = vmatprep.subr.mxu0 0.0
    %288 = vmatpush1.msra.mxu0 %v72
    %289 = vmatprep.subr.mxu0 0.0
    %290 = vmatpush1.msra.mxu0 %v73
    %291 = vmatprep.subr.mxu0 0.0
    %292 = vmatpush1.msra.mxu0 %v74
    %293 = vmatprep.subr.mxu0 0.0
    %294 = vmatpush1.msra.mxu0 0.0
    %295 = vmatprep.subr.mxu0 0.0
    %296 = vmatpush1.msra.mxu0 0.0
    %297 = vmatprep.subr.mxu0 0.0
    %298 = vmatpush1.msra.mxu0 0.0
    %299 = vmatprep.subr.mxu0 0.0
    %300 = vmatpush1.msra.mxu0 0.0
    %301 = vmatprep.subr.mxu0 0.0
    %302 = vmatpush1.msra.mxu0 0.0
    %303 = vmatprep.subr.mxu0 0.0
    %304 = vmatpush1.msra.mxu0 0.0
    %305 = vmatprep.subr.mxu0 0.0
    %306 = vmatpush1.msra.mxu0 0.0
    %307 = vmatprep.subr.mxu0 0.0
    %308 = vmatpush1.msra.mxu0 0.0
    %309 = vmatprep.subr.mxu0 0.0
    %310 = vmatpush1.msra.mxu0 0.0
    %311 = vmatprep.subr.mxu0 0.0
    %312 = vmatpush1.msra.mxu0 0.0
    %313 = vmatprep.subr.mxu0 0.0
    %314 = vmatpush1.msra.mxu0 0.0
    %315 = vmatprep.subr.mxu0 0.0
    %316 = vmatpush1.msra.mxu0 0.0
    %317 = vmatprep.subr.mxu0 0.0
    %318 = vmatpush1.msra.mxu0 0.0
    %319 = vmatprep.subr.mxu0 0.0
    %320 = vmatpush1.msra.mxu0 0.0
    %321 = vmatprep.subr.mxu0 0.0
    %322 = vmatpush1.msra.mxu0 0.0
    %323 = vmatprep.subr.mxu0 0.0
    %324 = vmatpush1.msra.mxu0 0.0
    %325 = vmatprep.subr.mxu0 0.0
    %326 = vmatpush1.msra.mxu0 0.0
    %327 = vmatprep.subr.mxu0 0.0
    %328 = vmatpush1.msra.mxu0 0.0
    %329 = vmatprep.subr.mxu0 0.0
    %330 = vmatpush1.msra.mxu0 0.0
    %331 = vmatprep.subr.mxu0 0.0
    %332 = vmatpush1.msra.mxu0 0.0
    %333 = vmatprep.subr.mxu0 0.0
    %334 = vmatpush1.msra.mxu0 0.0
    %335 = vmatprep.subr.mxu0 0.0
    %336 = vmatpush1.msra.mxu0 0.0
    %337 = vmatprep.subr.mxu0 0.0
    %338 = vmatpush1.msra.mxu0 0.0
    %339 = vmatprep.subr.mxu0 0.0
    %340 = vmatpush1.msra.mxu0 0.0
    %341 = vmatprep.subr.mxu0 0.0
    %342 = vmatpush1.msra.mxu0 0.0
    %343 = vmatprep.subr.mxu0 0.0
    %344 = vmatpush1.msra.mxu0 0.0
    %345 = vmatprep.subr.mxu0 0.0
    %346 = vmatpush1.msra.mxu0 0.0
    %347 = vmatprep.subr.mxu0 0.0
    %348 = vmatpush1.msra.mxu0 0.0
    %349 = vmatprep.mubr.f32.mxu0 0.0
    %350 = vmatmul.mubr.f32.gmra.mrb[0].mxu0 %v283
    %v351 = vpop.f32.mrb[0].mxu0
    %v352 = vadd.f32 %v277, %v351
    %v353 = vpop.f32.mrb[0].mxu0
    %354 = vdwg.mxu0
    %v356 = vlaneseq
    %v357 = vshrl.u32 %v356, 7
    %v358 = vsub.s32 0, %v357
    %v359 = vrot.slane %v78, %v358
    %361 = vmatprep.subr.mxu0 0.0
    %362 = vmatpush1.msra.mxu0 %v75
    %363 = vmatprep.subr.mxu0 0.0
    %364 = vmatpush1.msra.mxu0 %v76
    %365 = vmatprep.subr.mxu0 0.0
    %366 = vmatpush1.msra.mxu0 0.0
    %367 = vmatprep.subr.mxu0 0.0
    %368 = vmatpush1.msra.mxu0 0.0
    %369 = vmatprep.subr.mxu0 0.0
    %370 = vmatpush1.msra.mxu0 0.0
    %371 = vmatprep.subr.mxu0 0.0
    %372 = vmatpush1.msra.mxu0 0.0
    %373 = vmatprep.subr.mxu0 0.0
    %374 = vmatpush1.msra.mxu0 0.0
    %375 = vmatprep.subr.mxu0 0.0
    %376 = vmatpush1.msra.mxu0 0.0
    %377 = vmatprep.subr.mxu0 0.0
    %378 = vmatpush1.msra.mxu0 0.0
    %379 = vmatprep.subr.mxu0 0.0
    %380 = vmatpush1.msra.mxu0 0.0
    %381 = vmatprep.subr.mxu0 0.0
    %382 = vmatpush1.msra.mxu0 0.0
    %383 = vmatprep.subr.mxu0 0.0
    %384 = vmatpush1.msra.mxu0 0.0
    %385 = vmatprep.subr.mxu0 0.0
    %386 = vmatpush1.msra.mxu0 0.0
    %387 = vmatprep.subr.mxu0 0.0
    %388 = vmatpush1.msra.mxu0 0.0
    %389 = vmatprep.subr.mxu0 0.0
    %390 = vmatpush1.msra.mxu0 0.0
    %391 = vmatprep.subr.mxu0 0.0
    %392 = vmatpush1.msra.mxu0 0.0
    %393 = vmatprep.subr.mxu0 0.0
    %394 = vmatpush1.msra.mxu0 0.0
    %395 = vmatprep.subr.mxu0 0.0
    %396 = vmatpush1.msra.mxu0 0.0
    %397 = vmatprep.subr.mxu0 0.0
    %398 = vmatpush1.msra.mxu0 0.0
    %399 = vmatprep.subr.mxu0 0.0
    %400 = vmatpush1.msra.mxu0 0.0
    %401 = vmatprep.subr.mxu0 0.0
    %402 = vmatpush1.msra.mxu0 0.0
    %403 = vmatprep.subr.mxu0 0.0
    %404 = vmatpush1.msra.mxu0 0.0
    %405 = vmatprep.subr.mxu0 0.0
    %406 = vmatpush1.msra.mxu0 0.0
    %407 = vmatprep.subr.mxu0 0.0
    %408 = vmatpush1.msra.mxu0 0.0
    %409 = vmatprep.subr.mxu0 0.0
    %410 = vmatpush1.msra.mxu0 0.0
    %411 = vmatprep.subr.mxu0 0.0
    %412 = vmatpush1.msra.mxu0 0.0
    %413 = vmatprep.subr.mxu0 0.0
    %414 = vmatpush1.msra.mxu0 0.0
    %415 = vmatprep.subr.mxu0 0.0
    %416 = vmatpush1.msra.mxu0 0.0
    %417 = vmatprep.subr.mxu0 0.0
    %418 = vmatpush1.msra.mxu0 0.0
    %419 = vmatprep.subr.mxu0 0.0
    %420 = vmatpush1.msra.mxu0 0.0
    %421 = vmatprep.subr.mxu0 0.0
    %422 = vmatpush1.msra.mxu0 0.0
    %423 = vmatprep.subr.mxu0 0.0
    %424 = vmatpush1.msra.mxu0 0.0
    %425 = vmatprep.mubr.f32.mxu0 0.0
    %426 = vmatmul.mubr.f32.gmra.mrb[0].mxu0 %v173
    %v427 = vpop.f32.mrb[0].mxu0
    %v428 = vadd.f32 %v359, %v427
    %v429 = vpop.f32.mrb[0].mxu0
    %430 = vdwg.mxu0
    %v431 = vadd.f32 %v352, %v428
    %v432 = vxor.u32 %v431, 2147483648
    %v433 = vmul.f32 %v432, 1.442695
    %v434 = vpow.pop %v433
    %v435 = vadd.f32 %v434, 1.0
    %v436 = vrcp.pop %v435
    %v437 = vmul.f32 1.0, %v436
    %439 = vrot.lane.b32.xlu0 %v428, 96
    %v440 = vpop.permute.xlu0 %439
    %v442 = vmul.f32 %v437, %v440
    %444 = vrot.lane.b32.xlu0 %v442, 32
    %v445 = vpop.permute.xlu0 %444
    %v447 = vadd.f32 %v352, %v445
    %v448 = vtanh.pop %v447
    %v449 = vsub.f32 1.0, %v437
    %451 = vrot.lane.b32.xlu0 %v448, 112
    %v452 = vpop.permute.xlu0 %451
    %v454 = vmul.f32 %v449, %v452
    %v455 = vmul.f32 %v437, 0.0
    %v456 = vadd.f32 %v454, %v455
    %v457 = vld [vmem:[%s0 + $0x1] sm:$0x1]
    %v458 = vld [vmem:[%s0 + $0x5] sm:$0x1]
    %v461 = vrot.slane %v458, 7
    %v462 = vsel %vm90, %v461, %v457
    %v463 = vsel %vm92, %v462, 0
    %465 = vmatprep.subr.mxu0 0.0
    %466 = vmatpush1.msra.mxu0 %v63
    %467 = vmatprep.subr.mxu0 0.0
    %468 = vmatpush1.msra.mxu0 %v64
    %469 = vmatprep.subr.mxu0 0.0
    %470 = vmatpush1.msra.mxu0 %v65
    %471 = vmatprep.subr.mxu0 0.0
    %472 = vmatpush1.msra.mxu0 %v66
    %473 = vmatprep.subr.mxu0 0.0
    %474 = vmatpush1.msra.mxu0 0.0
    %475 = vmatprep.subr.mxu0 0.0
    %476 = vmatpush1.msra.mxu0 0.0
    %477 = vmatprep.subr.mxu0 0.0
    %478 = vmatpush1.msra.mxu0 0.0
    %479 = vmatprep.subr.mxu0 0.0
    %480 = vmatpush1.msra.mxu0 0.0
    %481 = vmatprep.subr.mxu0 0.0
    %482 = vmatpush1.msra.mxu0 0.0
    %483 = vmatprep.subr.mxu0 0.0
    %484 = vmatpush1.msra.mxu0 0.0
    %485 = vmatprep.subr.mxu0 0.0
    %486 = vmatpush1.msra.mxu0 0.0
    %487 = vmatprep.subr.mxu0 0.0
    %488 = vmatpush1.msra.mxu0 0.0
    %489 = vmatprep.subr.mxu0 0.0
    %490 = vmatpush1.msra.mxu0 0.0
    %491 = vmatprep.subr.mxu0 0.0
    %492 = vmatpush1.msra.mxu0 0.0
    %493 = vmatprep.subr.mxu0 0.0
    %494 = vmatpush1.msra.mxu0 0.0
    %495 = vmatprep.subr.mxu0 0.0
    %496 = vmatpush1.msra.mxu0 0.0
    %497 = vmatprep.subr.mxu0 0.0
    %498 = vmatpush1.msra.mxu0 0.0
    %499 = vmatprep.subr.mxu0 0.0
    %500 = vmatpush1.msra.mxu0 0.0
    %501 = vmatprep.subr.mxu0 0.0
    %502 = vmatpush1.msra.mxu0 0.0
    %503 = vmatprep.subr.mxu0 0.0
    %504 = vmatpush1.msra.mxu0 0.0
    %505 = vmatprep.subr.mxu0 0.0
    %506 = vmatpush1.msra.mxu0 0.0
    %507 = vmatprep.subr.mxu0 0.0
    %508 = vmatpush1.msra.mxu0 0.0
    %509 = vmatprep.subr.mxu0 0.0
    %510 = vmatpush1.msra.mxu0 0.0
    %511 = vmatprep.subr.mxu0 0.0
    %512 = vmatpush1.msra.mxu0 0.0
    %513 = vmatprep.subr.mxu0 0.0
    %514 = vmatpush1.msra.mxu0 0.0
    %515 = vmatprep.subr.mxu0 0.0
    %516 = vmatpush1.msra.mxu0 0.0
    %517 = vmatprep.subr.mxu0 0.0
    %518 = vmatpush1.msra.mxu0 0.0
    %519 = vmatprep.subr.mxu0 0.0
    %520 = vmatpush1.msra.mxu0 0.0
    %521 = vmatprep.subr.mxu0 0.0
    %522 = vmatpush1.msra.mxu0 0.0
    %523 = vmatprep.subr.mxu0 0.0
    %524 = vmatpush1.msra.mxu0 0.0
    %525 = vmatprep.subr.mxu0 0.0
    %526 = vmatpush1.msra.mxu0 0.0
    %527 = vmatprep.subr.mxu0 0.0
    %528 = vmatpush1.msra.mxu0 0.0
    %529 = vmatprep.mubr.f32.mxu0 0.0
    %530 = vmatmul.mubr.f32.gmra.mrb[0].mxu0 %v463
    %v531 = vpop.f32.mrb[0].mxu0
    %v532 = vadd.f32 %v85, %v531
    %v533 = vpop.f32.mrb[0].mxu0
    %534 = vdwg.mxu0
    %536 = vrot.lane.b32.xlu0 %v270, 112
    %v537 = vpop.permute.xlu0 %536
    %v538 = vsel %vm171, %v537, 0
    %540 = vmatprep.subr.mxu0 0.0
    %541 = vmatpush1.msra.mxu0 %v67
    %542 = vmatprep.subr.mxu0 0.0
    %543 = vmatpush1.msra.mxu0 %v68
    %544 = vmatprep.subr.mxu0 0.0
    %545 = vmatpush1.msra.mxu0 0.0
    %546 = vmatprep.subr.mxu0 0.0
    %547 = vmatpush1.msra.mxu0 0.0
    %548 = vmatprep.subr.mxu0 0.0
    %549 = vmatpush1.msra.mxu0 0.0
    %550 = vmatprep.subr.mxu0 0.0
    %551 = vmatpush1.msra.mxu0 0.0
    %552 = vmatprep.subr.mxu0 0.0
    %553 = vmatpush1.msra.mxu0 0.0
    %554 = vmatprep.subr.mxu0 0.0
    %555 = vmatpush1.msra.mxu0 0.0
    %556 = vmatprep.subr.mxu0 0.0
    %557 = vmatpush1.msra.mxu0 0.0
    %558 = vmatprep.subr.mxu0 0.0
    %559 = vmatpush1.msra.mxu0 0.0
    %560 = vmatprep.subr.mxu0 0.0
    %561 = vmatpush1.msra.mxu0 0.0
    %562 = vmatprep.subr.mxu0 0.0
    %563 = vmatpush1.msra.mxu0 0.0
    %564 = vmatprep.subr.mxu0 0.0
    %565 = vmatpush1.msra.mxu0 0.0
    %566 = vmatprep.subr.mxu0 0.0
    %567 = vmatpush1.msra.mxu0 0.0
    %568 = vmatprep.subr.mxu0 0.0
    %569 = vmatpush1.msra.mxu0 0.0
    %570 = vmatprep.subr.mxu0 0.0
    %571 = vmatpush1.msra.mxu0 0.0
    %572 = vmatprep.subr.mxu0 0.0
    %573 = vmatpush1.msra.mxu0 0.0
    %574 = vmatprep.subr.mxu0 0.0
    %575 = vmatpush1.msra.mxu0 0.0
    %576 = vmatprep.subr.mxu0 0.0
    %577 = vmatpush1.msra.mxu0 0.0
    %578 = vmatprep.subr.mxu0 0.0
    %579 = vmatpush1.msra.mxu0 0.0
    %580 = vmatprep.subr.mxu0 0.0
    %581 = vmatpush1.msra.mxu0 0.0
    %582 = vmatprep.subr.mxu0 0.0
    %583 = vmatpush1.msra.mxu0 0.0
    %584 = vmatprep.subr.mxu0 0.0
    %585 = vmatpush1.msra.mxu0 0.0
    %586 = vmatprep.subr.mxu0 0.0
    %587 = vmatpush1.msra.mxu0 0.0
    %588 = vmatprep.subr.mxu0 0.0
    %589 = vmatpush1.msra.mxu0 0.0
    %590 = vmatprep.subr.mxu0 0.0
    %591 = vmatpush1.msra.mxu0 0.0
    %592 = vmatprep.subr.mxu0 0.0
    %593 = vmatpush1.msra.mxu0 0.0
    %594 = vmatprep.subr.mxu0 0.0
    %595 = vmatpush1.msra.mxu0 0.0
    %596 = vmatprep.subr.mxu0 0.0
    %597 = vmatpush1.msra.mxu0 0.0
    %598 = vmatprep.subr.mxu0 0.0
    %599 = vmatpush1.msra.mxu0 0.0
    %600 = vmatprep.subr.mxu0 0.0
    %601 = vmatpush1.msra.mxu0 0.0
    %602 = vmatprep.subr.mxu0 0.0
    %603 = vmatpush1.msra.mxu0 0.0
    %604 = vmatprep.mubr.f32.mxu0 0.0
    %605 = vmatmul.mubr.f32.gmra.mrb[0].mxu0 %v538
    %v606 = vpop.f32.mrb[0].mxu0
    %v607 = vadd.f32 %v169, %v606
    %v608 = vpop.f32.mrb[0].mxu0
    %609 = vdwg.mxu0
    %v610 = vadd.f32 %v532, %v607
    %v611 = vxor.u32 %v610, 2147483648
    %v612 = vmul.f32 %v611, 1.442695
    %v613 = vpow.pop %v612
    %v614 = vadd.f32 %v613, 1.0
    %v615 = vrcp.pop %v614
    %v616 = vmul.f32 1.0, %v615
    %618 = vrot.lane.b32.xlu0 %v607, 96
    %v619 = vpop.permute.xlu0 %618
    %v621 = vmul.f32 %v616, %v619
    %623 = vrot.lane.b32.xlu0 %v621, 32
    %v624 = vpop.permute.xlu0 %623
    %v626 = vadd.f32 %v532, %v624
    %v627 = vtanh.pop %v626
    %v628 = vsub.f32 1.0, %v616
    %630 = vrot.lane.b32.xlu0 %v627, 112
    %v631 = vpop.permute.xlu0 %630
    %v633 = vmul.f32 %v628, %v631
    %v634 = vmul.f32 %v616, %v270
    %v635 = vadd.f32 %v633, %v634
    %v636 = vld [vmem:[%s0 + $0x2] sm:$0x1]
    %v637 = vld [vmem:[%s0 + $0x6] sm:$0x1]
    %v640 = vrot.slane %v637, 7
    %v641 = vsel %vm90, %v640, %v636
    %v642 = vsel %vm92, %v641, 0
    %644 = vmatprep.subr.mxu0 0.0
    %645 = vmatpush1.msra.mxu0 %v71
    %646 = vmatprep.subr.mxu0 0.0
    %647 = vmatpush1.msra.mxu0 %v72
    %648 = vmatprep.subr.mxu0 0.0
    %649 = vmatpush1.msra.mxu0 %v73
    %650 = vmatprep.subr.mxu0 0.0
    %651 = vmatpush1.msra.mxu0 %v74
    %652 = vmatprep.subr.mxu0 0.0
    %653 = vmatpush1.msra.mxu0 0.0
    %654 = vmatprep.subr.mxu0 0.0
    %655 = vmatpush1.msra.mxu0 0.0
    %656 = vmatprep.subr.mxu0 0.0
    %657 = vmatpush1.msra.mxu0 0.0
    %658 = vmatprep.subr.mxu0 0.0
    %659 = vmatpush1.msra.mxu0 0.0
    %660 = vmatprep.subr.mxu0 0.0
    %661 = vmatpush1.msra.mxu0 0.0
    %662 = vmatprep.subr.mxu0 0.0
    %663 = vmatpush1.msra.mxu0 0.0
    %664 = vmatprep.subr.mxu0 0.0
    %665 = vmatpush1.msra.mxu0 0.0
    %666 = vmatprep.subr.mxu0 0.0
    %667 = vmatpush1.msra.mxu0 0.0
    %668 = vmatprep.subr.mxu0 0.0
    %669 = vmatpush1.msra.mxu0 0.0
    %670 = vmatprep.subr.mxu0 0.0
    %671 = vmatpush1.msra.mxu0 0.0
    %672 = vmatprep.subr.mxu0 0.0
    %673 = vmatpush1.msra.mxu0 0.0
    %674 = vmatprep.subr.mxu0 0.0
    %675 = vmatpush1.msra.mxu0 0.0
    %676 = vmatprep.subr.mxu0 0.0
    %677 = vmatpush1.msra.mxu0 0.0
    %678 = vmatprep.subr.mxu0 0.0
    %679 = vmatpush1.msra.mxu0 0.0
    %680 = vmatprep.subr.mxu0 0.0
    %681 = vmatpush1.msra.mxu0 0.0
    %682 = vmatprep.subr.mxu0 0.0
    %683 = vmatpush1.msra.mxu0 0.0
    %684 = vmatprep.subr.mxu0 0.0
    %685 = vmatpush1.msra.mxu0 0.0
    %686 = vmatprep.subr.mxu0 0.0
    %687 = vmatpush1.msra.mxu0 0.0
    %688 = vmatprep.subr.mxu0 0.0
    %689 = vmatpush1.msra.mxu0 0.0
    %690 = vmatprep.subr.mxu0 0.0
    %691 = vmatpush1.msra.mxu0 0.0
    %692 = vmatprep.subr.mxu0 0.0
    %693 = vmatpush1.msra.mxu0 0.0
    %694 = vmatprep.subr.mxu0 0.0
    %695 = vmatpush1.msra.mxu0 0.0
    %696 = vmatprep.subr.mxu0 0.0
    %697 = vmatpush1.msra.mxu0 0.0
    %698 = vmatprep.subr.mxu0 0.0
    %699 = vmatpush1.msra.mxu0 0.0
    %700 = vmatprep.subr.mxu0 0.0
    %701 = vmatpush1.msra.mxu0 0.0
    %702 = vmatprep.subr.mxu0 0.0
    %703 = vmatpush1.msra.mxu0 0.0
    %704 = vmatprep.subr.mxu0 0.0
    %705 = vmatpush1.msra.mxu0 0.0
    %706 = vmatprep.subr.mxu0 0.0
    %707 = vmatpush1.msra.mxu0 0.0
    %708 = vmatprep.mubr.f32.mxu0 0.0
    %709 = vmatmul.mubr.f32.gmra.mrb[0].mxu0 %v642
    %v710 = vpop.f32.mrb[0].mxu0
    %v711 = vadd.f32 %v277, %v710
    %v712 = vpop.f32.mrb[0].mxu0
    %713 = vdwg.mxu0
    %715 = vrot.lane.b32.xlu0 %v456, 112
    %v716 = vpop.permute.xlu0 %715
    %v717 = vsel %vm171, %v716, 0
    %719 = vmatprep.subr.mxu0 0.0
    %720 = vmatpush1.msra.mxu0 %v75
    %721 = vmatprep.subr.mxu0 0.0
    %722 = vmatpush1.msra.mxu0 %v76
    %723 = vmatprep.subr.mxu0 0.0
    %724 = vmatpush1.msra.mxu0 0.0
    %725 = vmatprep.subr.mxu0 0.0
    %726 = vmatpush1.msra.mxu0 0.0
    %727 = vmatprep.subr.mxu0 0.0
    %728 = vmatpush1.msra.mxu0 0.0
    %729 = vmatprep.subr.mxu0 0.0
    %730 = vmatpush1.msra.mxu0 0.0
    %731 = vmatprep.subr.mxu0 0.0
    %732 = vmatpush1.msra.mxu0 0.0
    %733 = vmatprep.subr.mxu0 0.0
    %734 = vmatpush1.msra.mxu0 0.0
    %735 = vmatprep.subr.mxu0 0.0
    %736 = vmatpush1.msra.mxu0 0.0
    %737 = vmatprep.subr.mxu0 0.0
    %738 = vmatpush1.msra.mxu0 0.0
    %739 = vmatprep.subr.mxu0 0.0
    %740 = vmatpush1.msra.mxu0 0.0
    %741 = vmatprep.subr.mxu0 0.0
    %742 = vmatpush1.msra.mxu0 0.0
    %743 = vmatprep.subr.mxu0 0.0
    %744 = vmatpush1.msra.mxu0 0.0
    %745 = vmatprep.subr.mxu0 0.0
    %746 = vmatpush1.msra.mxu0 0.0
    %747 = vmatprep.subr.mxu0 0.0
    %748 = vmatpush1.msra.mxu0 0.0
    %749 = vmatprep.subr.mxu0 0.0
    %750 = vmatpush1.msra.mxu0 0.0
    %751 = vmatprep.subr.mxu0 0.0
    %752 = vmatpush1.msra.mxu0 0.0
    %753 = vmatprep.subr.mxu0 0.0
    %754 = vmatpush1.msra.mxu0 0.0
    %755 = vmatprep.subr.mxu0 0.0
    %756 = vmatpush1.msra.mxu0 0.0
    %757 = vmatprep.subr.mxu0 0.0
    %758 = vmatpush1.msra.mxu0 0.0
    %759 = vmatprep.subr.mxu0 0.0
    %760 = vmatpush1.msra.mxu0 0.0
    %761 = vmatprep.subr.mxu0 0.0
    %762 = vmatpush1.msra.mxu0 0.0
    %763 = vmatprep.subr.mxu0 0.0
    %764 = vmatpush1.msra.mxu0 0.0
    %765 = vmatprep.subr.mxu0 0.0
    %766 = vmatpush1.msra.mxu0 0.0
    %767 = vmatprep.subr.mxu0 0.0
    %768 = vmatpush1.msra.mxu0 0.0
    %769 = vmatprep.subr.mxu0 0.0
    %770 = vmatpush1.msra.mxu0 0.0
    %771 = vmatprep.subr.mxu0 0.0
    %772 = vmatpush1.msra.mxu0 0.0
    %773 = vmatprep.subr.mxu0 0.0
    %774 = vmatpush1.msra.mxu0 0.0
    %775 = vmatprep.subr.mxu0 0.0
    %776 = vmatpush1.msra.mxu0 0.0
    %777 = vmatprep.subr.mxu0 0.0
    %778 = vmatpush1.msra.mxu0 0.0
    %779 = vmatprep.subr.mxu0 0.0
    %780 = vmatpush1.msra.mxu0 0.0
    %781 = vmatprep.subr.mxu0 0.0
    %782 = vmatpush1.msra.mxu0 0.0
    %783 = vmatprep.mubr.f32.mxu0 0.0
    %784 = vmatmul.mubr.f32.gmra.mrb[0].mxu0 %v717
    %v785 = vpop.f32.mrb[0].mxu0
    %v786 = vadd.f32 %v359, %v785
    %v787 = vpop.f32.mrb[0].mxu0
    %788 = vdwg.mxu0
    %v789 = vadd.f32 %v711, %v786
    %v790 = vxor.u32 %v789, 2147483648
    %v791 = vmul.f32 %v790, 1.442695
    %v792 = vpow.pop %v791
    %v793 = vadd.f32 %v792, 1.0
    %v794 = vrcp.pop %v793
    %v795 = vmul.f32 1.0, %v794
    %797 = vrot.lane.b32.xlu0 %v786, 96
    %v798 = vpop.permute.xlu0 %797
    %v800 = vmul.f32 %v795, %v798
    %802 = vrot.lane.b32.xlu0 %v800, 32
    %v803 = vpop.permute.xlu0 %802
    %v805 = vadd.f32 %v711, %v803
    %v806 = vtanh.pop %v805
    %v807 = vsub.f32 1.0, %v795
    %809 = vrot.lane.b32.xlu0 %v806, 112
    %v810 = vpop.permute.xlu0 %809
    %v812 = vmul.f32 %v807, %v810
    %v813 = vmul.f32 %v795, %v456
    %v814 = vadd.f32 %v812, %v813
    %815 = vmatprep.subr.mxu0 0.0
    %816 = vmatpush1.msra.mxu0 %v63
    %817 = vmatprep.subr.mxu0 0.0
    %818 = vmatpush1.msra.mxu0 %v64
    %819 = vmatprep.subr.mxu0 0.0
    %820 = vmatpush1.msra.mxu0 %v65
    %821 = vmatprep.subr.mxu0 0.0
    %822 = vmatpush1.msra.mxu0 %v66
    %823 = vmatprep.subr.mxu0 0.0
    %824 = vmatpush1.msra.mxu0 0.0
    %825 = vmatprep.subr.mxu0 0.0
    %826 = vmatpush1.msra.mxu0 0.0
    %827 = vmatprep.subr.mxu0 0.0
    %828 = vmatpush1.msra.mxu0 0.0
    %829 = vmatprep.subr.mxu0 0.0
    %830 = vmatpush1.msra.mxu0 0.0
    %831 = vmatprep.subr.mxu0 0.0
    %832 = vmatpush1.msra.mxu0 0.0
    %833 = vmatprep.subr.mxu0 0.0
    %834 = vmatpush1.msra.mxu0 0.0
    %835 = vmatprep.subr.mxu0 0.0
    %836 = vmatpush1.msra.mxu0 0.0
    %837 = vmatprep.subr.mxu0 0.0
    %838 = vmatpush1.msra.mxu0 0.0
    %839 = vmatprep.subr.mxu0 0.0
    %840 = vmatpush1.msra.mxu0 0.0
    %841 = vmatprep.subr.mxu0 0.0
    %842 = vmatpush1.msra.mxu0 0.0
    %843 = vmatprep.subr.mxu0 0.0
    %844 = vmatpush1.msra.mxu0 0.0
    %845 = vmatprep.subr.mxu0 0.0
    %846 = vmatpush1.msra.mxu0 0.0
    %847 = vmatprep.subr.mxu0 0.0
    %848 = vmatpush1.msra.mxu0 0.0
    %849 = vmatprep.subr.mxu0 0.0
    %850 = vmatpush1.msra.mxu0 0.0
    %851 = vmatprep.subr.mxu0 0.0
    %852 = vmatpush1.msra.mxu0 0.0
    %853 = vmatprep.subr.mxu0 0.0
    %854 = vmatpush1.msra.mxu0 0.0
    %855 = vmatprep.subr.mxu0 0.0
    %856 = vmatpush1.msra.mxu0 0.0
    %857 = vmatprep.subr.mxu0 0.0
    %858 = vmatpush1.msra.mxu0 0.0
    %859 = vmatprep.subr.mxu0 0.0
    %860 = vmatpush1.msra.mxu0 0.0
    %861 = vmatprep.subr.mxu0 0.0
    %862 = vmatpush1.msra.mxu0 0.0
    %863 = vmatprep.subr.mxu0 0.0
    %864 = vmatpush1.msra.mxu0 0.0
    %865 = vmatprep.subr.mxu0 0.0
    %866 = vmatpush1.msra.mxu0 0.0
    %867 = vmatprep.subr.mxu0 0.0
    %868 = vmatpush1.msra.mxu0 0.0
    %869 = vmatprep.subr.mxu0 0.0
    %870 = vmatpush1.msra.mxu0 0.0
    %871 = vmatprep.subr.mxu0 0.0
    %872 = vmatpush1.msra.mxu0 0.0
    %873 = vmatprep.subr.mxu0 0.0
    %874 = vmatpush1.msra.mxu0 0.0
    %875 = vmatprep.subr.mxu0 0.0
    %876 = vmatpush1.msra.mxu0 0.0
    %877 = vmatprep.subr.mxu0 0.0
    %878 = vmatpush1.msra.mxu0 0.0
    %879 = vmatprep.mubr.f32.mxu0 0.0
    %880 = vmatmul.mubr.f32.gmra.mrb[0].mxu0 %v642
    %v881 = vpop.f32.mrb[0].mxu0
    %v882 = vadd.f32 %v85, %v881
    %v883 = vpop.f32.mrb[0].mxu0
    %884 = vdwg.mxu0
    %886 = vrot.lane.b32.xlu0 %v635, 112
    %v887 = vpop.permute.xlu0 %886
    %v888 = vsel %vm171, %v887, 0
    %890 = vmatprep.subr.mxu0 0.0
    %891 = vmatpush1.msra.mxu0 %v67
    %892 = vmatprep.subr.mxu0 0.0
    %893 = vmatpush1.msra.mxu0 %v68
    %894 = vmatprep.subr.mxu0 0.0
    %895 = vmatpush1.msra.mxu0 0.0
    %896 = vmatprep.subr.mxu0 0.0
    %897 = vmatpush1.msra.mxu0 0.0
    %898 = vmatprep.subr.mxu0 0.0
    %899 = vmatpush1.msra.mxu0 0.0
    %900 = vmatprep.subr.mxu0 0.0
    %901 = vmatpush1.msra.mxu0 0.0
    %902 = vmatprep.subr.mxu0 0.0
    %903 = vmatpush1.msra.mxu0 0.0
    %904 = vmatprep.subr.mxu0 0.0
    %905 = vmatpush1.msra.mxu0 0.0
    %906 = vmatprep.subr.mxu0 0.0
    %907 = vmatpush1.msra.mxu0 0.0
    %908 = vmatprep.subr.mxu0 0.0
    %909 = vmatpush1.msra.mxu0 0.0
    %910 = vmatprep.subr.mxu0 0.0
    %911 = vmatpush1.msra.mxu0 0.0
    %912 = vmatprep.subr.mxu0 0.0
    %913 = vmatpush1.msra.mxu0 0.0
    %914 = vmatprep.subr.mxu0 0.0
    %915 = vmatpush1.msra.mxu0 0.0
    %916 = vmatprep.subr.mxu0 0.0
    %917 = vmatpush1.msra.mxu0 0.0
    %918 = vmatprep.subr.mxu0 0.0
    %919 = vmatpush1.msra.mxu0 0.0
    %920 = vmatprep.subr.mxu0 0.0
    %921 = vmatpush1.msra.mxu0 0.0
    %922 = vmatprep.subr.mxu0 0.0
    %923 = vmatpush1.msra.mxu0 0.0
    %924 = vmatprep.subr.mxu0 0.0
    %925 = vmatpush1.msra.mxu0 0.0
    %926 = vmatprep.subr.mxu0 0.0
    %927 = vmatpush1.msra.mxu0 0.0
    %928 = vmatprep.subr.mxu0 0.0
    %929 = vmatpush1.msra.mxu0 0.0
    %930 = vmatprep.subr.mxu0 0.0
    %931 = vmatpush1.msra.mxu0 0.0
    %932 = vmatprep.subr.mxu0 0.0
    %933 = vmatpush1.msra.mxu0 0.0
    %934 = vmatprep.subr.mxu0 0.0
    %935 = vmatpush1.msra.mxu0 0.0
    %936 = vmatprep.subr.mxu0 0.0
    %937 = vmatpush1.msra.mxu0 0.0
    %938 = vmatprep.subr.mxu0 0.0
    %939 = vmatpush1.msra.mxu0 0.0
    %940 = vmatprep.subr.mxu0 0.0
    %941 = vmatpush1.msra.mxu0 0.0
    %942 = vmatprep.subr.mxu0 0.0
    %943 = vmatpush1.msra.mxu0 0.0
    %944 = vmatprep.subr.mxu0 0.0
    %945 = vmatpush1.msra.mxu0 0.0
    %946 = vmatprep.subr.mxu0 0.0
    %947 = vmatpush1.msra.mxu0 0.0
    %948 = vmatprep.subr.mxu0 0.0
    %949 = vmatpush1.msra.mxu0 0.0
    %950 = vmatprep.subr.mxu0 0.0
    %951 = vmatpush1.msra.mxu0 0.0
    %952 = vmatprep.subr.mxu0 0.0
    %953 = vmatpush1.msra.mxu0 0.0
    %954 = vmatprep.mubr.f32.mxu0 0.0
    %955 = vmatmul.mubr.f32.gmra.mrb[0].mxu0 %v888
    %v956 = vpop.f32.mrb[0].mxu0
    %v957 = vadd.f32 %v169, %v956
    %v958 = vpop.f32.mrb[0].mxu0
    %959 = vdwg.mxu0
    %v960 = vadd.f32 %v882, %v957
    %v961 = vxor.u32 %v960, 2147483648
    %v962 = vmul.f32 %v961, 1.442695
    %v963 = vpow.pop %v962
    %v964 = vadd.f32 %v963, 1.0
    %v965 = vrcp.pop %v964
    %v966 = vmul.f32 1.0, %v965
    %968 = vrot.lane.b32.xlu0 %v957, 96
    %v969 = vpop.permute.xlu0 %968
    %v971 = vmul.f32 %v966, %v969
    %973 = vrot.lane.b32.xlu0 %v971, 32
    %v974 = vpop.permute.xlu0 %973
    %v976 = vadd.f32 %v882, %v974
    %v977 = vtanh.pop %v976
    %v978 = vsub.f32 1.0, %v966
    %980 = vrot.lane.b32.xlu0 %v977, 112
    %v981 = vpop.permute.xlu0 %980
    %v983 = vmul.f32 %v978, %v981
    %v984 = vmul.f32 %v966, %v635
    %v985 = vadd.f32 %v983, %v984
    %986 = vmatprep.subr.mxu0 0.0
    %987 = vmatpush1.msra.mxu0 %v71
    %988 = vmatprep.subr.mxu0 0.0
    %989 = vmatpush1.msra.mxu0 %v72
    %990 = vmatprep.subr.mxu0 0.0
    %991 = vmatpush1.msra.mxu0 %v73
    %992 = vmatprep.subr.mxu0 0.0
    %993 = vmatpush1.msra.mxu0 %v74
    %994 = vmatprep.subr.mxu0 0.0
    %995 = vmatpush1.msra.mxu0 0.0
    %996 = vmatprep.subr.mxu0 0.0
    %997 = vmatpush1.msra.mxu0 0.0
    %998 = vmatprep.subr.mxu0 0.0
    %999 = vmatpush1.msra.mxu0 0.0
    %1000 = vmatprep.subr.mxu0 0.0
    %1001 = vmatpush1.msra.mxu0 0.0
    %1002 = vmatprep.subr.mxu0 0.0
    %1003 = vmatpush1.msra.mxu0 0.0
    %1004 = vmatprep.subr.mxu0 0.0
    %1005 = vmatpush1.msra.mxu0 0.0
    %1006 = vmatprep.subr.mxu0 0.0
    %1007 = vmatpush1.msra.mxu0 0.0
    %1008 = vmatprep.subr.mxu0 0.0
    %1009 = vmatpush1.msra.mxu0 0.0
    %1010 = vmatprep.subr.mxu0 0.0
    %1011 = vmatpush1.msra.mxu0 0.0
    %1012 = vmatprep.subr.mxu0 0.0
    %1013 = vmatpush1.msra.mxu0 0.0
    %1014 = vmatprep.subr.mxu0 0.0
    %1015 = vmatpush1.msra.mxu0 0.0
    %1016 = vmatprep.subr.mxu0 0.0
    %1017 = vmatpush1.msra.mxu0 0.0
    %1018 = vmatprep.subr.mxu0 0.0
    %1019 = vmatpush1.msra.mxu0 0.0
    %1020 = vmatprep.subr.mxu0 0.0
    %1021 = vmatpush1.msra.mxu0 0.0
    %1022 = vmatprep.subr.mxu0 0.0
    %1023 = vmatpush1.msra.mxu0 0.0
    %1024 = vmatprep.subr.mxu0 0.0
    %1025 = vmatpush1.msra.mxu0 0.0
    %1026 = vmatprep.subr.mxu0 0.0
    %1027 = vmatpush1.msra.mxu0 0.0
    %1028 = vmatprep.subr.mxu0 0.0
    %1029 = vmatpush1.msra.mxu0 0.0
    %1030 = vmatprep.subr.mxu0 0.0
    %1031 = vmatpush1.msra.mxu0 0.0
    %1032 = vmatprep.subr.mxu0 0.0
    %1033 = vmatpush1.msra.mxu0 0.0
    %1034 = vmatprep.subr.mxu0 0.0
    %1035 = vmatpush1.msra.mxu0 0.0
    %1036 = vmatprep.subr.mxu0 0.0
    %1037 = vmatpush1.msra.mxu0 0.0
    %1038 = vmatprep.subr.mxu0 0.0
    %1039 = vmatpush1.msra.mxu0 0.0
    %1040 = vmatprep.subr.mxu0 0.0
    %1041 = vmatpush1.msra.mxu0 0.0
    %1042 = vmatprep.subr.mxu0 0.0
    %1043 = vmatpush1.msra.mxu0 0.0
    %1044 = vmatprep.subr.mxu0 0.0
    %1045 = vmatpush1.msra.mxu0 0.0
    %1046 = vmatprep.subr.mxu0 0.0
    %1047 = vmatpush1.msra.mxu0 0.0
    %1048 = vmatprep.subr.mxu0 0.0
    %1049 = vmatpush1.msra.mxu0 0.0
    %1050 = vmatprep.mubr.f32.mxu0 0.0
    %1051 = vmatmul.mubr.f32.gmra.mrb[0].mxu0 %v463
    %v1052 = vpop.f32.mrb[0].mxu0
    %v1053 = vadd.f32 %v277, %v1052
    %v1054 = vpop.f32.mrb[0].mxu0
    %1055 = vdwg.mxu0
    %1057 = vrot.lane.b32.xlu0 %v814, 112
    %v1058 = vpop.permute.xlu0 %1057
    %v1059 = vsel %vm171, %v1058, 0
    %1061 = vmatprep.subr.mxu0 0.0
    %1062 = vmatpush1.msra.mxu0 %v75
    %1063 = vmatprep.subr.mxu0 0.0
    %1064 = vmatpush1.msra.mxu0 %v76
    %1065 = vmatprep.subr.mxu0 0.0
    %1066 = vmatpush1.msra.mxu0 0.0
    %1067 = vmatprep.subr.mxu0 0.0
    %1068 = vmatpush1.msra.mxu0 0.0
    %1069 = vmatprep.subr.mxu0 0.0
    %1070 = vmatpush1.msra.mxu0 0.0
    %1071 = vmatprep.subr.mxu0 0.0
    %1072 = vmatpush1.msra.mxu0 0.0
    %1073 = vmatprep.subr.mxu0 0.0
    %1074 = vmatpush1.msra.mxu0 0.0
    %1075 = vmatprep.subr.mxu0 0.0
    %1076 = vmatpush1.msra.mxu0 0.0
    %1077 = vmatprep.subr.mxu0 0.0
    %1078 = vmatpush1.msra.mxu0 0.0
    %1079 = vmatprep.subr.mxu0 0.0
    %1080 = vmatpush1.msra.mxu0 0.0
    %1081 = vmatprep.subr.mxu0 0.0
    %1082 = vmatpush1.msra.mxu0 0.0
    %1083 = vmatprep.subr.mxu0 0.0
    %1084 = vmatpush1.msra.mxu0 0.0
    %1085 = vmatprep.subr.mxu0 0.0
    %1086 = vmatpush1.msra.mxu0 0.0
    %1087 = vmatprep.subr.mxu0 0.0
    %1088 = vmatpush1.msra.mxu0 0.0
    %1089 = vmatprep.subr.mxu0 0.0
    %1090 = vmatpush1.msra.mxu0 0.0
    %1091 = vmatprep.subr.mxu0 0.0
    %1092 = vmatpush1.msra.mxu0 0.0
    %1093 = vmatprep.subr.mxu0 0.0
    %1094 = vmatpush1.msra.mxu0 0.0
    %1095 = vmatprep.subr.mxu0 0.0
    %1096 = vmatpush1.msra.mxu0 0.0
    %1097 = vmatprep.subr.mxu0 0.0
    %1098 = vmatpush1.msra.mxu0 0.0
    %1099 = vmatprep.subr.mxu0 0.0
    %1100 = vmatpush1.msra.mxu0 0.0
    %1101 = vmatprep.subr.mxu0 0.0
    %1102 = vmatpush1.msra.mxu0 0.0
    %1103 = vmatprep.subr.mxu0 0.0
    %1104 = vmatpush1.msra.mxu0 0.0
    %1105 = vmatprep.subr.mxu0 0.0
    %1106 = vmatpush1.msra.mxu0 0.0
    %1107 = vmatprep.subr.mxu0 0.0
    %1108 = vmatpush1.msra.mxu0 0.0
    %1109 = vmatprep.subr.mxu0 0.0
    %1110 = vmatpush1.msra.mxu0 0.0
    %1111 = vmatprep.subr.mxu0 0.0
    %1112 = vmatpush1.msra.mxu0 0.0
    %1113 = vmatprep.subr.mxu0 0.0
    %1114 = vmatpush1.msra.mxu0 0.0
    %1115 = vmatprep.subr.mxu0 0.0
    %1116 = vmatpush1.msra.mxu0 0.0
    %1117 = vmatprep.subr.mxu0 0.0
    %1118 = vmatpush1.msra.mxu0 0.0
    %1119 = vmatprep.subr.mxu0 0.0
    %1120 = vmatpush1.msra.mxu0 0.0
    %1121 = vmatprep.subr.mxu0 0.0
    %1122 = vmatpush1.msra.mxu0 0.0
    %1123 = vmatprep.subr.mxu0 0.0
    %1124 = vmatpush1.msra.mxu0 0.0
    %1125 = vmatprep.mubr.f32.mxu0 0.0
    %1126 = vmatmul.mubr.f32.gmra.mrb[0].mxu0 %v1059
    %v1127 = vpop.f32.mrb[0].mxu0
    %v1128 = vadd.f32 %v359, %v1127
    %v1129 = vpop.f32.mrb[0].mxu0
    %1130 = vdwg.mxu0
    %v1131 = vadd.f32 %v1053, %v1128
    %v1132 = vxor.u32 %v1131, 2147483648
    %v1133 = vmul.f32 %v1132, 1.442695
    %v1134 = vpow.pop %v1133
    %v1135 = vadd.f32 %v1134, 1.0
    %v1136 = vrcp.pop %v1135
    %v1137 = vmul.f32 1.0, %v1136
    %1139 = vrot.lane.b32.xlu0 %v1128, 96
    %v1140 = vpop.permute.xlu0 %1139
    %v1142 = vmul.f32 %v1137, %v1140
    %1144 = vrot.lane.b32.xlu0 %v1142, 32
    %v1145 = vpop.permute.xlu0 %1144
    %v1147 = vadd.f32 %v1053, %v1145
    %v1148 = vtanh.pop %v1147
    %v1149 = vsub.f32 1.0, %v1137
    %1151 = vrot.lane.b32.xlu0 %v1148, 112
    %v1152 = vpop.permute.xlu0 %1151
    %v1154 = vmul.f32 %v1149, %v1152
    %v1155 = vmul.f32 %v1137, %v814
    %v1156 = vadd.f32 %v1154, %v1155
    %1157 = vmatprep.subr.mxu0 0.0
    %1158 = vmatpush1.msra.mxu0 %v63
    %1159 = vmatprep.subr.mxu0 0.0
    %1160 = vmatpush1.msra.mxu0 %v64
    %1161 = vmatprep.subr.mxu0 0.0
    %1162 = vmatpush1.msra.mxu0 %v65
    %1163 = vmatprep.subr.mxu0 0.0
    %1164 = vmatpush1.msra.mxu0 %v66
    %1165 = vmatprep.subr.mxu0 0.0
    %1166 = vmatpush1.msra.mxu0 0.0
    %1167 = vmatprep.subr.mxu0 0.0
    %1168 = vmatpush1.msra.mxu0 0.0
    %1169 = vmatprep.subr.mxu0 0.0
    %1170 = vmatpush1.msra.mxu0 0.0
    %1171 = vmatprep.subr.mxu0 0.0
    %1172 = vmatpush1.msra.mxu0 0.0
    %1173 = vmatprep.subr.mxu0 0.0
    %1174 = vmatpush1.msra.mxu0 0.0
    %1175 = vmatprep.subr.mxu0 0.0
    %1176 = vmatpush1.msra.mxu0 0.0
    %1177 = vmatprep.subr.mxu0 0.0
    %1178 = vmatpush1.msra.mxu0 0.0
    %1179 = vmatprep.subr.mxu0 0.0
    %1180 = vmatpush1.msra.mxu0 0.0
    %1181 = vmatprep.subr.mxu0 0.0
    %1182 = vmatpush1.msra.mxu0 0.0
    %1183 = vmatprep.subr.mxu0 0.0
    %1184 = vmatpush1.msra.mxu0 0.0
    %1185 = vmatprep.subr.mxu0 0.0
    %1186 = vmatpush1.msra.mxu0 0.0
    %1187 = vmatprep.subr.mxu0 0.0
    %1188 = vmatpush1.msra.mxu0 0.0
    %1189 = vmatprep.subr.mxu0 0.0
    %1190 = vmatpush1.msra.mxu0 0.0
    %1191 = vmatprep.subr.mxu0 0.0
    %1192 = vmatpush1.msra.mxu0 0.0
    %1193 = vmatprep.subr.mxu0 0.0
    %1194 = vmatpush1.msra.mxu0 0.0
    %1195 = vmatprep.subr.mxu0 0.0
    %1196 = vmatpush1.msra.mxu0 0.0
    %1197 = vmatprep.subr.mxu0 0.0
    %1198 = vmatpush1.msra.mxu0 0.0
    %1199 = vmatprep.subr.mxu0 0.0
    %1200 = vmatpush1.msra.mxu0 0.0
    %1201 = vmatprep.subr.mxu0 0.0
    %1202 = vmatpush1.msra.mxu0 0.0
    %1203 = vmatprep.subr.mxu0 0.0
    %1204 = vmatpush1.msra.mxu0 0.0
    %1205 = vmatprep.subr.mxu0 0.0
    %1206 = vmatpush1.msra.mxu0 0.0
    %1207 = vmatprep.subr.mxu0 0.0
    %1208 = vmatpush1.msra.mxu0 0.0
    %1209 = vmatprep.subr.mxu0 0.0
    %1210 = vmatpush1.msra.mxu0 0.0
    %1211 = vmatprep.subr.mxu0 0.0
    %1212 = vmatpush1.msra.mxu0 0.0
    %1213 = vmatprep.subr.mxu0 0.0
    %1214 = vmatpush1.msra.mxu0 0.0
    %1215 = vmatprep.subr.mxu0 0.0
    %1216 = vmatpush1.msra.mxu0 0.0
    %1217 = vmatprep.subr.mxu0 0.0
    %1218 = vmatpush1.msra.mxu0 0.0
    %1219 = vmatprep.subr.mxu0 0.0
    %1220 = vmatpush1.msra.mxu0 0.0
    %1221 = vmatprep.mubr.f32.mxu0 0.0
    %1222 = vmatmul.mubr.f32.gmra.mrb[0].mxu0 %v283
    %v1223 = vpop.f32.mrb[0].mxu0
    %v1224 = vadd.f32 %v85, %v1223
    %v1225 = vpop.f32.mrb[0].mxu0
    %1226 = vdwg.mxu0
    %1228 = vrot.lane.b32.xlu0 %v985, 112
    %v1229 = vpop.permute.xlu0 %1228
    %v1230 = vsel %vm171, %v1229, 0
    %1232 = vmatprep.subr.mxu0 0.0
    %1233 = vmatpush1.msra.mxu0 %v67
    %1234 = vmatprep.subr.mxu0 0.0
    %1235 = vmatpush1.msra.mxu0 %v68
    %1236 = vmatprep.subr.mxu0 0.0
    %1237 = vmatpush1.msra.mxu0 0.0
    %1238 = vmatprep.subr.mxu0 0.0
    %1239 = vmatpush1.msra.mxu0 0.0
    %1240 = vmatprep.subr.mxu0 0.0
    %1241 = vmatpush1.msra.mxu0 0.0
    %1242 = vmatprep.subr.mxu0 0.0
    %1243 = vmatpush1.msra.mxu0 0.0
    %1244 = vmatprep.subr.mxu0 0.0
    %1245 = vmatpush1.msra.mxu0 0.0
    %1246 = vmatprep.subr.mxu0 0.0
    %1247 = vmatpush1.msra.mxu0 0.0
    %1248 = vmatprep.subr.mxu0 0.0
    %1249 = vmatpush1.msra.mxu0 0.0
    %1250 = vmatprep.subr.mxu0 0.0
    %1251 = vmatpush1.msra.mxu0 0.0
    %1252 = vmatprep.subr.mxu0 0.0
    %1253 = vmatpush1.msra.mxu0 0.0
    %1254 = vmatprep.subr.mxu0 0.0
    %1255 = vmatpush1.msra.mxu0 0.0
    %1256 = vmatprep.subr.mxu0 0.0
    %1257 = vmatpush1.msra.mxu0 0.0
    %1258 = vmatprep.subr.mxu0 0.0
    %1259 = vmatpush1.msra.mxu0 0.0
    %1260 = vmatprep.subr.mxu0 0.0
    %1261 = vmatpush1.msra.mxu0 0.0
    %1262 = vmatprep.subr.mxu0 0.0
    %1263 = vmatpush1.msra.mxu0 0.0
    %1264 = vmatprep.subr.mxu0 0.0
    %1265 = vmatpush1.msra.mxu0 0.0
    %1266 = vmatprep.subr.mxu0 0.0
    %1267 = vmatpush1.msra.mxu0 0.0
    %1268 = vmatprep.subr.mxu0 0.0
    %1269 = vmatpush1.msra.mxu0 0.0
    %1270 = vmatprep.subr.mxu0 0.0
    %1271 = vmatpush1.msra.mxu0 0.0
    %1272 = vmatprep.subr.mxu0 0.0
    %1273 = vmatpush1.msra.mxu0 0.0
    %1274 = vmatprep.subr.mxu0 0.0
    %1275 = vmatpush1.msra.mxu0 0.0
    %1276 = vmatprep.subr.mxu0 0.0
    %1277 = vmatpush1.msra.mxu0 0.0
    %1278 = vmatprep.subr.mxu0 0.0
    %1279 = vmatpush1.msra.mxu0 0.0
    %1280 = vmatprep.subr.mxu0 0.0
    %1281 = vmatpush1.msra.mxu0 0.0
    %1282 = vmatprep.subr.mxu0 0.0
    %1283 = vmatpush1.msra.mxu0 0.0
    %1284 = vmatprep.subr.mxu0 0.0
    %1285 = vmatpush1.msra.mxu0 0.0
    %1286 = vmatprep.subr.mxu0 0.0
    %1287 = vmatpush1.msra.mxu0 0.0
    %1288 = vmatprep.subr.mxu0 0.0
    %1289 = vmatpush1.msra.mxu0 0.0
    %1290 = vmatprep.subr.mxu0 0.0
    %1291 = vmatpush1.msra.mxu0 0.0
    %1292 = vmatprep.subr.mxu0 0.0
    %1293 = vmatpush1.msra.mxu0 0.0
    %1294 = vmatprep.subr.mxu0 0.0
    %1295 = vmatpush1.msra.mxu0 0.0
    %1296 = vmatprep.mubr.f32.mxu0 0.0
    %1297 = vmatmul.mubr.f32.gmra.mrb[0].mxu0 %v1230
    %v1298 = vpop.f32.mrb[0].mxu0
    %v1299 = vadd.f32 %v169, %v1298
    %v1300 = vpop.f32.mrb[0].mxu0
    %1301 = vdwg.mxu0
    %v1302 = vadd.f32 %v1224, %v1299
    %v1303 = vxor.u32 %v1302, 2147483648
    %v1304 = vmul.f32 %v1303, 1.442695
    %v1305 = vpow.pop %v1304
    %v1306 = vadd.f32 %v1305, 1.0
    %v1307 = vrcp.pop %v1306
    %v1308 = vmul.f32 1.0, %v1307
    %1310 = vrot.lane.b32.xlu0 %v1299, 96
    %v1311 = vpop.permute.xlu0 %1310
    %v1313 = vmul.f32 %v1308, %v1311
    %1315 = vrot.lane.b32.xlu0 %v1313, 32
    %v1316 = vpop.permute.xlu0 %1315
    %v1318 = vadd.f32 %v1224, %v1316
    %v1319 = vtanh.pop %v1318
    %v1320 = vsub.f32 1.0, %v1308
    %1322 = vrot.lane.b32.xlu0 %v1319, 112
    %v1323 = vpop.permute.xlu0 %1322
    %v1325 = vmul.f32 %v1320, %v1323
    %v1326 = vmul.f32 %v1308, %v985
    %v1327 = vadd.f32 %v1325, %v1326
    %1328 = vmatprep.subr.mxu0 0.0
    %1329 = vmatpush1.msra.mxu0 %v71
    %1330 = vmatprep.subr.mxu0 0.0
    %1331 = vmatpush1.msra.mxu0 %v72
    %1332 = vmatprep.subr.mxu0 0.0
    %1333 = vmatpush1.msra.mxu0 %v73
    %1334 = vmatprep.subr.mxu0 0.0
    %1335 = vmatpush1.msra.mxu0 %v74
    %1336 = vmatprep.subr.mxu0 0.0
    %1337 = vmatpush1.msra.mxu0 0.0
    %1338 = vmatprep.subr.mxu0 0.0
    %1339 = vmatpush1.msra.mxu0 0.0
    %1340 = vmatprep.subr.mxu0 0.0
    %1341 = vmatpush1.msra.mxu0 0.0
    %1342 = vmatprep.subr.mxu0 0.0
    %1343 = vmatpush1.msra.mxu0 0.0
    %1344 = vmatprep.subr.mxu0 0.0
    %1345 = vmatpush1.msra.mxu0 0.0
    %1346 = vmatprep.subr.mxu0 0.0
    %1347 = vmatpush1.msra.mxu0 0.0
    %1348 = vmatprep.subr.mxu0 0.0
    %1349 = vmatpush1.msra.mxu0 0.0
    %1350 = vmatprep.subr.mxu0 0.0
    %1351 = vmatpush1.msra.mxu0 0.0
    %1352 = vmatprep.subr.mxu0 0.0
    %1353 = vmatpush1.msra.mxu0 0.0
    %1354 = vmatprep.subr.mxu0 0.0
    %1355 = vmatpush1.msra.mxu0 0.0
    %1356 = vmatprep.subr.mxu0 0.0
    %1357 = vmatpush1.msra.mxu0 0.0
    %1358 = vmatprep.subr.mxu0 0.0
    %1359 = vmatpush1.msra.mxu0 0.0
    %1360 = vmatprep.subr.mxu0 0.0
    %1361 = vmatpush1.msra.mxu0 0.0
    %1362 = vmatprep.subr.mxu0 0.0
    %1363 = vmatpush1.msra.mxu0 0.0
    %1364 = vmatprep.subr.mxu0 0.0
    %1365 = vmatpush1.msra.mxu0 0.0
    %1366 = vmatprep.subr.mxu0 0.0
    %1367 = vmatpush1.msra.mxu0 0.0
    %1368 = vmatprep.subr.mxu0 0.0
    %1369 = vmatpush1.msra.mxu0 0.0
    %1370 = vmatprep.subr.mxu0 0.0
    %1371 = vmatpush1.msra.mxu0 0.0
    %1372 = vmatprep.subr.mxu0 0.0
    %1373 = vmatpush1.msra.mxu0 0.0
    %1374 = vmatprep.subr.mxu0 0.0
    %1375 = vmatpush1.msra.mxu0 0.0
    %1376 = vmatprep.subr.mxu0 0.0
    %1377 = vmatpush1.msra.mxu0 0.0
    %1378 = vmatprep.subr.mxu0 0.0
    %1379 = vmatpush1.msra.mxu0 0.0
    %1380 = vmatprep.subr.mxu0 0.0
    %1381 = vmatpush1.msra.mxu0 0.0
    %1382 = vmatprep.subr.mxu0 0.0
    %1383 = vmatpush1.msra.mxu0 0.0
    %1384 = vmatprep.subr.mxu0 0.0
    %1385 = vmatpush1.msra.mxu0 0.0
    %1386 = vmatprep.subr.mxu0 0.0
    %1387 = vmatpush1.msra.mxu0 0.0
    %1388 = vmatprep.subr.mxu0 0.0
    %1389 = vmatpush1.msra.mxu0 0.0
    %1390 = vmatprep.subr.mxu0 0.0
    %1391 = vmatpush1.msra.mxu0 0.0
    %1392 = vmatprep.mubr.f32.mxu0 0.0
    %1393 = vmatmul.mubr.f32.gmra.mrb[0].mxu0 %v93
    %v1394 = vpop.f32.mrb[0].mxu0
    %v1395 = vadd.f32 %v277, %v1394
    %v1396 = vpop.f32.mrb[0].mxu0
    %1397 = vdwg.mxu0
    %1399 = vrot.lane.b32.xlu0 %v1156, 112
    %v1400 = vpop.permute.xlu0 %1399
    %v1401 = vsel %vm171, %v1400, 0
    %1403 = vmatprep.subr.mxu0 0.0
    %1404 = vmatpush1.msra.mxu0 %v75
    %1405 = vmatprep.subr.mxu0 0.0
    %1406 = vmatpush1.msra.mxu0 %v76
    %1407 = vmatprep.subr.mxu0 0.0
    %1408 = vmatpush1.msra.mxu0 0.0
    %1409 = vmatprep.subr.mxu0 0.0
    %1410 = vmatpush1.msra.mxu0 0.0
    %1411 = vmatprep.subr.mxu0 0.0
    %1412 = vmatpush1.msra.mxu0 0.0
    %1413 = vmatprep.subr.mxu0 0.0
    %1414 = vmatpush1.msra.mxu0 0.0
    %1415 = vmatprep.subr.mxu0 0.0
    %1416 = vmatpush1.msra.mxu0 0.0
    %1417 = vmatprep.subr.mxu0 0.0
    %1418 = vmatpush1.msra.mxu0 0.0
    %1419 = vmatprep.subr.mxu0 0.0
    %1420 = vmatpush1.msra.mxu0 0.0
    %1421 = vmatprep.subr.mxu0 0.0
    %1422 = vmatpush1.msra.mxu0 0.0
    %1423 = vmatprep.subr.mxu0 0.0
    %1424 = vmatpush1.msra.mxu0 0.0
    %1425 = vmatprep.subr.mxu0 0.0
    %1426 = vmatpush1.msra.mxu0 0.0
    %1427 = vmatprep.subr.mxu0 0.0
    %1428 = vmatpush1.msra.mxu0 0.0
    %1429 = vmatprep.subr.mxu0 0.0
    %1430 = vmatpush1.msra.mxu0 0.0
    %1431 = vmatprep.subr.mxu0 0.0
    %1432 = vmatpush1.msra.mxu0 0.0
    %1433 = vmatprep.subr.mxu0 0.0
    %1434 = vmatpush1.msra.mxu0 0.0
    %1435 = vmatprep.subr.mxu0 0.0
    %1436 = vmatpush1.msra.mxu0 0.0
    %1437 = vmatprep.subr.mxu0 0.0
    %1438 = vmatpush1.msra.mxu0 0.0
    %1439 = vmatprep.subr.mxu0 0.0
    %1440 = vmatpush1.msra.mxu0 0.0
    %1441 = vmatprep.subr.mxu0 0.0
    %1442 = vmatpush1.msra.mxu0 0.0
    %1443 = vmatprep.subr.mxu0 0.0
    %1444 = vmatpush1.msra.mxu0 0.0
    %1445 = vmatprep.subr.mxu0 0.0
    %1446 = vmatpush1.msra.mxu0 0.0
    %1447 = vmatprep.subr.mxu0 0.0
    %1448 = vmatpush1.msra.mxu0 0.0
    %1449 = vmatprep.subr.mxu0 0.0
    %1450 = vmatpush1.msra.mxu0 0.0
    %1451 = vmatprep.subr.mxu0 0.0
    %1452 = vmatpush1.msra.mxu0 0.0
    %1453 = vmatprep.subr.mxu0 0.0
    %1454 = vmatpush1.msra.mxu0 0.0
    %1455 = vmatprep.subr.mxu0 0.0
    %1456 = vmatpush1.msra.mxu0 0.0
    %1457 = vmatprep.subr.mxu0 0.0
    %1458 = vmatpush1.msra.mxu0 0.0
    %1459 = vmatprep.subr.mxu0 0.0
    %1460 = vmatpush1.msra.mxu0 0.0
    %1461 = vmatprep.subr.mxu0 0.0
    %1462 = vmatpush1.msra.mxu0 0.0
    %1463 = vmatprep.subr.mxu0 0.0
    %1464 = vmatpush1.msra.mxu0 0.0
    %1465 = vmatprep.subr.mxu0 0.0
    %1466 = vmatpush1.msra.mxu0 0.0
    %1467 = vmatprep.mubr.f32.mxu0 0.0
    %1468 = vmatmul.mubr.f32.gmra.mrb[0].mxu0 %v1401
    %v1469 = vpop.f32.mrb[0].mxu0
    %v1470 = vadd.f32 %v359, %v1469
    %v1471 = vpop.f32.mrb[0].mxu0
    %1472 = vdwg.mxu0
    %v1473 = vadd.f32 %v1395, %v1470
    %v1474 = vxor.u32 %v1473, 2147483648
    %v1475 = vmul.f32 %v1474, 1.442695
    %v1476 = vpow.pop %v1475
    %v1477 = vadd.f32 %v1476, 1.0
    %v1478 = vrcp.pop %v1477
    %v1479 = vmul.f32 1.0, %v1478
    %1481 = vrot.lane.b32.xlu0 %v1470, 96
    %v1482 = vpop.permute.xlu0 %1481
    %v1484 = vmul.f32 %v1479, %v1482
    %1486 = vrot.lane.b32.xlu0 %v1484, 32
    %v1487 = vpop.permute.xlu0 %1486
    %v1489 = vadd.f32 %v1395, %v1487
    %v1490 = vtanh.pop %v1489
    %v1491 = vsub.f32 1.0, %v1479
    %1493 = vrot.lane.b32.xlu0 %v1490, 112
    %v1494 = vpop.permute.xlu0 %1493
    %v1496 = vmul.f32 %v1491, %v1494
    %v1497 = vmul.f32 %v1479, %v1156
    %v1498 = vadd.f32 %v1496, %v1497
    %v1500 = vsel %vm171, %v537, %v1498
    %v1502 = vsel %vm171, %v887, %v1156
    %v1504 = vsel %vm171, %v1229, %v814
    %1506 = vrot.lane.b32.xlu0 %v1327, 112
    %v1507 = vpop.permute.xlu0 %1506
    %v1509 = vsel %vm171, %v1507, %v456
    %v1510 = vld [vmem:[%s9] sm:$0xff]
    %v1511 = vld [vmem:[%s9 + $0x8] sm:$0xff]
    %v1512 = vld [vmem:[%s9 + $0x10] sm:$0xff]
    %v1513 = vld [vmem:[%s9 + $0x18] sm:$0xff]
    %v1514 = vld [vmem:[%s10] sm:$0x1]
    %v1515 = vld [vmem:[%s11] sm:$0x1]
    %v1517 = vlaneseq
    %v1518 = vshrl.u32 %v1517, 7
    %v1519 = vsub.s32 0, %v1518
    %v1520 = vrot.slane %v1514, %v1519
    %v1523 = vsel %vm92, %v1500, 0
    %1525 = vmatprep.subr.mxu0 0.0
    %1526 = vmatpush1.msra.mxu0 %v1510
    %1527 = vmatprep.subr.mxu0 0.0
    %1528 = vmatpush1.msra.mxu0 %v1511
    %1529 = vmatprep.subr.mxu0 0.0
    %1530 = vmatpush1.msra.mxu0 %v1512
    %1531 = vmatprep.subr.mxu0 0.0
    %1532 = vmatpush1.msra.mxu0 %v1513
    %1533 = vmatprep.subr.mxu0 0.0
    %1534 = vmatpush1.msra.mxu0 0.0
    %1535 = vmatprep.subr.mxu0 0.0
    %1536 = vmatpush1.msra.mxu0 0.0
    %1537 = vmatprep.subr.mxu0 0.0
    %1538 = vmatpush1.msra.mxu0 0.0
    %1539 = vmatprep.subr.mxu0 0.0
    %1540 = vmatpush1.msra.mxu0 0.0
    %1541 = vmatprep.subr.mxu0 0.0
    %1542 = vmatpush1.msra.mxu0 0.0
    %1543 = vmatprep.subr.mxu0 0.0
    %1544 = vmatpush1.msra.mxu0 0.0
    %1545 = vmatprep.subr.mxu0 0.0
    %1546 = vmatpush1.msra.mxu0 0.0
    %1547 = vmatprep.subr.mxu0 0.0
    %1548 = vmatpush1.msra.mxu0 0.0
    %1549 = vmatprep.subr.mxu0 0.0
    %1550 = vmatpush1.msra.mxu0 0.0
    %1551 = vmatprep.subr.mxu0 0.0
    %1552 = vmatpush1.msra.mxu0 0.0
    %1553 = vmatprep.subr.mxu0 0.0
    %1554 = vmatpush1.msra.mxu0 0.0
    %1555 = vmatprep.subr.mxu0 0.0
    %1556 = vmatpush1.msra.mxu0 0.0
    %1557 = vmatprep.subr.mxu0 0.0
    %1558 = vmatpush1.msra.mxu0 0.0
    %1559 = vmatprep.subr.mxu0 0.0
    %1560 = vmatpush1.msra.mxu0 0.0
    %1561 = vmatprep.subr.mxu0 0.0
    %1562 = vmatpush1.msra.mxu0 0.0
    %1563 = vmatprep.subr.mxu0 0.0
    %1564 = vmatpush1.msra.mxu0 0.0
    %1565 = vmatprep.subr.mxu0 0.0
    %1566 = vmatpush1.msra.mxu0 0.0
    %1567 = vmatprep.subr.mxu0 0.0
    %1568 = vmatpush1.msra.mxu0 0.0
    %1569 = vmatprep.subr.mxu0 0.0
    %1570 = vmatpush1.msra.mxu0 0.0
    %1571 = vmatprep.subr.mxu0 0.0
    %1572 = vmatpush1.msra.mxu0 0.0
    %1573 = vmatprep.subr.mxu0 0.0
    %1574 = vmatpush1.msra.mxu0 0.0
    %1575 = vmatprep.subr.mxu0 0.0
    %1576 = vmatpush1.msra.mxu0 0.0
    %1577 = vmatprep.subr.mxu0 0.0
    %1578 = vmatpush1.msra.mxu0 0.0
    %1579 = vmatprep.subr.mxu0 0.0
    %1580 = vmatpush1.msra.mxu0 0.0
    %1581 = vmatprep.subr.mxu0 0.0
    %1582 = vmatpush1.msra.mxu0 0.0
    %1583 = vmatprep.subr.mxu0 0.0
    %1584 = vmatpush1.msra.mxu0 0.0
    %1585 = vmatprep.subr.mxu0 0.0
    %1586 = vmatpush1.msra.mxu0 0.0
    %1587 = vmatprep.subr.mxu0 0.0
    %1588 = vmatpush1.msra.mxu0 0.0
    %1589 = vmatprep.mubr.f32.mxu0 0.0
    %1590 = vmatmul.mubr.f32.gmra.mrb[0].mxu0 %v1523
    %v1591 = vpop.f32.mrb[0].mxu0
    %v1592 = vadd.f32 %v1520, %v1591
    %v1593 = vpop.f32.mrb[0].mxu0
    %1594 = vdwg.mxu0
    %v1595 = vtanh.pop %v1592
    %v1597 = vlaneseq
    %v1598 = vshrl.u32 %v1597, 7
    %v1599 = vsub.s32 0, %v1598
    %v1600 = vrot.slane %v1515, %v1599
    %v1602 = vmul.f32 %v1595, %v1600
    %vm1603 = vcmask 254976
    %v1604 = vsel %vm1603, %v1602, 0.0
    %1605 = vadd.xlane.f32.xlu0 %v1604
    %v1606 = vpop.xlane.xlu0 %1605
    %v1608 = vsel %vm92, %v1502, 0
    %1610 = vmatprep.subr.mxu0 0.0
    %1611 = vmatpush1.msra.mxu0 %v1510
    %1612 = vmatprep.subr.mxu0 0.0
    %1613 = vmatpush1.msra.mxu0 %v1511
    %1614 = vmatprep.subr.mxu0 0.0
    %1615 = vmatpush1.msra.mxu0 %v1512
    %1616 = vmatprep.subr.mxu0 0.0
    %1617 = vmatpush1.msra.mxu0 %v1513
    %1618 = vmatprep.subr.mxu0 0.0
    %1619 = vmatpush1.msra.mxu0 0.0
    %1620 = vmatprep.subr.mxu0 0.0
    %1621 = vmatpush1.msra.mxu0 0.0
    %1622 = vmatprep.subr.mxu0 0.0
    %1623 = vmatpush1.msra.mxu0 0.0
    %1624 = vmatprep.subr.mxu0 0.0
    %1625 = vmatpush1.msra.mxu0 0.0
    %1626 = vmatprep.subr.mxu0 0.0
    %1627 = vmatpush1.msra.mxu0 0.0
    %1628 = vmatprep.subr.mxu0 0.0
    %1629 = vmatpush1.msra.mxu0 0.0
    %1630 = vmatprep.subr.mxu0 0.0
    %1631 = vmatpush1.msra.mxu0 0.0
    %1632 = vmatprep.subr.mxu0 0.0
    %1633 = vmatpush1.msra.mxu0 0.0
    %1634 = vmatprep.subr.mxu0 0.0
    %1635 = vmatpush1.msra.mxu0 0.0
    %1636 = vmatprep.subr.mxu0 0.0
    %1637 = vmatpush1.msra.mxu0 0.0
    %1638 = vmatprep.subr.mxu0 0.0
    %1639 = vmatpush1.msra.mxu0 0.0
    %1640 = vmatprep.subr.mxu0 0.0
    %1641 = vmatpush1.msra.mxu0 0.0
    %1642 = vmatprep.subr.mxu0 0.0
    %1643 = vmatpush1.msra.mxu0 0.0
    %1644 = vmatprep.subr.mxu0 0.0
    %1645 = vmatpush1.msra.mxu0 0.0
    %1646 = vmatprep.subr.mxu0 0.0
    %1647 = vmatpush1.msra.mxu0 0.0
    %1648 = vmatprep.subr.mxu0 0.0
    %1649 = vmatpush1.msra.mxu0 0.0
    %1650 = vmatprep.subr.mxu0 0.0
    %1651 = vmatpush1.msra.mxu0 0.0
    %1652 = vmatprep.subr.mxu0 0.0
    %1653 = vmatpush1.msra.mxu0 0.0
    %1654 = vmatprep.subr.mxu0 0.0
    %1655 = vmatpush1.msra.mxu0 0.0
    %1656 = vmatprep.subr.mxu0 0.0
    %1657 = vmatpush1.msra.mxu0 0.0
    %1658 = vmatprep.subr.mxu0 0.0
    %1659 = vmatpush1.msra.mxu0 0.0
    %1660 = vmatprep.subr.mxu0 0.0
    %1661 = vmatpush1.msra.mxu0 0.0
    %1662 = vmatprep.subr.mxu0 0.0
    %1663 = vmatpush1.msra.mxu0 0.0
    %1664 = vmatprep.subr.mxu0 0.0
    %1665 = vmatpush1.msra.mxu0 0.0
    %1666 = vmatprep.subr.mxu0 0.0
    %1667 = vmatpush1.msra.mxu0 0.0
    %1668 = vmatprep.subr.mxu0 0.0
    %1669 = vmatpush1.msra.mxu0 0.0
    %1670 = vmatprep.subr.mxu0 0.0
    %1671 = vmatpush1.msra.mxu0 0.0
    %1672 = vmatprep.subr.mxu0 0.0
    %1673 = vmatpush1.msra.mxu0 0.0
    %1674 = vmatprep.mubr.f32.mxu0 0.0
    %1675 = vmatmul.mubr.f32.gmra.mrb[0].mxu0 %v1608
    %v1676 = vpop.f32.mrb[0].mxu0
    %v1677 = vadd.f32 %v1520, %v1676
    %v1678 = vpop.f32.mrb[0].mxu0
    %1679 = vdwg.mxu0
    %v1680 = vtanh.pop %v1677
    %v1681 = vmul.f32 %v1680, %v1600
    %v1682 = vsel %vm1603, %v1681, 0.0
    %1683 = vadd.xlane.f32.xlu0 %v1682
    %v1684 = vpop.xlane.xlu0 %1683
    %v1686 = vsel %vm92, %v1504, 0
    %1688 = vmatprep.subr.mxu0 0.0
    %1689 = vmatpush1.msra.mxu0 %v1510
    %1690 = vmatprep.subr.mxu0 0.0
    %1691 = vmatpush1.msra.mxu0 %v1511
    %1692 = vmatprep.subr.mxu0 0.0
    %1693 = vmatpush1.msra.mxu0 %v1512
    %1694 = vmatprep.subr.mxu0 0.0
    %1695 = vmatpush1.msra.mxu0 %v1513
    %1696 = vmatprep.subr.mxu0 0.0
    %1697 = vmatpush1.msra.mxu0 0.0
    %1698 = vmatprep.subr.mxu0 0.0
    %1699 = vmatpush1.msra.mxu0 0.0
    %1700 = vmatprep.subr.mxu0 0.0
    %1701 = vmatpush1.msra.mxu0 0.0
    %1702 = vmatprep.subr.mxu0 0.0
    %1703 = vmatpush1.msra.mxu0 0.0
    %1704 = vmatprep.subr.mxu0 0.0
    %1705 = vmatpush1.msra.mxu0 0.0
    %1706 = vmatprep.subr.mxu0 0.0
    %1707 = vmatpush1.msra.mxu0 0.0
    %1708 = vmatprep.subr.mxu0 0.0
    %1709 = vmatpush1.msra.mxu0 0.0
    %1710 = vmatprep.subr.mxu0 0.0
    %1711 = vmatpush1.msra.mxu0 0.0
    %1712 = vmatprep.subr.mxu0 0.0
    %1713 = vmatpush1.msra.mxu0 0.0
    %1714 = vmatprep.subr.mxu0 0.0
    %1715 = vmatpush1.msra.mxu0 0.0
    %1716 = vmatprep.subr.mxu0 0.0
    %1717 = vmatpush1.msra.mxu0 0.0
    %1718 = vmatprep.subr.mxu0 0.0
    %1719 = vmatpush1.msra.mxu0 0.0
    %1720 = vmatprep.subr.mxu0 0.0
    %1721 = vmatpush1.msra.mxu0 0.0
    %1722 = vmatprep.subr.mxu0 0.0
    %1723 = vmatpush1.msra.mxu0 0.0
    %1724 = vmatprep.subr.mxu0 0.0
    %1725 = vmatpush1.msra.mxu0 0.0
    %1726 = vmatprep.subr.mxu0 0.0
    %1727 = vmatpush1.msra.mxu0 0.0
    %1728 = vmatprep.subr.mxu0 0.0
    %1729 = vmatpush1.msra.mxu0 0.0
    %1730 = vmatprep.subr.mxu0 0.0
    %1731 = vmatpush1.msra.mxu0 0.0
    %1732 = vmatprep.subr.mxu0 0.0
    %1733 = vmatpush1.msra.mxu0 0.0
    %1734 = vmatprep.subr.mxu0 0.0
    %1735 = vmatpush1.msra.mxu0 0.0
    %1736 = vmatprep.subr.mxu0 0.0
    %1737 = vmatpush1.msra.mxu0 0.0
    %1738 = vmatprep.subr.mxu0 0.0
    %1739 = vmatpush1.msra.mxu0 0.0
    %1740 = vmatprep.subr.mxu0 0.0
    %1741 = vmatpush1.msra.mxu0 0.0
    %1742 = vmatprep.subr.mxu0 0.0
    %1743 = vmatpush1.msra.mxu0 0.0
    %1744 = vmatprep.subr.mxu0 0.0
    %1745 = vmatpush1.msra.mxu0 0.0
    %1746 = vmatprep.subr.mxu0 0.0
    %1747 = vmatpush1.msra.mxu0 0.0
    %1748 = vmatprep.subr.mxu0 0.0
    %1749 = vmatpush1.msra.mxu0 0.0
    %1750 = vmatprep.subr.mxu0 0.0
    %1751 = vmatpush1.msra.mxu0 0.0
    %1752 = vmatprep.mubr.f32.mxu0 0.0
    %1753 = vmatmul.mubr.f32.gmra.mrb[0].mxu0 %v1686
    %v1754 = vpop.f32.mrb[0].mxu0
    %v1755 = vadd.f32 %v1520, %v1754
    %v1756 = vpop.f32.mrb[0].mxu0
    %1757 = vdwg.mxu0
    %v1758 = vtanh.pop %v1755
    %v1759 = vmul.f32 %v1758, %v1600
    %v1760 = vsel %vm1603, %v1759, 0.0
    %1761 = vadd.xlane.f32.xlu0 %v1760
    %v1762 = vpop.xlane.xlu0 %1761
    %v1764 = vsel %vm92, %v1509, 0
    %1766 = vmatprep.subr.mxu0 0.0
    %1767 = vmatpush1.msra.mxu0 %v1510
    %1768 = vmatprep.subr.mxu0 0.0
    %1769 = vmatpush1.msra.mxu0 %v1511
    %1770 = vmatprep.subr.mxu0 0.0
    %1771 = vmatpush1.msra.mxu0 %v1512
    %1772 = vmatprep.subr.mxu0 0.0
    %1773 = vmatpush1.msra.mxu0 %v1513
    %1774 = vmatprep.subr.mxu0 0.0
    %1775 = vmatpush1.msra.mxu0 0.0
    %1776 = vmatprep.subr.mxu0 0.0
    %1777 = vmatpush1.msra.mxu0 0.0
    %1778 = vmatprep.subr.mxu0 0.0
    %1779 = vmatpush1.msra.mxu0 0.0
    %1780 = vmatprep.subr.mxu0 0.0
    %1781 = vmatpush1.msra.mxu0 0.0
    %1782 = vmatprep.subr.mxu0 0.0
    %1783 = vmatpush1.msra.mxu0 0.0
    %1784 = vmatprep.subr.mxu0 0.0
    %1785 = vmatpush1.msra.mxu0 0.0
    %1786 = vmatprep.subr.mxu0 0.0
    %1787 = vmatpush1.msra.mxu0 0.0
    %1788 = vmatprep.subr.mxu0 0.0
    %1789 = vmatpush1.msra.mxu0 0.0
    %1790 = vmatprep.subr.mxu0 0.0
    %1791 = vmatpush1.msra.mxu0 0.0
    %1792 = vmatprep.subr.mxu0 0.0
    %1793 = vmatpush1.msra.mxu0 0.0
    %1794 = vmatprep.subr.mxu0 0.0
    %1795 = vmatpush1.msra.mxu0 0.0
    %1796 = vmatprep.subr.mxu0 0.0
    %1797 = vmatpush1.msra.mxu0 0.0
    %1798 = vmatprep.subr.mxu0 0.0
    %1799 = vmatpush1.msra.mxu0 0.0
    %1800 = vmatprep.subr.mxu0 0.0
    %1801 = vmatpush1.msra.mxu0 0.0
    %1802 = vmatprep.subr.mxu0 0.0
    %1803 = vmatpush1.msra.mxu0 0.0
    %1804 = vmatprep.subr.mxu0 0.0
    %1805 = vmatpush1.msra.mxu0 0.0
    %1806 = vmatprep.subr.mxu0 0.0
    %1807 = vmatpush1.msra.mxu0 0.0
    %1808 = vmatprep.subr.mxu0 0.0
    %1809 = vmatpush1.msra.mxu0 0.0
    %1810 = vmatprep.subr.mxu0 0.0
    %1811 = vmatpush1.msra.mxu0 0.0
    %1812 = vmatprep.subr.mxu0 0.0
    %1813 = vmatpush1.msra.mxu0 0.0
    %1814 = vmatprep.subr.mxu0 0.0
    %1815 = vmatpush1.msra.mxu0 0.0
    %1816 = vmatprep.subr.mxu0 0.0
    %1817 = vmatpush1.msra.mxu0 0.0
    %1818 = vmatprep.subr.mxu0 0.0
    %1819 = vmatpush1.msra.mxu0 0.0
    %1820 = vmatprep.subr.mxu0 0.0
    %1821 = vmatpush1.msra.mxu0 0.0
    %1822 = vmatprep.subr.mxu0 0.0
    %1823 = vmatpush1.msra.mxu0 0.0
    %1824 = vmatprep.subr.mxu0 0.0
    %1825 = vmatpush1.msra.mxu0 0.0
    %1826 = vmatprep.subr.mxu0 0.0
    %1827 = vmatpush1.msra.mxu0 0.0
    %1828 = vmatprep.subr.mxu0 0.0
    %1829 = vmatpush1.msra.mxu0 0.0
    %1830 = vmatprep.mubr.f32.mxu0 0.0
    %1831 = vmatmul.mubr.f32.gmra.mrb[0].mxu0 %v1764
    %v1832 = vpop.f32.mrb[0].mxu0
    %v1833 = vadd.f32 %v1520, %v1832
    %v1834 = vpop.f32.mrb[0].mxu0
    %1835 = vdwg.mxu0
    %v1836 = vtanh.pop %v1833
    %v1837 = vmul.f32 %v1836, %v1600
    %v1838 = vsel %vm1603, %v1837, 0.0
    %1839 = vadd.xlane.f32.xlu0 %v1838
    %v1840 = vpop.xlane.xlu0 %1839
    %vm1841 = vcmask 7168
    %v1842 = vsel %vm1841, %v1606, %v1684
    %vm1843 = vcmask 15360
    %v1844 = vsel %vm1843, %v1842, %v1762
    %vm1845 = vcmask 23552
    %v1846 = vsel %vm1845, %v1844, %v1840
    %vm1847 = vcmask 25600
    %v1848 = vsel %vm1847, %v1846, -inf
    %1849 = vmax.xlane.f32.xlu0 %v1848
    %v1850 = vpop.xlane.xlu0 %1849
    %v1851 = vsub.f32 %v1846, %v1850
    %v1852 = vmul.f32 %v1851, 1.442695
    %v1853 = vpow.pop %v1852
    %v1854 = vsel %vm1847, %v1853, 0.0
    %1855 = vadd.xlane.f32.xlu0 %v1854
    %v1856 = vpop.xlane.xlu0 %1855
    %v1857 = vrcp.pop %v1856
    %v1858 = vmul.f32 %v1853, %v1857
    %1860 = vset.pattern.permute.xlu0 0
    %1861 = vperm.xlu0 %1860, %v1858
    %v1862 = vpop.permute.xlu0 %1861
    %v1864 = vmul.f32 %v1862, %v1500
    %v1865 = vadd.f32 %v1864, 0.0
    %1866 = vset.pattern.permute.xlu0 1
    %1867 = vperm.xlu0 %1866, %v1858
    %v1868 = vpop.permute.xlu0 %1867
    %v1870 = vmul.f32 %v1868, %v1502
    %v1871 = vadd.f32 %v1865, %v1870
    %1872 = vset.pattern.permute.xlu0 2
    %1873 = vperm.xlu0 %1872, %v1858
    %v1874 = vpop.permute.xlu0 %1873
    %v1876 = vmul.f32 %v1874, %v1504
    %v1877 = vadd.f32 %v1871, %v1876
    %1878 = vset.pattern.permute.xlu0 3
    %1879 = vperm.xlu0 %1878, %v1858
    %v1880 = vpop.permute.xlu0 %1879
    %v1882 = vmul.f32 %v1880, %v1509
    %v1883 = vadd.f32 %v1877, %v1882
    %v1884 = vld [vmem:[%s15] sm:$0x1]
    %v1885 = vadd.f32 %v1884, 1e-05
    %v1886 = vrsqrt.pop %v1885
    %v1887 = vld [vmem:[%s14] sm:$0x1]
    %v1889 = vlaneseq
    %v1890 = vshrl.u32 %v1889, 7
    %v1891 = vsub.s32 0, %v1890
    %v1892 = vrot.slane %v1887, %v1891
    %v1894 = vsub.f32 %v1883, %v1892
    %v1896 = vlaneseq
    %v1897 = vshrl.u32 %v1896, 7
    %v1898 = vsub.s32 0, %v1897
    %v1899 = vrot.slane %v1886, %v1898
    %v1901 = vmul.f32 %v1894, %v1899
    %v1902 = vld [vmem:[%s12] sm:$0x1]
    %v1904 = vlaneseq
    %v1905 = vshrl.u32 %v1904, 7
    %v1906 = vsub.s32 0, %v1905
    %v1907 = vrot.slane %v1902, %v1906
    %v1909 = vmul.f32 %v1901, %v1907
    %v1910 = vld [vmem:[%s13] sm:$0x1]
    %v1912 = vlaneseq
    %v1913 = vshrl.u32 %v1912, 7
    %v1914 = vsub.s32 0, %v1913
    %v1915 = vrot.slane %v1910, %v1914
    %v1917 = vadd.f32 %v1909, %v1915
    %v1918 = vld [vmem:[%s16] sm:$0xff]
    %v1919 = vld [vmem:[%s16 + $0x8] sm:$0xff]
    %v1920 = vld [vmem:[%s16 + $0x10] sm:$0xff]
    %v1921 = vld [vmem:[%s16 + $0x18] sm:$0xff]
    %v1922 = vld [vmem:[%s17] sm:$0x1]
    %v1924 = vlaneseq
    %v1925 = vshrl.u32 %v1924, 7
    %v1926 = vsub.s32 0, %v1925
    %v1927 = vrot.slane %v1922, %v1926
    %v1930 = vsel %vm92, %v1917, 0
    %1932 = vmatprep.subr.mxu0 0.0
    %1933 = vmatpush1.msra.mxu0 %v1918
    %1934 = vmatprep.subr.mxu0 0.0
    %1935 = vmatpush1.msra.mxu0 %v1919
    %1936 = vmatprep.subr.mxu0 0.0
    %1937 = vmatpush1.msra.mxu0 %v1920
    %1938 = vmatprep.subr.mxu0 0.0
    %1939 = vmatpush1.msra.mxu0 %v1921
    %1940 = vmatprep.subr.mxu0 0.0
    %1941 = vmatpush1.msra.mxu0 0.0
    %1942 = vmatprep.subr.mxu0 0.0
    %1943 = vmatpush1.msra.mxu0 0.0
    %1944 = vmatprep.subr.mxu0 0.0
    %1945 = vmatpush1.msra.mxu0 0.0
    %1946 = vmatprep.subr.mxu0 0.0
    %1947 = vmatpush1.msra.mxu0 0.0
    %1948 = vmatprep.subr.mxu0 0.0
    %1949 = vmatpush1.msra.mxu0 0.0
    %1950 = vmatprep.subr.mxu0 0.0
    %1951 = vmatpush1.msra.mxu0 0.0
    %1952 = vmatprep.subr.mxu0 0.0
    %1953 = vmatpush1.msra.mxu0 0.0
    %1954 = vmatprep.subr.mxu0 0.0
    %1955 = vmatpush1.msra.mxu0 0.0
    %1956 = vmatprep.subr.mxu0 0.0
    %1957 = vmatpush1.msra.mxu0 0.0
    %1958 = vmatprep.subr.mxu0 0.0
    %1959 = vmatpush1.msra.mxu0 0.0
    %1960 = vmatprep.subr.mxu0 0.0
    %1961 = vmatpush1.msra.mxu0 0.0
    %1962 = vmatprep.subr.mxu0 0.0
    %1963 = vmatpush1.msra.mxu0 0.0
    %1964 = vmatprep.subr.mxu0 0.0
    %1965 = vmatpush1.msra.mxu0 0.0
    %1966 = vmatprep.subr.mxu0 0.0
    %1967 = vmatpush1.msra.mxu0 0.0
    %1968 = vmatprep.subr.mxu0 0.0
    %1969 = vmatpush1.msra.mxu0 0.0
    %1970 = vmatprep.subr.mxu0 0.0
    %1971 = vmatpush1.msra.mxu0 0.0
    %1972 = vmatprep.subr.mxu0 0.0
    %1973 = vmatpush1.msra.mxu0 0.0
    %1974 = vmatprep.subr.mxu0 0.0
    %1975 = vmatpush1.msra.mxu0 0.0
    %1976 = vmatprep.subr.mxu0 0.0
    %1977 = vmatpush1.msra.mxu0 0.0
    %1978 = vmatprep.subr.mxu0 0.0
    %1979 = vmatpush1.msra.mxu0 0.0
    %1980 = vmatprep.subr.mxu0 0.0
    %1981 = vmatpush1.msra.mxu0 0.0
    %1982 = vmatprep.subr.mxu0 0.0
    %1983 = vmatpush1.msra.mxu0 0.0
    %1984 = vmatprep.subr.mxu0 0.0
    %1985 = vmatpush1.msra.mxu0 0.0
    %1986 = vmatprep.subr.mxu0 0.0
    %1987 = vmatpush1.msra.mxu0 0.0
    %1988 = vmatprep.subr.mxu0 0.0
    %1989 = vmatpush1.msra.mxu0 0.0
    %1990 = vmatprep.subr.mxu0 0.0
    %1991 = vmatpush1.msra.mxu0 0.0
    %1992 = vmatprep.subr.mxu0 0.0
    %1993 = vmatpush1.msra.mxu0 0.0
    %1994 = vmatprep.subr.mxu0 0.0
    %1995 = vmatpush1.msra.mxu0 0.0
    %1996 = vmatprep.mubr.f32.mxu0 0.0
    %1997 = vmatmul.mubr.f32.gmra.mrb[0].mxu0 %v1930
    %v1998 = vpop.f32.mrb[0].mxu0
    %v1999 = vadd.f32 %v1927, %v1998
    %v2000 = vpop.f32.mrb[0].mxu0
    %2001 = vdwg.mxu0
    %vm2002 = vcmask 33792
    %2003 = vst.msk [vmem:[#allocation2] sm:$0x3] %vm2002, %v1999
    %2004 = vst.msk [vmem:[#allocation4] sm:$0x3] %vm1847, %v1858
    // Predicated region
    $region74: #{han_forward.3} parent=1 // pred_check
      _
    $region75: #{han_forward.3} parent=1 // pred_check_branch
      %2006 = sbr.rel (0) target = $region77
    $region76: #{han_forward.3} parent=1 // pred_region
      %s2008 = ssub.s32 32, 32
      %2009 = vsyncadd [#allocation3], %s2008
      %s2011 = sshll.u32 [#allocation2], 4
      %s2012 = int_to_ptr.vmem [resolvable:$true] %s2011
      %2014 = dma.vmem_to_hbm [thread:$0]  %s2012, 32, %s18, [#allocation3]
    $region77: #{han_forward.3} parent=1 // pred_fallthru
      _
    // Predicated region
    $region78: #{han_forward.3} parent=1 // pred_check
      _
    $region79: #{han_forward.3} parent=1 // pred_check_branch
      %2016 = sbr.rel (0) target = $region81
    $region80: #{han_forward.3} parent=1 // pred_region
      %s2018 = ssub.s32 32, 32
      %2019 = vsyncadd [#allocation5], %s2018
      %s2021 = sshll.u32 [#allocation4], 4
      %s2022 = int_to_ptr.vmem [resolvable:$true] %s2021
      %2024 = dma.vmem_to_hbm [thread:$0]  %s2022, 32, %s19, [#allocation5]
    $region81: #{han_forward.3} parent=1 // pred_fallthru
      _
    // Predicated region
    $region82: #{han_forward.3} parent=1 // pred_check
      _
    $region83: #{han_forward.3} parent=1 // pred_check_branch
      %2026 = sbr.rel (0) target = $region85
    $region84: #{han_forward.3} parent=1 // pred_region
      %2027 = dma.done [#allocation3], 32
    $region85: #{han_forward.3} parent=1 // pred_fallthru
      _
    // Predicated region
    $region86: #{han_forward.3} parent=1 // pred_check
      _
    $region87: #{han_forward.3} parent=1 // pred_check_branch
      %2029 = sbr.rel (0) target = $region89
    $region88: #{han_forward.3} parent=1 // pred_region
      %2030 = dma.done [#allocation5], 32
    $region89: #{han_forward.3} parent=1 // pred_fallthru
      _
    %2031 = vsyncpa [#allocation3], 1
    %2032 = vsyncpa [#allocation5], 1

// kernel: han_forward.2
$region0: #{han_forward.2}
  #allocation0 [shape = 'u32[]', space=smem, size = 0x4, offset = 0x4, fixed_abs, tag = 'smem constant byte address 0x4 - core index']
  #allocation1 [shape = 'u32[144,128]{1,0:T(1,128)}', space=vmem, size = 0x12000, scoped, tag = 'internal scratch']
  %s0 = inlined_call_operand.vmem [shape: f32[8,8,32], index: 0, kind: input, shape index: {}]
  %s1 = inlined_call_operand.vmem [shape: f32[32,48], index: 1, kind: input, shape index: {}]
  %s2 = inlined_call_operand.vmem [shape: f32[16,48], index: 2, kind: input, shape index: {}]
  %s3 = inlined_call_operand.vmem [shape: f32[1,48], index: 3, kind: input, shape index: {}]
  %s4 = inlined_call_operand.vmem [shape: f32[1,48], index: 4, kind: input, shape index: {}]
  %s5 = inlined_call_operand.vmem [shape: f32[32,48], index: 5, kind: input, shape index: {}]
  %s6 = inlined_call_operand.vmem [shape: f32[16,48], index: 6, kind: input, shape index: {}]
  %s7 = inlined_call_operand.vmem [shape: f32[1,48], index: 7, kind: input, shape index: {}]
  %s8 = inlined_call_operand.vmem [shape: f32[1,48], index: 8, kind: input, shape index: {}]
  %s9 = inlined_call_operand.vmem [shape: f32[32,32], index: 9, kind: input, shape index: {}]
  %s10 = inlined_call_operand.vmem [shape: f32[1,32], index: 10, kind: input, shape index: {}]
  %s11 = inlined_call_operand.vmem [shape: f32[1,32], index: 11, kind: input, shape index: {}]
  %s12 = inlined_call_operand.vmem [shape: f32[2,4,32], index: 12, kind: output, shape index: {0}]
  %s13 = inlined_call_operand.hbm [shape: f32[2,4,8], index: 13, kind: output, shape index: {1}]
  %14 = xla_tuple %s12, %s13
  %s15 = sld [smem:[#allocation0]]
  $region89: #{han_forward.2} parent=0
    _
  %s17 = ssub.s32 1, %s15
  %s18 = scalar_select 0, %s17, %s15
  $region1: #{han_forward.2} parent=0
    #allocation2 [shape = 'u8[4096]{0}', space=vmem, size = 0x1000, scoped, tag = 'output window, operand 1']
    #allocation3 [shape = 's32[2]{0}', space=sflag, size = 0x8, scoped, tag = 'scoped memory for han_forward.2']
    %19 = vsyncpa [#allocation3], 0
    %s20 = scalar_lea.sflag [#allocation3], 1
    %21 = vsyncpa %s20, 0
    loop: start=0, step=1, limit=4
    $region2: #{han_forward.2} parent=1 // loop_pre_header
      _
    $region3: #{han_forward.2} parent=1 // loop_header
      %s23 = sphi 0, %s27
      %p24 = scmp.ge.s32.totalorder %s23, 4
      %s33 = sphi 0, %s35
      %s36 = sphi 0, %s33
      %s37 = sphi 0, %s36
      %s53 = sphi 0, %s37
      %s57 = sphi 0, %s57
      %s59 = sphi 0, %s57
      %s60 = sphi 0, %s59
      %s74 = sphi 0, %s60
      %s78 = sphi 0, %s78
      %s80 = sphi 0, %s78
      %s81 = sphi 0, %s80
      %s95 = sphi 0, %s81
      %s99 = sphi 0, %s99
      %s101 = sphi 0, %s99
      %s102 = sphi 0, %s101
      %s116 = sphi 0, %s102
      %s120 = sphi 0, %s120
      %s122 = sphi 0, %s120
      %s123 = sphi 0, %s122
      %s137 = sphi 0, %s123
      %s141 = sphi 0, %s141
      %s143 = sphi 0, %s141
      %s144 = sphi 0, %s143
      %s158 = sphi 0, %s144
      %s162 = sphi 0, %s162
      %s164 = sphi 0, %s162
      %s165 = sphi 0, %s164
      %s179 = sphi 0, %s165
      %s183 = sphi 0, %s183
      %s185 = sphi 0, %s183
      %s186 = sphi 0, %s185
      %s200 = sphi 0, %s186
      %s204 = sphi 0, %s204
      %s206 = sphi 0, %s204
      %s207 = sphi 0, %s206
      %s221 = sphi 0, %s207
      %s225 = sphi 0, %s225
      %s227 = sphi 0, %s225
      %s228 = sphi 0, %s227
      %s242 = sphi 0, %s228
      %s246 = sphi 0, %s246
      %s248 = sphi 0, %s246
      %s249 = sphi 0, %s248
      %s263 = sphi 0, %s249
      %s267 = sphi 0, %s267
      %s269 = sphi 0, %s267
      %s270 = sphi 0, %s269
      %s284 = sphi 0, %s270
      %s290 = sphi 0, %s292
      %s293 = sphi 0, %s290
      %s294 = sphi 0, %s293
      %s310 = sphi 0, %s294
      %s316 = sphi 0, %s318
      %s319 = sphi 0, %s316
      %s320 = sphi 0, %s319
      %s336 = sphi 0, %s320
    $region4: #{han_forward.2} parent=1 // loop_header_branch
      %26 = sbr.rel (%p24) target = $region8
    $region5: #{han_forward.2} parent=1 // loop_body
      %s28 = ssub.s32 %s23, 1
      %s29 = ssub.s32 %s23, 2
      %s30 = sadd.s32 %s23, 1
      %s31 = ssub.s32 %s23, %s30
      %p32 = scmp.eq.s32.totalorder %s31, 0
      %s34 = sadd.s32 %s33, 1
      %s35 = scalar_select %p32, %s33, %s34
      %p38 = pneg %p32
      %p39 = scmp.eq.s32.totalorder %s23, 1
      %p40 = por %p38, %p39
      %p41 = scmp.ne.s32.totalorder %s33, %s36
      %p42 = scmp.eq.s32.totalorder %s23, 0
      %p43 = por %p41, %p42
      %p44 = scmp.ne.s32.totalorder %s33, %s36
      %p45 = scmp.eq.s32.totalorder %s28, 1
      %p46 = por %p44, %p45
      %p47 = scmp.ne.s32.totalorder %s36, %s37
      %p48 = scmp.eq.s32.totalorder %s28, 0
      %p49 = por %p47, %p48
      %p50 = scmp.ne.s32.totalorder %s36, %s37
      %p51 = scmp.eq.s32.totalorder %s29, 1
      %p52 = por %p50, %p51
      %p54 = scmp.ne.s32.totalorder %s37, %s53
      %p55 = scmp.eq.s32.totalorder %s29, 0
      %p56 = por %p54, %p55
      %s58 = sadd.s32 %s57, 1
      %p61 = scmp.eq.s32.totalorder %s23, 1
      %p62 = scmp.ne.s32.totalorder %s57, %s59
      %p63 = scmp.eq.s32.totalorder %s23, 0
      %p64 = por %p62, %p63
      %p65 = scmp.ne.s32.totalorder %s57, %s59
      %p66 = scmp.eq.s32.totalorder %s28, 1
      %p67 = por %p65, %p66
      %p68 = scmp.ne.s32.totalorder %s59, %s60
      %p69 = scmp.eq.s32.totalorder %s28, 0
      %p70 = por %p68, %p69
      %p71 = scmp.ne.s32.totalorder %s59, %s60
      %p72 = scmp.eq.s32.totalorder %s29, 1
      %p73 = por %p71, %p72
      %p75 = scmp.ne.s32.totalorder %s60, %s74
      %p76 = scmp.eq.s32.totalorder %s29, 0
      %p77 = por %p75, %p76
      %s79 = sadd.s32 %s78, 1
      %p82 = scmp.eq.s32.totalorder %s23, 1
      %p83 = scmp.ne.s32.totalorder %s78, %s80
      %p84 = scmp.eq.s32.totalorder %s23, 0
      %p85 = por %p83, %p84
      %p86 = scmp.ne.s32.totalorder %s78, %s80
      %p87 = scmp.eq.s32.totalorder %s28, 1
      %p88 = por %p86, %p87
      %p89 = scmp.ne.s32.totalorder %s80, %s81
      %p90 = scmp.eq.s32.totalorder %s28, 0
      %p91 = por %p89, %p90
      %p92 = scmp.ne.s32.totalorder %s80, %s81
      %p93 = scmp.eq.s32.totalorder %s29, 1
      %p94 = por %p92, %p93
      %p96 = scmp.ne.s32.totalorder %s81, %s95
      %p97 = scmp.eq.s32.totalorder %s29, 0
      %p98 = por %p96, %p97
      %s100 = sadd.s32 %s99, 1
      %p103 = scmp.eq.s32.totalorder %s23, 1
      %p104 = scmp.ne.s32.totalorder %s99, %s101
      %p105 = scmp.eq.s32.totalorder %s23, 0
      %p106 = por %p104, %p105
      %p107 = scmp.ne.s32.totalorder %s99, %s101
      %p108 = scmp.eq.s32.totalorder %s28, 1
      %p109 = por %p107, %p108
      %p110 = scmp.ne.s32.totalorder %s101, %s102
      %p111 = scmp.eq.s32.totalorder %s28, 0
      %p112 = por %p110, %p111
      %p113 = scmp.ne.s32.totalorder %s101, %s102
      %p114 = scmp.eq.s32.totalorder %s29, 1
      %p115 = por %p113, %p114
      %p117 = scmp.ne.s32.totalorder %s102, %s116
      %p118 = scmp.eq.s32.totalorder %s29, 0
      %p119 = por %p117, %p118
      %s121 = sadd.s32 %s120, 1
      %p124 = scmp.eq.s32.totalorder %s23, 1
      %p125 = scmp.ne.s32.totalorder %s120, %s122
      %p126 = scmp.eq.s32.totalorder %s23, 0
      %p127 = por %p125, %p126
      %p128 = scmp.ne.s32.totalorder %s120, %s122
      %p129 = scmp.eq.s32.totalorder %s28, 1
      %p130 = por %p128, %p129
      %p131 = scmp.ne.s32.totalorder %s122, %s123
      %p132 = scmp.eq.s32.totalorder %s28, 0
      %p133 = por %p131, %p132
      %p134 = scmp.ne.s32.totalorder %s122, %s123
      %p135 = scmp.eq.s32.totalorder %s29, 1
      %p136 = por %p134, %p135
      %p138 = scmp.ne.s32.totalorder %s123, %s137
      %p139 = scmp.eq.s32.totalorder %s29, 0
      %p140 = por %p138, %p139
      %s142 = sadd.s32 %s141, 1
      %p145 = scmp.eq.s32.totalorder %s23, 1
      %p146 = scmp.ne.s32.totalorder %s141, %s143
      %p147 = scmp.eq.s32.totalorder %s23, 0
      %p148 = por %p146, %p147
      %p149 = scmp.ne.s32.totalorder %s141, %s143
      %p150 = scmp.eq.s32.totalorder %s28, 1
      %p151 = por %p149, %p150
      %p152 = scmp.ne.s32.totalorder %s143, %s144
      %p153 = scmp.eq.s32.totalorder %s28, 0
      %p154 = por %p152, %p153
      %p155 = scmp.ne.s32.totalorder %s143, %s144
      %p156 = scmp.eq.s32.totalorder %s29, 1
      %p157 = por %p155, %p156
      %p159 = scmp.ne.s32.totalorder %s144, %s158
      %p160 = scmp.eq.s32.totalorder %s29, 0
      %p161 = por %p159, %p160
      %s163 = sadd.s32 %s162, 1
      %p166 = scmp.eq.s32.totalorder %s23, 1
      %p167 = scmp.ne.s32.totalorder %s162, %s164
      %p168 = scmp.eq.s32.totalorder %s23, 0
      %p169 = por %p167, %p168
      %p170 = scmp.ne.s32.totalorder %s162, %s164
      %p171 = scmp.eq.s32.totalorder %s28, 1
      %p172 = por %p170, %p171
      %p173 = scmp.ne.s32.totalorder %s164, %s165
      %p174 = scmp.eq.s32.totalorder %s28, 0
      %p175 = por %p173, %p174
      %p176 = scmp.ne.s32.totalorder %s164, %s165
      %p177 = scmp.eq.s32.totalorder %s29, 1
      %p178 = por %p176, %p177
      %p180 = scmp.ne.s32.totalorder %s165, %s179
      %p181 = scmp.eq.s32.totalorder %s29, 0
      %p182 = por %p180, %p181
      %s184 = sadd.s32 %s183, 1
      %p187 = scmp.eq.s32.totalorder %s23, 1
      %p188 = scmp.ne.s32.totalorder %s183, %s185
      %p189 = scmp.eq.s32.totalorder %s23, 0
      %p190 = por %p188, %p189
      %p191 = scmp.ne.s32.totalorder %s183, %s185
      %p192 = scmp.eq.s32.totalorder %s28, 1
      %p193 = por %p191, %p192
      %p194 = scmp.ne.s32.totalorder %s185, %s186
      %p195 = scmp.eq.s32.totalorder %s28, 0
      %p196 = por %p194, %p195
      %p197 = scmp.ne.s32.totalorder %s185, %s186
      %p198 = scmp.eq.s32.totalorder %s29, 1
      %p199 = por %p197, %p198
      %p201 = scmp.ne.s32.totalorder %s186, %s200
      %p202 = scmp.eq.s32.totalorder %s29, 0
      %p203 = por %p201, %p202
      %s205 = sadd.s32 %s204, 1
      %p208 = scmp.eq.s32.totalorder %s23, 1
      %p209 = scmp.ne.s32.totalorder %s204, %s206
      %p210 = scmp.eq.s32.totalorder %s23, 0
      %p211 = por %p209, %p210
      %p212 = scmp.ne.s32.totalorder %s204, %s206
      %p213 = scmp.eq.s32.totalorder %s28, 1
      %p214 = por %p212, %p213
      %p215 = scmp.ne.s32.totalorder %s206, %s207
      %p216 = scmp.eq.s32.totalorder %s28, 0
      %p217 = por %p215, %p216
      %p218 = scmp.ne.s32.totalorder %s206, %s207
      %p219 = scmp.eq.s32.totalorder %s29, 1
      %p220 = por %p218, %p219
      %p222 = scmp.ne.s32.totalorder %s207, %s221
      %p223 = scmp.eq.s32.totalorder %s29, 0
      %p224 = por %p222, %p223
      %s226 = sadd.s32 %s225, 1
      %p229 = scmp.eq.s32.totalorder %s23, 1
      %p230 = scmp.ne.s32.totalorder %s225, %s227
      %p231 = scmp.eq.s32.totalorder %s23, 0
      %p232 = por %p230, %p231
      %p233 = scmp.ne.s32.totalorder %s225, %s227
      %p234 = scmp.eq.s32.totalorder %s28, 1
      %p235 = por %p233, %p234
      %p236 = scmp.ne.s32.totalorder %s227, %s228
      %p237 = scmp.eq.s32.totalorder %s28, 0
      %p238 = por %p236, %p237
      %p239 = scmp.ne.s32.totalorder %s227, %s228
      %p240 = scmp.eq.s32.totalorder %s29, 1
      %p241 = por %p239, %p240
      %p243 = scmp.ne.s32.totalorder %s228, %s242
      %p244 = scmp.eq.s32.totalorder %s29, 0
      %p245 = por %p243, %p244
      %s247 = sadd.s32 %s246, 1
      %p250 = scmp.eq.s32.totalorder %s23, 1
      %p251 = scmp.ne.s32.totalorder %s246, %s248
      %p252 = scmp.eq.s32.totalorder %s23, 0
      %p253 = por %p251, %p252
      %p254 = scmp.ne.s32.totalorder %s246, %s248
      %p255 = scmp.eq.s32.totalorder %s28, 1
      %p256 = por %p254, %p255
      %p257 = scmp.ne.s32.totalorder %s248, %s249
      %p258 = scmp.eq.s32.totalorder %s28, 0
      %p259 = por %p257, %p258
      %p260 = scmp.ne.s32.totalorder %s248, %s249
      %p261 = scmp.eq.s32.totalorder %s29, 1
      %p262 = por %p260, %p261
      %p264 = scmp.ne.s32.totalorder %s249, %s263
      %p265 = scmp.eq.s32.totalorder %s29, 0
      %p266 = por %p264, %p265
      %s268 = sadd.s32 %s267, 1
      %p271 = scmp.eq.s32.totalorder %s23, 1
      %p272 = scmp.ne.s32.totalorder %s267, %s269
      %p273 = scmp.eq.s32.totalorder %s23, 0
      %p274 = por %p272, %p273
      %p275 = scmp.ne.s32.totalorder %s267, %s269
      %p276 = scmp.eq.s32.totalorder %s28, 1
      %p277 = por %p275, %p276
      %p278 = scmp.ne.s32.totalorder %s269, %s270
      %p279 = scmp.eq.s32.totalorder %s28, 0
      %p280 = por %p278, %p279
      %p281 = scmp.ne.s32.totalorder %s269, %s270
      %p282 = scmp.eq.s32.totalorder %s29, 1
      %p283 = por %p281, %p282
      %p285 = scmp.ne.s32.totalorder %s270, %s284
      %p286 = scmp.eq.s32.totalorder %s29, 0
      %p287 = por %p285, %p286
      %s288 = ssub.s32 %s23, %s30
      %p289 = scmp.eq.s32.totalorder %s288, 0
      %s291 = sadd.s32 %s290, 1
      %s292 = scalar_select %p289, %s290, %s291
      %p295 = pneg %p289
      %p296 = scmp.eq.s32.totalorder %s23, 1
      %p297 = por %p295, %p296
      %p298 = scmp.ne.s32.totalorder %s290, %s293
      %p299 = scmp.eq.s32.totalorder %s23, 0
      %p300 = por %p298, %p299
      %p301 = scmp.ne.s32.totalorder %s290, %s293
      %p302 = scmp.eq.s32.totalorder %s28, 1
      %p303 = por %p301, %p302
      %p304 = scmp.ne.s32.totalorder %s293, %s294
      %p305 = scmp.eq.s32.totalorder %s28, 0
      %p306 = por %p304, %p305
      %p307 = scmp.ne.s32.totalorder %s293, %s294
      %p308 = scmp.eq.s32.totalorder %s29, 1
      %p309 = por %p307, %p308
      %p311 = scmp.ne.s32.totalorder %s294, %s310
      %p312 = scmp.eq.s32.totalorder %s29, 0
      %p313 = por %p311, %p312
      %s314 = ssub.s32 %s23, %s30
      %p315 = scmp.eq.s32.totalorder %s314, 0
      %s317 = sadd.s32 %s316, 1
      %s318 = scalar_select %p315, %s316, %s317
      %p321 = pneg %p315
      %p322 = scmp.eq.s32.totalorder %s23, 1
      %p323 = por %p321, %p322
      %p324 = scmp.ne.s32.totalorder %s316, %s319
      %p325 = scmp.eq.s32.totalorder %s23, 0
      %p326 = por %p324, %p325
      %p327 = scmp.ne.s32.totalorder %s316, %s319
      %p328 = scmp.eq.s32.totalorder %s28, 1
      %p329 = por %p327, %p328
      %p330 = scmp.ne.s32.totalorder %s319, %s320
      %p331 = scmp.eq.s32.totalorder %s28, 0
      %p332 = por %p330, %p331
      %p333 = scmp.ne.s32.totalorder %s319, %s320
      %p334 = scmp.eq.s32.totalorder %s29, 1
      %p335 = por %p333, %p334
      %p337 = scmp.ne.s32.totalorder %s320, %s336
      %p338 = scmp.eq.s32.totalorder %s29, 0
      %p339 = por %p337, %p338
      %p340 = scmp.le.s32.totalorder 1, %s23
      %p341 = scmp.lt.s32.totalorder %s23, 3
      %p342 = pnand %p340, %p341
      %p343 = pneg %p342
      // Predicated region
      $region9: #{han_forward.2} parent=5 // pred_check
        _
      $region10: #{han_forward.2} parent=5 // pred_check_branch
        %345 = sbr.rel (%p342) target = $region12
      $region11: #{han_forward.2} parent=5 // pred_region
        %s346 = ssub.s32 %s23, 1
        // Predicated region
        $region13: #{han_forward.2} parent=11 // pred_check
          %p347 = pneg %p70
        $region14: #{han_forward.2} parent=11 // pred_check_branch
          %349 = sbr.rel (%p347) target = $region16
        $region15: #{han_forward.2} parent=11 // pred_region
          _
        $region16: #{han_forward.2} parent=11 // pred_fallthru
          _
        // Predicated region
        $region17: #{han_forward.2} parent=11 // pred_check
          %p350 = pneg %p91
        $region18: #{han_forward.2} parent=11 // pred_check_branch
          %352 = sbr.rel (%p350) target = $region20
        $region19: #{han_forward.2} parent=11 // pred_region
          _
        $region20: #{han_forward.2} parent=11 // pred_fallthru
          _
        // Predicated region
        $region21: #{han_forward.2} parent=11 // pred_check
          %p353 = pneg %p112
        $region22: #{han_forward.2} parent=11 // pred_check_branch
          %355 = sbr.rel (%p353) target = $region24
        $region23: #{han_forward.2} parent=11 // pred_region
          _
        $region24: #{han_forward.2} parent=11 // pred_fallthru
          _
        // Predicated region
        $region25: #{han_forward.2} parent=11 // pred_check
          %p356 = pneg %p133
        $region26: #{han_forward.2} parent=11 // pred_check_branch
          %358 = sbr.rel (%p356) target = $region28
        $region27: #{han_forward.2} parent=11 // pred_region
          _
        $region28: #{han_forward.2} parent=11 // pred_fallthru
          _
        // Predicated region
        $region29: #{han_forward.2} parent=11 // pred_check
          %p359 = pneg %p154
        $region30: #{han_forward.2} parent=11 // pred_check_branch
          %361 = sbr.rel (%p359) target = $region32
        $region31: #{han_forward.2} parent=11 // pred_region
          _
        $region32: #{han_forward.2} parent=11 // pred_fallthru
          _
        // Predicated region
        $region33: #{han_forward.2} parent=11 // pred_check
          %p362 = pneg %p175
        $region34: #{han_forward.2} parent=11 // pred_check_branch
          %364 = sbr.rel (%p362) target = $region36
        $region35: #{han_forward.2} parent=11 // pred_region
          _
        $region36: #{han_forward.2} parent=11 // pred_fallthru
          _
        // Predicated region
        $region37: #{han_forward.2} parent=11 // pred_check
          %p365 = pneg %p196
        $region38: #{han_forward.2} parent=11 // pred_check_branch
          %367 = sbr.rel (%p365) target = $region40
        $region39: #{han_forward.2} parent=11 // pred_region
          _
        $region40: #{han_forward.2} parent=11 // pred_fallthru
          _
        // Predicated region
        $region41: #{han_forward.2} parent=11 // pred_check
          %p368 = pneg %p217
        $region42: #{han_forward.2} parent=11 // pred_check_branch
          %370 = sbr.rel (%p368) target = $region44
        $region43: #{han_forward.2} parent=11 // pred_region
          _
        $region44: #{han_forward.2} parent=11 // pred_fallthru
          _
        // Predicated region
        $region45: #{han_forward.2} parent=11 // pred_check
          %p371 = pneg %p238
        $region46: #{han_forward.2} parent=11 // pred_check_branch
          %373 = sbr.rel (%p371) target = $region48
        $region47: #{han_forward.2} parent=11 // pred_region
          _
        $region48: #{han_forward.2} parent=11 // pred_fallthru
          _
        // Predicated region
        $region49: #{han_forward.2} parent=11 // pred_check
          %p374 = pneg %p259
        $region50: #{han_forward.2} parent=11 // pred_check_branch
          %376 = sbr.rel (%p374) target = $region52
        $region51: #{han_forward.2} parent=11 // pred_region
          _
        $region52: #{han_forward.2} parent=11 // pred_fallthru
          _
        // Predicated region
        $region53: #{han_forward.2} parent=11 // pred_check
          %p377 = pneg %p280
        $region54: #{han_forward.2} parent=11 // pred_check_branch
          %379 = sbr.rel (%p377) target = $region56
        $region55: #{han_forward.2} parent=11 // pred_region
          _
        $region56: #{han_forward.2} parent=11 // pred_fallthru
          _
      $region12: #{han_forward.2} parent=5 // pred_fallthru
        _
      %p380 = scmp.lt.s32.totalorder %s23, 2
      // Predicated region
      $region57: #{han_forward.2} parent=5 // pred_check
        %p381 = pneg %p380
      $region58: #{han_forward.2} parent=5 // pred_check_branch
        %383 = sbr.rel (%p381) target = $region60
      $region59: #{han_forward.2} parent=5 // pred_region
        // Predicated region
        $region61: #{han_forward.2} parent=59 // pred_check
          %p384 = pneg %p43
        $region62: #{han_forward.2} parent=59 // pred_check_branch
          %386 = sbr.rel (%p384) target = $region64
        $region63: #{han_forward.2} parent=59 // pred_region
          %s387 = smul.u32 4, %s23
          %p388 = scmp.lt.s32.totalorder %s387, 7
          %s389 = scalar_select %p388, %s387, 7
          %s390 = smul.addr %s389, 8
          %s391 = scalar_lea.vmem %s0, %s390
          %s392 = smul.u32 4, %s23
        $region64: #{han_forward.2} parent=59 // pred_fallthru
          _
      $region60: #{han_forward.2} parent=5 // pred_fallthru
        _
      %p393 = scmp.le.s32.totalorder 1, %s23
      %p394 = scmp.lt.s32.totalorder %s23, 3
      %p395 = pnand %p393, %p394
      %p396 = pneg %p395
      // Predicated region
      $region65: #{han_forward.2} parent=5 // pred_check
        _
      $region66: #{han_forward.2} parent=5 // pred_check_branch
        %398 = sbr.rel (%p395) target = $region68
      $region67: #{han_forward.2} parent=5 // pred_region
        %s399 = ssub.s32 %s23, 1
        %s400 = smul.u32 4, %s28
        %p401 = scmp.lt.s32.totalorder %s400, 7
        %s402 = scalar_select %p401, %s400, 7
        %s403 = smul.addr %s402, 8
        %s404 = scalar_lea.vmem %s0, %s403
        %p405 = pneg %p49
        %p406 = pneg %p46
        %p407 = pneg %p70
        %p408 = pneg %p67
        %p409 = pneg %p91
        %p410 = pneg %p88
        %p411 = pneg %p112
        %p412 = pneg %p109
        %p413 = pneg %p133
        %p414 = pneg %p130
        %p415 = pneg %p154
        %p416 = pneg %p151
        %p417 = pneg %p175
        %p418 = pneg %p172
        %p419 = pneg %p196
        %p420 = pneg %p193
        %p421 = pneg %p217
        %p422 = pneg %p214
        %p423 = pneg %p238
        %p424 = pneg %p235
        %p425 = pneg %p259
        %p426 = pneg %p256
        %p427 = pneg %p280
        %p428 = pneg %p277
        %p429 = pneg %p306
        %p430 = pneg %p303
        %p431 = scmp.lt.s32.totalorder %s28, 1
        %s432 = scalar_select %p431, %s28, 1
        %s433 = smul.addr %s432, 4
        %s434 = scalar_lea.vmem %s12, %s433
        %p435 = pneg %p332
        %p436 = pneg %p329
        %s437 = sand.u32 %s319, 1
        %s438 = scalar_lea.sflag [#allocation3], %s437
        %s439 = sand.u32 %s319, 1
        %s440 = smul.addr %s439, 4
        %s441 = scalar_lea.vmem [#allocation2], %s440
        %s442 = smul.u32 4, %s28
        %p443 = scmp.lt.s32.totalorder %s442, 7
        %s444 = scalar_select %p443, %s442, 7
        %s445 = smul.addr %s444, 8
        %s446 = scalar_lea.vmem %s0, %s445
        %s447 = smul.u32 4, %s28
        %p448 = scmp.lt.s32.totalorder %s28, 1
        %s449 = scalar_select %p448, %s28, 1
        %s450 = smul.addr %s449, 4
        %s451 = scalar_lea.vmem %s12, %s450
        %v452 = vld [vmem:[%s1] sm:$0xff]
        %v453 = vld [vmem:[%s1 + $0x8] sm:$0xff]
        %v454 = vld [vmem:[%s1 + $0x10] sm:$0xff]
        %v455 = vld [vmem:[%s1 + $0x18] sm:$0xff]
        %v456 = vld [vmem:[%s2] sm:$0xff]
        %v457 = vld [vmem:[%s2 + $0x8] sm:$0xff]
        %v458 = vld [vmem:[%s3] sm:$0x1]
        %v459 = vld [vmem:[%s4] sm:$0x1]
        %v460 = vld [vmem:[%s5] sm:$0xff]
        %v461 = vld [vmem:[%s5 + $0x8] sm:$0xff]
        %v462 = vld [vmem:[%s5 + $0x10] sm:$0xff]
        %v463 = vld [vmem:[%s5 + $0x18] sm:$0xff]
        %v464 = vld [vmem:[%s6] sm:$0xff]
        %v465 = vld [vmem:[%s6 + $0x8] sm:$0xff]
        %v466 = vld [vmem:[%s7] sm:$0x1]
        %v467 = vld [vmem:[%s8] sm:$0x1]
        %v468 = vld [vmem:[%s446] sm:$0xff]
        %v469 = vld [vmem:[%s446 + $0x8] sm:$0xff]
        %v470 = vld [vmem:[%s446 + $0x10] sm:$0xff]
        %v471 = vld [vmem:[%s446 + $0x18] sm:$0xff]
        %v473 = vlaneseq
        %v474 = vshrl.u32 %v473, 7
        %v475 = vsub.s32 0, %v474
        %v476 = vrot.slane %v458, %v475
        %vm478 = vcmask 261120
        %v480 = vsel %vm478, %v468, 0
        %v483 = vsel %vm478, %v469, 0
        %v486 = vsel %vm478, %v470, 0
        %v489 = vsel %vm478, %v471, 0
        %491 = vmatprep.subr.mxu0 0.0
        %492 = vmatpush1.msra.mxu0 %v452
        %493 = vmatprep.subr.mxu0 0.0
        %494 = vmatpush1.msra.mxu0 %v453
        %495 = vmatprep.subr.mxu0 0.0
        %496 = vmatpush1.msra.mxu0 %v454
        %497 = vmatprep.subr.mxu0 0.0
        %498 = vmatpush1.msra.mxu0 %v455
        %499 = vmatprep.subr.mxu0 0.0
        %500 = vmatpush1.msra.mxu0 0.0
        %501 = vmatprep.subr.mxu0 0.0
        %502 = vmatpush1.msra.mxu0 0.0
        %503 = vmatprep.subr.mxu0 0.0
        %504 = vmatpush1.msra.mxu0 0.0
        %505 = vmatprep.subr.mxu0 0.0
        %506 = vmatpush1.msra.mxu0 0.0
        %507 = vmatprep.subr.mxu0 0.0
        %508 = vmatpush1.msra.mxu0 0.0
        %509 = vmatprep.subr.mxu0 0.0
        %510 = vmatpush1.msra.mxu0 0.0
        %511 = vmatprep.subr.mxu0 0.0
        %512 = vmatpush1.msra.mxu0 0.0
        %513 = vmatprep.subr.mxu0 0.0
        %514 = vmatpush1.msra.mxu0 0.0
        %515 = vmatprep.subr.mxu0 0.0
        %516 = vmatpush1.msra.mxu0 0.0
        %517 = vmatprep.subr.mxu0 0.0
        %518 = vmatpush1.msra.mxu0 0.0
        %519 = vmatprep.subr.mxu0 0.0
        %520 = vmatpush1.msra.mxu0 0.0
        %521 = vmatprep.subr.mxu0 0.0
        %522 = vmatpush1.msra.mxu0 0.0
        %523 = vmatprep.subr.mxu0 0.0
        %524 = vmatpush1.msra.mxu0 0.0
        %525 = vmatprep.subr.mxu0 0.0
        %526 = vmatpush1.msra.mxu0 0.0
        %527 = vmatprep.subr.mxu0 0.0
        %528 = vmatpush1.msra.mxu0 0.0
        %529 = vmatprep.subr.mxu0 0.0
        %530 = vmatpush1.msra.mxu0 0.0
        %531 = vmatprep.subr.mxu0 0.0
        %532 = vmatpush1.msra.mxu0 0.0
        %533 = vmatprep.subr.mxu0 0.0
        %534 = vmatpush1.msra.mxu0 0.0
        %535 = vmatprep.subr.mxu0 0.0
        %536 = vmatpush1.msra.mxu0 0.0
        %537 = vmatprep.subr.mxu0 0.0
        %538 = vmatpush1.msra.mxu0 0.0
        %539 = vmatprep.subr.mxu0 0.0
        %540 = vmatpush1.msra.mxu0 0.0
        %541 = vmatprep.subr.mxu0 0.0
        %542 = vmatpush1.msra.mxu0 0.0
        %543 = vmatprep.subr.mxu0 0.0
        %544 = vmatpush1.msra.mxu0 0.0
        %545 = vmatprep.subr.mxu0 0.0
        %546 = vmatpush1.msra.mxu0 0.0
        %547 = vmatprep.subr.mxu0 0.0
        %548 = vmatpush1.msra.mxu0 0.0
        %549 = vmatprep.subr.mxu0 0.0
        %550 = vmatpush1.msra.mxu0 0.0
        %551 = vmatprep.subr.mxu0 0.0
        %552 = vmatpush1.msra.mxu0 0.0
        %553 = vmatprep.subr.mxu0 0.0
        %554 = vmatpush1.msra.mxu0 0.0
        %555 = vmatprep.mubr.f32.mxu0 0.0
        %556 = vmatmul.mubr.f32.gmra.mrb[0].mxu0 %v480
        %v557 = vpop.f32.mrb[0].mxu0
        %v558 = vadd.f32 %v476, %v557
        %v559 = vpop.f32.mrb[0].mxu0
        %560 = vmatprep.mubr.f32.mxu0 0.0
        %561 = vmatmul.mubr.f32.gmra.mrb[0].mxu0 %v483
        %v562 = vpop.f32.mrb[0].mxu0
        %v563 = vadd.f32 %v476, %v562
        %v564 = vpop.f32.mrb[0].mxu0
        %565 = vmatprep.mubr.f32.mxu0 0.0
        %566 = vmatmul.mubr.f32.gmra.mrb[0].mxu0 %v486
        %v567 = vpop.f32.mrb[0].mxu0
        %v568 = vadd.f32 %v476, %v567
        %v569 = vpop.f32.mrb[0].mxu0
        %570 = vmatprep.mubr.f32.mxu0 0.0
        %571 = vmatmul.mubr.f32.gmra.mrb[0].mxu0 %v489
        %v572 = vpop.f32.mrb[0].mxu0
        %v573 = vadd.f32 %v476, %v572
        %v574 = vpop.f32.mrb[0].mxu0
        %575 = vdwg.mxu0
        %v577 = vlaneseq
        %v578 = vshrl.u32 %v577, 7
        %v579 = vsub.s32 0, %v578
        %v580 = vrot.slane %v466, %v579
        %582 = vmatprep.subr.mxu0 0.0
        %583 = vmatpush1.msra.mxu0 %v460
        %584 = vmatprep.subr.mxu0 0.0
        %585 = vmatpush1.msra.mxu0 %v461
        %586 = vmatprep.subr.mxu0 0.0
        %587 = vmatpush1.msra.mxu0 %v462
        %588 = vmatprep.subr.mxu0 0.0
        %589 = vmatpush1.msra.mxu0 %v463
        %590 = vmatprep.subr.mxu0 0.0
        %591 = vmatpush1.msra.mxu0 0.0
        %592 = vmatprep.subr.mxu0 0.0
        %593 = vmatpush1.msra.mxu0 0.0
        %594 = vmatprep.subr.mxu0 0.0
        %595 = vmatpush1.msra.mxu0 0.0
        %596 = vmatprep.subr.mxu0 0.0
        %597 = vmatpush1.msra.mxu0 0.0
        %598 = vmatprep.subr.mxu0 0.0
        %599 = vmatpush1.msra.mxu0 0.0
        %600 = vmatprep.subr.mxu0 0.0
        %601 = vmatpush1.msra.mxu0 0.0
        %602 = vmatprep.subr.mxu0 0.0
        %603 = vmatpush1.msra.mxu0 0.0
        %604 = vmatprep.subr.mxu0 0.0
        %605 = vmatpush1.msra.mxu0 0.0
        %606 = vmatprep.subr.mxu0 0.0
        %607 = vmatpush1.msra.mxu0 0.0
        %608 = vmatprep.subr.mxu0 0.0
        %609 = vmatpush1.msra.mxu0 0.0
        %610 = vmatprep.subr.mxu0 0.0
        %611 = vmatpush1.msra.mxu0 0.0
        %612 = vmatprep.subr.mxu0 0.0
        %613 = vmatpush1.msra.mxu0 0.0
        %614 = vmatprep.subr.mxu0 0.0
        %615 = vmatpush1.msra.mxu0 0.0
        %616 = vmatprep.subr.mxu0 0.0
        %617 = vmatpush1.msra.mxu0 0.0
        %618 = vmatprep.subr.mxu0 0.0
        %619 = vmatpush1.msra.mxu0 0.0
        %620 = vmatprep.subr.mxu0 0.0
        %621 = vmatpush1.msra.mxu0 0.0
        %622 = vmatprep.subr.mxu0 0.0
        %623 = vmatpush1.msra.mxu0 0.0
        %624 = vmatprep.subr.mxu0 0.0
        %625 = vmatpush1.msra.mxu0 0.0
        %626 = vmatprep.subr.mxu0 0.0
        %627 = vmatpush1.msra.mxu0 0.0
        %628 = vmatprep.subr.mxu0 0.0
        %629 = vmatpush1.msra.mxu0 0.0
        %630 = vmatprep.subr.mxu0 0.0
        %631 = vmatpush1.msra.mxu0 0.0
        %632 = vmatprep.subr.mxu0 0.0
        %633 = vmatpush1.msra.mxu0 0.0
        %634 = vmatprep.subr.mxu0 0.0
        %635 = vmatpush1.msra.mxu0 0.0
        %636 = vmatprep.subr.mxu0 0.0
        %637 = vmatpush1.msra.mxu0 0.0
        %638 = vmatprep.subr.mxu0 0.0
        %639 = vmatpush1.msra.mxu0 0.0
        %640 = vmatprep.subr.mxu0 0.0
        %641 = vmatpush1.msra.mxu0 0.0
        %642 = vmatprep.subr.mxu0 0.0
        %643 = vmatpush1.msra.mxu0 0.0
        %644 = vmatprep.subr.mxu0 0.0
        %645 = vmatpush1.msra.mxu0 0.0
        %646 = vmatprep.mubr.f32.mxu0 0.0
        %647 = vmatmul.mubr.f32.gmra.mrb[0].mxu0 %v480
        %v648 = vpop.f32.mrb[0].mxu0
        %v649 = vadd.f32 %v580, %v648
        %v650 = vpop.f32.mrb[0].mxu0
        %651 = vmatprep.mubr.f32.mxu0 0.0
        %652 = vmatmul.mubr.f32.gmra.mrb[0].mxu0 %v483
        %v653 = vpop.f32.mrb[0].mxu0
        %v654 = vadd.f32 %v580, %v653
        %v655 = vpop.f32.mrb[0].mxu0
        %656 = vmatprep.mubr.f32.mxu0 0.0
        %657 = vmatmul.mubr.f32.gmra.mrb[0].mxu0 %v486
        %v658 = vpop.f32.mrb[0].mxu0
        %v659 = vadd.f32 %v580, %v658
        %v660 = vpop.f32.mrb[0].mxu0
        %661 = vmatprep.mubr.f32.mxu0 0.0
        %662 = vmatmul.mubr.f32.gmra.mrb[0].mxu0 %v489
        %v663 = vpop.f32.mrb[0].mxu0
        %v664 = vadd.f32 %v580, %v663
        %v665 = vpop.f32.mrb[0].mxu0
        %666 = vdwg.mxu0
        %v668 = vlaneseq
        %v669 = vshrl.u32 %v668, 7
        %v670 = vsub.s32 0, %v669
        %v671 = vrot.slane %v459, %v670
        %vm673 = vcmask 130048
        %v675 = vsel %vm673, 0.0, 0
        %677 = vmatprep.subr.mxu0 0.0
        %678 = vmatpush1.msra.mxu0 %v456
        %679 = vmatprep.subr.mxu0 0.0
        %680 = vmatpush1.msra.mxu0 %v457
        %681 = vmatprep.subr.mxu0 0.0
        %682 = vmatpush1.msra.mxu0 0.0
        %683 = vmatprep.subr.mxu0 0.0
        %684 = vmatpush1.msra.mxu0 0.0
        %685 = vmatprep.subr.mxu0 0.0
        %686 = vmatpush1.msra.mxu0 0.0
        %687 = vmatprep.subr.mxu0 0.0
        %688 = vmatpush1.msra.mxu0 0.0
        %689 = vmatprep.subr.mxu0 0.0
        %690 = vmatpush1.msra.mxu0 0.0
        %691 = vmatprep.subr.mxu0 0.0
        %692 = vmatpush1.msra.mxu0 0.0
        %693 = vmatprep.subr.mxu0 0.0
        %694 = vmatpush1.msra.mxu0 0.0
        %695 = vmatprep.subr.mxu0 0.0
        %696 = vmatpush1.msra.mxu0 0.0
        %697 = vmatprep.subr.mxu0 0.0
        %698 = vmatpush1.msra.mxu0 0.0
        %699 = vmatprep.subr.mxu0 0.0
        %700 = vmatpush1.msra.mxu0 0.0
        %701 = vmatprep.subr.mxu0 0.0
        %702 = vmatpush1.msra.mxu0 0.0
        %703 = vmatprep.subr.mxu0 0.0
        %704 = vmatpush1.msra.mxu0 0.0
        %705 = vmatprep.subr.mxu0 0.0
        %706 = vmatpush1.msra.mxu0 0.0
        %707 = vmatprep.subr.mxu0 0.0
        %708 = vmatpush1.msra.mxu0 0.0
        %709 = vmatprep.subr.mxu0 0.0
        %710 = vmatpush1.msra.mxu0 0.0
        %711 = vmatprep.subr.mxu0 0.0
        %712 = vmatpush1.msra.mxu0 0.0
        %713 = vmatprep.subr.mxu0 0.0
        %714 = vmatpush1.msra.mxu0 0.0
        %715 = vmatprep.subr.mxu0 0.0
        %716 = vmatpush1.msra.mxu0 0.0
        %717 = vmatprep.subr.mxu0 0.0
        %718 = vmatpush1.msra.mxu0 0.0
        %719 = vmatprep.subr.mxu0 0.0
        %720 = vmatpush1.msra.mxu0 0.0
        %721 = vmatprep.subr.mxu0 0.0
        %722 = vmatpush1.msra.mxu0 0.0
        %723 = vmatprep.subr.mxu0 0.0
        %724 = vmatpush1.msra.mxu0 0.0
        %725 = vmatprep.subr.mxu0 0.0
        %726 = vmatpush1.msra.mxu0 0.0
        %727 = vmatprep.subr.mxu0 0.0
        %728 = vmatpush1.msra.mxu0 0.0
        %729 = vmatprep.subr.mxu0 0.0
        %730 = vmatpush1.msra.mxu0 0.0
        %731 = vmatprep.subr.mxu0 0.0
        %732 = vmatpush1.msra.mxu0 0.0
        %733 = vmatprep.subr.mxu0 0.0
        %734 = vmatpush1.msra.mxu0 0.0
        %735 = vmatprep.subr.mxu0 0.0
        %736 = vmatpush1.msra.mxu0 0.0
        %737 = vmatprep.subr.mxu0 0.0
        %738 = vmatpush1.msra.mxu0 0.0
        %739 = vmatprep.subr.mxu0 0.0
        %740 = vmatpush1.msra.mxu0 0.0
        %741 = vmatprep.mubr.f32.mxu0 0.0
        %742 = vmatmul.mubr.f32.gmra.mrb[0].mxu0 %v675
        %v743 = vpop.f32.mrb[0].mxu0
        %v744 = vadd.f32 %v671, %v743
        %v745 = vpop.f32.mrb[0].mxu0
        %746 = vdwg.mxu0
        %v748 = vrot.slane %v744, 1
        %v749 = vrot.slane %v744, 2
        %v750 = vrot.slane %v744, 3
        %v755 = vadd.f32 %v558, %v744
        %v756 = vadd.f32 %v563, %v748
        %v757 = vadd.f32 %v568, %v749
        %v758 = vadd.f32 %v573, %v750
        %v759 = vxor.u32 %v755, 2147483648
        %v760 = vxor.u32 %v756, 2147483648
        %v761 = vxor.u32 %v757, 2147483648
        %v762 = vxor.u32 %v758, 2147483648
        %v763 = vmul.f32 %v759, 1.442695
        %v764 = vpow.pop %v763
        %v765 = vmul.f32 %v760, 1.442695
        %v766 = vpow.pop %v765
        %v767 = vmul.f32 %v761, 1.442695
        %v768 = vpow.pop %v767
        %v769 = vmul.f32 %v762, 1.442695
        %v770 = vpow.pop %v769
        %v771 = vadd.f32 %v764, 1.0
        %v772 = vadd.f32 %v766, 1.0
        %v773 = vadd.f32 %v768, 1.0
        %v774 = vadd.f32 %v770, 1.0
        %v775 = vrcp.pop %v771
        %v776 = vmul.f32 1.0, %v775
        %v777 = vrcp.pop %v772
        %v778 = vmul.f32 1.0, %v777
        %v779 = vrcp.pop %v773
        %v780 = vmul.f32 1.0, %v779
        %v781 = vrcp.pop %v774
        %v782 = vmul.f32 1.0, %v781
        %783 = vrot.lane.b32.xlu0 %v744, 96
        %v784 = vpop.permute.xlu0 %783
        %785 = vrot.lane.b32.xlu0 %v748, 96
        %v786 = vpop.permute.xlu0 %785
        %787 = vrot.lane.b32.xlu0 %v749, 96
        %v788 = vpop.permute.xlu0 %787
        %789 = vrot.lane.b32.xlu0 %v750, 96
        %v790 = vpop.permute.xlu0 %789
        %v795 = vmul.f32 %v776, %v784
        %v796 = vmul.f32 %v778, %v786
        %v797 = vmul.f32 %v780, %v788
        %v798 = vmul.f32 %v782, %v790
        %803 = vrot.lane.b32.xlu0 %v795, 32
        %v804 = vpop.permute.xlu0 %803
        %805 = vrot.lane.b32.xlu0 %v796, 32
        %v806 = vpop.permute.xlu0 %805
        %807 = vrot.lane.b32.xlu0 %v797, 32
        %v808 = vpop.permute.xlu0 %807
        %809 = vrot.lane.b32.xlu0 %v798, 32
        %v810 = vpop.permute.xlu0 %809
        %v815 = vadd.f32 %v558, %v804
        %v816 = vadd.f32 %v563, %v806
        %v817 = vadd.f32 %v568, %v808
        %v818 = vadd.f32 %v573, %v810
        %v819 = vtanh.pop %v815
        %v820 = vtanh.pop %v816
        %v821 = vtanh.pop %v817
        %v822 = vtanh.pop %v818
        %v823 = vsub.f32 1.0, %v776
        %v824 = vsub.f32 1.0, %v778
        %v825 = vsub.f32 1.0, %v780
        %v826 = vsub.f32 1.0, %v782
        %831 = vrot.lane.b32.xlu0 %v819, 112
        %v832 = vpop.permute.xlu0 %831
        %833 = vrot.lane.b32.xlu0 %v820, 112
        %v834 = vpop.permute.xlu0 %833
        %835 = vrot.lane.b32.xlu0 %v821, 112
        %v836 = vpop.permute.xlu0 %835
        %837 = vrot.lane.b32.xlu0 %v822, 112
        %v838 = vpop.permute.xlu0 %837
        %v843 = vmul.f32 %v823, %v832
        %v844 = vmul.f32 %v824, %v834
        %v845 = vmul.f32 %v825, %v836
        %v846 = vmul.f32 %v826, %v838
        %v847 = vmul.f32 %v776, 0.0
        %v848 = vmul.f32 %v778, 0.0
        %v849 = vmul.f32 %v780, 0.0
        %v850 = vmul.f32 %v782, 0.0
        %v851 = vadd.f32 %v843, %v847
        %v852 = vadd.f32 %v844, %v848
        %v853 = vadd.f32 %v845, %v849
        %v854 = vadd.f32 %v846, %v850
        %v856 = vlaneseq
        %v857 = vshrl.u32 %v856, 7
        %v858 = vsub.s32 0, %v857
        %v859 = vrot.slane %v467, %v858
        %861 = vmatprep.subr.mxu0 0.0
        %862 = vmatpush1.msra.mxu0 %v464
        %863 = vmatprep.subr.mxu0 0.0
        %864 = vmatpush1.msra.mxu0 %v465
        %865 = vmatprep.subr.mxu0 0.0
        %866 = vmatpush1.msra.mxu0 0.0
        %867 = vmatprep.subr.mxu0 0.0
        %868 = vmatpush1.msra.mxu0 0.0
        %869 = vmatprep.subr.mxu0 0.0
        %870 = vmatpush1.msra.mxu0 0.0
        %871 = vmatprep.subr.mxu0 0.0
        %872 = vmatpush1.msra.mxu0 0.0
        %873 = vmatprep.subr.mxu0 0.0
        %874 = vmatpush1.msra.mxu0 0.0
        %875 = vmatprep.subr.mxu0 0.0
        %876 = vmatpush1.msra.mxu0 0.0
        %877 = vmatprep.subr.mxu0 0.0
        %878 = vmatpush1.msra.mxu0 0.0
        %879 = vmatprep.subr.mxu0 0.0
        %880 = vmatpush1.msra.mxu0 0.0
        %881 = vmatprep.subr.mxu0 0.0
        %882 = vmatpush1.msra.mxu0 0.0
        %883 = vmatprep.subr.mxu0 0.0
        %884 = vmatpush1.msra.mxu0 0.0
        %885 = vmatprep.subr.mxu0 0.0
        %886 = vmatpush1.msra.mxu0 0.0
        %887 = vmatprep.subr.mxu0 0.0
        %888 = vmatpush1.msra.mxu0 0.0
        %889 = vmatprep.subr.mxu0 0.0
        %890 = vmatpush1.msra.mxu0 0.0
        %891 = vmatprep.subr.mxu0 0.0
        %892 = vmatpush1.msra.mxu0 0.0
        %893 = vmatprep.subr.mxu0 0.0
        %894 = vmatpush1.msra.mxu0 0.0
        %895 = vmatprep.subr.mxu0 0.0
        %896 = vmatpush1.msra.mxu0 0.0
        %897 = vmatprep.subr.mxu0 0.0
        %898 = vmatpush1.msra.mxu0 0.0
        %899 = vmatprep.subr.mxu0 0.0
        %900 = vmatpush1.msra.mxu0 0.0
        %901 = vmatprep.subr.mxu0 0.0
        %902 = vmatpush1.msra.mxu0 0.0
        %903 = vmatprep.subr.mxu0 0.0
        %904 = vmatpush1.msra.mxu0 0.0
        %905 = vmatprep.subr.mxu0 0.0
        %906 = vmatpush1.msra.mxu0 0.0
        %907 = vmatprep.subr.mxu0 0.0
        %908 = vmatpush1.msra.mxu0 0.0
        %909 = vmatprep.subr.mxu0 0.0
        %910 = vmatpush1.msra.mxu0 0.0
        %911 = vmatprep.subr.mxu0 0.0
        %912 = vmatpush1.msra.mxu0 0.0
        %913 = vmatprep.subr.mxu0 0.0
        %914 = vmatpush1.msra.mxu0 0.0
        %915 = vmatprep.subr.mxu0 0.0
        %916 = vmatpush1.msra.mxu0 0.0
        %917 = vmatprep.subr.mxu0 0.0
        %918 = vmatpush1.msra.mxu0 0.0
        %919 = vmatprep.subr.mxu0 0.0
        %920 = vmatpush1.msra.mxu0 0.0
        %921 = vmatprep.subr.mxu0 0.0
        %922 = vmatpush1.msra.mxu0 0.0
        %923 = vmatprep.subr.mxu0 0.0
        %924 = vmatpush1.msra.mxu0 0.0
        %925 = vmatprep.mubr.f32.mxu0 0.0
        %926 = vmatmul.mubr.f32.gmra.mrb[0].mxu0 %v675
        %v927 = vpop.f32.mrb[0].mxu0
        %v928 = vadd.f32 %v859, %v927
        %v929 = vpop.f32.mrb[0].mxu0
        %930 = vdwg.mxu0
        %v932 = vrot.slane %v928, 1
        %v933 = vrot.slane %v928, 2
        %v934 = vrot.slane %v928, 3
        %v935 = vrot.slane %v928, 4
        %v940 = vadd.f32 %v649, %v932
        %v941 = vadd.f32 %v654, %v933
        %v942 = vadd.f32 %v659, %v934
        %v943 = vadd.f32 %v664, %v935
        %v944 = vxor.u32 %v940, 2147483648
        %v945 = vxor.u32 %v941, 2147483648
        %v946 = vxor.u32 %v942, 2147483648
        %v947 = vxor.u32 %v943, 2147483648
        %v948 = vmul.f32 %v944, 1.442695
        %v949 = vpow.pop %v948
        %v950 = vmul.f32 %v945, 1.442695
        %v951 = vpow.pop %v950
        %v952 = vmul.f32 %v946, 1.442695
        %v953 = vpow.pop %v952
        %v954 = vmul.f32 %v947, 1.442695
        %v955 = vpow.pop %v954
        %v956 = vadd.f32 %v949, 1.0
        %v957 = vadd.f32 %v951, 1.0
        %v958 = vadd.f32 %v953, 1.0
        %v959 = vadd.f32 %v955, 1.0
        %v960 = vrcp.pop %v956
        %v961 = vmul.f32 1.0, %v960
        %v962 = vrcp.pop %v957
        %v963 = vmul.f32 1.0, %v962
        %v964 = vrcp.pop %v958
        %v965 = vmul.f32 1.0, %v964
        %v966 = vrcp.pop %v959
        %v967 = vmul.f32 1.0, %v966
        %968 = vrot.lane.b32.xlu0 %v932, 96
        %v969 = vpop.permute.xlu0 %968
        %970 = vrot.lane.b32.xlu0 %v933, 96
        %v971 = vpop.permute.xlu0 %970
        %972 = vrot.lane.b32.xlu0 %v934, 96
        %v973 = vpop.permute.xlu0 %972
        %974 = vrot.lane.b32.xlu0 %v935, 96
        %v975 = vpop.permute.xlu0 %974
        %v980 = vmul.f32 %v961, %v969
        %v981 = vmul.f32 %v963, %v971
        %v982 = vmul.f32 %v965, %v973
        %v983 = vmul.f32 %v967, %v975
        %988 = vrot.lane.b32.xlu0 %v980, 32
        %v989 = vpop.permute.xlu0 %988
        %990 = vrot.lane.b32.xlu0 %v981, 32
        %v991 = vpop.permute.xlu0 %990
        %992 = vrot.lane.b32.xlu0 %v982, 32
        %v993 = vpop.permute.xlu0 %992
        %994 = vrot.lane.b32.xlu0 %v983, 32
        %v995 = vpop.permute.xlu0 %994
        %v1000 = vadd.f32 %v649, %v989
        %v1001 = vadd.f32 %v654, %v991
        %v1002 = vadd.f32 %v659, %v993
        %v1003 = vadd.f32 %v664, %v995
        %v1004 = vtanh.pop %v1000
        %v1005 = vtanh.pop %v1001
        %v1006 = vtanh.pop %v1002
        %v1007 = vtanh.pop %v1003
        %v1008 = vsub.f32 1.0, %v961
        %v1009 = vsub.f32 1.0, %v963
        %v1010 = vsub.f32 1.0, %v965
        %v1011 = vsub.f32 1.0, %v967
        %1016 = vrot.lane.b32.xlu0 %v1004, 112
        %v1017 = vpop.permute.xlu0 %1016
        %1018 = vrot.lane.b32.xlu0 %v1005, 112
        %v1019 = vpop.permute.xlu0 %1018
        %1020 = vrot.lane.b32.xlu0 %v1006, 112
        %v1021 = vpop.permute.xlu0 %1020
        %1022 = vrot.lane.b32.xlu0 %v1007, 112
        %v1023 = vpop.permute.xlu0 %1022
        %v1028 = vmul.f32 %v1008, %v1017
        %v1029 = vmul.f32 %v1009, %v1019
        %v1030 = vmul.f32 %v1010, %v1021
        %v1031 = vmul.f32 %v1011, %v1023
        %v1032 = vmul.f32 %v961, 0.0
        %v1033 = vmul.f32 %v963, 0.0
        %v1034 = vmul.f32 %v965, 0.0
        %v1035 = vmul.f32 %v967, 0.0
        %v1036 = vadd.f32 %v1028, %v1032
        %v1037 = vadd.f32 %v1029, %v1033
        %v1038 = vadd.f32 %v1030, %v1034
        %v1039 = vadd.f32 %v1031, %v1035
        %v1044 = vrot.slane %v852, 7
        %vm1045 = vcmask 1041409
        %v1046 = vsel %vm1045, %v1044, %v851
        %v1047 = vrot.slane %v853, 6
        %vm1048 = vcmask 1042434
        %v1049 = vsel %vm1048, %v1047, %v1046
        %v1050 = vrot.slane %v854, 5
        %vm1051 = vcmask 1043459
        %v1052 = vsel %vm1051, %v1050, %v1049
        %1053 = vrot.lane.b32.xlu0 %v1052, 112
        %v1054 = vpop.permute.xlu0 %1053
        %v1055 = vsel %vm673, %v1054, 0
        %1057 = vmatprep.subr.mxu0 0.0
        %1058 = vmatpush1.msra.mxu0 %v456
        %1059 = vmatprep.subr.mxu0 0.0
        %1060 = vmatpush1.msra.mxu0 %v457
        %1061 = vmatprep.subr.mxu0 0.0
        %1062 = vmatpush1.msra.mxu0 0.0
        %1063 = vmatprep.subr.mxu0 0.0
        %1064 = vmatpush1.msra.mxu0 0.0
        %1065 = vmatprep.subr.mxu0 0.0
        %1066 = vmatpush1.msra.mxu0 0.0
        %1067 = vmatprep.subr.mxu0 0.0
        %1068 = vmatpush1.msra.mxu0 0.0
        %1069 = vmatprep.subr.mxu0 0.0
        %1070 = vmatpush1.msra.mxu0 0.0
        %1071 = vmatprep.subr.mxu0 0.0
        %1072 = vmatpush1.msra.mxu0 0.0
        %1073 = vmatprep.subr.mxu0 0.0
        %1074 = vmatpush1.msra.mxu0 0.0
        %1075 = vmatprep.subr.mxu0 0.0
        %1076 = vmatpush1.msra.mxu0 0.0
        %1077 = vmatprep.subr.mxu0 0.0
        %1078 = vmatpush1.msra.mxu0 0.0
        %1079 = vmatprep.subr.mxu0 0.0
        %1080 = vmatpush1.msra.mxu0 0.0
        %1081 = vmatprep.subr.mxu0 0.0
        %1082 = vmatpush1.msra.mxu0 0.0
        %1083 = vmatprep.subr.mxu0 0.0
        %1084 = vmatpush1.msra.mxu0 0.0
        %1085 = vmatprep.subr.mxu0 0.0
        %1086 = vmatpush1.msra.mxu0 0.0
        %1087 = vmatprep.subr.mxu0 0.0
        %1088 = vmatpush1.msra.mxu0 0.0
        %1089 = vmatprep.subr.mxu0 0.0
        %1090 = vmatpush1.msra.mxu0 0.0
        %1091 = vmatprep.subr.mxu0 0.0
        %1092 = vmatpush1.msra.mxu0 0.0
        %1093 = vmatprep.subr.mxu0 0.0
        %1094 = vmatpush1.msra.mxu0 0.0
        %1095 = vmatprep.subr.mxu0 0.0
        %1096 = vmatpush1.msra.mxu0 0.0
        %1097 = vmatprep.subr.mxu0 0.0
        %1098 = vmatpush1.msra.mxu0 0.0
        %1099 = vmatprep.subr.mxu0 0.0
        %1100 = vmatpush1.msra.mxu0 0.0
        %1101 = vmatprep.subr.mxu0 0.0
        %1102 = vmatpush1.msra.mxu0 0.0
        %1103 = vmatprep.subr.mxu0 0.0
        %1104 = vmatpush1.msra.mxu0 0.0
        %1105 = vmatprep.subr.mxu0 0.0
        %1106 = vmatpush1.msra.mxu0 0.0
        %1107 = vmatprep.subr.mxu0 0.0
        %1108 = vmatpush1.msra.mxu0 0.0
        %1109 = vmatprep.subr.mxu0 0.0
        %1110 = vmatpush1.msra.mxu0 0.0
        %1111 = vmatprep.subr.mxu0 0.0
        %1112 = vmatpush1.msra.mxu0 0.0
        %1113 = vmatprep.subr.mxu0 0.0
        %1114 = vmatpush1.msra.mxu0 0.0
        %1115 = vmatprep.subr.mxu0 0.0
        %1116 = vmatpush1.msra.mxu0 0.0
        %1117 = vmatprep.subr.mxu0 0.0
        %1118 = vmatpush1.msra.mxu0 0.0
        %1119 = vmatprep.subr.mxu0 0.0
        %1120 = vmatpush1.msra.mxu0 0.0
        %1121 = vmatprep.mubr.f32.mxu0 0.0
        %1122 = vmatmul.mubr.f32.gmra.mrb[0].mxu0 %v1055
        %v1123 = vpop.f32.mrb[0].mxu0
        %v1124 = vadd.f32 %v671, %v1123
        %v1125 = vpop.f32.mrb[0].mxu0
        %1126 = vdwg.mxu0
        %v1128 = vrot.slane %v1124, 7
        %v1129 = vrot.slane %v1124, 1
        %v1130 = vrot.slane %v1124, 2
        %v1135 = vadd.f32 %v558, %v1128
        %v1136 = vadd.f32 %v563, %v1124
        %v1137 = vadd.f32 %v568, %v1129
        %v1138 = vadd.f32 %v573, %v1130
        %v1139 = vxor.u32 %v1135, 2147483648
        %v1140 = vxor.u32 %v1136, 2147483648
        %v1141 = vxor.u32 %v1137, 2147483648
        %v1142 = vxor.u32 %v1138, 2147483648
        %v1143 = vmul.f32 %v1139, 1.442695
        %v1144 = vpow.pop %v1143
        %v1145 = vmul.f32 %v1140, 1.442695
        %v1146 = vpow.pop %v1145
        %v1147 = vmul.f32 %v1141, 1.442695
        %v1148 = vpow.pop %v1147
        %v1149 = vmul.f32 %v1142, 1.442695
        %v1150 = vpow.pop %v1149
        %v1151 = vadd.f32 %v1144, 1.0
        %v1152 = vadd.f32 %v1146, 1.0
        %v1153 = vadd.f32 %v1148, 1.0
        %v1154 = vadd.f32 %v1150, 1.0
        %v1155 = vrcp.pop %v1151
        %v1156 = vmul.f32 1.0, %v1155
        %v1157 = vrcp.pop %v1152
        %v1158 = vmul.f32 1.0, %v1157
        %v1159 = vrcp.pop %v1153
        %v1160 = vmul.f32 1.0, %v1159
        %v1161 = vrcp.pop %v1154
        %v1162 = vmul.f32 1.0, %v1161
        %1163 = vrot.lane.b32.xlu0 %v1128, 96
        %v1164 = vpop.permute.xlu0 %1163
        %1165 = vrot.lane.b32.xlu0 %v1124, 96
        %v1166 = vpop.permute.xlu0 %1165
        %1167 = vrot.lane.b32.xlu0 %v1129, 96
        %v1168 = vpop.permute.xlu0 %1167
        %1169 = vrot.lane.b32.xlu0 %v1130, 96
        %v1170 = vpop.permute.xlu0 %1169
        %v1175 = vmul.f32 %v1156, %v1164
        %v1176 = vmul.f32 %v1158, %v1166
        %v1177 = vmul.f32 %v1160, %v1168
        %v1178 = vmul.f32 %v1162, %v1170
        %1183 = vrot.lane.b32.xlu0 %v1175, 32
        %v1184 = vpop.permute.xlu0 %1183
        %1185 = vrot.lane.b32.xlu0 %v1176, 32
        %v1186 = vpop.permute.xlu0 %1185
        %1187 = vrot.lane.b32.xlu0 %v1177, 32
        %v1188 = vpop.permute.xlu0 %1187
        %1189 = vrot.lane.b32.xlu0 %v1178, 32
        %v1190 = vpop.permute.xlu0 %1189
        %v1195 = vadd.f32 %v558, %v1184
        %v1196 = vadd.f32 %v563, %v1186
        %v1197 = vadd.f32 %v568, %v1188
        %v1198 = vadd.f32 %v573, %v1190
        %v1199 = vtanh.pop %v1195
        %v1200 = vtanh.pop %v1196
        %v1201 = vtanh.pop %v1197
        %v1202 = vtanh.pop %v1198
        %v1203 = vsub.f32 1.0, %v1156
        %v1204 = vsub.f32 1.0, %v1158
        %v1205 = vsub.f32 1.0, %v1160
        %v1206 = vsub.f32 1.0, %v1162
        %1211 = vrot.lane.b32.xlu0 %v1199, 112
        %v1212 = vpop.permute.xlu0 %1211
        %1213 = vrot.lane.b32.xlu0 %v1200, 112
        %v1214 = vpop.permute.xlu0 %1213
        %1215 = vrot.lane.b32.xlu0 %v1201, 112
        %v1216 = vpop.permute.xlu0 %1215
        %1217 = vrot.lane.b32.xlu0 %v1202, 112
        %v1218 = vpop.permute.xlu0 %1217
        %v1223 = vmul.f32 %v1203, %v1212
        %v1224 = vmul.f32 %v1204, %v1214
        %v1225 = vmul.f32 %v1205, %v1216
        %v1226 = vmul.f32 %v1206, %v1218
        %v1227 = vrot.slane %v851, 7
        %v1228 = vrot.slane %v853, 7
        %v1229 = vrot.slane %v854, 7
        %v1234 = vmul.f32 %v1156, %v1227
        %v1235 = vmul.f32 %v1158, %v1044
        %v1236 = vmul.f32 %v1160, %v1228
        %v1237 = vmul.f32 %v1162, %v1229
        %v1238 = vadd.f32 %v1223, %v1234
        %v1239 = vadd.f32 %v1224, %v1235
        %v1240 = vadd.f32 %v1225, %v1236
        %v1241 = vadd.f32 %v1226, %v1237
        %v1246 = vrot.slane %v1036, 7
        %v1247 = vrot.slane %v1037, 6
        %v1248 = vsel %vm1045, %v1247, %v1246
        %v1249 = vrot.slane %v1038, 5
        %v1250 = vsel %vm1048, %v1249, %v1248
        %v1251 = vrot.slane %v1039, 4
        %v1252 = vsel %vm1051, %v1251, %v1250
        %1253 = vrot.lane.b32.xlu0 %v1252, 112
        %v1254 = vpop.permute.xlu0 %1253
        %v1255 = vsel %vm673, %v1254, 0
        %1257 = vmatprep.subr.mxu0 0.0
        %1258 = vmatpush1.msra.mxu0 %v464
        %1259 = vmatprep.subr.mxu0 0.0
        %1260 = vmatpush1.msra.mxu0 %v465
        %1261 = vmatprep.subr.mxu0 0.0
        %1262 = vmatpush1.msra.mxu0 0.0
        %1263 = vmatprep.subr.mxu0 0.0
        %1264 = vmatpush1.msra.mxu0 0.0
        %1265 = vmatprep.subr.mxu0 0.0
        %1266 = vmatpush1.msra.mxu0 0.0
        %1267 = vmatprep.subr.mxu0 0.0
        %1268 = vmatpush1.msra.mxu0 0.0
        %1269 = vmatprep.subr.mxu0 0.0
        %1270 = vmatpush1.msra.mxu0 0.0
        %1271 = vmatprep.subr.mxu0 0.0
        %1272 = vmatpush1.msra.mxu0 0.0
        %1273 = vmatprep.subr.mxu0 0.0
        %1274 = vmatpush1.msra.mxu0 0.0
        %1275 = vmatprep.subr.mxu0 0.0
        %1276 = vmatpush1.msra.mxu0 0.0
        %1277 = vmatprep.subr.mxu0 0.0
        %1278 = vmatpush1.msra.mxu0 0.0
        %1279 = vmatprep.subr.mxu0 0.0
        %1280 = vmatpush1.msra.mxu0 0.0
        %1281 = vmatprep.subr.mxu0 0.0
        %1282 = vmatpush1.msra.mxu0 0.0
        %1283 = vmatprep.subr.mxu0 0.0
        %1284 = vmatpush1.msra.mxu0 0.0
        %1285 = vmatprep.subr.mxu0 0.0
        %1286 = vmatpush1.msra.mxu0 0.0
        %1287 = vmatprep.subr.mxu0 0.0
        %1288 = vmatpush1.msra.mxu0 0.0
        %1289 = vmatprep.subr.mxu0 0.0
        %1290 = vmatpush1.msra.mxu0 0.0
        %1291 = vmatprep.subr.mxu0 0.0
        %1292 = vmatpush1.msra.mxu0 0.0
        %1293 = vmatprep.subr.mxu0 0.0
        %1294 = vmatpush1.msra.mxu0 0.0
        %1295 = vmatprep.subr.mxu0 0.0
        %1296 = vmatpush1.msra.mxu0 0.0
        %1297 = vmatprep.subr.mxu0 0.0
        %1298 = vmatpush1.msra.mxu0 0.0
        %1299 = vmatprep.subr.mxu0 0.0
        %1300 = vmatpush1.msra.mxu0 0.0
        %1301 = vmatprep.subr.mxu0 0.0
        %1302 = vmatpush1.msra.mxu0 0.0
        %1303 = vmatprep.subr.mxu0 0.0
        %1304 = vmatpush1.msra.mxu0 0.0
        %1305 = vmatprep.subr.mxu0 0.0
        %1306 = vmatpush1.msra.mxu0 0.0
        %1307 = vmatprep.subr.mxu0 0.0
        %1308 = vmatpush1.msra.mxu0 0.0
        %1309 = vmatprep.subr.mxu0 0.0
        %1310 = vmatpush1.msra.mxu0 0.0
        %1311 = vmatprep.subr.mxu0 0.0
        %1312 = vmatpush1.msra.mxu0 0.0
        %1313 = vmatprep.subr.mxu0 0.0
        %1314 = vmatpush1.msra.mxu0 0.0
        %1315 = vmatprep.subr.mxu0 0.0
        %1316 = vmatpush1.msra.mxu0 0.0
        %1317 = vmatprep.subr.mxu0 0.0
        %1318 = vmatpush1.msra.mxu0 0.0
        %1319 = vmatprep.subr.mxu0 0.0
        %1320 = vmatpush1.msra.mxu0 0.0
        %1321 = vmatprep.mubr.f32.mxu0 0.0
        %1322 = vmatmul.mubr.f32.gmra.mrb[0].mxu0 %v1255
        %v1323 = vpop.f32.mrb[0].mxu0
        %v1324 = vadd.f32 %v859, %v1323
        %v1325 = vpop.f32.mrb[0].mxu0
        %1326 = vdwg.mxu0
        %v1328 = vrot.slane %v1324, 2
        %v1329 = vrot.slane %v1324, 3
        %v1330 = vrot.slane %v1324, 4
        %v1331 = vrot.slane %v1324, 5
        %v1336 = vadd.f32 %v649, %v1328
        %v1337 = vadd.f32 %v654, %v1329
        %v1338 = vadd.f32 %v659, %v1330
        %v1339 = vadd.f32 %v664, %v1331
        %v1340 = vxor.u32 %v1336, 2147483648
        %v1341 = vxor.u32 %v1337, 2147483648
        %v1342 = vxor.u32 %v1338, 2147483648
        %v1343 = vxor.u32 %v1339, 2147483648
        %v1344 = vmul.f32 %v1340, 1.442695
        %v1345 = vpow.pop %v1344
        %v1346 = vmul.f32 %v1341, 1.442695
        %v1347 = vpow.pop %v1346
        %v1348 = vmul.f32 %v1342, 1.442695
        %v1349 = vpow.pop %v1348
        %v1350 = vmul.f32 %v1343, 1.442695
        %v1351 = vpow.pop %v1350
        %v1352 = vadd.f32 %v1345, 1.0
        %v1353 = vadd.f32 %v1347, 1.0
        %v1354 = vadd.f32 %v1349, 1.0
        %v1355 = vadd.f32 %v1351, 1.0
        %v1356 = vrcp.pop %v1352
        %v1357 = vmul.f32 1.0, %v1356
        %v1358 = vrcp.pop %v1353
        %v1359 = vmul.f32 1.0, %v1358
        %v1360 = vrcp.pop %v1354
        %v1361 = vmul.f32 1.0, %v1360
        %v1362 = vrcp.pop %v1355
        %v1363 = vmul.f32 1.0, %v1362
        %1364 = vrot.lane.b32.xlu0 %v1328, 96
        %v1365 = vpop.permute.xlu0 %1364
        %1366 = vrot.lane.b32.xlu0 %v1329, 96
        %v1367 = vpop.permute.xlu0 %1366
        %1368 = vrot.lane.b32.xlu0 %v1330, 96
        %v1369 = vpop.permute.xlu0 %1368
        %1370 = vrot.lane.b32.xlu0 %v1331, 96
        %v1371 = vpop.permute.xlu0 %1370
        %v1376 = vmul.f32 %v1357, %v1365
        %v1377 = vmul.f32 %v1359, %v1367
        %v1378 = vmul.f32 %v1361, %v1369
        %v1379 = vmul.f32 %v1363, %v1371
        %1384 = vrot.lane.b32.xlu0 %v1376, 32
        %v1385 = vpop.permute.xlu0 %1384
        %1386 = vrot.lane.b32.xlu0 %v1377, 32
        %v1387 = vpop.permute.xlu0 %1386
        %1388 = vrot.lane.b32.xlu0 %v1378, 32
        %v1389 = vpop.permute.xlu0 %1388
        %1390 = vrot.lane.b32.xlu0 %v1379, 32
        %v1391 = vpop.permute.xlu0 %1390
        %v1396 = vadd.f32 %v649, %v1385
        %v1397 = vadd.f32 %v654, %v1387
        %v1398 = vadd.f32 %v659, %v1389
        %v1399 = vadd.f32 %v664, %v1391
        %v1400 = vtanh.pop %v1396
        %v1401 = vtanh.pop %v1397
        %v1402 = vtanh.pop %v1398
        %v1403 = vtanh.pop %v1399
        %v1404 = vsub.f32 1.0, %v1357
        %v1405 = vsub.f32 1.0, %v1359
        %v1406 = vsub.f32 1.0, %v1361
        %v1407 = vsub.f32 1.0, %v1363
        %1412 = vrot.lane.b32.xlu0 %v1400, 112
        %v1413 = vpop.permute.xlu0 %1412
        %1414 = vrot.lane.b32.xlu0 %v1401, 112
        %v1415 = vpop.permute.xlu0 %1414
        %1416 = vrot.lane.b32.xlu0 %v1402, 112
        %v1417 = vpop.permute.xlu0 %1416
        %1418 = vrot.lane.b32.xlu0 %v1403, 112
        %v1419 = vpop.permute.xlu0 %1418
        %v1424 = vmul.f32 %v1404, %v1413
        %v1425 = vmul.f32 %v1405, %v1415
        %v1426 = vmul.f32 %v1406, %v1417
        %v1427 = vmul.f32 %v1407, %v1419
        %v1428 = vrot.slane %v1036, 1
        %v1429 = vrot.slane %v1037, 1
        %v1430 = vrot.slane %v1038, 1
        %v1431 = vrot.slane %v1039, 1
        %v1436 = vmul.f32 %v1357, %v1428
        %v1437 = vmul.f32 %v1359, %v1429
        %v1438 = vmul.f32 %v1361, %v1430
        %v1439 = vmul.f32 %v1363, %v1431
        %v1440 = vadd.f32 %v1424, %v1436
        %v1441 = vadd.f32 %v1425, %v1437
        %v1442 = vadd.f32 %v1426, %v1438
        %v1443 = vadd.f32 %v1427, %v1439
        %v1448 = vrot.slane %v1238, 1
        %v1449 = vsel %vm1045, %v1239, %v1448
        %v1450 = vrot.slane %v1240, 7
        %v1451 = vsel %vm1048, %v1450, %v1449
        %v1452 = vrot.slane %v1241, 6
        %v1453 = vsel %vm1051, %v1452, %v1451
        %1454 = vrot.lane.b32.xlu0 %v1453, 112
        %v1455 = vpop.permute.xlu0 %1454
        %v1456 = vsel %vm673, %v1455, 0
        %1458 = vmatprep.subr.mxu0 0.0
        %1459 = vmatpush1.msra.mxu0 %v456
        %1460 = vmatprep.subr.mxu0 0.0
        %1461 = vmatpush1.msra.mxu0 %v457
        %1462 = vmatprep.subr.mxu0 0.0
        %1463 = vmatpush1.msra.mxu0 0.0
        %1464 = vmatprep.subr.mxu0 0.0
        %1465 = vmatpush1.msra.mxu0 0.0
        %1466 = vmatprep.subr.mxu0 0.0
        %1467 = vmatpush1.msra.mxu0 0.0
        %1468 = vmatprep.subr.mxu0 0.0
        %1469 = vmatpush1.msra.mxu0 0.0
        %1470 = vmatprep.subr.mxu0 0.0
        %1471 = vmatpush1.msra.mxu0 0.0
        %1472 = vmatprep.subr.mxu0 0.0
        %1473 = vmatpush1.msra.mxu0 0.0
        %1474 = vmatprep.subr.mxu0 0.0
        %1475 = vmatpush1.msra.mxu0 0.0
        %1476 = vmatprep.subr.mxu0 0.0
        %1477 = vmatpush1.msra.mxu0 0.0
        %1478 = vmatprep.subr.mxu0 0.0
        %1479 = vmatpush1.msra.mxu0 0.0
        %1480 = vmatprep.subr.mxu0 0.0
        %1481 = vmatpush1.msra.mxu0 0.0
        %1482 = vmatprep.subr.mxu0 0.0
        %1483 = vmatpush1.msra.mxu0 0.0
        %1484 = vmatprep.subr.mxu0 0.0
        %1485 = vmatpush1.msra.mxu0 0.0
        %1486 = vmatprep.subr.mxu0 0.0
        %1487 = vmatpush1.msra.mxu0 0.0
        %1488 = vmatprep.subr.mxu0 0.0
        %1489 = vmatpush1.msra.mxu0 0.0
        %1490 = vmatprep.subr.mxu0 0.0
        %1491 = vmatpush1.msra.mxu0 0.0
        %1492 = vmatprep.subr.mxu0 0.0
        %1493 = vmatpush1.msra.mxu0 0.0
        %1494 = vmatprep.subr.mxu0 0.0
        %1495 = vmatpush1.msra.mxu0 0.0
        %1496 = vmatprep.subr.mxu0 0.0
        %1497 = vmatpush1.msra.mxu0 0.0
        %1498 = vmatprep.subr.mxu0 0.0
        %1499 = vmatpush1.msra.mxu0 0.0
        %1500 = vmatprep.subr.mxu0 0.0
        %1501 = vmatpush1.msra.mxu0 0.0
        %1502 = vmatprep.subr.mxu0 0.0
        %1503 = vmatpush1.msra.mxu0 0.0
        %1504 = vmatprep.subr.mxu0 0.0
        %1505 = vmatpush1.msra.mxu0 0.0
        %1506 = vmatprep.subr.mxu0 0.0
        %1507 = vmatpush1.msra.mxu0 0.0
        %1508 = vmatprep.subr.mxu0 0.0
        %1509 = vmatpush1.msra.mxu0 0.0
        %1510 = vmatprep.subr.mxu0 0.0
        %1511 = vmatpush1.msra.mxu0 0.0
        %1512 = vmatprep.subr.mxu0 0.0
        %1513 = vmatpush1.msra.mxu0 0.0
        %1514 = vmatprep.subr.mxu0 0.0
        %1515 = vmatpush1.msra.mxu0 0.0
        %1516 = vmatprep.subr.mxu0 0.0
        %1517 = vmatpush1.msra.mxu0 0.0
        %1518 = vmatprep.subr.mxu0 0.0
        %1519 = vmatpush1.msra.mxu0 0.0
        %1520 = vmatprep.subr.mxu0 0.0
        %1521 = vmatpush1.msra.mxu0 0.0
        %1522 = vmatprep.mubr.f32.mxu0 0.0
        %1523 = vmatmul.mubr.f32.gmra.mrb[0].mxu0 %v1456
        %v1524 = vpop.f32.mrb[0].mxu0
        %v1525 = vadd.f32 %v671, %v1524
        %v1526 = vpop.f32.mrb[0].mxu0
        %1527 = vdwg.mxu0
        %v1529 = vrot.slane %v1525, 6
        %v1530 = vrot.slane %v1525, 7
        %v1531 = vrot.slane %v1525, 1
        %v1536 = vadd.f32 %v558, %v1529
        %v1537 = vadd.f32 %v563, %v1530
        %v1538 = vadd.f32 %v568, %v1525
        %v1539 = vadd.f32 %v573, %v1531
        %v1540 = vxor.u32 %v1536, 2147483648
        %v1541 = vxor.u32 %v1537, 2147483648
        %v1542 = vxor.u32 %v1538, 2147483648
        %v1543 = vxor.u32 %v1539, 2147483648
        %v1544 = vmul.f32 %v1540, 1.442695
        %v1545 = vpow.pop %v1544
        %v1546 = vmul.f32 %v1541, 1.442695
        %v1547 = vpow.pop %v1546
        %v1548 = vmul.f32 %v1542, 1.442695
        %v1549 = vpow.pop %v1548
        %v1550 = vmul.f32 %v1543, 1.442695
        %v1551 = vpow.pop %v1550
        %v1552 = vadd.f32 %v1545, 1.0
        %v1553 = vadd.f32 %v1547, 1.0
        %v1554 = vadd.f32 %v1549, 1.0
        %v1555 = vadd.f32 %v1551, 1.0
        %v1556 = vrcp.pop %v1552
        %v1557 = vmul.f32 1.0, %v1556
        %v1558 = vrcp.pop %v1553
        %v1559 = vmul.f32 1.0, %v1558
        %v1560 = vrcp.pop %v1554
        %v1561 = vmul.f32 1.0, %v1560
        %v1562 = vrcp.pop %v1555
        %v1563 = vmul.f32 1.0, %v1562
        %1564 = vrot.lane.b32.xlu0 %v1529, 96
        %v1565 = vpop.permute.xlu0 %1564
        %1566 = vrot.lane.b32.xlu0 %v1530, 96
        %v1567 = vpop.permute.xlu0 %1566
        %1568 = vrot.lane.b32.xlu0 %v1525, 96
        %v1569 = vpop.permute.xlu0 %1568
        %1570 = vrot.lane.b32.xlu0 %v1531, 96
        %v1571 = vpop.permute.xlu0 %1570
        %v1576 = vmul.f32 %v1557, %v1565
        %v1577 = vmul.f32 %v1559, %v1567
        %v1578 = vmul.f32 %v1561, %v1569
        %v1579 = vmul.f32 %v1563, %v1571
        %1584 = vrot.lane.b32.xlu0 %v1576, 32
        %v1585 = vpop.permute.xlu0 %1584
        %1586 = vrot.lane.b32.xlu0 %v1577, 32
        %v1587 = vpop.permute.xlu0 %1586
        %1588 = vrot.lane.b32.xlu0 %v1578, 32
        %v1589 = vpop.permute.xlu0 %1588
        %1590 = vrot.lane.b32.xlu0 %v1579, 32
        %v1591 = vpop.permute.xlu0 %1590
        %v1596 = vadd.f32 %v558, %v1585
        %v1597 = vadd.f32 %v563, %v1587
        %v1598 = vadd.f32 %v568, %v1589
        %v1599 = vadd.f32 %v573, %v1591
        %v1600 = vtanh.pop %v1596
        %v1601 = vtanh.pop %v1597
        %v1602 = vtanh.pop %v1598
        %v1603 = vtanh.pop %v1599
        %v1604 = vsub.f32 1.0, %v1557
        %v1605 = vsub.f32 1.0, %v1559
        %v1606 = vsub.f32 1.0, %v1561
        %v1607 = vsub.f32 1.0, %v1563
        %1612 = vrot.lane.b32.xlu0 %v1600, 112
        %v1613 = vpop.permute.xlu0 %1612
        %1614 = vrot.lane.b32.xlu0 %v1601, 112
        %v1615 = vpop.permute.xlu0 %1614
        %1616 = vrot.lane.b32.xlu0 %v1602, 112
        %v1617 = vpop.permute.xlu0 %1616
        %1618 = vrot.lane.b32.xlu0 %v1603, 112
        %v1619 = vpop.permute.xlu0 %1618
        %v1624 = vmul.f32 %v1604, %v1613
        %v1625 = vmul.f32 %v1605, %v1615
        %v1626 = vmul.f32 %v1606, %v1617
        %v1627 = vmul.f32 %v1607, %v1619
        %v1628 = vrot.slane %v1238, 7
        %v1629 = vrot.slane %v1239, 7
        %v1630 = vrot.slane %v1241, 7
        %v1635 = vmul.f32 %v1557, %v1628
        %v1636 = vmul.f32 %v1559, %v1629
        %v1637 = vmul.f32 %v1561, %v1450
        %v1638 = vmul.f32 %v1563, %v1630
        %v1639 = vadd.f32 %v1624, %v1635
        %v1640 = vadd.f32 %v1625, %v1636
        %v1641 = vadd.f32 %v1626, %v1637
        %v1642 = vadd.f32 %v1627, %v1638
        %v1647 = vrot.slane %v1440, 6
        %v1648 = vrot.slane %v1441, 5
        %v1649 = vsel %vm1045, %v1648, %v1647
        %v1650 = vrot.slane %v1442, 4
        %v1651 = vsel %vm1048, %v1650, %v1649
        %v1652 = vrot.slane %v1443, 3
        %v1653 = vsel %vm1051, %v1652, %v1651
        %1654 = vrot.lane.b32.xlu0 %v1653, 112
        %v1655 = vpop.permute.xlu0 %1654
        %v1656 = vsel %vm673, %v1655, 0
        %1658 = vmatprep.subr.mxu0 0.0
        %1659 = vmatpush1.msra.mxu0 %v464
        %1660 = vmatprep.subr.mxu0 0.0
        %1661 = vmatpush1.msra.mxu0 %v465
        %1662 = vmatprep.subr.mxu0 0.0
        %1663 = vmatpush1.msra.mxu0 0.0
        %1664 = vmatprep.subr.mxu0 0.0
        %1665 = vmatpush1.msra.mxu0 0.0
        %1666 = vmatprep.subr.mxu0 0.0
        %1667 = vmatpush1.msra.mxu0 0.0
        %1668 = vmatprep.subr.mxu0 0.0
        %1669 = vmatpush1.msra.mxu0 0.0
        %1670 = vmatprep.subr.mxu0 0.0
        %1671 = vmatpush1.msra.mxu0 0.0
        %1672 = vmatprep.subr.mxu0 0.0
        %1673 = vmatpush1.msra.mxu0 0.0
        %1674 = vmatprep.subr.mxu0 0.0
        %1675 = vmatpush1.msra.mxu0 0.0
        %1676 = vmatprep.subr.mxu0 0.0
        %1677 = vmatpush1.msra.mxu0 0.0
        %1678 = vmatprep.subr.mxu0 0.0
        %1679 = vmatpush1.msra.mxu0 0.0
        %1680 = vmatprep.subr.mxu0 0.0
        %1681 = vmatpush1.msra.mxu0 0.0
        %1682 = vmatprep.subr.mxu0 0.0
        %1683 = vmatpush1.msra.mxu0 0.0
        %1684 = vmatprep.subr.mxu0 0.0
        %1685 = vmatpush1.msra.mxu0 0.0
        %1686 = vmatprep.subr.mxu0 0.0
        %1687 = vmatpush1.msra.mxu0 0.0
        %1688 = vmatprep.subr.mxu0 0.0
        %1689 = vmatpush1.msra.mxu0 0.0
        %1690 = vmatprep.subr.mxu0 0.0
        %1691 = vmatpush1.msra.mxu0 0.0
        %1692 = vmatprep.subr.mxu0 0.0
        %1693 = vmatpush1.msra.mxu0 0.0
        %1694 = vmatprep.subr.mxu0 0.0
        %1695 = vmatpush1.msra.mxu0 0.0
        %1696 = vmatprep.subr.mxu0 0.0
        %1697 = vmatpush1.msra.mxu0 0.0
        %1698 = vmatprep.subr.mxu0 0.0
        %1699 = vmatpush1.msra.mxu0 0.0
        %1700 = vmatprep.subr.mxu0 0.0
        %1701 = vmatpush1.msra.mxu0 0.0
        %1702 = vmatprep.subr.mxu0 0.0
        %1703 = vmatpush1.msra.mxu0 0.0
        %1704 = vmatprep.subr.mxu0 0.0
        %1705 = vmatpush1.msra.mxu0 0.0
        %1706 = vmatprep.subr.mxu0 0.0
        %1707 = vmatpush1.msra.mxu0 0.0
        %1708 = vmatprep.subr.mxu0 0.0
        %1709 = vmatpush1.msra.mxu0 0.0
        %1710 = vmatprep.subr.mxu0 0.0
        %1711 = vmatpush1.msra.mxu0 0.0
        %1712 = vmatprep.subr.mxu0 0.0
        %1713 = vmatpush1.msra.mxu0 0.0
        %1714 = vmatprep.subr.mxu0 0.0
        %1715 = vmatpush1.msra.mxu0 0.0
        %1716 = vmatprep.subr.mxu0 0.0
        %1717 = vmatpush1.msra.mxu0 0.0
        %1718 = vmatprep.subr.mxu0 0.0
        %1719 = vmatpush1.msra.mxu0 0.0
        %1720 = vmatprep.subr.mxu0 0.0
        %1721 = vmatpush1.msra.mxu0 0.0
        %1722 = vmatprep.mubr.f32.mxu0 0.0
        %1723 = vmatmul.mubr.f32.gmra.mrb[0].mxu0 %v1656
        %v1724 = vpop.f32.mrb[0].mxu0
        %v1725 = vadd.f32 %v859, %v1724
        %v1726 = vpop.f32.mrb[0].mxu0
        %1727 = vdwg.mxu0
        %v1729 = vrot.slane %v1725, 3
        %v1730 = vrot.slane %v1725, 4
        %v1731 = vrot.slane %v1725, 5
        %v1732 = vrot.slane %v1725, 6
        %v1737 = vadd.f32 %v649, %v1729
        %v1738 = vadd.f32 %v654, %v1730
        %v1739 = vadd.f32 %v659, %v1731
        %v1740 = vadd.f32 %v664, %v1732
        %v1741 = vxor.u32 %v1737, 2147483648
        %v1742 = vxor.u32 %v1738, 2147483648
        %v1743 = vxor.u32 %v1739, 2147483648
        %v1744 = vxor.u32 %v1740, 2147483648
        %v1745 = vmul.f32 %v1741, 1.442695
        %v1746 = vpow.pop %v1745
        %v1747 = vmul.f32 %v1742, 1.442695
        %v1748 = vpow.pop %v1747
        %v1749 = vmul.f32 %v1743, 1.442695
        %v1750 = vpow.pop %v1749
        %v1751 = vmul.f32 %v1744, 1.442695
        %v1752 = vpow.pop %v1751
        %v1753 = vadd.f32 %v1746, 1.0
        %v1754 = vadd.f32 %v1748, 1.0
        %v1755 = vadd.f32 %v1750, 1.0
        %v1756 = vadd.f32 %v1752, 1.0
        %v1757 = vrcp.pop %v1753
        %v1758 = vmul.f32 1.0, %v1757
        %v1759 = vrcp.pop %v1754
        %v1760 = vmul.f32 1.0, %v1759
        %v1761 = vrcp.pop %v1755
        %v1762 = vmul.f32 1.0, %v1761
        %v1763 = vrcp.pop %v1756
        %v1764 = vmul.f32 1.0, %v1763
        %1765 = vrot.lane.b32.xlu0 %v1729, 96
        %v1766 = vpop.permute.xlu0 %1765
        %1767 = vrot.lane.b32.xlu0 %v1730, 96
        %v1768 = vpop.permute.xlu0 %1767
        %1769 = vrot.lane.b32.xlu0 %v1731, 96
        %v1770 = vpop.permute.xlu0 %1769
        %1771 = vrot.lane.b32.xlu0 %v1732, 96
        %v1772 = vpop.permute.xlu0 %1771
        %v1777 = vmul.f32 %v1758, %v1766
        %v1778 = vmul.f32 %v1760, %v1768
        %v1779 = vmul.f32 %v1762, %v1770
        %v1780 = vmul.f32 %v1764, %v1772
        %1785 = vrot.lane.b32.xlu0 %v1777, 32
        %v1786 = vpop.permute.xlu0 %1785
        %1787 = vrot.lane.b32.xlu0 %v1778, 32
        %v1788 = vpop.permute.xlu0 %1787
        %1789 = vrot.lane.b32.xlu0 %v1779, 32
        %v1790 = vpop.permute.xlu0 %1789
        %1791 = vrot.lane.b32.xlu0 %v1780, 32
        %v1792 = vpop.permute.xlu0 %1791
        %v1797 = vadd.f32 %v649, %v1786
        %v1798 = vadd.f32 %v654, %v1788
        %v1799 = vadd.f32 %v659, %v1790
        %v1800 = vadd.f32 %v664, %v1792
        %v1801 = vtanh.pop %v1797
        %v1802 = vtanh.pop %v1798
        %v1803 = vtanh.pop %v1799
        %v1804 = vtanh.pop %v1800
        %v1805 = vsub.f32 1.0, %v1758
        %v1806 = vsub.f32 1.0, %v1760
        %v1807 = vsub.f32 1.0, %v1762
        %v1808 = vsub.f32 1.0, %v1764
        %1813 = vrot.lane.b32.xlu0 %v1801, 112
        %v1814 = vpop.permute.xlu0 %1813
        %1815 = vrot.lane.b32.xlu0 %v1802, 112
        %v1816 = vpop.permute.xlu0 %1815
        %1817 = vrot.lane.b32.xlu0 %v1803, 112
        %v1818 = vpop.permute.xlu0 %1817
        %1819 = vrot.lane.b32.xlu0 %v1804, 112
        %v1820 = vpop.permute.xlu0 %1819
        %v1825 = vmul.f32 %v1805, %v1814
        %v1826 = vmul.f32 %v1806, %v1816
        %v1827 = vmul.f32 %v1807, %v1818
        %v1828 = vmul.f32 %v1808, %v1820
        %v1829 = vrot.slane %v1440, 1
        %v1830 = vrot.slane %v1441, 1
        %v1831 = vrot.slane %v1442, 1
        %v1832 = vrot.slane %v1443, 1
        %v1837 = vmul.f32 %v1758, %v1829
        %v1838 = vmul.f32 %v1760, %v1830
        %v1839 = vmul.f32 %v1762, %v1831
        %v1840 = vmul.f32 %v1764, %v1832
        %v1841 = vadd.f32 %v1825, %v1837
        %v1842 = vadd.f32 %v1826, %v1838
        %v1843 = vadd.f32 %v1827, %v1839
        %v1844 = vadd.f32 %v1828, %v1840
        %v1849 = vrot.slane %v1639, 2
        %v1850 = vrot.slane %v1640, 1
        %v1851 = vsel %vm1045, %v1850, %v1849
        %v1852 = vsel %vm1048, %v1641, %v1851
        %v1853 = vrot.slane %v1642, 7
        %v1854 = vsel %vm1051, %v1853, %v1852
        %1855 = vrot.lane.b32.xlu0 %v1854, 112
        %v1856 = vpop.permute.xlu0 %1855
        %v1857 = vsel %vm673, %v1856, 0
        %1859 = vmatprep.subr.mxu0 0.0
        %1860 = vmatpush1.msra.mxu0 %v456
        %1861 = vmatprep.subr.mxu0 0.0
        %1862 = vmatpush1.msra.mxu0 %v457
        %1863 = vmatprep.subr.mxu0 0.0
        %1864 = vmatpush1.msra.mxu0 0.0
        %1865 = vmatprep.subr.mxu0 0.0
        %1866 = vmatpush1.msra.mxu0 0.0
        %1867 = vmatprep.subr.mxu0 0.0
        %1868 = vmatpush1.msra.mxu0 0.0
        %1869 = vmatprep.subr.mxu0 0.0
        %1870 = vmatpush1.msra.mxu0 0.0
        %1871 = vmatprep.subr.mxu0 0.0
        %1872 = vmatpush1.msra.mxu0 0.0
        %1873 = vmatprep.subr.mxu0 0.0
        %1874 = vmatpush1.msra.mxu0 0.0
        %1875 = vmatprep.subr.mxu0 0.0
        %1876 = vmatpush1.msra.mxu0 0.0
        %1877 = vmatprep.subr.mxu0 0.0
        %1878 = vmatpush1.msra.mxu0 0.0
        %1879 = vmatprep.subr.mxu0 0.0
        %1880 = vmatpush1.msra.mxu0 0.0
        %1881 = vmatprep.subr.mxu0 0.0
        %1882 = vmatpush1.msra.mxu0 0.0
        %1883 = vmatprep.subr.mxu0 0.0
        %1884 = vmatpush1.msra.mxu0 0.0
        %1885 = vmatprep.subr.mxu0 0.0
        %1886 = vmatpush1.msra.mxu0 0.0
        %1887 = vmatprep.subr.mxu0 0.0
        %1888 = vmatpush1.msra.mxu0 0.0
        %1889 = vmatprep.subr.mxu0 0.0
        %1890 = vmatpush1.msra.mxu0 0.0
        %1891 = vmatprep.subr.mxu0 0.0
        %1892 = vmatpush1.msra.mxu0 0.0
        %1893 = vmatprep.subr.mxu0 0.0
        %1894 = vmatpush1.msra.mxu0 0.0
        %1895 = vmatprep.subr.mxu0 0.0
        %1896 = vmatpush1.msra.mxu0 0.0
        %1897 = vmatprep.subr.mxu0 0.0
        %1898 = vmatpush1.msra.mxu0 0.0
        %1899 = vmatprep.subr.mxu0 0.0
        %1900 = vmatpush1.msra.mxu0 0.0
        %1901 = vmatprep.subr.mxu0 0.0
        %1902 = vmatpush1.msra.mxu0 0.0
        %1903 = vmatprep.subr.mxu0 0.0
        %1904 = vmatpush1.msra.mxu0 0.0
        %1905 = vmatprep.subr.mxu0 0.0
        %1906 = vmatpush1.msra.mxu0 0.0
        %1907 = vmatprep.subr.mxu0 0.0
        %1908 = vmatpush1.msra.mxu0 0.0
        %1909 = vmatprep.subr.mxu0 0.0
        %1910 = vmatpush1.msra.mxu0 0.0
        %1911 = vmatprep.subr.mxu0 0.0
        %1912 = vmatpush1.msra.mxu0 0.0
        %1913 = vmatprep.subr.mxu0 0.0
        %1914 = vmatpush1.msra.mxu0 0.0
        %1915 = vmatprep.subr.mxu0 0.0
        %1916 = vmatpush1.msra.mxu0 0.0
        %1917 = vmatprep.subr.mxu0 0.0
        %1918 = vmatpush1.msra.mxu0 0.0
        %1919 = vmatprep.subr.mxu0 0.0
        %1920 = vmatpush1.msra.mxu0 0.0
        %1921 = vmatprep.subr.mxu0 0.0
        %1922 = vmatpush1.msra.mxu0 0.0
        %1923 = vmatprep.mubr.f32.mxu0 0.0
        %1924 = vmatmul.mubr.f32.gmra.mrb[0].mxu0 %v1857
        %v1925 = vpop.f32.mrb[0].mxu0
        %v1926 = vadd.f32 %v671, %v1925
        %v1927 = vpop.f32.mrb[0].mxu0
        %1928 = vdwg.mxu0
        %v1930 = vrot.slane %v1926, 5
        %v1931 = vrot.slane %v1926, 6
        %v1932 = vrot.slane %v1926, 7
        %v1937 = vadd.f32 %v558, %v1930
        %v1938 = vadd.f32 %v563, %v1931
        %v1939 = vadd.f32 %v568, %v1932
        %v1940 = vadd.f32 %v573, %v1926
        %v1941 = vxor.u32 %v1937, 2147483648
        %v1942 = vxor.u32 %v1938, 2147483648
        %v1943 = vxor.u32 %v1939, 2147483648
        %v1944 = vxor.u32 %v1940, 2147483648
        %v1945 = vmul.f32 %v1941, 1.442695
        %v1946 = vpow.pop %v1945
        %v1947 = vmul.f32 %v1942, 1.442695
        %v1948 = vpow.pop %v1947
        %v1949 = vmul.f32 %v1943, 1.442695
        %v1950 = vpow.pop %v1949
        %v1951 = vmul.f32 %v1944, 1.442695
        %v1952 = vpow.pop %v1951
        %v1953 = vadd.f32 %v1946, 1.0
        %v1954 = vadd.f32 %v1948, 1.0
        %v1955 = vadd.f32 %v1950, 1.0
        %v1956 = vadd.f32 %v1952, 1.0
        %v1957 = vrcp.pop %v1953
        %v1958 = vmul.f32 1.0, %v1957
        %v1959 = vrcp.pop %v1954
        %v1960 = vmul.f32 1.0, %v1959
        %v1961 = vrcp.pop %v1955
        %v1962 = vmul.f32 1.0, %v1961
        %v1963 = vrcp.pop %v1956
        %v1964 = vmul.f32 1.0, %v1963
        %1965 = vrot.lane.b32.xlu0 %v1930, 96
        %v1966 = vpop.permute.xlu0 %1965
        %1967 = vrot.lane.b32.xlu0 %v1931, 96
        %v1968 = vpop.permute.xlu0 %1967
        %1969 = vrot.lane.b32.xlu0 %v1932, 96
        %v1970 = vpop.permute.xlu0 %1969
        %1971 = vrot.lane.b32.xlu0 %v1926, 96
        %v1972 = vpop.permute.xlu0 %1971
        %v1977 = vmul.f32 %v1958, %v1966
        %v1978 = vmul.f32 %v1960, %v1968
        %v1979 = vmul.f32 %v1962, %v1970
        %v1980 = vmul.f32 %v1964, %v1972
        %1985 = vrot.lane.b32.xlu0 %v1977, 32
        %v1986 = vpop.permute.xlu0 %1985
        %1987 = vrot.lane.b32.xlu0 %v1978, 32
        %v1988 = vpop.permute.xlu0 %1987
        %1989 = vrot.lane.b32.xlu0 %v1979, 32
        %v1990 = vpop.permute.xlu0 %1989
        %1991 = vrot.lane.b32.xlu0 %v1980, 32
        %v1992 = vpop.permute.xlu0 %1991
        %v1997 = vadd.f32 %v558, %v1986
        %v1998 = vadd.f32 %v563, %v1988
        %v1999 = vadd.f32 %v568, %v1990
        %v2000 = vadd.f32 %v573, %v1992
        %v2001 = vtanh.pop %v1997
        %v2002 = vtanh.pop %v1998
        %v2003 = vtanh.pop %v1999
        %v2004 = vtanh.pop %v2000
        %v2005 = vsub.f32 1.0, %v1958
        %v2006 = vsub.f32 1.0, %v1960
        %v2007 = vsub.f32 1.0, %v1962
        %v2008 = vsub.f32 1.0, %v1964
        %2013 = vrot.lane.b32.xlu0 %v2001, 112
        %v2014 = vpop.permute.xlu0 %2013
        %2015 = vrot.lane.b32.xlu0 %v2002, 112
        %v2016 = vpop.permute.xlu0 %2015
        %2017 = vrot.lane.b32.xlu0 %v2003, 112
        %v2018 = vpop.permute.xlu0 %2017
        %2019 = vrot.lane.b32.xlu0 %v2004, 112
        %v2020 = vpop.permute.xlu0 %2019
        %v2025 = vmul.f32 %v2005, %v2014
        %v2026 = vmul.f32 %v2006, %v2016
        %v2027 = vmul.f32 %v2007, %v2018
        %v2028 = vmul.f32 %v2008, %v2020
        %v2029 = vrot.slane %v1639, 7
        %v2030 = vrot.slane %v1640, 7
        %v2031 = vrot.slane %v1641, 7
        %v2036 = vmul.f32 %v1958, %v2029
        %v2037 = vmul.f32 %v1960, %v2030
        %v2038 = vmul.f32 %v1962, %v2031
        %v2039 = vmul.f32 %v1964, %v1853
        %v2040 = vadd.f32 %v2025, %v2036
        %v2041 = vadd.f32 %v2026, %v2037
        %v2042 = vadd.f32 %v2027, %v2038
        %v2043 = vadd.f32 %v2028, %v2039
        %v2048 = vrot.slane %v1841, 5
        %v2049 = vrot.slane %v1842, 4
        %v2050 = vsel %vm1045, %v2049, %v2048
        %v2051 = vrot.slane %v1843, 3
        %v2052 = vsel %vm1048, %v2051, %v2050
        %v2053 = vrot.slane %v1844, 2
        %v2054 = vsel %vm1051, %v2053, %v2052
        %2055 = vrot.lane.b32.xlu0 %v2054, 112
        %v2056 = vpop.permute.xlu0 %2055
        %v2057 = vsel %vm673, %v2056, 0
        %2059 = vmatprep.subr.mxu0 0.0
        %2060 = vmatpush1.msra.mxu0 %v464
        %2061 = vmatprep.subr.mxu0 0.0
        %2062 = vmatpush1.msra.mxu0 %v465
        %2063 = vmatprep.subr.mxu0 0.0
        %2064 = vmatpush1.msra.mxu0 0.0
        %2065 = vmatprep.subr.mxu0 0.0
        %2066 = vmatpush1.msra.mxu0 0.0
        %2067 = vmatprep.subr.mxu0 0.0
        %2068 = vmatpush1.msra.mxu0 0.0
        %2069 = vmatprep.subr.mxu0 0.0
        %2070 = vmatpush1.msra.mxu0 0.0
        %2071 = vmatprep.subr.mxu0 0.0
        %2072 = vmatpush1.msra.mxu0 0.0
        %2073 = vmatprep.subr.mxu0 0.0
        %2074 = vmatpush1.msra.mxu0 0.0
        %2075 = vmatprep.subr.mxu0 0.0
        %2076 = vmatpush1.msra.mxu0 0.0
        %2077 = vmatprep.subr.mxu0 0.0
        %2078 = vmatpush1.msra.mxu0 0.0
        %2079 = vmatprep.subr.mxu0 0.0
        %2080 = vmatpush1.msra.mxu0 0.0
        %2081 = vmatprep.subr.mxu0 0.0
        %2082 = vmatpush1.msra.mxu0 0.0
        %2083 = vmatprep.subr.mxu0 0.0
        %2084 = vmatpush1.msra.mxu0 0.0
        %2085 = vmatprep.subr.mxu0 0.0
        %2086 = vmatpush1.msra.mxu0 0.0
        %2087 = vmatprep.subr.mxu0 0.0
        %2088 = vmatpush1.msra.mxu0 0.0
        %2089 = vmatprep.subr.mxu0 0.0
        %2090 = vmatpush1.msra.mxu0 0.0
        %2091 = vmatprep.subr.mxu0 0.0
        %2092 = vmatpush1.msra.mxu0 0.0
        %2093 = vmatprep.subr.mxu0 0.0
        %2094 = vmatpush1.msra.mxu0 0.0
        %2095 = vmatprep.subr.mxu0 0.0
        %2096 = vmatpush1.msra.mxu0 0.0
        %2097 = vmatprep.subr.mxu0 0.0
        %2098 = vmatpush1.msra.mxu0 0.0
        %2099 = vmatprep.subr.mxu0 0.0
        %2100 = vmatpush1.msra.mxu0 0.0
        %2101 = vmatprep.subr.mxu0 0.0
        %2102 = vmatpush1.msra.mxu0 0.0
        %2103 = vmatprep.subr.mxu0 0.0
        %2104 = vmatpush1.msra.mxu0 0.0
        %2105 = vmatprep.subr.mxu0 0.0
        %2106 = vmatpush1.msra.mxu0 0.0
        %2107 = vmatprep.subr.mxu0 0.0
        %2108 = vmatpush1.msra.mxu0 0.0
        %2109 = vmatprep.subr.mxu0 0.0
        %2110 = vmatpush1.msra.mxu0 0.0
        %2111 = vmatprep.subr.mxu0 0.0
        %2112 = vmatpush1.msra.mxu0 0.0
        %2113 = vmatprep.subr.mxu0 0.0
        %2114 = vmatpush1.msra.mxu0 0.0
        %2115 = vmatprep.subr.mxu0 0.0
        %2116 = vmatpush1.msra.mxu0 0.0
        %2117 = vmatprep.subr.mxu0 0.0
        %2118 = vmatpush1.msra.mxu0 0.0
        %2119 = vmatprep.subr.mxu0 0.0
        %2120 = vmatpush1.msra.mxu0 0.0
        %2121 = vmatprep.subr.mxu0 0.0
        %2122 = vmatpush1.msra.mxu0 0.0
        %2123 = vmatprep.mubr.f32.mxu0 0.0
        %2124 = vmatmul.mubr.f32.gmra.mrb[0].mxu0 %v2057
        %v2125 = vpop.f32.mrb[0].mxu0
        %v2126 = vadd.f32 %v859, %v2125
        %v2127 = vpop.f32.mrb[0].mxu0
        %2128 = vdwg.mxu0
        %v2130 = vrot.slane %v2126, 4
        %v2131 = vrot.slane %v2126, 5
        %v2132 = vrot.slane %v2126, 6
        %v2133 = vrot.slane %v2126, 7
        %v2138 = vadd.f32 %v649, %v2130
        %v2139 = vadd.f32 %v654, %v2131
        %v2140 = vadd.f32 %v659, %v2132
        %v2141 = vadd.f32 %v664, %v2133
        %v2142 = vxor.u32 %v2138, 2147483648
        %v2143 = vxor.u32 %v2139, 2147483648
        %v2144 = vxor.u32 %v2140, 2147483648
        %v2145 = vxor.u32 %v2141, 2147483648
        %v2146 = vmul.f32 %v2142, 1.442695
        %v2147 = vpow.pop %v2146
        %v2148 = vmul.f32 %v2143, 1.442695
        %v2149 = vpow.pop %v2148
        %v2150 = vmul.f32 %v2144, 1.442695
        %v2151 = vpow.pop %v2150
        %v2152 = vmul.f32 %v2145, 1.442695
        %v2153 = vpow.pop %v2152
        %v2154 = vadd.f32 %v2147, 1.0
        %v2155 = vadd.f32 %v2149, 1.0
        %v2156 = vadd.f32 %v2151, 1.0
        %v2157 = vadd.f32 %v2153, 1.0
        %v2158 = vrcp.pop %v2154
        %v2159 = vmul.f32 1.0, %v2158
        %v2160 = vrcp.pop %v2155
        %v2161 = vmul.f32 1.0, %v2160
        %v2162 = vrcp.pop %v2156
        %v2163 = vmul.f32 1.0, %v2162
        %v2164 = vrcp.pop %v2157
        %v2165 = vmul.f32 1.0, %v2164
        %2166 = vrot.lane.b32.xlu0 %v2130, 96
        %v2167 = vpop.permute.xlu0 %2166
        %2168 = vrot.lane.b32.xlu0 %v2131, 96
        %v2169 = vpop.permute.xlu0 %2168
        %2170 = vrot.lane.b32.xlu0 %v2132, 96
        %v2171 = vpop.permute.xlu0 %2170
        %2172 = vrot.lane.b32.xlu0 %v2133, 96
        %v2173 = vpop.permute.xlu0 %2172
        %v2178 = vmul.f32 %v2159, %v2167
        %v2179 = vmul.f32 %v2161, %v2169
        %v2180 = vmul.f32 %v2163, %v2171
        %v2181 = vmul.f32 %v2165, %v2173
        %2186 = vrot.lane.b32.xlu0 %v2178, 32
        %v2187 = vpop.permute.xlu0 %2186
        %2188 = vrot.lane.b32.xlu0 %v2179, 32
        %v2189 = vpop.permute.xlu0 %2188
        %2190 = vrot.lane.b32.xlu0 %v2180, 32
        %v2191 = vpop.permute.xlu0 %2190
        %2192 = vrot.lane.b32.xlu0 %v2181, 32
        %v2193 = vpop.permute.xlu0 %2192
        %v2198 = vadd.f32 %v649, %v2187
        %v2199 = vadd.f32 %v654, %v2189
        %v2200 = vadd.f32 %v659, %v2191
        %v2201 = vadd.f32 %v664, %v2193
        %v2202 = vtanh.pop %v2198
        %v2203 = vtanh.pop %v2199
        %v2204 = vtanh.pop %v2200
        %v2205 = vtanh.pop %v2201
        %v2206 = vsub.f32 1.0, %v2159
        %v2207 = vsub.f32 1.0, %v2161
        %v2208 = vsub.f32 1.0, %v2163
        %v2209 = vsub.f32 1.0, %v2165
        %2214 = vrot.lane.b32.xlu0 %v2202, 112
        %v2215 = vpop.permute.xlu0 %2214
        %2216 = vrot.lane.b32.xlu0 %v2203, 112
        %v2217 = vpop.permute.xlu0 %2216
        %2218 = vrot.lane.b32.xlu0 %v2204, 112
        %v2219 = vpop.permute.xlu0 %2218
        %2220 = vrot.lane.b32.xlu0 %v2205, 112
        %v2221 = vpop.permute.xlu0 %2220
        %v2226 = vmul.f32 %v2206, %v2215
        %v2227 = vmul.f32 %v2207, %v2217
        %v2228 = vmul.f32 %v2208, %v2219
        %v2229 = vmul.f32 %v2209, %v2221
        %v2230 = vrot.slane %v1841, 1
        %v2231 = vrot.slane %v1842, 1
        %v2232 = vrot.slane %v1843, 1
        %v2233 = vrot.slane %v1844, 1
        %v2238 = vmul.f32 %v2159, %v2230
        %v2239 = vmul.f32 %v2161, %v2231
        %v2240 = vmul.f32 %v2163, %v2232
        %v2241 = vmul.f32 %v2165, %v2233
        %v2242 = vadd.f32 %v2226, %v2238
        %v2243 = vadd.f32 %v2227, %v2239
        %v2244 = vadd.f32 %v2228, %v2240
        %v2245 = vadd.f32 %v2229, %v2241
        %v2250 = vrot.slane %v2040, 3
        %v2251 = vrot.slane %v2041, 2
        %v2252 = vsel %vm1045, %v2251, %v2250
        %v2253 = vrot.slane %v2042, 1
        %v2254 = vsel %vm1048, %v2253, %v2252
        %v2255 = vsel %vm1051, %v2043, %v2254
        %2256 = vrot.lane.b32.xlu0 %v2255, 112
        %v2257 = vpop.permute.xlu0 %2256
        %v2258 = vsel %vm673, %v2257, 0
        %2260 = vmatprep.subr.mxu0 0.0
        %2261 = vmatpush1.msra.mxu0 %v456
        %2262 = vmatprep.subr.mxu0 0.0
        %2263 = vmatpush1.msra.mxu0 %v457
        %2264 = vmatprep.subr.mxu0 0.0
        %2265 = vmatpush1.msra.mxu0 0.0
        %2266 = vmatprep.subr.mxu0 0.0
        %2267 = vmatpush1.msra.mxu0 0.0
        %2268 = vmatprep.subr.mxu0 0.0
        %2269 = vmatpush1.msra.mxu0 0.0
        %2270 = vmatprep.subr.mxu0 0.0
        %2271 = vmatpush1.msra.mxu0 0.0
        %2272 = vmatprep.subr.mxu0 0.0
        %2273 = vmatpush1.msra.mxu0 0.0
        %2274 = vmatprep.subr.mxu0 0.0
        %2275 = vmatpush1.msra.mxu0 0.0
        %2276 = vmatprep.subr.mxu0 0.0
        %2277 = vmatpush1.msra.mxu0 0.0
        %2278 = vmatprep.subr.mxu0 0.0
        %2279 = vmatpush1.msra.mxu0 0.0
        %2280 = vmatprep.subr.mxu0 0.0
        %2281 = vmatpush1.msra.mxu0 0.0
        %2282 = vmatprep.subr.mxu0 0.0
        %2283 = vmatpush1.msra.mxu0 0.0
        %2284 = vmatprep.subr.mxu0 0.0
        %2285 = vmatpush1.msra.mxu0 0.0
        %2286 = vmatprep.subr.mxu0 0.0
        %2287 = vmatpush1.msra.mxu0 0.0
        %2288 = vmatprep.subr.mxu0 0.0
        %2289 = vmatpush1.msra.mxu0 0.0
        %2290 = vmatprep.subr.mxu0 0.0
        %2291 = vmatpush1.msra.mxu0 0.0
        %2292 = vmatprep.subr.mxu0 0.0
        %2293 = vmatpush1.msra.mxu0 0.0
        %2294 = vmatprep.subr.mxu0 0.0
        %2295 = vmatpush1.msra.mxu0 0.0
        %2296 = vmatprep.subr.mxu0 0.0
        %2297 = vmatpush1.msra.mxu0 0.0
        %2298 = vmatprep.subr.mxu0 0.0
        %2299 = vmatpush1.msra.mxu0 0.0
        %2300 = vmatprep.subr.mxu0 0.0
        %2301 = vmatpush1.msra.mxu0 0.0
        %2302 = vmatprep.subr.mxu0 0.0
        %2303 = vmatpush1.msra.mxu0 0.0
        %2304 = vmatprep.subr.mxu0 0.0
        %2305 = vmatpush1.msra.mxu0 0.0
        %2306 = vmatprep.subr.mxu0 0.0
        %2307 = vmatpush1.msra.mxu0 0.0
        %2308 = vmatprep.subr.mxu0 0.0
        %2309 = vmatpush1.msra.mxu0 0.0
        %2310 = vmatprep.subr.mxu0 0.0
        %2311 = vmatpush1.msra.mxu0 0.0
        %2312 = vmatprep.subr.mxu0 0.0
        %2313 = vmatpush1.msra.mxu0 0.0
        %2314 = vmatprep.subr.mxu0 0.0
        %2315 = vmatpush1.msra.mxu0 0.0
        %2316 = vmatprep.subr.mxu0 0.0
        %2317 = vmatpush1.msra.mxu0 0.0
        %2318 = vmatprep.subr.mxu0 0.0
        %2319 = vmatpush1.msra.mxu0 0.0
        %2320 = vmatprep.subr.mxu0 0.0
        %2321 = vmatpush1.msra.mxu0 0.0
        %2322 = vmatprep.subr.mxu0 0.0
        %2323 = vmatpush1.msra.mxu0 0.0
        %2324 = vmatprep.mubr.f32.mxu0 0.0
        %2325 = vmatmul.mubr.f32.gmra.mrb[0].mxu0 %v2258
        %v2326 = vpop.f32.mrb[0].mxu0
        %v2327 = vadd.f32 %v671, %v2326
        %v2328 = vpop.f32.mrb[0].mxu0
        %2329 = vdwg.mxu0
        %v2331 = vrot.slane %v2327, 4
        %v2332 = vrot.slane %v2327, 5
        %v2333 = vrot.slane %v2327, 6
        %v2334 = vrot.slane %v2327, 7
        %v2339 = vadd.f32 %v558, %v2331
        %v2340 = vadd.f32 %v563, %v2332
        %v2341 = vadd.f32 %v568, %v2333
        %v2342 = vadd.f32 %v573, %v2334
        %v2343 = vxor.u32 %v2339, 2147483648
        %v2344 = vxor.u32 %v2340, 2147483648
        %v2345 = vxor.u32 %v2341, 2147483648
        %v2346 = vxor.u32 %v2342, 2147483648
        %v2347 = vmul.f32 %v2343, 1.442695
        %v2348 = vpow.pop %v2347
        %v2349 = vmul.f32 %v2344, 1.442695
        %v2350 = vpow.pop %v2349
        %v2351 = vmul.f32 %v2345, 1.442695
        %v2352 = vpow.pop %v2351
        %v2353 = vmul.f32 %v2346, 1.442695
        %v2354 = vpow.pop %v2353
        %v2355 = vadd.f32 %v2348, 1.0
        %v2356 = vadd.f32 %v2350, 1.0
        %v2357 = vadd.f32 %v2352, 1.0
        %v2358 = vadd.f32 %v2354, 1.0
        %v2359 = vrcp.pop %v2355
        %v2360 = vmul.f32 1.0, %v2359
        %v2361 = vrcp.pop %v2356
        %v2362 = vmul.f32 1.0, %v2361
        %v2363 = vrcp.pop %v2357
        %v2364 = vmul.f32 1.0, %v2363
        %v2365 = vrcp.pop %v2358
        %v2366 = vmul.f32 1.0, %v2365
        %2367 = vrot.lane.b32.xlu0 %v2331, 96
        %v2368 = vpop.permute.xlu0 %2367
        %2369 = vrot.lane.b32.xlu0 %v2332, 96
        %v2370 = vpop.permute.xlu0 %2369
        %2371 = vrot.lane.b32.xlu0 %v2333, 96
        %v2372 = vpop.permute.xlu0 %2371
        %2373 = vrot.lane.b32.xlu0 %v2334, 96
        %v2374 = vpop.permute.xlu0 %2373
        %v2379 = vmul.f32 %v2360, %v2368
        %v2380 = vmul.f32 %v2362, %v2370
        %v2381 = vmul.f32 %v2364, %v2372
        %v2382 = vmul.f32 %v2366, %v2374
        %2387 = vrot.lane.b32.xlu0 %v2379, 32
        %v2388 = vpop.permute.xlu0 %2387
        %2389 = vrot.lane.b32.xlu0 %v2380, 32
        %v2390 = vpop.permute.xlu0 %2389
        %2391 = vrot.lane.b32.xlu0 %v2381, 32
        %v2392 = vpop.permute.xlu0 %2391
        %2393 = vrot.lane.b32.xlu0 %v2382, 32
        %v2394 = vpop.permute.xlu0 %2393
        %v2399 = vadd.f32 %v558, %v2388
        %v2400 = vadd.f32 %v563, %v2390
        %v2401 = vadd.f32 %v568, %v2392
        %v2402 = vadd.f32 %v573, %v2394
        %v2403 = vtanh.pop %v2399
        %v2404 = vtanh.pop %v2400
        %v2405 = vtanh.pop %v2401
        %v2406 = vtanh.pop %v2402
        %v2407 = vsub.f32 1.0, %v2360
        %v2408 = vsub.f32 1.0, %v2362
        %v2409 = vsub.f32 1.0, %v2364
        %v2410 = vsub.f32 1.0, %v2366
        %2415 = vrot.lane.b32.xlu0 %v2403, 112
        %v2416 = vpop.permute.xlu0 %2415
        %2417 = vrot.lane.b32.xlu0 %v2404, 112
        %v2418 = vpop.permute.xlu0 %2417
        %2419 = vrot.lane.b32.xlu0 %v2405, 112
        %v2420 = vpop.permute.xlu0 %2419
        %2421 = vrot.lane.b32.xlu0 %v2406, 112
        %v2422 = vpop.permute.xlu0 %2421
        %v2427 = vmul.f32 %v2407, %v2416
        %v2428 = vmul.f32 %v2408, %v2418
        %v2429 = vmul.f32 %v2409, %v2420
        %v2430 = vmul.f32 %v2410, %v2422
        %v2431 = vrot.slane %v2040, 7
        %v2432 = vrot.slane %v2041, 7
        %v2433 = vrot.slane %v2042, 7
        %v2434 = vrot.slane %v2043, 7
        %v2439 = vmul.f32 %v2360, %v2431
        %v2440 = vmul.f32 %v2362, %v2432
        %v2441 = vmul.f32 %v2364, %v2433
        %v2442 = vmul.f32 %v2366, %v2434
        %v2443 = vadd.f32 %v2427, %v2439
        %v2444 = vadd.f32 %v2428, %v2440
        %v2445 = vadd.f32 %v2429, %v2441
        %v2446 = vadd.f32 %v2430, %v2442
        %v2451 = vrot.slane %v2242, 4
        %v2452 = vrot.slane %v2243, 3
        %v2453 = vsel %vm1045, %v2452, %v2451
        %v2454 = vrot.slane %v2244, 2
        %v2455 = vsel %vm1048, %v2454, %v2453
        %v2456 = vrot.slane %v2245, 1
        %v2457 = vsel %vm1051, %v2456, %v2455
        %2458 = vrot.lane.b32.xlu0 %v2457, 112
        %v2459 = vpop.permute.xlu0 %2458
        %v2460 = vsel %vm673, %v2459, 0
        %2462 = vmatprep.subr.mxu0 0.0
        %2463 = vmatpush1.msra.mxu0 %v464
        %2464 = vmatprep.subr.mxu0 0.0
        %2465 = vmatpush1.msra.mxu0 %v465
        %2466 = vmatprep.subr.mxu0 0.0
        %2467 = vmatpush1.msra.mxu0 0.0
        %2468 = vmatprep.subr.mxu0 0.0
        %2469 = vmatpush1.msra.mxu0 0.0
        %2470 = vmatprep.subr.mxu0 0.0
        %2471 = vmatpush1.msra.mxu0 0.0
        %2472 = vmatprep.subr.mxu0 0.0
        %2473 = vmatpush1.msra.mxu0 0.0
        %2474 = vmatprep.subr.mxu0 0.0
        %2475 = vmatpush1.msra.mxu0 0.0
        %2476 = vmatprep.subr.mxu0 0.0
        %2477 = vmatpush1.msra.mxu0 0.0
        %2478 = vmatprep.subr.mxu0 0.0
        %2479 = vmatpush1.msra.mxu0 0.0
        %2480 = vmatprep.subr.mxu0 0.0
        %2481 = vmatpush1.msra.mxu0 0.0
        %2482 = vmatprep.subr.mxu0 0.0
        %2483 = vmatpush1.msra.mxu0 0.0
        %2484 = vmatprep.subr.mxu0 0.0
        %2485 = vmatpush1.msra.mxu0 0.0
        %2486 = vmatprep.subr.mxu0 0.0
        %2487 = vmatpush1.msra.mxu0 0.0
        %2488 = vmatprep.subr.mxu0 0.0
        %2489 = vmatpush1.msra.mxu0 0.0
        %2490 = vmatprep.subr.mxu0 0.0
        %2491 = vmatpush1.msra.mxu0 0.0
        %2492 = vmatprep.subr.mxu0 0.0
        %2493 = vmatpush1.msra.mxu0 0.0
        %2494 = vmatprep.subr.mxu0 0.0
        %2495 = vmatpush1.msra.mxu0 0.0
        %2496 = vmatprep.subr.mxu0 0.0
        %2497 = vmatpush1.msra.mxu0 0.0
        %2498 = vmatprep.subr.mxu0 0.0
        %2499 = vmatpush1.msra.mxu0 0.0
        %2500 = vmatprep.subr.mxu0 0.0
        %2501 = vmatpush1.msra.mxu0 0.0
        %2502 = vmatprep.subr.mxu0 0.0
        %2503 = vmatpush1.msra.mxu0 0.0
        %2504 = vmatprep.subr.mxu0 0.0
        %2505 = vmatpush1.msra.mxu0 0.0
        %2506 = vmatprep.subr.mxu0 0.0
        %2507 = vmatpush1.msra.mxu0 0.0
        %2508 = vmatprep.subr.mxu0 0.0
        %2509 = vmatpush1.msra.mxu0 0.0
        %2510 = vmatprep.subr.mxu0 0.0
        %2511 = vmatpush1.msra.mxu0 0.0
        %2512 = vmatprep.subr.mxu0 0.0
        %2513 = vmatpush1.msra.mxu0 0.0
        %2514 = vmatprep.subr.mxu0 0.0
        %2515 = vmatpush1.msra.mxu0 0.0
        %2516 = vmatprep.subr.mxu0 0.0
        %2517 = vmatpush1.msra.mxu0 0.0
        %2518 = vmatprep.subr.mxu0 0.0
        %2519 = vmatpush1.msra.mxu0 0.0
        %2520 = vmatprep.subr.mxu0 0.0
        %2521 = vmatpush1.msra.mxu0 0.0
        %2522 = vmatprep.subr.mxu0 0.0
        %2523 = vmatpush1.msra.mxu0 0.0
        %2524 = vmatprep.subr.mxu0 0.0
        %2525 = vmatpush1.msra.mxu0 0.0
        %2526 = vmatprep.mubr.f32.mxu0 0.0
        %2527 = vmatmul.mubr.f32.gmra.mrb[0].mxu0 %v2460
        %v2528 = vpop.f32.mrb[0].mxu0
        %v2529 = vadd.f32 %v859, %v2528
        %v2530 = vpop.f32.mrb[0].mxu0
        %2531 = vdwg.mxu0
        %v2533 = vrot.slane %v2529, 5
        %v2534 = vrot.slane %v2529, 6
        %v2535 = vrot.slane %v2529, 7
        %v2540 = vadd.f32 %v649, %v2533
        %v2541 = vadd.f32 %v654, %v2534
        %v2542 = vadd.f32 %v659, %v2535
        %v2543 = vadd.f32 %v664, %v2529
        %v2544 = vxor.u32 %v2540, 2147483648
        %v2545 = vxor.u32 %v2541, 2147483648
        %v2546 = vxor.u32 %v2542, 2147483648
        %v2547 = vxor.u32 %v2543, 2147483648
        %v2548 = vmul.f32 %v2544, 1.442695
        %v2549 = vpow.pop %v2548
        %v2550 = vmul.f32 %v2545, 1.442695
        %v2551 = vpow.pop %v2550
        %v2552 = vmul.f32 %v2546, 1.442695
        %v2553 = vpow.pop %v2552
        %v2554 = vmul.f32 %v2547, 1.442695
        %v2555 = vpow.pop %v2554
        %v2556 = vadd.f32 %v2549, 1.0
        %v2557 = vadd.f32 %v2551, 1.0
        %v2558 = vadd.f32 %v2553, 1.0
        %v2559 = vadd.f32 %v2555, 1.0
        %v2560 = vrcp.pop %v2556
        %v2561 = vmul.f32 1.0, %v2560
        %v2562 = vrcp.pop %v2557
        %v2563 = vmul.f32 1.0, %v2562
        %v2564 = vrcp.pop %v2558
        %v2565 = vmul.f32 1.0, %v2564
        %v2566 = vrcp.pop %v2559
        %v2567 = vmul.f32 1.0, %v2566
        %2568 = vrot.lane.b32.xlu0 %v2533, 96
        %v2569 = vpop.permute.xlu0 %2568
        %2570 = vrot.lane.b32.xlu0 %v2534, 96
        %v2571 = vpop.permute.xlu0 %2570
        %2572 = vrot.lane.b32.xlu0 %v2535, 96
        %v2573 = vpop.permute.xlu0 %2572
        %2574 = vrot.lane.b32.xlu0 %v2529, 96
        %v2575 = vpop.permute.xlu0 %2574
        %v2580 = vmul.f32 %v2561, %v2569
        %v2581 = vmul.f32 %v2563, %v2571
        %v2582 = vmul.f32 %v2565, %v2573
        %v2583 = vmul.f32 %v2567, %v2575
        %2588 = vrot.lane.b32.xlu0 %v2580, 32
        %v2589 = vpop.permute.xlu0 %2588
        %2590 = vrot.lane.b32.xlu0 %v2581, 32
        %v2591 = vpop.permute.xlu0 %2590
        %2592 = vrot.lane.b32.xlu0 %v2582, 32
        %v2593 = vpop.permute.xlu0 %2592
        %2594 = vrot.lane.b32.xlu0 %v2583, 32
        %v2595 = vpop.permute.xlu0 %2594
        %v2600 = vadd.f32 %v649, %v2589
        %v2601 = vadd.f32 %v654, %v2591
        %v2602 = vadd.f32 %v659, %v2593
        %v2603 = vadd.f32 %v664, %v2595
        %v2604 = vtanh.pop %v2600
        %v2605 = vtanh.pop %v2601
        %v2606 = vtanh.pop %v2602
        %v2607 = vtanh.pop %v2603
        %v2608 = vsub.f32 1.0, %v2561
        %v2609 = vsub.f32 1.0, %v2563
        %v2610 = vsub.f32 1.0, %v2565
        %v2611 = vsub.f32 1.0, %v2567
        %2616 = vrot.lane.b32.xlu0 %v2604, 112
        %v2617 = vpop.permute.xlu0 %2616
        %2618 = vrot.lane.b32.xlu0 %v2605, 112
        %v2619 = vpop.permute.xlu0 %2618
        %2620 = vrot.lane.b32.xlu0 %v2606, 112
        %v2621 = vpop.permute.xlu0 %2620
        %2622 = vrot.lane.b32.xlu0 %v2607, 112
        %v2623 = vpop.permute.xlu0 %2622
        %v2628 = vmul.f32 %v2608, %v2617
        %v2629 = vmul.f32 %v2609, %v2619
        %v2630 = vmul.f32 %v2610, %v2621
        %v2631 = vmul.f32 %v2611, %v2623
        %v2632 = vrot.slane %v2242, 1
        %v2633 = vrot.slane %v2243, 1
        %v2634 = vrot.slane %v2244, 1
        %v2639 = vmul.f32 %v2561, %v2632
        %v2640 = vmul.f32 %v2563, %v2633
        %v2641 = vmul.f32 %v2565, %v2634
        %v2642 = vmul.f32 %v2567, %v2456
        %v2643 = vadd.f32 %v2628, %v2639
        %v2644 = vadd.f32 %v2629, %v2640
        %v2645 = vadd.f32 %v2630, %v2641
        %v2646 = vadd.f32 %v2631, %v2642
        %v2651 = vrot.slane %v2443, 4
        %v2652 = vrot.slane %v2444, 3
        %v2653 = vsel %vm1045, %v2652, %v2651
        %v2654 = vrot.slane %v2445, 2
        %v2655 = vsel %vm1048, %v2654, %v2653
        %v2656 = vrot.slane %v2446, 1
        %v2657 = vsel %vm1051, %v2656, %v2655
        %2658 = vrot.lane.b32.xlu0 %v2657, 112
        %v2659 = vpop.permute.xlu0 %2658
        %v2660 = vsel %vm673, %v2659, 0
        %2662 = vmatprep.subr.mxu0 0.0
        %2663 = vmatpush1.msra.mxu0 %v456
        %2664 = vmatprep.subr.mxu0 0.0
        %2665 = vmatpush1.msra.mxu0 %v457
        %2666 = vmatprep.subr.mxu0 0.0
        %2667 = vmatpush1.msra.mxu0 0.0
        %2668 = vmatprep.subr.mxu0 0.0
        %2669 = vmatpush1.msra.mxu0 0.0
        %2670 = vmatprep.subr.mxu0 0.0
        %2671 = vmatpush1.msra.mxu0 0.0
        %2672 = vmatprep.subr.mxu0 0.0
        %2673 = vmatpush1.msra.mxu0 0.0
        %2674 = vmatprep.subr.mxu0 0.0
        %2675 = vmatpush1.msra.mxu0 0.0
        %2676 = vmatprep.subr.mxu0 0.0
        %2677 = vmatpush1.msra.mxu0 0.0
        %2678 = vmatprep.subr.mxu0 0.0
        %2679 = vmatpush1.msra.mxu0 0.0
        %2680 = vmatprep.subr.mxu0 0.0
        %2681 = vmatpush1.msra.mxu0 0.0
        %2682 = vmatprep.subr.mxu0 0.0
        %2683 = vmatpush1.msra.mxu0 0.0
        %2684 = vmatprep.subr.mxu0 0.0
        %2685 = vmatpush1.msra.mxu0 0.0
        %2686 = vmatprep.subr.mxu0 0.0
        %2687 = vmatpush1.msra.mxu0 0.0
        %2688 = vmatprep.subr.mxu0 0.0
        %2689 = vmatpush1.msra.mxu0 0.0
        %2690 = vmatprep.subr.mxu0 0.0
        %2691 = vmatpush1.msra.mxu0 0.0
        %2692 = vmatprep.subr.mxu0 0.0
        %2693 = vmatpush1.msra.mxu0 0.0
        %2694 = vmatprep.subr.mxu0 0.0
        %2695 = vmatpush1.msra.mxu0 0.0
        %2696 = vmatprep.subr.mxu0 0.0
        %2697 = vmatpush1.msra.mxu0 0.0
        %2698 = vmatprep.subr.mxu0 0.0
        %2699 = vmatpush1.msra.mxu0 0.0
        %2700 = vmatprep.subr.mxu0 0.0
        %2701 = vmatpush1.msra.mxu0 0.0
        %2702 = vmatprep.subr.mxu0 0.0
        %2703 = vmatpush1.msra.mxu0 0.0
        %2704 = vmatprep.subr.mxu0 0.0
        %2705 = vmatpush1.msra.mxu0 0.0
        %2706 = vmatprep.subr.mxu0 0.0
        %2707 = vmatpush1.msra.mxu0 0.0
        %2708 = vmatprep.subr.mxu0 0.0
        %2709 = vmatpush1.msra.mxu0 0.0
        %2710 = vmatprep.subr.mxu0 0.0
        %2711 = vmatpush1.msra.mxu0 0.0
        %2712 = vmatprep.subr.mxu0 0.0
        %2713 = vmatpush1.msra.mxu0 0.0
        %2714 = vmatprep.subr.mxu0 0.0
        %2715 = vmatpush1.msra.mxu0 0.0
        %2716 = vmatprep.subr.mxu0 0.0
        %2717 = vmatpush1.msra.mxu0 0.0
        %2718 = vmatprep.subr.mxu0 0.0
        %2719 = vmatpush1.msra.mxu0 0.0
        %2720 = vmatprep.subr.mxu0 0.0
        %2721 = vmatpush1.msra.mxu0 0.0
        %2722 = vmatprep.subr.mxu0 0.0
        %2723 = vmatpush1.msra.mxu0 0.0
        %2724 = vmatprep.subr.mxu0 0.0
        %2725 = vmatpush1.msra.mxu0 0.0
        %2726 = vmatprep.mubr.f32.mxu0 0.0
        %2727 = vmatmul.mubr.f32.gmra.mrb[0].mxu0 %v2660
        %v2728 = vpop.f32.mrb[0].mxu0
        %v2729 = vadd.f32 %v671, %v2728
        %v2730 = vpop.f32.mrb[0].mxu0
        %2731 = vdwg.mxu0
        %v2733 = vrot.slane %v2729, 3
        %v2734 = vrot.slane %v2729, 4
        %v2735 = vrot.slane %v2729, 5
        %v2736 = vrot.slane %v2729, 6
        %v2741 = vadd.f32 %v558, %v2733
        %v2742 = vadd.f32 %v563, %v2734
        %v2743 = vadd.f32 %v568, %v2735
        %v2744 = vadd.f32 %v573, %v2736
        %v2745 = vxor.u32 %v2741, 2147483648
        %v2746 = vxor.u32 %v2742, 2147483648
        %v2747 = vxor.u32 %v2743, 2147483648
        %v2748 = vxor.u32 %v2744, 2147483648
        %v2749 = vmul.f32 %v2745, 1.442695
        %v2750 = vpow.pop %v2749
        %v2751 = vmul.f32 %v2746, 1.442695
        %v2752 = vpow.pop %v2751
        %v2753 = vmul.f32 %v2747, 1.442695
        %v2754 = vpow.pop %v2753
        %v2755 = vmul.f32 %v2748, 1.442695
        %v2756 = vpow.pop %v2755
        %v2757 = vadd.f32 %v2750, 1.0
        %v2758 = vadd.f32 %v2752, 1.0
        %v2759 = vadd.f32 %v2754, 1.0
        %v2760 = vadd.f32 %v2756, 1.0
        %v2761 = vrcp.pop %v2757
        %v2762 = vmul.f32 1.0, %v2761
        %v2763 = vrcp.pop %v2758
        %v2764 = vmul.f32 1.0, %v2763
        %v2765 = vrcp.pop %v2759
        %v2766 = vmul.f32 1.0, %v2765
        %v2767 = vrcp.pop %v2760
        %v2768 = vmul.f32 1.0, %v2767
        %2769 = vrot.lane.b32.xlu0 %v2733, 96
        %v2770 = vpop.permute.xlu0 %2769
        %2771 = vrot.lane.b32.xlu0 %v2734, 96
        %v2772 = vpop.permute.xlu0 %2771
        %2773 = vrot.lane.b32.xlu0 %v2735, 96
        %v2774 = vpop.permute.xlu0 %2773
        %2775 = vrot.lane.b32.xlu0 %v2736, 96
        %v2776 = vpop.permute.xlu0 %2775
        %v2781 = vmul.f32 %v2762, %v2770
        %v2782 = vmul.f32 %v2764, %v2772
        %v2783 = vmul.f32 %v2766, %v2774
        %v2784 = vmul.f32 %v2768, %v2776
        %2789 = vrot.lane.b32.xlu0 %v2781, 32
        %v2790 = vpop.permute.xlu0 %2789
        %2791 = vrot.lane.b32.xlu0 %v2782, 32
        %v2792 = vpop.permute.xlu0 %2791
        %2793 = vrot.lane.b32.xlu0 %v2783, 32
        %v2794 = vpop.permute.xlu0 %2793
        %2795 = vrot.lane.b32.xlu0 %v2784, 32
        %v2796 = vpop.permute.xlu0 %2795
        %v2801 = vadd.f32 %v558, %v2790
        %v2802 = vadd.f32 %v563, %v2792
        %v2803 = vadd.f32 %v568, %v2794
        %v2804 = vadd.f32 %v573, %v2796
        %v2805 = vtanh.pop %v2801
        %v2806 = vtanh.pop %v2802
        %v2807 = vtanh.pop %v2803
        %v2808 = vtanh.pop %v2804
        %v2809 = vsub.f32 1.0, %v2762
        %v2810 = vsub.f32 1.0, %v2764
        %v2811 = vsub.f32 1.0, %v2766
        %v2812 = vsub.f32 1.0, %v2768
        %2817 = vrot.lane.b32.xlu0 %v2805, 112
        %v2818 = vpop.permute.xlu0 %2817
        %2819 = vrot.lane.b32.xlu0 %v2806, 112
        %v2820 = vpop.permute.xlu0 %2819
        %2821 = vrot.lane.b32.xlu0 %v2807, 112
        %v2822 = vpop.permute.xlu0 %2821
        %2823 = vrot.lane.b32.xlu0 %v2808, 112
        %v2824 = vpop.permute.xlu0 %2823
        %v2829 = vmul.f32 %v2809, %v2818
        %v2830 = vmul.f32 %v2810, %v2820
        %v2831 = vmul.f32 %v2811, %v2822
        %v2832 = vmul.f32 %v2812, %v2824
        %v2833 = vrot.slane %v2443, 7
        %v2834 = vrot.slane %v2444, 7
        %v2835 = vrot.slane %v2445, 7
        %v2836 = vrot.slane %v2446, 7
        %v2841 = vmul.f32 %v2762, %v2833
        %v2842 = vmul.f32 %v2764, %v2834
        %v2843 = vmul.f32 %v2766, %v2835
        %v2844 = vmul.f32 %v2768, %v2836
        %v2845 = vadd.f32 %v2829, %v2841
        %v2846 = vadd.f32 %v2830, %v2842
        %v2847 = vadd.f32 %v2831, %v2843
        %v2848 = vadd.f32 %v2832, %v2844
        %v2853 = vrot.slane %v2643, 3
        %v2854 = vrot.slane %v2644, 2
        %v2855 = vsel %vm1045, %v2854, %v2853
        %v2856 = vrot.slane %v2645, 1
        %v2857 = vsel %vm1048, %v2856, %v2855
        %v2858 = vsel %vm1051, %v2646, %v2857
        %2859 = vrot.lane.b32.xlu0 %v2858, 112
        %v2860 = vpop.permute.xlu0 %2859
        %v2861 = vsel %vm673, %v2860, 0
        %2863 = vmatprep.subr.mxu0 0.0
        %2864 = vmatpush1.msra.mxu0 %v464
        %2865 = vmatprep.subr.mxu0 0.0
        %2866 = vmatpush1.msra.mxu0 %v465
        %2867 = vmatprep.subr.mxu0 0.0
        %2868 = vmatpush1.msra.mxu0 0.0
        %2869 = vmatprep.subr.mxu0 0.0
        %2870 = vmatpush1.msra.mxu0 0.0
        %2871 = vmatprep.subr.mxu0 0.0
        %2872 = vmatpush1.msra.mxu0 0.0
        %2873 = vmatprep.subr.mxu0 0.0
        %2874 = vmatpush1.msra.mxu0 0.0
        %2875 = vmatprep.subr.mxu0 0.0
        %2876 = vmatpush1.msra.mxu0 0.0
        %2877 = vmatprep.subr.mxu0 0.0
        %2878 = vmatpush1.msra.mxu0 0.0
        %2879 = vmatprep.subr.mxu0 0.0
        %2880 = vmatpush1.msra.mxu0 0.0
        %2881 = vmatprep.subr.mxu0 0.0
        %2882 = vmatpush1.msra.mxu0 0.0
        %2883 = vmatprep.subr.mxu0 0.0
        %2884 = vmatpush1.msra.mxu0 0.0
        %2885 = vmatprep.subr.mxu0 0.0
        %2886 = vmatpush1.msra.mxu0 0.0
        %2887 = vmatprep.subr.mxu0 0.0
        %2888 = vmatpush1.msra.mxu0 0.0
        %2889 = vmatprep.subr.mxu0 0.0
        %2890 = vmatpush1.msra.mxu0 0.0
        %2891 = vmatprep.subr.mxu0 0.0
        %2892 = vmatpush1.msra.mxu0 0.0
        %2893 = vmatprep.subr.mxu0 0.0
        %2894 = vmatpush1.msra.mxu0 0.0
        %2895 = vmatprep.subr.mxu0 0.0
        %2896 = vmatpush1.msra.mxu0 0.0
        %2897 = vmatprep.subr.mxu0 0.0
        %2898 = vmatpush1.msra.mxu0 0.0
        %2899 = vmatprep.subr.mxu0 0.0
        %2900 = vmatpush1.msra.mxu0 0.0
        %2901 = vmatprep.subr.mxu0 0.0
        %2902 = vmatpush1.msra.mxu0 0.0
        %2903 = vmatprep.subr.mxu0 0.0
        %2904 = vmatpush1.msra.mxu0 0.0
        %2905 = vmatprep.subr.mxu0 0.0
        %2906 = vmatpush1.msra.mxu0 0.0
        %2907 = vmatprep.subr.mxu0 0.0
        %2908 = vmatpush1.msra.mxu0 0.0
        %2909 = vmatprep.subr.mxu0 0.0
        %2910 = vmatpush1.msra.mxu0 0.0
        %2911 = vmatprep.subr.mxu0 0.0
        %2912 = vmatpush1.msra.mxu0 0.0
        %2913 = vmatprep.subr.mxu0 0.0
        %2914 = vmatpush1.msra.mxu0 0.0
        %2915 = vmatprep.subr.mxu0 0.0
        %2916 = vmatpush1.msra.mxu0 0.0
        %2917 = vmatprep.subr.mxu0 0.0
        %2918 = vmatpush1.msra.mxu0 0.0
        %2919 = vmatprep.subr.mxu0 0.0
        %2920 = vmatpush1.msra.mxu0 0.0
        %2921 = vmatprep.subr.mxu0 0.0
        %2922 = vmatpush1.msra.mxu0 0.0
        %2923 = vmatprep.subr.mxu0 0.0
        %2924 = vmatpush1.msra.mxu0 0.0
        %2925 = vmatprep.subr.mxu0 0.0
        %2926 = vmatpush1.msra.mxu0 0.0
        %2927 = vmatprep.mubr.f32.mxu0 0.0
        %2928 = vmatmul.mubr.f32.gmra.mrb[0].mxu0 %v2861
        %v2929 = vpop.f32.mrb[0].mxu0
        %v2930 = vadd.f32 %v859, %v2929
        %v2931 = vpop.f32.mrb[0].mxu0
        %2932 = vdwg.mxu0
        %v2934 = vrot.slane %v2930, 6
        %v2935 = vrot.slane %v2930, 7
        %v2936 = vrot.slane %v2930, 1
        %v2941 = vadd.f32 %v649, %v2934
        %v2942 = vadd.f32 %v654, %v2935
        %v2943 = vadd.f32 %v659, %v2930
        %v2944 = vadd.f32 %v664, %v2936
        %v2945 = vxor.u32 %v2941, 2147483648
        %v2946 = vxor.u32 %v2942, 2147483648
        %v2947 = vxor.u32 %v2943, 2147483648
        %v2948 = vxor.u32 %v2944, 2147483648
        %v2949 = vmul.f32 %v2945, 1.442695
        %v2950 = vpow.pop %v2949
        %v2951 = vmul.f32 %v2946, 1.442695
        %v2952 = vpow.pop %v2951
        %v2953 = vmul.f32 %v2947, 1.442695
        %v2954 = vpow.pop %v2953
        %v2955 = vmul.f32 %v2948, 1.442695
        %v2956 = vpow.pop %v2955
        %v2957 = vadd.f32 %v2950, 1.0
        %v2958 = vadd.f32 %v2952, 1.0
        %v2959 = vadd.f32 %v2954, 1.0
        %v2960 = vadd.f32 %v2956, 1.0
        %v2961 = vrcp.pop %v2957
        %v2962 = vmul.f32 1.0, %v2961
        %v2963 = vrcp.pop %v2958
        %v2964 = vmul.f32 1.0, %v2963
        %v2965 = vrcp.pop %v2959
        %v2966 = vmul.f32 1.0, %v2965
        %v2967 = vrcp.pop %v2960
        %v2968 = vmul.f32 1.0, %v2967
        %2969 = vrot.lane.b32.xlu0 %v2934, 96
        %v2970 = vpop.permute.xlu0 %2969
        %2971 = vrot.lane.b32.xlu0 %v2935, 96
        %v2972 = vpop.permute.xlu0 %2971
        %2973 = vrot.lane.b32.xlu0 %v2930, 96
        %v2974 = vpop.permute.xlu0 %2973
        %2975 = vrot.lane.b32.xlu0 %v2936, 96
        %v2976 = vpop.permute.xlu0 %2975
        %v2981 = vmul.f32 %v2962, %v2970
        %v2982 = vmul.f32 %v2964, %v2972
        %v2983 = vmul.f32 %v2966, %v2974
        %v2984 = vmul.f32 %v2968, %v2976
        %2989 = vrot.lane.b32.xlu0 %v2981, 32
        %v2990 = vpop.permute.xlu0 %2989
        %2991 = vrot.lane.b32.xlu0 %v2982, 32
        %v2992 = vpop.permute.xlu0 %2991
        %2993 = vrot.lane.b32.xlu0 %v2983, 32
        %v2994 = vpop.permute.xlu0 %2993
        %2995 = vrot.lane.b32.xlu0 %v2984, 32
        %v2996 = vpop.permute.xlu0 %2995
        %v3001 = vadd.f32 %v649, %v2990
        %v3002 = vadd.f32 %v654, %v2992
        %v3003 = vadd.f32 %v659, %v2994
        %v3004 = vadd.f32 %v664, %v2996
        %v3005 = vtanh.pop %v3001
        %v3006 = vtanh.pop %v3002
        %v3007 = vtanh.pop %v3003
        %v3008 = vtanh.pop %v3004
        %v3009 = vsub.f32 1.0, %v2962
        %v3010 = vsub.f32 1.0, %v2964
        %v3011 = vsub.f32 1.0, %v2966
        %v3012 = vsub.f32 1.0, %v2968
        %3017 = vrot.lane.b32.xlu0 %v3005, 112
        %v3018 = vpop.permute.xlu0 %3017
        %3019 = vrot.lane.b32.xlu0 %v3006, 112
        %v3020 = vpop.permute.xlu0 %3019
        %3021 = vrot.lane.b32.xlu0 %v3007, 112
        %v3022 = vpop.permute.xlu0 %3021
        %3023 = vrot.lane.b32.xlu0 %v3008, 112
        %v3024 = vpop.permute.xlu0 %3023
        %v3029 = vmul.f32 %v3009, %v3018
        %v3030 = vmul.f32 %v3010, %v3020
        %v3031 = vmul.f32 %v3011, %v3022
        %v3032 = vmul.f32 %v3012, %v3024
        %v3033 = vrot.slane %v2643, 1
        %v3034 = vrot.slane %v2644, 1
        %v3035 = vrot.slane %v2646, 1
        %v3040 = vmul.f32 %v2962, %v3033
        %v3041 = vmul.f32 %v2964, %v3034
        %v3042 = vmul.f32 %v2966, %v2856
        %v3043 = vmul.f32 %v2968, %v3035
        %v3044 = vadd.f32 %v3029, %v3040
        %v3045 = vadd.f32 %v3030, %v3041
        %v3046 = vadd.f32 %v3031, %v3042
        %v3047 = vadd.f32 %v3032, %v3043
        %v3052 = vrot.slane %v2845, 5
        %v3053 = vrot.slane %v2846, 4
        %v3054 = vsel %vm1045, %v3053, %v3052
        %v3055 = vrot.slane %v2847, 3
        %v3056 = vsel %vm1048, %v3055, %v3054
        %v3057 = vrot.slane %v2848, 2
        %v3058 = vsel %vm1051, %v3057, %v3056
        %3059 = vrot.lane.b32.xlu0 %v3058, 112
        %v3060 = vpop.permute.xlu0 %3059
        %v3061 = vsel %vm673, %v3060, 0
        %3063 = vmatprep.subr.mxu0 0.0
        %3064 = vmatpush1.msra.mxu0 %v456
        %3065 = vmatprep.subr.mxu0 0.0
        %3066 = vmatpush1.msra.mxu0 %v457
        %3067 = vmatprep.subr.mxu0 0.0
        %3068 = vmatpush1.msra.mxu0 0.0
        %3069 = vmatprep.subr.mxu0 0.0
        %3070 = vmatpush1.msra.mxu0 0.0
        %3071 = vmatprep.subr.mxu0 0.0
        %3072 = vmatpush1.msra.mxu0 0.0
        %3073 = vmatprep.subr.mxu0 0.0
        %3074 = vmatpush1.msra.mxu0 0.0
        %3075 = vmatprep.subr.mxu0 0.0
        %3076 = vmatpush1.msra.mxu0 0.0
        %3077 = vmatprep.subr.mxu0 0.0
        %3078 = vmatpush1.msra.mxu0 0.0
        %3079 = vmatprep.subr.mxu0 0.0
        %3080 = vmatpush1.msra.mxu0 0.0
        %3081 = vmatprep.subr.mxu0 0.0
        %3082 = vmatpush1.msra.mxu0 0.0
        %3083 = vmatprep.subr.mxu0 0.0
        %3084 = vmatpush1.msra.mxu0 0.0
        %3085 = vmatprep.subr.mxu0 0.0
        %3086 = vmatpush1.msra.mxu0 0.0
        %3087 = vmatprep.subr.mxu0 0.0
        %3088 = vmatpush1.msra.mxu0 0.0
        %3089 = vmatprep.subr.mxu0 0.0
        %3090 = vmatpush1.msra.mxu0 0.0
        %3091 = vmatprep.subr.mxu0 0.0
        %3092 = vmatpush1.msra.mxu0 0.0
        %3093 = vmatprep.subr.mxu0 0.0
        %3094 = vmatpush1.msra.mxu0 0.0
        %3095 = vmatprep.subr.mxu0 0.0
        %3096 = vmatpush1.msra.mxu0 0.0
        %3097 = vmatprep.subr.mxu0 0.0
        %3098 = vmatpush1.msra.mxu0 0.0
        %3099 = vmatprep.subr.mxu0 0.0
        %3100 = vmatpush1.msra.mxu0 0.0
        %3101 = vmatprep.subr.mxu0 0.0
        %3102 = vmatpush1.msra.mxu0 0.0
        %3103 = vmatprep.subr.mxu0 0.0
        %3104 = vmatpush1.msra.mxu0 0.0
        %3105 = vmatprep.subr.mxu0 0.0
        %3106 = vmatpush1.msra.mxu0 0.0
        %3107 = vmatprep.subr.mxu0 0.0
        %3108 = vmatpush1.msra.mxu0 0.0
        %3109 = vmatprep.subr.mxu0 0.0
        %3110 = vmatpush1.msra.mxu0 0.0
        %3111 = vmatprep.subr.mxu0 0.0
        %3112 = vmatpush1.msra.mxu0 0.0
        %3113 = vmatprep.subr.mxu0 0.0
        %3114 = vmatpush1.msra.mxu0 0.0
        %3115 = vmatprep.subr.mxu0 0.0
        %3116 = vmatpush1.msra.mxu0 0.0
        %3117 = vmatprep.subr.mxu0 0.0
        %3118 = vmatpush1.msra.mxu0 0.0
        %3119 = vmatprep.subr.mxu0 0.0
        %3120 = vmatpush1.msra.mxu0 0.0
        %3121 = vmatprep.subr.mxu0 0.0
        %3122 = vmatpush1.msra.mxu0 0.0
        %3123 = vmatprep.subr.mxu0 0.0
        %3124 = vmatpush1.msra.mxu0 0.0
        %3125 = vmatprep.subr.mxu0 0.0
        %3126 = vmatpush1.msra.mxu0 0.0
        %3127 = vmatprep.mubr.f32.mxu0 0.0
        %3128 = vmatmul.mubr.f32.gmra.mrb[0].mxu0 %v3061
        %v3129 = vpop.f32.mrb[0].mxu0
        %v3130 = vadd.f32 %v671, %v3129
        %v3131 = vpop.f32.mrb[0].mxu0
        %3132 = vdwg.mxu0
        %v3134 = vrot.slane %v3130, 2
        %v3135 = vrot.slane %v3130, 3
        %v3136 = vrot.slane %v3130, 4
        %v3137 = vrot.slane %v3130, 5
        %v3142 = vadd.f32 %v558, %v3134
        %v3143 = vadd.f32 %v563, %v3135
        %v3144 = vadd.f32 %v568, %v3136
        %v3145 = vadd.f32 %v573, %v3137
        %v3146 = vxor.u32 %v3142, 2147483648
        %v3147 = vxor.u32 %v3143, 2147483648
        %v3148 = vxor.u32 %v3144, 2147483648
        %v3149 = vxor.u32 %v3145, 2147483648
        %v3150 = vmul.f32 %v3146, 1.442695
        %v3151 = vpow.pop %v3150
        %v3152 = vmul.f32 %v3147, 1.442695
        %v3153 = vpow.pop %v3152
        %v3154 = vmul.f32 %v3148, 1.442695
        %v3155 = vpow.pop %v3154
        %v3156 = vmul.f32 %v3149, 1.442695
        %v3157 = vpow.pop %v3156
        %v3158 = vadd.f32 %v3151, 1.0
        %v3159 = vadd.f32 %v3153, 1.0
        %v3160 = vadd.f32 %v3155, 1.0
        %v3161 = vadd.f32 %v3157, 1.0
        %v3162 = vrcp.pop %v3158
        %v3163 = vmul.f32 1.0, %v3162
        %v3164 = vrcp.pop %v3159
        %v3165 = vmul.f32 1.0, %v3164
        %v3166 = vrcp.pop %v3160
        %v3167 = vmul.f32 1.0, %v3166
        %v3168 = vrcp.pop %v3161
        %v3169 = vmul.f32 1.0, %v3168
        %3170 = vrot.lane.b32.xlu0 %v3134, 96
        %v3171 = vpop.permute.xlu0 %3170
        %3172 = vrot.lane.b32.xlu0 %v3135, 96
        %v3173 = vpop.permute.xlu0 %3172
        %3174 = vrot.lane.b32.xlu0 %v3136, 96
        %v3175 = vpop.permute.xlu0 %3174
        %3176 = vrot.lane.b32.xlu0 %v3137, 96
        %v3177 = vpop.permute.xlu0 %3176
        %v3182 = vmul.f32 %v3163, %v3171
        %v3183 = vmul.f32 %v3165, %v3173
        %v3184 = vmul.f32 %v3167, %v3175
        %v3185 = vmul.f32 %v3169, %v3177
        %3190 = vrot.lane.b32.xlu0 %v3182, 32
        %v3191 = vpop.permute.xlu0 %3190
        %3192 = vrot.lane.b32.xlu0 %v3183, 32
        %v3193 = vpop.permute.xlu0 %3192
        %3194 = vrot.lane.b32.xlu0 %v3184, 32
        %v3195 = vpop.permute.xlu0 %3194
        %3196 = vrot.lane.b32.xlu0 %v3185, 32
        %v3197 = vpop.permute.xlu0 %3196
        %v3202 = vadd.f32 %v558, %v3191
        %v3203 = vadd.f32 %v563, %v3193
        %v3204 = vadd.f32 %v568, %v3195
        %v3205 = vadd.f32 %v573, %v3197
        %v3206 = vtanh.pop %v3202
        %v3207 = vtanh.pop %v3203
        %v3208 = vtanh.pop %v3204
        %v3209 = vtanh.pop %v3205
        %v3210 = vsub.f32 1.0, %v3163
        %v3211 = vsub.f32 1.0, %v3165
        %v3212 = vsub.f32 1.0, %v3167
        %v3213 = vsub.f32 1.0, %v3169
        %3218 = vrot.lane.b32.xlu0 %v3206, 112
        %v3219 = vpop.permute.xlu0 %3218
        %3220 = vrot.lane.b32.xlu0 %v3207, 112
        %v3221 = vpop.permute.xlu0 %3220
        %3222 = vrot.lane.b32.xlu0 %v3208, 112
        %v3223 = vpop.permute.xlu0 %3222
        %3224 = vrot.lane.b32.xlu0 %v3209, 112
        %v3225 = vpop.permute.xlu0 %3224
        %v3230 = vmul.f32 %v3210, %v3219
        %v3231 = vmul.f32 %v3211, %v3221
        %v3232 = vmul.f32 %v3212, %v3223
        %v3233 = vmul.f32 %v3213, %v3225
        %v3234 = vrot.slane %v2845, 7
        %v3235 = vrot.slane %v2846, 7
        %v3236 = vrot.slane %v2847, 7
        %v3237 = vrot.slane %v2848, 7
        %v3242 = vmul.f32 %v3163, %v3234
        %v3243 = vmul.f32 %v3165, %v3235
        %v3244 = vmul.f32 %v3167, %v3236
        %v3245 = vmul.f32 %v3169, %v3237
        %v3246 = vadd.f32 %v3230, %v3242
        %v3247 = vadd.f32 %v3231, %v3243
        %v3248 = vadd.f32 %v3232, %v3244
        %v3249 = vadd.f32 %v3233, %v3245
        %v3254 = vrot.slane %v3044, 2
        %v3255 = vrot.slane %v3045, 1
        %v3256 = vsel %vm1045, %v3255, %v3254
        %v3257 = vsel %vm1048, %v3046, %v3256
        %v3258 = vrot.slane %v3047, 7
        %v3259 = vsel %vm1051, %v3258, %v3257
        %3260 = vrot.lane.b32.xlu0 %v3259, 112
        %v3261 = vpop.permute.xlu0 %3260
        %v3262 = vsel %vm673, %v3261, 0
        %3264 = vmatprep.subr.mxu0 0.0
        %3265 = vmatpush1.msra.mxu0 %v464
        %3266 = vmatprep.subr.mxu0 0.0
        %3267 = vmatpush1.msra.mxu0 %v465
        %3268 = vmatprep.subr.mxu0 0.0
        %3269 = vmatpush1.msra.mxu0 0.0
        %3270 = vmatprep.subr.mxu0 0.0
        %3271 = vmatpush1.msra.mxu0 0.0
        %3272 = vmatprep.subr.mxu0 0.0
        %3273 = vmatpush1.msra.mxu0 0.0
        %3274 = vmatprep.subr.mxu0 0.0
        %3275 = vmatpush1.msra.mxu0 0.0
        %3276 = vmatprep.subr.mxu0 0.0
        %3277 = vmatpush1.msra.mxu0 0.0
        %3278 = vmatprep.subr.mxu0 0.0
        %3279 = vmatpush1.msra.mxu0 0.0
        %3280 = vmatprep.subr.mxu0 0.0
        %3281 = vmatpush1.msra.mxu0 0.0
        %3282 = vmatprep.subr.mxu0 0.0
        %3283 = vmatpush1.msra.mxu0 0.0
        %3284 = vmatprep.subr.mxu0 0.0
        %3285 = vmatpush1.msra.mxu0 0.0
        %3286 = vmatprep.subr.mxu0 0.0
        %3287 = vmatpush1.msra.mxu0 0.0
        %3288 = vmatprep.subr.mxu0 0.0
        %3289 = vmatpush1.msra.mxu0 0.0
        %3290 = vmatprep.subr.mxu0 0.0
        %3291 = vmatpush1.msra.mxu0 0.0
        %3292 = vmatprep.subr.mxu0 0.0
        %3293 = vmatpush1.msra.mxu0 0.0
        %3294 = vmatprep.subr.mxu0 0.0
        %3295 = vmatpush1.msra.mxu0 0.0
        %3296 = vmatprep.subr.mxu0 0.0
        %3297 = vmatpush1.msra.mxu0 0.0
        %3298 = vmatprep.subr.mxu0 0.0
        %3299 = vmatpush1.msra.mxu0 0.0
        %3300 = vmatprep.subr.mxu0 0.0
        %3301 = vmatpush1.msra.mxu0 0.0
        %3302 = vmatprep.subr.mxu0 0.0
        %3303 = vmatpush1.msra.mxu0 0.0
        %3304 = vmatprep.subr.mxu0 0.0
        %3305 = vmatpush1.msra.mxu0 0.0
        %3306 = vmatprep.subr.mxu0 0.0
        %3307 = vmatpush1.msra.mxu0 0.0
        %3308 = vmatprep.subr.mxu0 0.0
        %3309 = vmatpush1.msra.mxu0 0.0
        %3310 = vmatprep.subr.mxu0 0.0
        %3311 = vmatpush1.msra.mxu0 0.0
        %3312 = vmatprep.subr.mxu0 0.0
        %3313 = vmatpush1.msra.mxu0 0.0
        %3314 = vmatprep.subr.mxu0 0.0
        %3315 = vmatpush1.msra.mxu0 0.0
        %3316 = vmatprep.subr.mxu0 0.0
        %3317 = vmatpush1.msra.mxu0 0.0
        %3318 = vmatprep.subr.mxu0 0.0
        %3319 = vmatpush1.msra.mxu0 0.0
        %3320 = vmatprep.subr.mxu0 0.0
        %3321 = vmatpush1.msra.mxu0 0.0
        %3322 = vmatprep.subr.mxu0 0.0
        %3323 = vmatpush1.msra.mxu0 0.0
        %3324 = vmatprep.subr.mxu0 0.0
        %3325 = vmatpush1.msra.mxu0 0.0
        %3326 = vmatprep.subr.mxu0 0.0
        %3327 = vmatpush1.msra.mxu0 0.0
        %3328 = vmatprep.mubr.f32.mxu0 0.0
        %3329 = vmatmul.mubr.f32.gmra.mrb[0].mxu0 %v3262
        %v3330 = vpop.f32.mrb[0].mxu0
        %v3331 = vadd.f32 %v859, %v3330
        %v3332 = vpop.f32.mrb[0].mxu0
        %3333 = vdwg.mxu0
        %v3335 = vrot.slane %v3331, 7
        %v3336 = vrot.slane %v3331, 1
        %v3337 = vrot.slane %v3331, 2
        %v3342 = vadd.f32 %v649, %v3335
        %v3343 = vadd.f32 %v654, %v3331
        %v3344 = vadd.f32 %v659, %v3336
        %v3345 = vadd.f32 %v664, %v3337
        %v3346 = vxor.u32 %v3342, 2147483648
        %v3347 = vxor.u32 %v3343, 2147483648
        %v3348 = vxor.u32 %v3344, 2147483648
        %v3349 = vxor.u32 %v3345, 2147483648
        %v3350 = vmul.f32 %v3346, 1.442695
        %v3351 = vpow.pop %v3350
        %v3352 = vmul.f32 %v3347, 1.442695
        %v3353 = vpow.pop %v3352
        %v3354 = vmul.f32 %v3348, 1.442695
        %v3355 = vpow.pop %v3354
        %v3356 = vmul.f32 %v3349, 1.442695
        %v3357 = vpow.pop %v3356
        %v3358 = vadd.f32 %v3351, 1.0
        %v3359 = vadd.f32 %v3353, 1.0
        %v3360 = vadd.f32 %v3355, 1.0
        %v3361 = vadd.f32 %v3357, 1.0
        %v3362 = vrcp.pop %v3358
        %v3363 = vmul.f32 1.0, %v3362
        %v3364 = vrcp.pop %v3359
        %v3365 = vmul.f32 1.0, %v3364
        %v3366 = vrcp.pop %v3360
        %v3367 = vmul.f32 1.0, %v3366
        %v3368 = vrcp.pop %v3361
        %v3369 = vmul.f32 1.0, %v3368
        %3370 = vrot.lane.b32.xlu0 %v3335, 96
        %v3371 = vpop.permute.xlu0 %3370
        %3372 = vrot.lane.b32.xlu0 %v3331, 96
        %v3373 = vpop.permute.xlu0 %3372
        %3374 = vrot.lane.b32.xlu0 %v3336, 96
        %v3375 = vpop.permute.xlu0 %3374
        %3376 = vrot.lane.b32.xlu0 %v3337, 96
        %v3377 = vpop.permute.xlu0 %3376
        %v3382 = vmul.f32 %v3363, %v3371
        %v3383 = vmul.f32 %v3365, %v3373
        %v3384 = vmul.f32 %v3367, %v3375
        %v3385 = vmul.f32 %v3369, %v3377
        %3390 = vrot.lane.b32.xlu0 %v3382, 32
        %v3391 = vpop.permute.xlu0 %3390
        %3392 = vrot.lane.b32.xlu0 %v3383, 32
        %v3393 = vpop.permute.xlu0 %3392
        %3394 = vrot.lane.b32.xlu0 %v3384, 32
        %v3395 = vpop.permute.xlu0 %3394
        %3396 = vrot.lane.b32.xlu0 %v3385, 32
        %v3397 = vpop.permute.xlu0 %3396
        %v3402 = vadd.f32 %v649, %v3391
        %v3403 = vadd.f32 %v654, %v3393
        %v3404 = vadd.f32 %v659, %v3395
        %v3405 = vadd.f32 %v664, %v3397
        %v3406 = vtanh.pop %v3402
        %v3407 = vtanh.pop %v3403
        %v3408 = vtanh.pop %v3404
        %v3409 = vtanh.pop %v3405
        %v3410 = vsub.f32 1.0, %v3363
        %v3411 = vsub.f32 1.0, %v3365
        %v3412 = vsub.f32 1.0, %v3367
        %v3413 = vsub.f32 1.0, %v3369
        %3418 = vrot.lane.b32.xlu0 %v3406, 112
        %v3419 = vpop.permute.xlu0 %3418
        %3420 = vrot.lane.b32.xlu0 %v3407, 112
        %v3421 = vpop.permute.xlu0 %3420
        %3422 = vrot.lane.b32.xlu0 %v3408, 112
        %v3423 = vpop.permute.xlu0 %3422
        %3424 = vrot.lane.b32.xlu0 %v3409, 112
        %v3425 = vpop.permute.xlu0 %3424
        %v3430 = vmul.f32 %v3410, %v3419
        %v3431 = vmul.f32 %v3411, %v3421
        %v3432 = vmul.f32 %v3412, %v3423
        %v3433 = vmul.f32 %v3413, %v3425
        %v3434 = vrot.slane %v3044, 1
        %v3435 = vrot.slane %v3046, 1
        %v3436 = vrot.slane %v3047, 1
        %v3441 = vmul.f32 %v3363, %v3434
        %v3442 = vmul.f32 %v3365, %v3255
        %v3443 = vmul.f32 %v3367, %v3435
        %v3444 = vmul.f32 %v3369, %v3436
        %v3445 = vadd.f32 %v3430, %v3441
        %v3446 = vadd.f32 %v3431, %v3442
        %v3447 = vadd.f32 %v3432, %v3443
        %v3448 = vadd.f32 %v3433, %v3444
        %v3453 = vrot.slane %v3246, 6
        %v3454 = vrot.slane %v3247, 5
        %v3455 = vsel %vm1045, %v3454, %v3453
        %v3456 = vrot.slane %v3248, 4
        %v3457 = vsel %vm1048, %v3456, %v3455
        %v3458 = vrot.slane %v3249, 3
        %v3459 = vsel %vm1051, %v3458, %v3457
        %3460 = vrot.lane.b32.xlu0 %v3459, 112
        %v3461 = vpop.permute.xlu0 %3460
        %v3462 = vsel %vm673, %v3461, 0
        %3464 = vmatprep.subr.mxu0 0.0
        %3465 = vmatpush1.msra.mxu0 %v456
        %3466 = vmatprep.subr.mxu0 0.0
        %3467 = vmatpush1.msra.mxu0 %v457
        %3468 = vmatprep.subr.mxu0 0.0
        %3469 = vmatpush1.msra.mxu0 0.0
        %3470 = vmatprep.subr.mxu0 0.0
        %3471 = vmatpush1.msra.mxu0 0.0
        %3472 = vmatprep.subr.mxu0 0.0
        %3473 = vmatpush1.msra.mxu0 0.0
        %3474 = vmatprep.subr.mxu0 0.0
        %3475 = vmatpush1.msra.mxu0 0.0
        %3476 = vmatprep.subr.mxu0 0.0
        %3477 = vmatpush1.msra.mxu0 0.0
        %3478 = vmatprep.subr.mxu0 0.0
        %3479 = vmatpush1.msra.mxu0 0.0
        %3480 = vmatprep.subr.mxu0 0.0
        %3481 = vmatpush1.msra.mxu0 0.0
        %3482 = vmatprep.subr.mxu0 0.0
        %3483 = vmatpush1.msra.mxu0 0.0
        %3484 = vmatprep.subr.mxu0 0.0
        %3485 = vmatpush1.msra.mxu0 0.0
        %3486 = vmatprep.subr.mxu0 0.0
        %3487 = vmatpush1.msra.mxu0 0.0
        %3488 = vmatprep.subr.mxu0 0.0
        %3489 = vmatpush1.msra.mxu0 0.0
        %3490 = vmatprep.subr.mxu0 0.0
        %3491 = vmatpush1.msra.mxu0 0.0
        %3492 = vmatprep.subr.mxu0 0.0
        %3493 = vmatpush1.msra.mxu0 0.0
        %3494 = vmatprep.subr.mxu0 0.0
        %3495 = vmatpush1.msra.mxu0 0.0
        %3496 = vmatprep.subr.mxu0 0.0
        %3497 = vmatpush1.msra.mxu0 0.0
        %3498 = vmatprep.subr.mxu0 0.0
        %3499 = vmatpush1.msra.mxu0 0.0
        %3500 = vmatprep.subr.mxu0 0.0
        %3501 = vmatpush1.msra.mxu0 0.0
        %3502 = vmatprep.subr.mxu0 0.0
        %3503 = vmatpush1.msra.mxu0 0.0
        %3504 = vmatprep.subr.mxu0 0.0
        %3505 = vmatpush1.msra.mxu0 0.0
        %3506 = vmatprep.subr.mxu0 0.0
        %3507 = vmatpush1.msra.mxu0 0.0
        %3508 = vmatprep.subr.mxu0 0.0
        %3509 = vmatpush1.msra.mxu0 0.0
        %3510 = vmatprep.subr.mxu0 0.0
        %3511 = vmatpush1.msra.mxu0 0.0
        %3512 = vmatprep.subr.mxu0 0.0
        %3513 = vmatpush1.msra.mxu0 0.0
        %3514 = vmatprep.subr.mxu0 0.0
        %3515 = vmatpush1.msra.mxu0 0.0
        %3516 = vmatprep.subr.mxu0 0.0
        %3517 = vmatpush1.msra.mxu0 0.0
        %3518 = vmatprep.subr.mxu0 0.0
        %3519 = vmatpush1.msra.mxu0 0.0
        %3520 = vmatprep.subr.mxu0 0.0
        %3521 = vmatpush1.msra.mxu0 0.0
        %3522 = vmatprep.subr.mxu0 0.0
        %3523 = vmatpush1.msra.mxu0 0.0
        %3524 = vmatprep.subr.mxu0 0.0
        %3525 = vmatpush1.msra.mxu0 0.0
        %3526 = vmatprep.subr.mxu0 0.0
        %3527 = vmatpush1.msra.mxu0 0.0
        %3528 = vmatprep.mubr.f32.mxu0 0.0
        %3529 = vmatmul.mubr.f32.gmra.mrb[0].mxu0 %v3462
        %v3530 = vpop.f32.mrb[0].mxu0
        %v3531 = vadd.f32 %v671, %v3530
        %v3532 = vpop.f32.mrb[0].mxu0
        %3533 = vdwg.mxu0
        %v3535 = vrot.slane %v3531, 1
        %v3536 = vrot.slane %v3531, 2
        %v3537 = vrot.slane %v3531, 3
        %v3538 = vrot.slane %v3531, 4
        %v3543 = vadd.f32 %v558, %v3535
        %v3544 = vadd.f32 %v563, %v3536
        %v3545 = vadd.f32 %v568, %v3537
        %v3546 = vadd.f32 %v573, %v3538
        %v3547 = vxor.u32 %v3543, 2147483648
        %v3548 = vxor.u32 %v3544, 2147483648
        %v3549 = vxor.u32 %v3545, 2147483648
        %v3550 = vxor.u32 %v3546, 2147483648
        %v3551 = vmul.f32 %v3547, 1.442695
        %v3552 = vpow.pop %v3551
        %v3553 = vmul.f32 %v3548, 1.442695
        %v3554 = vpow.pop %v3553
        %v3555 = vmul.f32 %v3549, 1.442695
        %v3556 = vpow.pop %v3555
        %v3557 = vmul.f32 %v3550, 1.442695
        %v3558 = vpow.pop %v3557
        %v3559 = vadd.f32 %v3552, 1.0
        %v3560 = vadd.f32 %v3554, 1.0
        %v3561 = vadd.f32 %v3556, 1.0
        %v3562 = vadd.f32 %v3558, 1.0
        %v3563 = vrcp.pop %v3559
        %v3564 = vmul.f32 1.0, %v3563
        %v3565 = vrcp.pop %v3560
        %v3566 = vmul.f32 1.0, %v3565
        %v3567 = vrcp.pop %v3561
        %v3568 = vmul.f32 1.0, %v3567
        %v3569 = vrcp.pop %v3562
        %v3570 = vmul.f32 1.0, %v3569
        %3571 = vrot.lane.b32.xlu0 %v3535, 96
        %v3572 = vpop.permute.xlu0 %3571
        %3573 = vrot.lane.b32.xlu0 %v3536, 96
        %v3574 = vpop.permute.xlu0 %3573
        %3575 = vrot.lane.b32.xlu0 %v3537, 96
        %v3576 = vpop.permute.xlu0 %3575
        %3577 = vrot.lane.b32.xlu0 %v3538, 96
        %v3578 = vpop.permute.xlu0 %3577
        %v3583 = vmul.f32 %v3564, %v3572
        %v3584 = vmul.f32 %v3566, %v3574
        %v3585 = vmul.f32 %v3568, %v3576
        %v3586 = vmul.f32 %v3570, %v3578
        %3591 = vrot.lane.b32.xlu0 %v3583, 32
        %v3592 = vpop.permute.xlu0 %3591
        %3593 = vrot.lane.b32.xlu0 %v3584, 32
        %v3594 = vpop.permute.xlu0 %3593
        %3595 = vrot.lane.b32.xlu0 %v3585, 32
        %v3596 = vpop.permute.xlu0 %3595
        %3597 = vrot.lane.b32.xlu0 %v3586, 32
        %v3598 = vpop.permute.xlu0 %3597
        %v3603 = vadd.f32 %v558, %v3592
        %v3604 = vadd.f32 %v563, %v3594
        %v3605 = vadd.f32 %v568, %v3596
        %v3606 = vadd.f32 %v573, %v3598
        %v3607 = vtanh.pop %v3603
        %v3608 = vtanh.pop %v3604
        %v3609 = vtanh.pop %v3605
        %v3610 = vtanh.pop %v3606
        %v3611 = vsub.f32 1.0, %v3564
        %v3612 = vsub.f32 1.0, %v3566
        %v3613 = vsub.f32 1.0, %v3568
        %v3614 = vsub.f32 1.0, %v3570
        %3619 = vrot.lane.b32.xlu0 %v3607, 112
        %v3620 = vpop.permute.xlu0 %3619
        %3621 = vrot.lane.b32.xlu0 %v3608, 112
        %v3622 = vpop.permute.xlu0 %3621
        %3623 = vrot.lane.b32.xlu0 %v3609, 112
        %v3624 = vpop.permute.xlu0 %3623
        %3625 = vrot.lane.b32.xlu0 %v3610, 112
        %v3626 = vpop.permute.xlu0 %3625
        %v3631 = vmul.f32 %v3611, %v3620
        %v3632 = vmul.f32 %v3612, %v3622
        %v3633 = vmul.f32 %v3613, %v3624
        %v3634 = vmul.f32 %v3614, %v3626
        %v3635 = vrot.slane %v3246, 7
        %v3636 = vrot.slane %v3247, 7
        %v3637 = vrot.slane %v3248, 7
        %v3638 = vrot.slane %v3249, 7
        %v3643 = vmul.f32 %v3564, %v3635
        %v3644 = vmul.f32 %v3566, %v3636
        %v3645 = vmul.f32 %v3568, %v3637
        %v3646 = vmul.f32 %v3570, %v3638
        %v3647 = vadd.f32 %v3631, %v3643
        %v3648 = vadd.f32 %v3632, %v3644
        %v3649 = vadd.f32 %v3633, %v3645
        %v3650 = vadd.f32 %v3634, %v3646
        %v3655 = vrot.slane %v3445, 1
        %v3656 = vsel %vm1045, %v3446, %v3655
        %v3657 = vrot.slane %v3447, 7
        %v3658 = vsel %vm1048, %v3657, %v3656
        %v3659 = vrot.slane %v3448, 6
        %v3660 = vsel %vm1051, %v3659, %v3658
        %3661 = vrot.lane.b32.xlu0 %v3660, 112
        %v3662 = vpop.permute.xlu0 %3661
        %v3663 = vsel %vm673, %v3662, 0
        %3665 = vmatprep.subr.mxu0 0.0
        %3666 = vmatpush1.msra.mxu0 %v464
        %3667 = vmatprep.subr.mxu0 0.0
        %3668 = vmatpush1.msra.mxu0 %v465
        %3669 = vmatprep.subr.mxu0 0.0
        %3670 = vmatpush1.msra.mxu0 0.0
        %3671 = vmatprep.subr.mxu0 0.0
        %3672 = vmatpush1.msra.mxu0 0.0
        %3673 = vmatprep.subr.mxu0 0.0
        %3674 = vmatpush1.msra.mxu0 0.0
        %3675 = vmatprep.subr.mxu0 0.0
        %3676 = vmatpush1.msra.mxu0 0.0
        %3677 = vmatprep.subr.mxu0 0.0
        %3678 = vmatpush1.msra.mxu0 0.0
        %3679 = vmatprep.subr.mxu0 0.0
        %3680 = vmatpush1.msra.mxu0 0.0
        %3681 = vmatprep.subr.mxu0 0.0
        %3682 = vmatpush1.msra.mxu0 0.0
        %3683 = vmatprep.subr.mxu0 0.0
        %3684 = vmatpush1.msra.mxu0 0.0
        %3685 = vmatprep.subr.mxu0 0.0
        %3686 = vmatpush1.msra.mxu0 0.0
        %3687 = vmatprep.subr.mxu0 0.0
        %3688 = vmatpush1.msra.mxu0 0.0
        %3689 = vmatprep.subr.mxu0 0.0
        %3690 = vmatpush1.msra.mxu0 0.0
        %3691 = vmatprep.subr.mxu0 0.0
        %3692 = vmatpush1.msra.mxu0 0.0
        %3693 = vmatprep.subr.mxu0 0.0
        %3694 = vmatpush1.msra.mxu0 0.0
        %3695 = vmatprep.subr.mxu0 0.0
        %3696 = vmatpush1.msra.mxu0 0.0
        %3697 = vmatprep.subr.mxu0 0.0
        %3698 = vmatpush1.msra.mxu0 0.0
        %3699 = vmatprep.subr.mxu0 0.0
        %3700 = vmatpush1.msra.mxu0 0.0
        %3701 = vmatprep.subr.mxu0 0.0
        %3702 = vmatpush1.msra.mxu0 0.0
        %3703 = vmatprep.subr.mxu0 0.0
        %3704 = vmatpush1.msra.mxu0 0.0
        %3705 = vmatprep.subr.mxu0 0.0
        %3706 = vmatpush1.msra.mxu0 0.0
        %3707 = vmatprep.subr.mxu0 0.0
        %3708 = vmatpush1.msra.mxu0 0.0
        %3709 = vmatprep.subr.mxu0 0.0
        %3710 = vmatpush1.msra.mxu0 0.0
        %3711 = vmatprep.subr.mxu0 0.0
        %3712 = vmatpush1.msra.mxu0 0.0
        %3713 = vmatprep.subr.mxu0 0.0
        %3714 = vmatpush1.msra.mxu0 0.0
        %3715 = vmatprep.subr.mxu0 0.0
        %3716 = vmatpush1.msra.mxu0 0.0
        %3717 = vmatprep.subr.mxu0 0.0
        %3718 = vmatpush1.msra.mxu0 0.0
        %3719 = vmatprep.subr.mxu0 0.0
        %3720 = vmatpush1.msra.mxu0 0.0
        %3721 = vmatprep.subr.mxu0 0.0
        %3722 = vmatpush1.msra.mxu0 0.0
        %3723 = vmatprep.subr.mxu0 0.0
        %3724 = vmatpush1.msra.mxu0 0.0
        %3725 = vmatprep.subr.mxu0 0.0
        %3726 = vmatpush1.msra.mxu0 0.0
        %3727 = vmatprep.subr.mxu0 0.0
        %3728 = vmatpush1.msra.mxu0 0.0
        %3729 = vmatprep.mubr.f32.mxu0 0.0
        %3730 = vmatmul.mubr.f32.gmra.mrb[0].mxu0 %v3663
        %v3731 = vpop.f32.mrb[0].mxu0
        %v3732 = vadd.f32 %v859, %v3731
        %v3733 = vpop.f32.mrb[0].mxu0
        %3734 = vdwg.mxu0
        %v3736 = vrot.slane %v3732, 1
        %v3737 = vrot.slane %v3732, 2
        %v3738 = vrot.slane %v3732, 3
        %v3743 = vadd.f32 %v649, %v3732
        %v3744 = vadd.f32 %v654, %v3736
        %v3745 = vadd.f32 %v659, %v3737
        %v3746 = vadd.f32 %v664, %v3738
        %v3747 = vxor.u32 %v3743, 2147483648
        %v3748 = vxor.u32 %v3744, 2147483648
        %v3749 = vxor.u32 %v3745, 2147483648
        %v3750 = vxor.u32 %v3746, 2147483648
        %v3751 = vmul.f32 %v3747, 1.442695
        %v3752 = vpow.pop %v3751
        %v3753 = vmul.f32 %v3748, 1.442695
        %v3754 = vpow.pop %v3753
        %v3755 = vmul.f32 %v3749, 1.442695
        %v3756 = vpow.pop %v3755
        %v3757 = vmul.f32 %v3750, 1.442695
        %v3758 = vpow.pop %v3757
        %v3759 = vadd.f32 %v3752, 1.0
        %v3760 = vadd.f32 %v3754, 1.0
        %v3761 = vadd.f32 %v3756, 1.0
        %v3762 = vadd.f32 %v3758, 1.0
        %v3763 = vrcp.pop %v3759
        %v3764 = vmul.f32 1.0, %v3763
        %v3765 = vrcp.pop %v3760
        %v3766 = vmul.f32 1.0, %v3765
        %v3767 = vrcp.pop %v3761
        %v3768 = vmul.f32 1.0, %v3767
        %v3769 = vrcp.pop %v3762
        %v3770 = vmul.f32 1.0, %v3769
        %3771 = vrot.lane.b32.xlu0 %v3732, 96
        %v3772 = vpop.permute.xlu0 %3771
        %3773 = vrot.lane.b32.xlu0 %v3736, 96
        %v3774 = vpop.permute.xlu0 %3773
        %3775 = vrot.lane.b32.xlu0 %v3737, 96
        %v3776 = vpop.permute.xlu0 %3775
        %3777 = vrot.lane.b32.xlu0 %v3738, 96
        %v3778 = vpop.permute.xlu0 %3777
        %v3783 = vmul.f32 %v3764, %v3772
        %v3784 = vmul.f32 %v3766, %v3774
        %v3785 = vmul.f32 %v3768, %v3776
        %v3786 = vmul.f32 %v3770, %v3778
        %3791 = vrot.lane.b32.xlu0 %v3783, 32
        %v3792 = vpop.permute.xlu0 %3791
        %3793 = vrot.lane.b32.xlu0 %v3784, 32
        %v3794 = vpop.permute.xlu0 %3793
        %3795 = vrot.lane.b32.xlu0 %v3785, 32
        %v3796 = vpop.permute.xlu0 %3795
        %3797 = vrot.lane.b32.xlu0 %v3786, 32
        %v3798 = vpop.permute.xlu0 %3797
        %v3803 = vadd.f32 %v649, %v3792
        %v3804 = vadd.f32 %v654, %v3794
        %v3805 = vadd.f32 %v659, %v3796
        %v3806 = vadd.f32 %v664, %v3798
        %v3807 = vtanh.pop %v3803
        %v3808 = vtanh.pop %v3804
        %v3809 = vtanh.pop %v3805
        %v3810 = vtanh.pop %v3806
        %v3811 = vsub.f32 1.0, %v3764
        %v3812 = vsub.f32 1.0, %v3766
        %v3813 = vsub.f32 1.0, %v3768
        %v3814 = vsub.f32 1.0, %v3770
        %3819 = vrot.lane.b32.xlu0 %v3807, 112
        %v3820 = vpop.permute.xlu0 %3819
        %3821 = vrot.lane.b32.xlu0 %v3808, 112
        %v3822 = vpop.permute.xlu0 %3821
        %3823 = vrot.lane.b32.xlu0 %v3809, 112
        %v3824 = vpop.permute.xlu0 %3823
        %3825 = vrot.lane.b32.xlu0 %v3810, 112
        %v3826 = vpop.permute.xlu0 %3825
        %v3831 = vmul.f32 %v3811, %v3820
        %v3832 = vmul.f32 %v3812, %v3822
        %v3833 = vmul.f32 %v3813, %v3824
        %v3834 = vmul.f32 %v3814, %v3826
        %v3835 = vrot.slane %v3446, 1
        %v3836 = vrot.slane %v3447, 1
        %v3837 = vrot.slane %v3448, 1
        %v3842 = vmul.f32 %v3764, %v3655
        %v3843 = vmul.f32 %v3766, %v3835
        %v3844 = vmul.f32 %v3768, %v3836
        %v3845 = vmul.f32 %v3770, %v3837
        %v3846 = vadd.f32 %v3831, %v3842
        %v3847 = vadd.f32 %v3832, %v3843
        %v3848 = vadd.f32 %v3833, %v3844
        %v3849 = vadd.f32 %v3834, %v3845
        %v3855 = vrot.slane %v3847, 7
        %v3856 = vsel %vm1045, %v3855, %v3846
        %v3857 = vrot.slane %v3848, 6
        %v3858 = vsel %vm1048, %v3857, %v3856
        %v3859 = vrot.slane %v3849, 5
        %v3860 = vsel %vm1051, %v3859, %v3858
        %v3862 = vsel %vm673, %v1054, %v3860
        %v3863 = vsel %vm1048, %v1629, %v1238
        %v3864 = vrot.slane %v1240, 6
        %v3865 = vsel %vm1051, %v3864, %v3863
        %v3866 = vrot.slane %v1241, 5
        %vm3867 = vcmask 1044484
        %v3868 = vsel %vm3867, %v3866, %v3865
        %3869 = vrot.lane.b32.xlu0 %v3868, 112
        %v3870 = vpop.permute.xlu0 %3869
        %v3872 = vrot.slane %v3446, 7
        %v3873 = vsel %vm1048, %v3872, %v3445
        %v3874 = vrot.slane %v3447, 6
        %v3875 = vsel %vm1051, %v3874, %v3873
        %v3876 = vrot.slane %v3448, 5
        %v3877 = vsel %vm3867, %v3876, %v3875
        %v3879 = vsel %vm673, %v3870, %v3877
        %v3880 = vsel %vm1051, %v2030, %v1639
        %v3881 = vrot.slane %v1641, 6
        %v3882 = vsel %vm3867, %v3881, %v3880
        %v3883 = vrot.slane %v1642, 5
        %vm3884 = vcmask 1045509
        %v3885 = vsel %vm3884, %v3883, %v3882
        %3886 = vrot.lane.b32.xlu0 %v3885, 112
        %v3887 = vpop.permute.xlu0 %3886
        %v3889 = vrot.slane %v3045, 7
        %v3890 = vsel %vm1051, %v3889, %v3044
        %v3891 = vrot.slane %v3046, 6
        %v3892 = vsel %vm3867, %v3891, %v3890
        %v3893 = vrot.slane %v3047, 5
        %v3894 = vsel %vm3884, %v3893, %v3892
        %v3896 = vsel %vm673, %v3887, %v3894
        %v3897 = vsel %vm3867, %v2432, %v2040
        %v3898 = vrot.slane %v2042, 6
        %v3899 = vsel %vm3884, %v3898, %v3897
        %v3900 = vrot.slane %v2043, 5
        %vm3901 = vcmask 1046534
        %v3902 = vsel %vm3901, %v3900, %v3899
        %3903 = vrot.lane.b32.xlu0 %v3902, 112
        %v3904 = vpop.permute.xlu0 %3903
        %v3906 = vrot.slane %v2644, 7
        %v3907 = vsel %vm3867, %v3906, %v2643
        %v3908 = vrot.slane %v2645, 6
        %v3909 = vsel %vm3884, %v3908, %v3907
        %v3910 = vrot.slane %v2646, 5
        %v3911 = vsel %vm3901, %v3910, %v3909
        %v3913 = vsel %vm673, %v3904, %v3911
        %v3914 = vsel %vm3884, %v2834, %v2443
        %v3915 = vrot.slane %v2445, 6
        %v3916 = vsel %vm3901, %v3915, %v3914
        %v3917 = vrot.slane %v2446, 5
        %vm3918 = vcmask 1047559
        %v3919 = vsel %vm3918, %v3917, %v3916
        %3920 = vrot.lane.b32.xlu0 %v3919, 112
        %v3921 = vpop.permute.xlu0 %3920
        %v3923 = vrot.slane %v2243, 7
        %v3924 = vsel %vm3884, %v3923, %v2242
        %v3925 = vrot.slane %v2244, 6
        %v3926 = vsel %vm3901, %v3925, %v3924
        %v3927 = vrot.slane %v2245, 5
        %v3928 = vsel %vm3918, %v3927, %v3926
        %v3930 = vsel %vm673, %v3921, %v3928
        %v3931 = vsel %vm3901, %v3235, %v2845
        %v3932 = vrot.slane %v2847, 6
        %v3933 = vsel %vm3918, %v3932, %v3931
        %v3934 = vrot.slane %v2848, 5
        %3935 = vrot.lane.b32.xlu0 %v3933, 112
        %v3936 = vpop.permute.xlu0 %3935
        %3937 = vrot.lane.b32.xlu0 %v3934, 112
        %v3938 = vpop.permute.xlu0 %3937
        %v3941 = vrot.slane %v1842, 7
        %v3942 = vsel %vm3901, %v3941, %v1841
        %v3943 = vrot.slane %v1843, 6
        %v3944 = vsel %vm3918, %v3943, %v3942
        %v3945 = vrot.slane %v1844, 5
        %v3948 = vsel %vm673, %v3936, %v3944
        %v3949 = vsel %vm673, %v3938, %v3945
        %v3950 = vsel %vm3918, %v3636, %v3246
        %v3951 = vrot.slane %v3248, 6
        %v3952 = vrot.slane %v3249, 5
        %v3953 = vsel %vm1045, %v3952, %v3951
        %3954 = vrot.lane.b32.xlu0 %v3950, 112
        %v3955 = vpop.permute.xlu0 %3954
        %3956 = vrot.lane.b32.xlu0 %v3953, 112
        %v3957 = vpop.permute.xlu0 %3956
        %v3960 = vrot.slane %v1441, 7
        %v3961 = vsel %vm3918, %v3960, %v1440
        %v3962 = vrot.slane %v1442, 6
        %v3963 = vrot.slane %v1443, 5
        %v3964 = vsel %vm1045, %v3963, %v3962
        %v3967 = vsel %vm673, %v3955, %v3961
        %v3968 = vsel %vm673, %v3957, %v3964
        %v3973 = vrot.slane %v3648, 7
        %v3974 = vrot.slane %v3649, 6
        %v3975 = vsel %vm1045, %v3974, %v3973
        %v3976 = vrot.slane %v3650, 5
        %v3977 = vsel %vm1048, %v3976, %v3975
        %3978 = vrot.lane.b32.xlu0 %v3647, 112
        %v3979 = vpop.permute.xlu0 %3978
        %3980 = vrot.lane.b32.xlu0 %v3977, 112
        %v3981 = vpop.permute.xlu0 %3980
        %v3984 = vrot.slane %v1037, 7
        %v3985 = vrot.slane %v1038, 6
        %v3986 = vsel %vm1045, %v3985, %v3984
        %v3987 = vrot.slane %v1039, 5
        %v3988 = vsel %vm1048, %v3987, %v3986
        %v3991 = vsel %vm673, %v3979, %v1036
        %v3992 = vsel %vm673, %v3981, %v3988
        %v3993 = vld [vmem:[%s9] sm:$0xff]
        %v3994 = vld [vmem:[%s9 + $0x8] sm:$0xff]
        %v3995 = vld [vmem:[%s9 + $0x10] sm:$0xff]
        %v3996 = vld [vmem:[%s9 + $0x18] sm:$0xff]
        %v3997 = vld [vmem:[%s10] sm:$0x1]
        %v3998 = vld [vmem:[%s11] sm:$0x1]
        %v4000 = vlaneseq
        %v4001 = vshrl.u32 %v4000, 7
        %v4002 = vsub.s32 0, %v4001
        %v4003 = vrot.slane %v3997, %v4002
        %v4006 = vsel %vm478, %v3862, 0
        %4008 = vmatprep.subr.mxu0 0.0
        %4009 = vmatpush1.msra.mxu0 %v3993
        %4010 = vmatprep.subr.mxu0 0.0
        %4011 = vmatpush1.msra.mxu0 %v3994
        %4012 = vmatprep.subr.mxu0 0.0
        %4013 = vmatpush1.msra.mxu0 %v3995
        %4014 = vmatprep.subr.mxu0 0.0
        %4015 = vmatpush1.msra.mxu0 %v3996
        %4016 = vmatprep.subr.mxu0 0.0
        %4017 = vmatpush1.msra.mxu0 0.0
        %4018 = vmatprep.subr.mxu0 0.0
        %4019 = vmatpush1.msra.mxu0 0.0
        %4020 = vmatprep.subr.mxu0 0.0
        %4021 = vmatpush1.msra.mxu0 0.0
        %4022 = vmatprep.subr.mxu0 0.0
        %4023 = vmatpush1.msra.mxu0 0.0
        %4024 = vmatprep.subr.mxu0 0.0
        %4025 = vmatpush1.msra.mxu0 0.0
        %4026 = vmatprep.subr.mxu0 0.0
        %4027 = vmatpush1.msra.mxu0 0.0
        %4028 = vmatprep.subr.mxu0 0.0
        %4029 = vmatpush1.msra.mxu0 0.0
        %4030 = vmatprep.subr.mxu0 0.0
        %4031 = vmatpush1.msra.mxu0 0.0
        %4032 = vmatprep.subr.mxu0 0.0
        %4033 = vmatpush1.msra.mxu0 0.0
        %4034 = vmatprep.subr.mxu0 0.0
        %4035 = vmatpush1.msra.mxu0 0.0
        %4036 = vmatprep.subr.mxu0 0.0
        %4037 = vmatpush1.msra.mxu0 0.0
        %4038 = vmatprep.subr.mxu0 0.0
        %4039 = vmatpush1.msra.mxu0 0.0
        %4040 = vmatprep.subr.mxu0 0.0
        %4041 = vmatpush1.msra.mxu0 0.0
        %4042 = vmatprep.subr.mxu0 0.0
        %4043 = vmatpush1.msra.mxu0 0.0
        %4044 = vmatprep.subr.mxu0 0.0
        %4045 = vmatpush1.msra.mxu0 0.0
        %4046 = vmatprep.subr.mxu0 0.0
        %4047 = vmatpush1.msra.mxu0 0.0
        %4048 = vmatprep.subr.mxu0 0.0
        %4049 = vmatpush1.msra.mxu0 0.0
        %4050 = vmatprep.subr.mxu0 0.0
        %4051 = vmatpush1.msra.mxu0 0.0
        %4052 = vmatprep.subr.mxu0 0.0
        %4053 = vmatpush1.msra.mxu0 0.0
        %4054 = vmatprep.subr.mxu0 0.0
        %4055 = vmatpush1.msra.mxu0 0.0
        %4056 = vmatprep.subr.mxu0 0.0
        %4057 = vmatpush1.msra.mxu0 0.0
        %4058 = vmatprep.subr.mxu0 0.0
        %4059 = vmatpush1.msra.mxu0 0.0
        %4060 = vmatprep.subr.mxu0 0.0
        %4061 = vmatpush1.msra.mxu0 0.0
        %4062 = vmatprep.subr.mxu0 0.0
        %4063 = vmatpush1.msra.mxu0 0.0
        %4064 = vmatprep.subr.mxu0 0.0
        %4065 = vmatpush1.msra.mxu0 0.0
        %4066 = vmatprep.subr.mxu0 0.0
        %4067 = vmatpush1.msra.mxu0 0.0
        %4068 = vmatprep.subr.mxu0 0.0
        %4069 = vmatpush1.msra.mxu0 0.0
        %4070 = vmatprep.subr.mxu0 0.0
        %4071 = vmatpush1.msra.mxu0 0.0
        %4072 = vmatprep.mubr.f32.mxu0 0.0
        %4073 = vmatmul.mubr.f32.gmra.mrb[0].mxu0 %v4006
        %v4074 = vpop.f32.mrb[0].mxu0
        %v4075 = vadd.f32 %v4003, %v4074
        %v4076 = vpop.f32.mrb[0].mxu0
        %4077 = vdwg.mxu0
        %v4078 = vtanh.pop %v4075
        %v4080 = vlaneseq
        %v4081 = vshrl.u32 %v4080, 7
        %v4082 = vsub.s32 0, %v4081
        %v4083 = vrot.slane %v3998, %v4082
        %v4085 = vmul.f32 %v4078, %v4083
        %vm4086 = vcmask 257024
        %v4087 = vsel %vm4086, %v4085, 0.0
        %4088 = vadd.xlane.f32.xlu0 %v4087
        %v4089 = vpop.xlane.xlu0 %4088
        %v4091 = vrot.slane %v3879, 1
        %v4092 = vsel %vm478, %v4091, 0
        %4094 = vmatprep.subr.mxu0 0.0
        %4095 = vmatpush1.msra.mxu0 %v3993
        %4096 = vmatprep.subr.mxu0 0.0
        %4097 = vmatpush1.msra.mxu0 %v3994
        %4098 = vmatprep.subr.mxu0 0.0
        %4099 = vmatpush1.msra.mxu0 %v3995
        %4100 = vmatprep.subr.mxu0 0.0
        %4101 = vmatpush1.msra.mxu0 %v3996
        %4102 = vmatprep.subr.mxu0 0.0
        %4103 = vmatpush1.msra.mxu0 0.0
        %4104 = vmatprep.subr.mxu0 0.0
        %4105 = vmatpush1.msra.mxu0 0.0
        %4106 = vmatprep.subr.mxu0 0.0
        %4107 = vmatpush1.msra.mxu0 0.0
        %4108 = vmatprep.subr.mxu0 0.0
        %4109 = vmatpush1.msra.mxu0 0.0
        %4110 = vmatprep.subr.mxu0 0.0
        %4111 = vmatpush1.msra.mxu0 0.0
        %4112 = vmatprep.subr.mxu0 0.0
        %4113 = vmatpush1.msra.mxu0 0.0
        %4114 = vmatprep.subr.mxu0 0.0
        %4115 = vmatpush1.msra.mxu0 0.0
        %4116 = vmatprep.subr.mxu0 0.0
        %4117 = vmatpush1.msra.mxu0 0.0
        %4118 = vmatprep.subr.mxu0 0.0
        %4119 = vmatpush1.msra.mxu0 0.0
        %4120 = vmatprep.subr.mxu0 0.0
        %4121 = vmatpush1.msra.mxu0 0.0
        %4122 = vmatprep.subr.mxu0 0.0
        %4123 = vmatpush1.msra.mxu0 0.0
        %4124 = vmatprep.subr.mxu0 0.0
        %4125 = vmatpush1.msra.mxu0 0.0
        %4126 = vmatprep.subr.mxu0 0.0
        %4127 = vmatpush1.msra.mxu0 0.0
        %4128 = vmatprep.subr.mxu0 0.0
        %4129 = vmatpush1.msra.mxu0 0.0
        %4130 = vmatprep.subr.mxu0 0.0
        %4131 = vmatpush1.msra.mxu0 0.0
        %4132 = vmatprep.subr.mxu0 0.0
        %4133 = vmatpush1.msra.mxu0 0.0
        %4134 = vmatprep.subr.mxu0 0.0
        %4135 = vmatpush1.msra.mxu0 0.0
        %4136 = vmatprep.subr.mxu0 0.0
        %4137 = vmatpush1.msra.mxu0 0.0
        %4138 = vmatprep.subr.mxu0 0.0
        %4139 = vmatpush1.msra.mxu0 0.0
        %4140 = vmatprep.subr.mxu0 0.0
        %4141 = vmatpush1.msra.mxu0 0.0
        %4142 = vmatprep.subr.mxu0 0.0
        %4143 = vmatpush1.msra.mxu0 0.0
        %4144 = vmatprep.subr.mxu0 0.0
        %4145 = vmatpush1.msra.mxu0 0.0
        %4146 = vmatprep.subr.mxu0 0.0
        %4147 = vmatpush1.msra.mxu0 0.0
        %4148 = vmatprep.subr.mxu0 0.0
        %4149 = vmatpush1.msra.mxu0 0.0
        %4150 = vmatprep.subr.mxu0 0.0
        %4151 = vmatpush1.msra.mxu0 0.0
        %4152 = vmatprep.subr.mxu0 0.0
        %4153 = vmatpush1.msra.mxu0 0.0
        %4154 = vmatprep.subr.mxu0 0.0
        %4155 = vmatpush1.msra.mxu0 0.0
        %4156 = vmatprep.subr.mxu0 0.0
        %4157 = vmatpush1.msra.mxu0 0.0
        %4158 = vmatprep.mubr.f32.mxu0 0.0
        %4159 = vmatmul.mubr.f32.gmra.mrb[0].mxu0 %v4092
        %v4160 = vpop.f32.mrb[0].mxu0
        %v4161 = vadd.f32 %v4003, %v4160
        %v4162 = vpop.f32.mrb[0].mxu0
        %4163 = vdwg.mxu0
        %v4164 = vtanh.pop %v4161
        %v4165 = vmul.f32 %v4164, %v4083
        %v4166 = vsel %vm4086, %v4165, 0.0
        %4167 = vadd.xlane.f32.xlu0 %v4166
        %v4168 = vpop.xlane.xlu0 %4167
        %v4170 = vrot.slane %v3896, 2
        %v4171 = vsel %vm478, %v4170, 0
        %4173 = vmatprep.subr.mxu0 0.0
        %4174 = vmatpush1.msra.mxu0 %v3993
        %4175 = vmatprep.subr.mxu0 0.0
        %4176 = vmatpush1.msra.mxu0 %v3994
        %4177 = vmatprep.subr.mxu0 0.0
        %4178 = vmatpush1.msra.mxu0 %v3995
        %4179 = vmatprep.subr.mxu0 0.0
        %4180 = vmatpush1.msra.mxu0 %v3996
        %4181 = vmatprep.subr.mxu0 0.0
        %4182 = vmatpush1.msra.mxu0 0.0
        %4183 = vmatprep.subr.mxu0 0.0
        %4184 = vmatpush1.msra.mxu0 0.0
        %4185 = vmatprep.subr.mxu0 0.0
        %4186 = vmatpush1.msra.mxu0 0.0
        %4187 = vmatprep.subr.mxu0 0.0
        %4188 = vmatpush1.msra.mxu0 0.0
        %4189 = vmatprep.subr.mxu0 0.0
        %4190 = vmatpush1.msra.mxu0 0.0
        %4191 = vmatprep.subr.mxu0 0.0
        %4192 = vmatpush1.msra.mxu0 0.0
        %4193 = vmatprep.subr.mxu0 0.0
        %4194 = vmatpush1.msra.mxu0 0.0
        %4195 = vmatprep.subr.mxu0 0.0
        %4196 = vmatpush1.msra.mxu0 0.0
        %4197 = vmatprep.subr.mxu0 0.0
        %4198 = vmatpush1.msra.mxu0 0.0
        %4199 = vmatprep.subr.mxu0 0.0
        %4200 = vmatpush1.msra.mxu0 0.0
        %4201 = vmatprep.subr.mxu0 0.0
        %4202 = vmatpush1.msra.mxu0 0.0
        %4203 = vmatprep.subr.mxu0 0.0
        %4204 = vmatpush1.msra.mxu0 0.0
        %4205 = vmatprep.subr.mxu0 0.0
        %4206 = vmatpush1.msra.mxu0 0.0
        %4207 = vmatprep.subr.mxu0 0.0
        %4208 = vmatpush1.msra.mxu0 0.0
        %4209 = vmatprep.subr.mxu0 0.0
        %4210 = vmatpush1.msra.mxu0 0.0
        %4211 = vmatprep.subr.mxu0 0.0
        %4212 = vmatpush1.msra.mxu0 0.0
        %4213 = vmatprep.subr.mxu0 0.0
        %4214 = vmatpush1.msra.mxu0 0.0
        %4215 = vmatprep.subr.mxu0 0.0
        %4216 = vmatpush1.msra.mxu0 0.0
        %4217 = vmatprep.subr.mxu0 0.0
        %4218 = vmatpush1.msra.mxu0 0.0
        %4219 = vmatprep.subr.mxu0 0.0
        %4220 = vmatpush1.msra.mxu0 0.0
        %4221 = vmatprep.subr.mxu0 0.0
        %4222 = vmatpush1.msra.mxu0 0.0
        %4223 = vmatprep.subr.mxu0 0.0
        %4224 = vmatpush1.msra.mxu0 0.0
        %4225 = vmatprep.subr.mxu0 0.0
        %4226 = vmatpush1.msra.mxu0 0.0
        %4227 = vmatprep.subr.mxu0 0.0
        %4228 = vmatpush1.msra.mxu0 0.0
        %4229 = vmatprep.subr.mxu0 0.0
        %4230 = vmatpush1.msra.mxu0 0.0
        %4231 = vmatprep.subr.mxu0 0.0
        %4232 = vmatpush1.msra.mxu0 0.0
        %4233 = vmatprep.subr.mxu0 0.0
        %4234 = vmatpush1.msra.mxu0 0.0
        %4235 = vmatprep.subr.mxu0 0.0
        %4236 = vmatpush1.msra.mxu0 0.0
        %4237 = vmatprep.mubr.f32.mxu0 0.0
        %4238 = vmatmul.mubr.f32.gmra.mrb[0].mxu0 %v4171
        %v4239 = vpop.f32.mrb[0].mxu0
        %v4240 = vadd.f32 %v4003, %v4239
        %v4241 = vpop.f32.mrb[0].mxu0
        %4242 = vdwg.mxu0
        %v4243 = vtanh.pop %v4240
        %v4244 = vmul.f32 %v4243, %v4083
        %v4245 = vsel %vm4086, %v4244, 0.0
        %4246 = vadd.xlane.f32.xlu0 %v4245
        %v4247 = vpop.xlane.xlu0 %4246
        %v4249 = vrot.slane %v3913, 3
        %v4250 = vsel %vm478, %v4249, 0
        %4252 = vmatprep.subr.mxu0 0.0
        %4253 = vmatpush1.msra.mxu0 %v3993
        %4254 = vmatprep.subr.mxu0 0.0
        %4255 = vmatpush1.msra.mxu0 %v3994
        %4256 = vmatprep.subr.mxu0 0.0
        %4257 = vmatpush1.msra.mxu0 %v3995
        %4258 = vmatprep.subr.mxu0 0.0
        %4259 = vmatpush1.msra.mxu0 %v3996
        %4260 = vmatprep.subr.mxu0 0.0
        %4261 = vmatpush1.msra.mxu0 0.0
        %4262 = vmatprep.subr.mxu0 0.0
        %4263 = vmatpush1.msra.mxu0 0.0
        %4264 = vmatprep.subr.mxu0 0.0
        %4265 = vmatpush1.msra.mxu0 0.0
        %4266 = vmatprep.subr.mxu0 0.0
        %4267 = vmatpush1.msra.mxu0 0.0
        %4268 = vmatprep.subr.mxu0 0.0
        %4269 = vmatpush1.msra.mxu0 0.0
        %4270 = vmatprep.subr.mxu0 0.0
        %4271 = vmatpush1.msra.mxu0 0.0
        %4272 = vmatprep.subr.mxu0 0.0
        %4273 = vmatpush1.msra.mxu0 0.0
        %4274 = vmatprep.subr.mxu0 0.0
        %4275 = vmatpush1.msra.mxu0 0.0
        %4276 = vmatprep.subr.mxu0 0.0
        %4277 = vmatpush1.msra.mxu0 0.0
        %4278 = vmatprep.subr.mxu0 0.0
        %4279 = vmatpush1.msra.mxu0 0.0
        %4280 = vmatprep.subr.mxu0 0.0
        %4281 = vmatpush1.msra.mxu0 0.0
        %4282 = vmatprep.subr.mxu0 0.0
        %4283 = vmatpush1.msra.mxu0 0.0
        %4284 = vmatprep.subr.mxu0 0.0
        %4285 = vmatpush1.msra.mxu0 0.0
        %4286 = vmatprep.subr.mxu0 0.0
        %4287 = vmatpush1.msra.mxu0 0.0
        %4288 = vmatprep.subr.mxu0 0.0
        %4289 = vmatpush1.msra.mxu0 0.0
        %4290 = vmatprep.subr.mxu0 0.0
        %4291 = vmatpush1.msra.mxu0 0.0
        %4292 = vmatprep.subr.mxu0 0.0
        %4293 = vmatpush1.msra.mxu0 0.0
        %4294 = vmatprep.subr.mxu0 0.0
        %4295 = vmatpush1.msra.mxu0 0.0
        %4296 = vmatprep.subr.mxu0 0.0
        %4297 = vmatpush1.msra.mxu0 0.0
        %4298 = vmatprep.subr.mxu0 0.0
        %4299 = vmatpush1.msra.mxu0 0.0
        %4300 = vmatprep.subr.mxu0 0.0
        %4301 = vmatpush1.msra.mxu0 0.0
        %4302 = vmatprep.subr.mxu0 0.0
        %4303 = vmatpush1.msra.mxu0 0.0
        %4304 = vmatprep.subr.mxu0 0.0
        %4305 = vmatpush1.msra.mxu0 0.0
        %4306 = vmatprep.subr.mxu0 0.0
        %4307 = vmatpush1.msra.mxu0 0.0
        %4308 = vmatprep.subr.mxu0 0.0
        %4309 = vmatpush1.msra.mxu0 0.0
        %4310 = vmatprep.subr.mxu0 0.0
        %4311 = vmatpush1.msra.mxu0 0.0
        %4312 = vmatprep.subr.mxu0 0.0
        %4313 = vmatpush1.msra.mxu0 0.0
        %4314 = vmatprep.subr.mxu0 0.0
        %4315 = vmatpush1.msra.mxu0 0.0
        %4316 = vmatprep.mubr.f32.mxu0 0.0
        %4317 = vmatmul.mubr.f32.gmra.mrb[0].mxu0 %v4250
        %v4318 = vpop.f32.mrb[0].mxu0
        %v4319 = vadd.f32 %v4003, %v4318
        %v4320 = vpop.f32.mrb[0].mxu0
        %4321 = vdwg.mxu0
        %v4322 = vtanh.pop %v4319
        %v4323 = vmul.f32 %v4322, %v4083
        %v4324 = vsel %vm4086, %v4323, 0.0
        %4325 = vadd.xlane.f32.xlu0 %v4324
        %v4326 = vpop.xlane.xlu0 %4325
        %v4328 = vrot.slane %v3930, 4
        %v4329 = vsel %vm478, %v4328, 0
        %4331 = vmatprep.subr.mxu0 0.0
        %4332 = vmatpush1.msra.mxu0 %v3993
        %4333 = vmatprep.subr.mxu0 0.0
        %4334 = vmatpush1.msra.mxu0 %v3994
        %4335 = vmatprep.subr.mxu0 0.0
        %4336 = vmatpush1.msra.mxu0 %v3995
        %4337 = vmatprep.subr.mxu0 0.0
        %4338 = vmatpush1.msra.mxu0 %v3996
        %4339 = vmatprep.subr.mxu0 0.0
        %4340 = vmatpush1.msra.mxu0 0.0
        %4341 = vmatprep.subr.mxu0 0.0
        %4342 = vmatpush1.msra.mxu0 0.0
        %4343 = vmatprep.subr.mxu0 0.0
        %4344 = vmatpush1.msra.mxu0 0.0
        %4345 = vmatprep.subr.mxu0 0.0
        %4346 = vmatpush1.msra.mxu0 0.0
        %4347 = vmatprep.subr.mxu0 0.0
        %4348 = vmatpush1.msra.mxu0 0.0
        %4349 = vmatprep.subr.mxu0 0.0
        %4350 = vmatpush1.msra.mxu0 0.0
        %4351 = vmatprep.subr.mxu0 0.0
        %4352 = vmatpush1.msra.mxu0 0.0
        %4353 = vmatprep.subr.mxu0 0.0
        %4354 = vmatpush1.msra.mxu0 0.0
        %4355 = vmatprep.subr.mxu0 0.0
        %4356 = vmatpush1.msra.mxu0 0.0
        %4357 = vmatprep.subr.mxu0 0.0
        %4358 = vmatpush1.msra.mxu0 0.0
        %4359 = vmatprep.subr.mxu0 0.0
        %4360 = vmatpush1.msra.mxu0 0.0
        %4361 = vmatprep.subr.mxu0 0.0
        %4362 = vmatpush1.msra.mxu0 0.0
        %4363 = vmatprep.subr.mxu0 0.0
        %4364 = vmatpush1.msra.mxu0 0.0
        %4365 = vmatprep.subr.mxu0 0.0
        %4366 = vmatpush1.msra.mxu0 0.0
        %4367 = vmatprep.subr.mxu0 0.0
        %4368 = vmatpush1.msra.mxu0 0.0
        %4369 = vmatprep.subr.mxu0 0.0
        %4370 = vmatpush1.msra.mxu0 0.0
        %4371 = vmatprep.subr.mxu0 0.0
        %4372 = vmatpush1.msra.mxu0 0.0
        %4373 = vmatprep.subr.mxu0 0.0
        %4374 = vmatpush1.msra.mxu0 0.0
        %4375 = vmatprep.subr.mxu0 0.0
        %4376 = vmatpush1.msra.mxu0 0.0
        %4377 = vmatprep.subr.mxu0 0.0
        %4378 = vmatpush1.msra.mxu0 0.0
        %4379 = vmatprep.subr.mxu0 0.0
        %4380 = vmatpush1.msra.mxu0 0.0
        %4381 = vmatprep.subr.mxu0 0.0
        %4382 = vmatpush1.msra.mxu0 0.0
        %4383 = vmatprep.subr.mxu0 0.0
        %4384 = vmatpush1.msra.mxu0 0.0
        %4385 = vmatprep.subr.mxu0 0.0
        %4386 = vmatpush1.msra.mxu0 0.0
        %4387 = vmatprep.subr.mxu0 0.0
        %4388 = vmatpush1.msra.mxu0 0.0
        %4389 = vmatprep.subr.mxu0 0.0
        %4390 = vmatpush1.msra.mxu0 0.0
        %4391 = vmatprep.subr.mxu0 0.0
        %4392 = vmatpush1.msra.mxu0 0.0
        %4393 = vmatprep.subr.mxu0 0.0
        %4394 = vmatpush1.msra.mxu0 0.0
        %4395 = vmatprep.mubr.f32.mxu0 0.0
        %4396 = vmatmul.mubr.f32.gmra.mrb[0].mxu0 %v4329
        %v4397 = vpop.f32.mrb[0].mxu0
        %v4398 = vadd.f32 %v4003, %v4397
        %v4399 = vpop.f32.mrb[0].mxu0
        %4400 = vdwg.mxu0
        %v4401 = vtanh.pop %v4398
        %v4402 = vmul.f32 %v4401, %v4083
        %v4403 = vsel %vm4086, %v4402, 0.0
        %4404 = vadd.xlane.f32.xlu0 %v4403
        %v4405 = vpop.xlane.xlu0 %4404
        %vm4408 = vcmask 1042432
        %v4409 = vrot.slane %v3948, 5
        %v4410 = vrot.slane %v3949, 5
        %v4411 = vsel %vm4408, %v4409, %v4410
        %v4412 = vsel %vm478, %v4411, 0
        %4414 = vmatprep.subr.mxu0 0.0
        %4415 = vmatpush1.msra.mxu0 %v3993
        %4416 = vmatprep.subr.mxu0 0.0
        %4417 = vmatpush1.msra.mxu0 %v3994
        %4418 = vmatprep.subr.mxu0 0.0
        %4419 = vmatpush1.msra.mxu0 %v3995
        %4420 = vmatprep.subr.mxu0 0.0
        %4421 = vmatpush1.msra.mxu0 %v3996
        %4422 = vmatprep.subr.mxu0 0.0
        %4423 = vmatpush1.msra.mxu0 0.0
        %4424 = vmatprep.subr.mxu0 0.0
        %4425 = vmatpush1.msra.mxu0 0.0
        %4426 = vmatprep.subr.mxu0 0.0
        %4427 = vmatpush1.msra.mxu0 0.0
        %4428 = vmatprep.subr.mxu0 0.0
        %4429 = vmatpush1.msra.mxu0 0.0
        %4430 = vmatprep.subr.mxu0 0.0
        %4431 = vmatpush1.msra.mxu0 0.0
        %4432 = vmatprep.subr.mxu0 0.0
        %4433 = vmatpush1.msra.mxu0 0.0
        %4434 = vmatprep.subr.mxu0 0.0
        %4435 = vmatpush1.msra.mxu0 0.0
        %4436 = vmatprep.subr.mxu0 0.0
        %4437 = vmatpush1.msra.mxu0 0.0
        %4438 = vmatprep.subr.mxu0 0.0
        %4439 = vmatpush1.msra.mxu0 0.0
        %4440 = vmatprep.subr.mxu0 0.0
        %4441 = vmatpush1.msra.mxu0 0.0
        %4442 = vmatprep.subr.mxu0 0.0
        %4443 = vmatpush1.msra.mxu0 0.0
        %4444 = vmatprep.subr.mxu0 0.0
        %4445 = vmatpush1.msra.mxu0 0.0
        %4446 = vmatprep.subr.mxu0 0.0
        %4447 = vmatpush1.msra.mxu0 0.0
        %4448 = vmatprep.subr.mxu0 0.0
        %4449 = vmatpush1.msra.mxu0 0.0
        %4450 = vmatprep.subr.mxu0 0.0
        %4451 = vmatpush1.msra.mxu0 0.0
        %4452 = vmatprep.subr.mxu0 0.0
        %4453 = vmatpush1.msra.mxu0 0.0
        %4454 = vmatprep.subr.mxu0 0.0
        %4455 = vmatpush1.msra.mxu0 0.0
        %4456 = vmatprep.subr.mxu0 0.0
        %4457 = vmatpush1.msra.mxu0 0.0
        %4458 = vmatprep.subr.mxu0 0.0
        %4459 = vmatpush1.msra.mxu0 0.0
        %4460 = vmatprep.subr.mxu0 0.0
        %4461 = vmatpush1.msra.mxu0 0.0
        %4462 = vmatprep.subr.mxu0 0.0
        %4463 = vmatpush1.msra.mxu0 0.0
        %4464 = vmatprep.subr.mxu0 0.0
        %4465 = vmatpush1.msra.mxu0 0.0
        %4466 = vmatprep.subr.mxu0 0.0
        %4467 = vmatpush1.msra.mxu0 0.0
        %4468 = vmatprep.subr.mxu0 0.0
        %4469 = vmatpush1.msra.mxu0 0.0
        %4470 = vmatprep.subr.mxu0 0.0
        %4471 = vmatpush1.msra.mxu0 0.0
        %4472 = vmatprep.subr.mxu0 0.0
        %4473 = vmatpush1.msra.mxu0 0.0
        %4474 = vmatprep.subr.mxu0 0.0
        %4475 = vmatpush1.msra.mxu0 0.0
        %4476 = vmatprep.subr.mxu0 0.0
        %4477 = vmatpush1.msra.mxu0 0.0
        %4478 = vmatprep.mubr.f32.mxu0 0.0
        %4479 = vmatmul.mubr.f32.gmra.mrb[0].mxu0 %v4412
        %v4480 = vpop.f32.mrb[0].mxu0
        %v4481 = vadd.f32 %v4003, %v4480
        %v4482 = vpop.f32.mrb[0].mxu0
        %4483 = vdwg.mxu0
        %v4484 = vtanh.pop %v4481
        %v4485 = vmul.f32 %v4484, %v4083
        %v4486 = vsel %vm4086, %v4485, 0.0
        %4487 = vadd.xlane.f32.xlu0 %v4486
        %v4488 = vpop.xlane.xlu0 %4487
        %vm4491 = vcmask 1041408
        %v4492 = vrot.slane %v3967, 6
        %v4493 = vrot.slane %v3968, 6
        %v4494 = vsel %vm4491, %v4492, %v4493
        %v4495 = vsel %vm478, %v4494, 0
        %4497 = vmatprep.subr.mxu0 0.0
        %4498 = vmatpush1.msra.mxu0 %v3993
        %4499 = vmatprep.subr.mxu0 0.0
        %4500 = vmatpush1.msra.mxu0 %v3994
        %4501 = vmatprep.subr.mxu0 0.0
        %4502 = vmatpush1.msra.mxu0 %v3995
        %4503 = vmatprep.subr.mxu0 0.0
        %4504 = vmatpush1.msra.mxu0 %v3996
        %4505 = vmatprep.subr.mxu0 0.0
        %4506 = vmatpush1.msra.mxu0 0.0
        %4507 = vmatprep.subr.mxu0 0.0
        %4508 = vmatpush1.msra.mxu0 0.0
        %4509 = vmatprep.subr.mxu0 0.0
        %4510 = vmatpush1.msra.mxu0 0.0
        %4511 = vmatprep.subr.mxu0 0.0
        %4512 = vmatpush1.msra.mxu0 0.0
        %4513 = vmatprep.subr.mxu0 0.0
        %4514 = vmatpush1.msra.mxu0 0.0
        %4515 = vmatprep.subr.mxu0 0.0
        %4516 = vmatpush1.msra.mxu0 0.0
        %4517 = vmatprep.subr.mxu0 0.0
        %4518 = vmatpush1.msra.mxu0 0.0
        %4519 = vmatprep.subr.mxu0 0.0
        %4520 = vmatpush1.msra.mxu0 0.0
        %4521 = vmatprep.subr.mxu0 0.0
        %4522 = vmatpush1.msra.mxu0 0.0
        %4523 = vmatprep.subr.mxu0 0.0
        %4524 = vmatpush1.msra.mxu0 0.0
        %4525 = vmatprep.subr.mxu0 0.0
        %4526 = vmatpush1.msra.mxu0 0.0
        %4527 = vmatprep.subr.mxu0 0.0
        %4528 = vmatpush1.msra.mxu0 0.0
        %4529 = vmatprep.subr.mxu0 0.0
        %4530 = vmatpush1.msra.mxu0 0.0
        %4531 = vmatprep.subr.mxu0 0.0
        %4532 = vmatpush1.msra.mxu0 0.0
        %4533 = vmatprep.subr.mxu0 0.0
        %4534 = vmatpush1.msra.mxu0 0.0
        %4535 = vmatprep.subr.mxu0 0.0
        %4536 = vmatpush1.msra.mxu0 0.0
        %4537 = vmatprep.subr.mxu0 0.0
        %4538 = vmatpush1.msra.mxu0 0.0
        %4539 = vmatprep.subr.mxu0 0.0
        %4540 = vmatpush1.msra.mxu0 0.0
        %4541 = vmatprep.subr.mxu0 0.0
        %4542 = vmatpush1.msra.mxu0 0.0
        %4543 = vmatprep.subr.mxu0 0.0
        %4544 = vmatpush1.msra.mxu0 0.0
        %4545 = vmatprep.subr.mxu0 0.0
        %4546 = vmatpush1.msra.mxu0 0.0
        %4547 = vmatprep.subr.mxu0 0.0
        %4548 = vmatpush1.msra.mxu0 0.0
        %4549 = vmatprep.subr.mxu0 0.0
        %4550 = vmatpush1.msra.mxu0 0.0
        %4551 = vmatprep.subr.mxu0 0.0
        %4552 = vmatpush1.msra.mxu0 0.0
        %4553 = vmatprep.subr.mxu0 0.0
        %4554 = vmatpush1.msra.mxu0 0.0
        %4555 = vmatprep.subr.mxu0 0.0
        %4556 = vmatpush1.msra.mxu0 0.0
        %4557 = vmatprep.subr.mxu0 0.0
        %4558 = vmatpush1.msra.mxu0 0.0
        %4559 = vmatprep.subr.mxu0 0.0
        %4560 = vmatpush1.msra.mxu0 0.0
        %4561 = vmatprep.mubr.f32.mxu0 0.0
        %4562 = vmatmul.mubr.f32.gmra.mrb[0].mxu0 %v4495
        %v4563 = vpop.f32.mrb[0].mxu0
        %v4564 = vadd.f32 %v4003, %v4563
        %v4565 = vpop.f32.mrb[0].mxu0
        %4566 = vdwg.mxu0
        %v4567 = vtanh.pop %v4564
        %v4568 = vmul.f32 %v4567, %v4083
        %v4569 = vsel %vm4086, %v4568, 0.0
        %4570 = vadd.xlane.f32.xlu0 %v4569
        %v4571 = vpop.xlane.xlu0 %4570
        %vm4574 = vcmask 1040384
        %v4575 = vrot.slane %v3991, 7
        %v4576 = vrot.slane %v3992, 7
        %v4577 = vsel %vm4574, %v4575, %v4576
        %v4578 = vsel %vm478, %v4577, 0
        %4580 = vmatprep.subr.mxu0 0.0
        %4581 = vmatpush1.msra.mxu0 %v3993
        %4582 = vmatprep.subr.mxu0 0.0
        %4583 = vmatpush1.msra.mxu0 %v3994
        %4584 = vmatprep.subr.mxu0 0.0
        %4585 = vmatpush1.msra.mxu0 %v3995
        %4586 = vmatprep.subr.mxu0 0.0
        %4587 = vmatpush1.msra.mxu0 %v3996
        %4588 = vmatprep.subr.mxu0 0.0
        %4589 = vmatpush1.msra.mxu0 0.0
        %4590 = vmatprep.subr.mxu0 0.0
        %4591 = vmatpush1.msra.mxu0 0.0
        %4592 = vmatprep.subr.mxu0 0.0
        %4593 = vmatpush1.msra.mxu0 0.0
        %4594 = vmatprep.subr.mxu0 0.0
        %4595 = vmatpush1.msra.mxu0 0.0
        %4596 = vmatprep.subr.mxu0 0.0
        %4597 = vmatpush1.msra.mxu0 0.0
        %4598 = vmatprep.subr.mxu0 0.0
        %4599 = vmatpush1.msra.mxu0 0.0
        %4600 = vmatprep.subr.mxu0 0.0
        %4601 = vmatpush1.msra.mxu0 0.0
        %4602 = vmatprep.subr.mxu0 0.0
        %4603 = vmatpush1.msra.mxu0 0.0
        %4604 = vmatprep.subr.mxu0 0.0
        %4605 = vmatpush1.msra.mxu0 0.0
        %4606 = vmatprep.subr.mxu0 0.0
        %4607 = vmatpush1.msra.mxu0 0.0
        %4608 = vmatprep.subr.mxu0 0.0
        %4609 = vmatpush1.msra.mxu0 0.0
        %4610 = vmatprep.subr.mxu0 0.0
        %4611 = vmatpush1.msra.mxu0 0.0
        %4612 = vmatprep.subr.mxu0 0.0
        %4613 = vmatpush1.msra.mxu0 0.0
        %4614 = vmatprep.subr.mxu0 0.0
        %4615 = vmatpush1.msra.mxu0 0.0
        %4616 = vmatprep.subr.mxu0 0.0
        %4617 = vmatpush1.msra.mxu0 0.0
        %4618 = vmatprep.subr.mxu0 0.0
        %4619 = vmatpush1.msra.mxu0 0.0
        %4620 = vmatprep.subr.mxu0 0.0
        %4621 = vmatpush1.msra.mxu0 0.0
        %4622 = vmatprep.subr.mxu0 0.0
        %4623 = vmatpush1.msra.mxu0 0.0
        %4624 = vmatprep.subr.mxu0 0.0
        %4625 = vmatpush1.msra.mxu0 0.0
        %4626 = vmatprep.subr.mxu0 0.0
        %4627 = vmatpush1.msra.mxu0 0.0
        %4628 = vmatprep.subr.mxu0 0.0
        %4629 = vmatpush1.msra.mxu0 0.0
        %4630 = vmatprep.subr.mxu0 0.0
        %4631 = vmatpush1.msra.mxu0 0.0
        %4632 = vmatprep.subr.mxu0 0.0
        %4633 = vmatpush1.msra.mxu0 0.0
        %4634 = vmatprep.subr.mxu0 0.0
        %4635 = vmatpush1.msra.mxu0 0.0
        %4636 = vmatprep.subr.mxu0 0.0
        %4637 = vmatpush1.msra.mxu0 0.0
        %4638 = vmatprep.subr.mxu0 0.0
        %4639 = vmatpush1.msra.mxu0 0.0
        %4640 = vmatprep.subr.mxu0 0.0
        %4641 = vmatpush1.msra.mxu0 0.0
        %4642 = vmatprep.subr.mxu0 0.0
        %4643 = vmatpush1.msra.mxu0 0.0
        %4644 = vmatprep.mubr.f32.mxu0 0.0
        %4645 = vmatmul.mubr.f32.gmra.mrb[0].mxu0 %v4578
        %v4646 = vpop.f32.mrb[0].mxu0
        %v4647 = vadd.f32 %v4003, %v4646
        %v4648 = vpop.f32.mrb[0].mxu0
        %4649 = vdwg.mxu0
        %v4650 = vtanh.pop %v4647
        %v4651 = vmul.f32 %v4650, %v4083
        %v4652 = vsel %vm4086, %v4651, 0.0
        %4653 = vadd.xlane.f32.xlu0 %v4652
        %v4654 = vpop.xlane.xlu0 %4653
        %vm4655 = vcmask 7168
        %v4656 = vsel %vm4655, %v4089, %v4168
        %vm4657 = vcmask 15360
        %v4658 = vsel %vm4657, %v4656, %v4247
        %vm4659 = vcmask 23552
        %v4660 = vsel %vm4659, %v4658, %v4326
        %vm4661 = vcmask 31744
        %v4662 = vsel %vm4661, %v4660, %v4405
        %vm4663 = vcmask 39936
        %v4664 = vsel %vm4663, %v4662, %v4488
        %vm4665 = vcmask 48128
        %v4666 = vsel %vm4665, %v4664, %v4571
        %vm4667 = vcmask 56320
        %v4668 = vsel %vm4667, %v4666, %v4654
        %vm4669 = vcmask 60416
        %v4670 = vsel %vm4669, %v4668, -inf
        %4671 = vmax.xlane.f32.xlu0 %v4670
        %v4672 = vpop.xlane.xlu0 %4671
        %v4673 = vsub.f32 %v4668, %v4672
        %v4674 = vmul.f32 %v4673, 1.442695
        %v4675 = vpow.pop %v4674
        %v4676 = vsel %vm4669, %v4675, 0.0
        %4677 = vadd.xlane.f32.xlu0 %v4676
        %v4678 = vpop.xlane.xlu0 %4677
        %v4679 = vrcp.pop %v4678
        %v4680 = vmul.f32 %v4675, %v4679
        %4682 = vset.pattern.permute.xlu0 0
        %4683 = vperm.xlu0 %4682, %v4680
        %v4684 = vpop.permute.xlu0 %4683
        %v4686 = vmul.f32 %v4684, %v3862
        %v4687 = vadd.f32 %v4686, 0.0
        %4688 = vset.pattern.permute.xlu0 1
        %4689 = vperm.xlu0 %4688, %v4680
        %v4690 = vpop.permute.xlu0 %4689
        %v4693 = vmul.f32 %v4690, %v4091
        %v4694 = vadd.f32 %v4687, %v4693
        %4695 = vset.pattern.permute.xlu0 2
        %4696 = vperm.xlu0 %4695, %v4680
        %v4697 = vpop.permute.xlu0 %4696
        %v4700 = vmul.f32 %v4697, %v4170
        %v4701 = vadd.f32 %v4694, %v4700
        %4702 = vset.pattern.permute.xlu0 3
        %4703 = vperm.xlu0 %4702, %v4680
        %v4704 = vpop.permute.xlu0 %4703
        %v4707 = vmul.f32 %v4704, %v4249
        %v4708 = vadd.f32 %v4701, %v4707
        %4709 = vset.pattern.permute.xlu0 4
        %4710 = vperm.xlu0 %4709, %v4680
        %v4711 = vpop.permute.xlu0 %4710
        %v4714 = vmul.f32 %v4711, %v4328
        %v4715 = vadd.f32 %v4708, %v4714
        %4716 = vset.pattern.permute.xlu0 5
        %4717 = vperm.xlu0 %4716, %v4680
        %v4718 = vpop.permute.xlu0 %4717
        %v4721 = vmul.f32 %v4718, %v4411
        %v4722 = vadd.f32 %v4715, %v4721
        %4723 = vset.pattern.permute.xlu0 6
        %4724 = vperm.xlu0 %4723, %v4680
        %v4725 = vpop.permute.xlu0 %4724
        %v4728 = vmul.f32 %v4725, %v4494
        %v4729 = vadd.f32 %v4722, %v4728
        %4730 = vset.pattern.permute.xlu0 7
        %4731 = vperm.xlu0 %4730, %v4680
        %v4732 = vpop.permute.xlu0 %4731
        %v4735 = vmul.f32 %v4732, %v4577
        %v4736 = vadd.f32 %v4729, %v4735
        %4737 = vst.msk [vmem:[%s451] sm:$0xf] %vm4086, %v4736
        %4738 = vst.msk [vmem:[%s441] sm:$0xf] %vm4669, %v4680
        %p4739 = scmp.lt.s32.totalorder %s28, 1
        %s4740 = scalar_select %p4739, %s28, 1
        %s4741 = smul.addr %s4740, 4
        %s4742 = scalar_lea.vmem %s12, %s4741
        %s4743 = sand.u32 %s319, 1
        %s4744 = scalar_lea.sflag [#allocation3], %s4743
        %s4745 = sand.u32 %s319, 1
        %s4746 = smul.addr %s4745, 4
        %s4747 = scalar_lea.vmem [#allocation2], %s4746
        // Predicated region
        $region69: #{han_forward.2} parent=67 // pred_check
          %p4748 = pneg %p303
        $region70: #{han_forward.2} parent=67 // pred_check_branch
          %4750 = sbr.rel (%p4748) target = $region72
        $region71: #{han_forward.2} parent=67 // pred_region
          _
        $region72: #{han_forward.2} parent=67 // pred_fallthru
          _
        // Predicated region
        $region73: #{han_forward.2} parent=67 // pred_check
          %p4751 = pneg %p329
        $region74: #{han_forward.2} parent=67 // pred_check_branch
          %4753 = sbr.rel (%p4751) target = $region76
        $region75: #{han_forward.2} parent=67 // pred_region
          %s4755 = ssub.s32 64, 64
          %4756 = vsyncadd %s4744, %s4755
          %s4757 = smul.addr %s28, 64
          %s4758 = scalar_lea.hbm %s13, %s4757
          %s4760 = sshll.u32 %s4747, 4
          %s4761 = int_to_ptr.vmem [resolvable:$true] %s4760
          %4763 = dma.vmem_to_hbm [thread:$0]  %s4761, 64, %s4758, %s4744
        $region76: #{han_forward.2} parent=67 // pred_fallthru
          _
      $region68: #{han_forward.2} parent=5 // pred_fallthru
        _
      %p4764 = scmp.le.s32.totalorder 2, %s23
      // Predicated region
      $region77: #{han_forward.2} parent=5 // pred_check
        %p4765 = pneg %p4764
      $region78: #{han_forward.2} parent=5 // pred_check_branch
        %4767 = sbr.rel (%p4765) target = $region80
      $region79: #{han_forward.2} parent=5 // pred_region
        %s4768 = ssub.s32 %s23, 2
        // Predicated region
        $region81: #{han_forward.2} parent=79 // pred_check
          %p4769 = pneg %p309
        $region82: #{han_forward.2} parent=79 // pred_check_branch
          %4771 = sbr.rel (%p4769) target = $region84
        $region83: #{han_forward.2} parent=79 // pred_region
          %p4772 = scmp.lt.s32.totalorder %s29, 1
          %s4773 = scalar_select %p4772, %s29, 1
          %s4774 = smul.addr %s4773, 4
          %s4775 = scalar_lea.vmem %s12, %s4774
        $region84: #{han_forward.2} parent=79 // pred_fallthru
          _
        // Predicated region
        $region85: #{han_forward.2} parent=79 // pred_check
          %p4776 = pneg %p335
        $region86: #{han_forward.2} parent=79 // pred_check_branch
          %4778 = sbr.rel (%p4776) target = $region88
        $region87: #{han_forward.2} parent=79 // pred_region
          %s4779 = sand.u32 %s320, 1
          %s4780 = scalar_lea.sflag [#allocation3], %s4779
          %s4781 = sand.u32 %s320, 1
          %s4782 = smul.addr %s4781, 4
          %s4783 = scalar_lea.vmem [#allocation2], %s4782
          %4784 = dma.done %s4780, 64
        $region88: #{han_forward.2} parent=79 // pred_fallthru
          _
      $region80: #{han_forward.2} parent=5 // pred_fallthru
        _
    $region6: #{han_forward.2} parent=1 // loop_footer
      %s27 = sadd.s32 1, %s23
    $region7: #{han_forward.2} parent=1 // loop_footer_branch
      %22 = sbr.rel target = $region3
    $region8: #{han_forward.2} parent=1 // loop_exit
      _
    %4785 = vsyncpa [#allocation3], 1
    %s4786 = scalar_lea.sflag [#allocation3], 1
    %4787 = vsyncpa %s4786, 1

</llo_original>
